<compile_context>
chip_gen: v7x
topology: tpu7x:2x2x1
jax: 0.10.0
libtpu: 0.0.40
codegen_flags: <defaults>
</compile_context>

<pallas_src>
import jax
import jax.numpy as jnp
from jax.experimental import pallas as pl
from jax.experimental.pallas import tpu as pltpu


# ----------------------------------------------------------------------------
# Fused kernel for one HAN level:
#   biGRU recurrence (packed-sequence semantics via masks) + LayerNorm +
#   tanh(Linear) + context score + masked exp + attention-weighted pooling.
# Single invocation, everything VMEM-resident.
# ----------------------------------------------------------------------------
def han_level_kernel(x2d_ref, mask_ref, wih_ref, bih_ref,
                     whh_f_ref, whh_b_ref, bhn_f_ref, bhn_b_ref,
                     ln_g_ref, ln_b_ref, att_w_ref, att_b_ref, ctx_ref,
                     pooled_ref, att_ref,
                     xpf_ref, xpb_ref, hf_ref, hb_ref):
    T, N, H = hf_ref.shape
    H3 = 3 * H

    # ---- prologue: hoisted input projection (both directions, all 3 gates, ONE matmul) ----
    # x2d: (T*N, Din), wih: (Din, 6H) = [fwd r|z|n , bwd r|z|n]; bias has b_ih (+ folded
    # b_hh for the r/z gates) already baked in.
    xp = jnp.dot(x2d_ref[...], wih_ref[...],
                 preferred_element_type=jnp.float32) + bih_ref[...]          # (T*N, 6H)
    for t in range(T):                                                       # static distribution
        blk = xp[t * N:(t + 1) * N]
        xpf_ref[t] = blk[:, :H3]
        xpb_ref[t] = blk[:, H3:]

    # ---- bidirectional GRU recurrence: only h @ W_hh stays in the serial loop ----
    def run_direction(xp_time_ref, whh_ref_, bhn_ref_, h_out_ref, reverse):
        whh = whh_ref_[...]          # (H, 3H) packed [r|z|n]
        bhn = bhn_ref_[...]          # (1, 3H): zeros except the n-gate slot (= b_hn)

        def step(i, h_prev):
            t = (T - 1 - i) if reverse else i
            xp_t = xp_time_ref[t]                                            # (N, 3H)
            m_t = mask_ref[t]                                                # (N, 1)
            hp = jnp.dot(h_prev, whh, preferred_element_type=jnp.float32) + bhn
            r = jax.nn.sigmoid(xp_t[:, :H] + hp[:, :H])
            z = jax.nn.sigmoid(xp_t[:, H:2 * H] + hp[:, H:2 * H])
            n = jnp.tanh(xp_t[:, 2 * H:] + r * hp[:, 2 * H:])
            h_cand = (1.0 - z) * n + z * h_prev
            h_next = jnp.where(m_t > 0.0, h_cand, h_prev)    # packed-seq: advance on valid steps
            h_out_ref[t] = h_next * m_t                      # padded steps emit zeros
            return h_next

        jax.lax.fori_loop(0, T, step, jnp.zeros((N, H), jnp.float32), unroll=True)

    run_direction(xpf_ref, whh_f_ref, bhn_f_ref, hf_ref, False)
    run_direction(xpb_ref, whh_b_ref, bhn_b_ref, hb_ref, True)

    # ---- epilogue: LayerNorm -> tanh(Linear) -> context score -> masked exp -> pooling ----
    ln_g = ln_g_ref[...]
    ln_b = ln_b_ref[...]
    att_w = att_w_ref[...]
    att_b = att_b_ref[...]
    ctx = ctx_ref[...]

    num = jnp.zeros((N, 2 * H), jnp.float32)
    den = jnp.zeros((N, 1), jnp.float32)
    e_cols = []
    for t in range(T):
        h_t = jnp.concatenate([hf_ref[t], hb_ref[t]], axis=-1)               # (N, 2H)
        mu = jnp.mean(h_t, axis=-1, keepdims=True)
        var = jnp.mean((h_t - mu) ** 2, axis=-1, keepdims=True)
        normed = (h_t - mu) * jax.lax.rsqrt(var + 1e-5) * ln_g + ln_b
        a = jnp.tanh(jnp.dot(normed, att_w, preferred_element_type=jnp.float32) + att_b)
        s = jnp.sum(a * ctx, axis=-1, keepdims=True)         # context proj: VPU mul + lane reduce
        e_t = jnp.exp(s) * mask_ref[t]                       # masked exp score (N, 1)
        num = num + e_t * h_t
        den = den + e_t
        e_cols.append(e_t)

    safe_den = jnp.where(den > 0.0, den, 1.0)
    inv = jnp.where(den > 0.0, 1.0 / safe_den, 0.0)          # zero-denominator guard
    pooled_ref[...] = num * inv                              # (N, 2H) attention-pooled output
    att_ref[...] = jnp.concatenate(e_cols, axis=-1) * inv    # (N, T) normalized attention


def run_han_level(x_tnd, mask_tn1, gru_f, gru_b, ln_g, ln_b, att_w, att_b, ctx, H):
    """One HAN level. x_tnd: (T, N, Din) time-major; mask_tn1: (T, N, 1)."""
    T, N, Din = x_tnd.shape
    D = 2 * H
    H3 = 3 * H

    def fold(gp):
        # Fold b_ih + b_hh into the hoisted input projection for the r/z gates.
        # b_hn must stay inside r * (h @ W_hn + b_hn) -> kept as a per-step bias.
        bih_fold = gp["b_ih"] + jnp.concatenate(
            [gp["b_hh"][: 2 * H], jnp.zeros((H,), jnp.float32)])
        bhn = jnp.concatenate([jnp.zeros((2 * H,), jnp.float32), gp["b_hh"][2 * H:]])
        return bih_fold, bhn[None, :]

    bih_f, bhn_f = fold(gru_f)
    bih_b, bhn_b = fold(gru_b)
    wih_both = jnp.concatenate([gru_f["w_ih"], gru_b["w_ih"]], axis=1)       # (Din, 6H)
    bih_both = jnp.concatenate([bih_f, bih_b])[None, :]                      # (1, 6H)
    x2d = x_tnd.reshape(T * N, Din)                                          # flattened for one matmul

    vmem = pl.BlockSpec(memory_space=pltpu.MemorySpace.VMEM)
    pooled, att = pl.pallas_call(
        han_level_kernel,
        out_shape=(
            jax.ShapeDtypeStruct((N, D), jnp.float32),   # attention-pooled embeddings
            jax.ShapeDtypeStruct((N, T), jnp.float32),   # attention weights (time on lane axis)
        ),
        in_specs=[vmem] * 13,
        out_specs=(vmem, vmem),
        scratch_shapes=[
            pltpu.VMEM((T, N, H3), jnp.float32),   # fwd input projections
            pltpu.VMEM((T, N, H3), jnp.float32),   # bwd input projections
            pltpu.VMEM((T, N, H), jnp.float32),    # fwd hidden states
            pltpu.VMEM((T, N, H), jnp.float32),    # bwd hidden states
        ],
    )(x2d, mask_tn1, wih_both, bih_both,
      gru_f["w_hh"], gru_b["w_hh"], bhn_f, bhn_b,
      ln_g, ln_b, att_w, att_b, ctx)
    return pooled, att


# ----------------------------------------------------------------------------
# Full forward (embedding lookup / reshapes as XLA glue, hot paths in the kernels)
# ----------------------------------------------------------------------------
def sentence_attention_forward(docs, doc_lengths, sent_lengths, params, Hw, Hs):
    B, S, W = docs.shape
    N = B * S

    # ---- word level: all sentences of all docs as one batch, masked ----
    tok = docs.reshape(N, W)
    x = jnp.take(params["emb"], tok, axis=0)              # (N, W, E)  embedding lookup (glue)
    x = jnp.transpose(x, (1, 0, 2)).astype(jnp.float32)   # (W, N, E)  time-major

    sent_len_flat = sent_lengths.reshape(N)
    doc_valid = (jnp.arange(S)[None, :] < doc_lengths[:, None]).reshape(N)          # (N,)
    wmask = (jnp.arange(W)[:, None] < sent_len_flat[None, :]) & doc_valid[None, :]  # (W, N)
    wmask_f = wmask.astype(jnp.float32)[:, :, None]                                 # (W, N, 1)

    sent_emb, word_att_nt = run_han_level(
        x, wmask_f, params["w_gru_f"], params["w_gru_b"],
        params["w_ln_g"], params["w_ln_b"],
        params["w_att_w"], params["w_att_b"], params["w_ctx"], Hw)
    # padded sentence rows have all-zero masks -> pooled = 0, attention = 0 (like pad_packed)
    word_att = word_att_nt.reshape(B, S, W)

    # ---- sentence level ----
    xs = jnp.transpose(sent_emb.reshape(B, S, 2 * Hw), (1, 0, 2))                   # (S, B, 2Hw)
    smask = (jnp.arange(S)[:, None] < doc_lengths[None, :]).astype(jnp.float32)[:, :, None]

    doc_emb, sent_att = run_han_level(
        xs, smask, params["s_gru_f"], params["s_gru_b"],
        params["s_ln_g"], params["s_ln_b"],
        params["s_att_w"], params["s_att_b"], params["s_ctx"], Hs)

    return doc_emb, word_att, sent_att


# ----------------------------------------------------------------------------
# Deterministic parameter init (packed GRU gate layout: [r | z | n])
# ----------------------------------------------------------------------------
def init_params(key, vocab, E, Hw, Hs):
    keys = iter(jax.random.split(key, 64))

    def nrm(shape, s=0.1):
        return (jax.random.normal(next(keys), shape) * s).astype(jnp.float32)

    def gru_params(Din, H):
        return dict(w_ih=nrm((Din, 3 * H)), w_hh=nrm((H, 3 * H)),
                    b_ih=nrm((3 * H,), 0.05), b_hh=nrm((3 * H,), 0.05))

    return dict(
        emb=nrm((vocab, E), 0.5),
        w_gru_f=gru_params(E, Hw), w_gru_b=gru_params(E, Hw),
        w_ln_g=jnp.ones((1, 2 * Hw), jnp.float32), w_ln_b=jnp.zeros((1, 2 * Hw), jnp.float32),
        w_att_w=nrm((2 * Hw, 2 * Hw)), w_att_b=nrm((1, 2 * Hw), 0.05), w_ctx=nrm((1, 2 * Hw)),
        s_gru_f=gru_params(2 * Hw, Hs), s_gru_b=gru_params(2 * Hw, Hs),
        s_ln_g=jnp.ones((1, 2 * Hs), jnp.float32), s_ln_b=jnp.zeros((1, 2 * Hs), jnp.float32),
        s_att_w=nrm((2 * Hs, 2 * Hs)), s_att_b=nrm((1, 2 * Hs), 0.05), s_ctx=nrm((1, 2 * Hs)),
    )


if __name__ == "__main__":
    vocab, E, Hw, Hs = 50, 32, 32, 32
    B, S, W = 4, 6, 8   # docs, padded doc length (sentences), padded sentence length (words)

    key = jax.random.PRNGKey(0)
    kp, kd, ks = jax.random.split(key, 3)
    params = init_params(kp, vocab, E, Hw, Hs)

    docs = jax.random.randint(kd, (B, S, W), 0, vocab, dtype=jnp.int32)
    doc_lengths = jnp.array([6, 3, 5, 2], dtype=jnp.int32)           # max == S
    sent_lengths = jax.random.randint(ks, (B, S), 1, W + 1, dtype=jnp.int32)
    sent_lengths = sent_lengths.at[0, 0].set(W)                       # max == W
    sent_lengths = jnp.where(jnp.arange(S)[None, :] < doc_lengths[:, None], sent_lengths, 0)

    doc_emb, word_att, sent_att = sentence_attention_forward(
        docs, doc_lengths, sent_lengths, params, Hw, Hs)
    jax.block_until_ready((doc_emb, word_att, sent_att))

    # shape + semantic sanity checks
    assert doc_emb.shape == (B, 2 * Hs)
    assert word_att.shape == (B, S, W)
    assert sent_att.shape == (B, S)
    assert bool(jnp.all(jnp.isfinite(doc_emb)))
    valid_sent = (jnp.arange(S)[None, :] < doc_lengths[:, None]).astype(jnp.float32)
    # word attention sums to 1 over valid sentences, 0 over padded sentences
    assert bool(jnp.allclose(word_att.sum(-1), valid_sent, atol=1e-4))
    # sentence attention sums to 1 per document
    assert bool(jnp.allclose(sent_att.sum(-1), jnp.ones((B,), jnp.float32), atol=1e-4))

    print("KERNEL_OK")
</pallas_src>

<mosaic_0001>
module attributes {stable_mosaic.version = 11 : i64} {
  func.func @han_level_kernel(%arg0: memref<192x32xf32, #tpu.memory_space<vmem>>, %arg1: memref<8x24x1xf32, #tpu.memory_space<vmem>>, %arg2: memref<32x192xf32, #tpu.memory_space<vmem>>, %arg3: memref<1x192xf32, #tpu.memory_space<vmem>>, %arg4: memref<32x96xf32, #tpu.memory_space<vmem>>, %arg5: memref<32x96xf32, #tpu.memory_space<vmem>>, %arg6: memref<1x96xf32, #tpu.memory_space<vmem>>, %arg7: memref<1x96xf32, #tpu.memory_space<vmem>>, %arg8: memref<1x64xf32, #tpu.memory_space<vmem>>, %arg9: memref<1x64xf32, #tpu.memory_space<vmem>>, %arg10: memref<64x64xf32, #tpu.memory_space<vmem>>, %arg11: memref<1x64xf32, #tpu.memory_space<vmem>>, %arg12: memref<1x64xf32, #tpu.memory_space<vmem>>, %arg13: memref<24x64xf32, #tpu.memory_space<vmem>>, %arg14: memref<24x8xf32, #tpu.memory_space<vmem>>, %arg15: memref<8x24x96xf32, #tpu.memory_space<vmem>>, %arg16: memref<8x24x96xf32, #tpu.memory_space<vmem>>, %arg17: memref<8x24x32xf32, #tpu.memory_space<vmem>>, %arg18: memref<8x24x32xf32, #tpu.memory_space<vmem>>) attributes {dimension_semantics = [], scalar_prefetch = 0 : i64, scratch_operands = 4 : i64, tpu.core_type = #tpu.core_type<tc>} {
    %c0 = arith.constant 0 : index
    %c0_0 = arith.constant 0 : index
    %0 = vector.load %arg0[%c0, %c0_0] : memref<192x32xf32, #tpu.memory_space<vmem>>, vector<192x32xf32>
    %c0_1 = arith.constant 0 : index
    %c0_2 = arith.constant 0 : index
    %1 = vector.load %arg2[%c0_1, %c0_2] : memref<32x192xf32, #tpu.memory_space<vmem>>, vector<32x192xf32>
    %cst = arith.constant dense<0.000000e+00> : vector<192x192xf32>
    %2 = tpu.matmul %0, %1, %cst {dimension_numbers = #tpu.dot_dimension_numbers<[1], [0], [0], [1], [0, 0, 1, 1], [], []>} : vector<192x32xf32>, vector<32x192xf32>, vector<192x192xf32> -> vector<192x192xf32>
    %c0_3 = arith.constant 0 : index
    %c0_4 = arith.constant 0 : index
    %3 = vector.load %arg3[%c0_3, %c0_4] : memref<1x192xf32, #tpu.memory_space<vmem>>, vector<1x192xf32>
    %4 = vector.broadcast %3 : vector<1x192xf32> to vector<192x192xf32>
    %5 = arith.addf %2, %4 : vector<192x192xf32>
    %6 = vector.extract_strided_slice %5 {offsets = [0, 0], sizes = [24, 192], strides = [1, 1]} : vector<192x192xf32> to vector<24x192xf32>
    %7 = vector.extract_strided_slice %6 {offsets = [0, 0], sizes = [24, 96], strides = [1, 1]} : vector<24x192xf32> to vector<24x96xf32>
    %c0_5 = arith.constant 0 : index
    %c0_6 = arith.constant 0 : index
    %c0_7 = arith.constant 0 : index
    %8 = vector.load %arg15[%c0_5, %c0_6, %c0_7] : memref<8x24x96xf32, #tpu.memory_space<vmem>>, vector<1x24x96xf32>
    %9 = vector.shape_cast %8 : vector<1x24x96xf32> to vector<24x96xf32>
    %10 = vector.shape_cast %7 : vector<24x96xf32> to vector<1x24x96xf32>
    tpu.vector_store %arg15[%c0_5, %c0_6, %c0_7], %10 {strides = array<i32>} : memref<8x24x96xf32, #tpu.memory_space<vmem>>, vector<1x24x96xf32>,
    %11 = vector.extract_strided_slice %6 {offsets = [0, 96], sizes = [24, 96], strides = [1, 1]} : vector<24x192xf32> to vector<24x96xf32>
    %c0_8 = arith.constant 0 : index
    %c0_9 = arith.constant 0 : index
    %c0_10 = arith.constant 0 : index
    %12 = vector.load %arg16[%c0_8, %c0_9, %c0_10] : memref<8x24x96xf32, #tpu.memory_space<vmem>>, vector<1x24x96xf32>
    %13 = vector.shape_cast %12 : vector<1x24x96xf32> to vector<24x96xf32>
    %14 = vector.shape_cast %11 : vector<24x96xf32> to vector<1x24x96xf32>
    tpu.vector_store %arg16[%c0_8, %c0_9, %c0_10], %14 {strides = array<i32>} : memref<8x24x96xf32, #tpu.memory_space<vmem>>, vector<1x24x96xf32>,
    %15 = vector.extract_strided_slice %5 {offsets = [24, 0], sizes = [24, 192], strides = [1, 1]} : vector<192x192xf32> to vector<24x192xf32>
    %16 = vector.extract_strided_slice %15 {offsets = [0, 0], sizes = [24, 96], strides = [1, 1]} : vector<24x192xf32> to vector<24x96xf32>
    %c1 = arith.constant 1 : index
    %c0_11 = arith.constant 0 : index
    %c0_12 = arith.constant 0 : index
    %17 = vector.load %arg15[%c1, %c0_11, %c0_12] : memref<8x24x96xf32, #tpu.memory_space<vmem>>, vector<1x24x96xf32>
    %18 = vector.shape_cast %17 : vector<1x24x96xf32> to vector<24x96xf32>
    %19 = vector.shape_cast %16 : vector<24x96xf32> to vector<1x24x96xf32>
    tpu.vector_store %arg15[%c1, %c0_11, %c0_12], %19 {strides = array<i32>} : memref<8x24x96xf32, #tpu.memory_space<vmem>>, vector<1x24x96xf32>,
    %20 = vector.extract_strided_slice %15 {offsets = [0, 96], sizes = [24, 96], strides = [1, 1]} : vector<24x192xf32> to vector<24x96xf32>
    %c1_13 = arith.constant 1 : index
    %c0_14 = arith.constant 0 : index
    %c0_15 = arith.constant 0 : index
    %21 = vector.load %arg16[%c1_13, %c0_14, %c0_15] : memref<8x24x96xf32, #tpu.memory_space<vmem>>, vector<1x24x96xf32>
    %22 = vector.shape_cast %21 : vector<1x24x96xf32> to vector<24x96xf32>
    %23 = vector.shape_cast %20 : vector<24x96xf32> to vector<1x24x96xf32>
    tpu.vector_store %arg16[%c1_13, %c0_14, %c0_15], %23 {strides = array<i32>} : memref<8x24x96xf32, #tpu.memory_space<vmem>>, vector<1x24x96xf32>,
    %24 = vector.extract_strided_slice %5 {offsets = [48, 0], sizes = [24, 192], strides = [1, 1]} : vector<192x192xf32> to vector<24x192xf32>
    %25 = vector.extract_strided_slice %24 {offsets = [0, 0], sizes = [24, 96], strides = [1, 1]} : vector<24x192xf32> to vector<24x96xf32>
    %c2 = arith.constant 2 : index
    %c0_16 = arith.constant 0 : index
    %c0_17 = arith.constant 0 : index
    %26 = vector.load %arg15[%c2, %c0_16, %c0_17] : memref<8x24x96xf32, #tpu.memory_space<vmem>>, vector<1x24x96xf32>
    %27 = vector.shape_cast %26 : vector<1x24x96xf32> to vector<24x96xf32>
    %28 = vector.shape_cast %25 : vector<24x96xf32> to vector<1x24x96xf32>
    tpu.vector_store %arg15[%c2, %c0_16, %c0_17], %28 {strides = array<i32>} : memref<8x24x96xf32, #tpu.memory_space<vmem>>, vector<1x24x96xf32>,
    %29 = vector.extract_strided_slice %24 {offsets = [0, 96], sizes = [24, 96], strides = [1, 1]} : vector<24x192xf32> to vector<24x96xf32>
    %c2_18 = arith.constant 2 : index
    %c0_19 = arith.constant 0 : index
    %c0_20 = arith.constant 0 : index
    %30 = vector.load %arg16[%c2_18, %c0_19, %c0_20] : memref<8x24x96xf32, #tpu.memory_space<vmem>>, vector<1x24x96xf32>
    %31 = vector.shape_cast %30 : vector<1x24x96xf32> to vector<24x96xf32>
    %32 = vector.shape_cast %29 : vector<24x96xf32> to vector<1x24x96xf32>
    tpu.vector_store %arg16[%c2_18, %c0_19, %c0_20], %32 {strides = array<i32>} : memref<8x24x96xf32, #tpu.memory_space<vmem>>, vector<1x24x96xf32>,
    %33 = vector.extract_strided_slice %5 {offsets = [72, 0], sizes = [24, 192], strides = [1, 1]} : vector<192x192xf32> to vector<24x192xf32>
    %34 = vector.extract_strided_slice %33 {offsets = [0, 0], sizes = [24, 96], strides = [1, 1]} : vector<24x192xf32> to vector<24x96xf32>
    %c3 = arith.constant 3 : index
    %c0_21 = arith.constant 0 : index
    %c0_22 = arith.constant 0 : index
    %35 = vector.load %arg15[%c3, %c0_21, %c0_22] : memref<8x24x96xf32, #tpu.memory_space<vmem>>, vector<1x24x96xf32>
    %36 = vector.shape_cast %35 : vector<1x24x96xf32> to vector<24x96xf32>
    %37 = vector.shape_cast %34 : vector<24x96xf32> to vector<1x24x96xf32>
    tpu.vector_store %arg15[%c3, %c0_21, %c0_22], %37 {strides = array<i32>} : memref<8x24x96xf32, #tpu.memory_space<vmem>>, vector<1x24x96xf32>,
    %38 = vector.extract_strided_slice %33 {offsets = [0, 96], sizes = [24, 96], strides = [1, 1]} : vector<24x192xf32> to vector<24x96xf32>
    %c3_23 = arith.constant 3 : index
    %c0_24 = arith.constant 0 : index
    %c0_25 = arith.constant 0 : index
    %39 = vector.load %arg16[%c3_23, %c0_24, %c0_25] : memref<8x24x96xf32, #tpu.memory_space<vmem>>, vector<1x24x96xf32>
    %40 = vector.shape_cast %39 : vector<1x24x96xf32> to vector<24x96xf32>
    %41 = vector.shape_cast %38 : vector<24x96xf32> to vector<1x24x96xf32>
    tpu.vector_store %arg16[%c3_23, %c0_24, %c0_25], %41 {strides = array<i32>} : memref<8x24x96xf32, #tpu.memory_space<vmem>>, vector<1x24x96xf32>,
    %42 = vector.extract_strided_slice %5 {offsets = [96, 0], sizes = [24, 192], strides = [1, 1]} : vector<192x192xf32> to vector<24x192xf32>
    %43 = vector.extract_strided_slice %42 {offsets = [0, 0], sizes = [24, 96], strides = [1, 1]} : vector<24x192xf32> to vector<24x96xf32>
    %c4 = arith.constant 4 : index
    %c0_26 = arith.constant 0 : index
    %c0_27 = arith.constant 0 : index
    %44 = vector.load %arg15[%c4, %c0_26, %c0_27] : memref<8x24x96xf32, #tpu.memory_space<vmem>>, vector<1x24x96xf32>
    %45 = vector.shape_cast %44 : vector<1x24x96xf32> to vector<24x96xf32>
    %46 = vector.shape_cast %43 : vector<24x96xf32> to vector<1x24x96xf32>
    tpu.vector_store %arg15[%c4, %c0_26, %c0_27], %46 {strides = array<i32>} : memref<8x24x96xf32, #tpu.memory_space<vmem>>, vector<1x24x96xf32>,
    %47 = vector.extract_strided_slice %42 {offsets = [0, 96], sizes = [24, 96], strides = [1, 1]} : vector<24x192xf32> to vector<24x96xf32>
    %c4_28 = arith.constant 4 : index
    %c0_29 = arith.constant 0 : index
    %c0_30 = arith.constant 0 : index
    %48 = vector.load %arg16[%c4_28, %c0_29, %c0_30] : memref<8x24x96xf32, #tpu.memory_space<vmem>>, vector<1x24x96xf32>
    %49 = vector.shape_cast %48 : vector<1x24x96xf32> to vector<24x96xf32>
    %50 = vector.shape_cast %47 : vector<24x96xf32> to vector<1x24x96xf32>
    tpu.vector_store %arg16[%c4_28, %c0_29, %c0_30], %50 {strides = array<i32>} : memref<8x24x96xf32, #tpu.memory_space<vmem>>, vector<1x24x96xf32>,
    %51 = vector.extract_strided_slice %5 {offsets = [120, 0], sizes = [24, 192], strides = [1, 1]} : vector<192x192xf32> to vector<24x192xf32>
    %52 = vector.extract_strided_slice %51 {offsets = [0, 0], sizes = [24, 96], strides = [1, 1]} : vector<24x192xf32> to vector<24x96xf32>
    %c5 = arith.constant 5 : index
    %c0_31 = arith.constant 0 : index
    %c0_32 = arith.constant 0 : index
    %53 = vector.load %arg15[%c5, %c0_31, %c0_32] : memref<8x24x96xf32, #tpu.memory_space<vmem>>, vector<1x24x96xf32>
    %54 = vector.shape_cast %53 : vector<1x24x96xf32> to vector<24x96xf32>
    %55 = vector.shape_cast %52 : vector<24x96xf32> to vector<1x24x96xf32>
    tpu.vector_store %arg15[%c5, %c0_31, %c0_32], %55 {strides = array<i32>} : memref<8x24x96xf32, #tpu.memory_space<vmem>>, vector<1x24x96xf32>,
    %56 = vector.extract_strided_slice %51 {offsets = [0, 96], sizes = [24, 96], strides = [1, 1]} : vector<24x192xf32> to vector<24x96xf32>
    %c5_33 = arith.constant 5 : index
    %c0_34 = arith.constant 0 : index
    %c0_35 = arith.constant 0 : index
    %57 = vector.load %arg16[%c5_33, %c0_34, %c0_35] : memref<8x24x96xf32, #tpu.memory_space<vmem>>, vector<1x24x96xf32>
    %58 = vector.shape_cast %57 : vector<1x24x96xf32> to vector<24x96xf32>
    %59 = vector.shape_cast %56 : vector<24x96xf32> to vector<1x24x96xf32>
    tpu.vector_store %arg16[%c5_33, %c0_34, %c0_35], %59 {strides = array<i32>} : memref<8x24x96xf32, #tpu.memory_space<vmem>>, vector<1x24x96xf32>,
    %60 = vector.extract_strided_slice %5 {offsets = [144, 0], sizes = [24, 192], strides = [1, 1]} : vector<192x192xf32> to vector<24x192xf32>
    %61 = vector.extract_strided_slice %60 {offsets = [0, 0], sizes = [24, 96], strides = [1, 1]} : vector<24x192xf32> to vector<24x96xf32>
    %c6 = arith.constant 6 : index
    %c0_36 = arith.constant 0 : index
    %c0_37 = arith.constant 0 : index
    %62 = vector.load %arg15[%c6, %c0_36, %c0_37] : memref<8x24x96xf32, #tpu.memory_space<vmem>>, vector<1x24x96xf32>
    %63 = vector.shape_cast %62 : vector<1x24x96xf32> to vector<24x96xf32>
    %64 = vector.shape_cast %61 : vector<24x96xf32> to vector<1x24x96xf32>
    tpu.vector_store %arg15[%c6, %c0_36, %c0_37], %64 {strides = array<i32>} : memref<8x24x96xf32, #tpu.memory_space<vmem>>, vector<1x24x96xf32>,
    %65 = vector.extract_strided_slice %60 {offsets = [0, 96], sizes = [24, 96], strides = [1, 1]} : vector<24x192xf32> to vector<24x96xf32>
    %c6_38 = arith.constant 6 : index
    %c0_39 = arith.constant 0 : index
    %c0_40 = arith.constant 0 : index
    %66 = vector.load %arg16[%c6_38, %c0_39, %c0_40] : memref<8x24x96xf32, #tpu.memory_space<vmem>>, vector<1x24x96xf32>
    %67 = vector.shape_cast %66 : vector<1x24x96xf32> to vector<24x96xf32>
    %68 = vector.shape_cast %65 : vector<24x96xf32> to vector<1x24x96xf32>
    tpu.vector_store %arg16[%c6_38, %c0_39, %c0_40], %68 {strides = array<i32>} : memref<8x24x96xf32, #tpu.memory_space<vmem>>, vector<1x24x96xf32>,
    %69 = vector.extract_strided_slice %5 {offsets = [168, 0], sizes = [24, 192], strides = [1, 1]} : vector<192x192xf32> to vector<24x192xf32>
    %70 = vector.extract_strided_slice %69 {offsets = [0, 0], sizes = [24, 96], strides = [1, 1]} : vector<24x192xf32> to vector<24x96xf32>
    %c7 = arith.constant 7 : index
    %c0_41 = arith.constant 0 : index
    %c0_42 = arith.constant 0 : index
    %71 = vector.load %arg15[%c7, %c0_41, %c0_42] : memref<8x24x96xf32, #tpu.memory_space<vmem>>, vector<1x24x96xf32>
    %72 = vector.shape_cast %71 : vector<1x24x96xf32> to vector<24x96xf32>
    %73 = vector.shape_cast %70 : vector<24x96xf32> to vector<1x24x96xf32>
    tpu.vector_store %arg15[%c7, %c0_41, %c0_42], %73 {strides = array<i32>} : memref<8x24x96xf32, #tpu.memory_space<vmem>>, vector<1x24x96xf32>,
    %74 = vector.extract_strided_slice %69 {offsets = [0, 96], sizes = [24, 96], strides = [1, 1]} : vector<24x192xf32> to vector<24x96xf32>
    %c7_43 = arith.constant 7 : index
    %c0_44 = arith.constant 0 : index
    %c0_45 = arith.constant 0 : index
    %75 = vector.load %arg16[%c7_43, %c0_44, %c0_45] : memref<8x24x96xf32, #tpu.memory_space<vmem>>, vector<1x24x96xf32>
    %76 = vector.shape_cast %75 : vector<1x24x96xf32> to vector<24x96xf32>
    %77 = vector.shape_cast %74 : vector<24x96xf32> to vector<1x24x96xf32>
    tpu.vector_store %arg16[%c7_43, %c0_44, %c0_45], %77 {strides = array<i32>} : memref<8x24x96xf32, #tpu.memory_space<vmem>>, vector<1x24x96xf32>,
    %c0_46 = arith.constant 0 : index
    %c0_47 = arith.constant 0 : index
    %78 = vector.load %arg4[%c0_46, %c0_47] : memref<32x96xf32, #tpu.memory_space<vmem>>, vector<32x96xf32>
    %c0_48 = arith.constant 0 : index
    %c0_49 = arith.constant 0 : index
    %79 = vector.load %arg6[%c0_48, %c0_49] : memref<1x96xf32, #tpu.memory_space<vmem>>, vector<1x96xf32>
    %cst_50 = arith.constant 0.000000e+00 : f32
    %80 = vector.broadcast %cst_50 : f32 to vector<24x32xf32>
    %c0_i32 = arith.constant 0 : i32
    %81 = arith.index_cast %c0_i32 : i32 to index
    %c0_51 = arith.constant 0 : index
    %c0_52 = arith.constant 0 : index
    %82 = vector.load %arg15[%81, %c0_51, %c0_52] : memref<8x24x96xf32, #tpu.memory_space<vmem>>, vector<1x24x96xf32>
    %83 = vector.shape_cast %82 : vector<1x24x96xf32> to vector<24x96xf32>
    %84 = arith.index_cast %c0_i32 : i32 to index
    %c0_53 = arith.constant 0 : index
    %c0_54 = arith.constant 0 : index
    %85 = vector.load %arg1[%84, %c0_53, %c0_54] : memref<8x24x1xf32, #tpu.memory_space<vmem>>, vector<1x24x1xf32>
    %86 = vector.shape_cast %85 : vector<1x24x1xf32> to vector<24x1xf32>
    %cst_55 = arith.constant dense<0.000000e+00> : vector<24x96xf32>
    %87 = tpu.matmul %80, %78, %cst_55 {dimension_numbers = #tpu.dot_dimension_numbers<[1], [0], [0], [1], [0, 0, 1, 1], [], []>} : vector<24x32xf32>, vector<32x96xf32>, vector<24x96xf32> -> vector<24x96xf32>
    %88 = vector.broadcast %79 : vector<1x96xf32> to vector<24x96xf32>
    %89 = arith.addf %87, %88 : vector<24x96xf32>
    %90 = vector.extract_strided_slice %83 {offsets = [0, 0], sizes = [24, 32], strides = [1, 1]} : vector<24x96xf32> to vector<24x32xf32>
    %91 = vector.extract_strided_slice %89 {offsets = [0, 0], sizes = [24, 32], strides = [1, 1]} : vector<24x96xf32> to vector<24x32xf32>
    %92 = arith.addf %90, %91 : vector<24x32xf32>
    %93 = arith.negf %92 : vector<24x32xf32>
    %94 = math.exp %93 : vector<24x32xf32>
    %cst_56 = arith.constant 1.000000e+00 : f32
    %95 = vector.broadcast %cst_56 : f32 to vector<24x32xf32>
    %96 = arith.addf %95, %94 : vector<24x32xf32>
    %97 = arith.divf %95, %96 : vector<24x32xf32>
    %98 = vector.extract_strided_slice %83 {offsets = [0, 32], sizes = [24, 32], strides = [1, 1]} : vector<24x96xf32> to vector<24x32xf32>
    %99 = vector.extract_strided_slice %89 {offsets = [0, 32], sizes = [24, 32], strides = [1, 1]} : vector<24x96xf32> to vector<24x32xf32>
    %100 = arith.addf %98, %99 : vector<24x32xf32>
    %101 = arith.negf %100 : vector<24x32xf32>
    %102 = math.exp %101 : vector<24x32xf32>
    %cst_57 = arith.constant 1.000000e+00 : f32
    %103 = vector.broadcast %cst_57 : f32 to vector<24x32xf32>
    %104 = arith.addf %103, %102 : vector<24x32xf32>
    %105 = arith.divf %103, %104 : vector<24x32xf32>
    %106 = vector.extract_strided_slice %83 {offsets = [0, 64], sizes = [24, 32], strides = [1, 1]} : vector<24x96xf32> to vector<24x32xf32>
    %107 = vector.extract_strided_slice %89 {offsets = [0, 64], sizes = [24, 32], strides = [1, 1]} : vector<24x96xf32> to vector<24x32xf32>
    %108 = arith.mulf %97, %107 : vector<24x32xf32>
    %109 = arith.addf %106, %108 : vector<24x32xf32>
    %110 = math.tanh %109 : vector<24x32xf32>
    %cst_58 = arith.constant 1.000000e+00 : f32
    %111 = vector.broadcast %cst_58 : f32 to vector<24x32xf32>
    %112 = arith.subf %111, %105 : vector<24x32xf32>
    %113 = arith.mulf %112, %110 : vector<24x32xf32>
    %114 = arith.mulf %105, %80 : vector<24x32xf32>
    %115 = arith.addf %113, %114 : vector<24x32xf32>
    %cst_59 = arith.constant 0.000000e+00 : f32
    %116 = vector.broadcast %cst_59 : f32 to vector<24x1xf32>
    %117 = arith.cmpf ogt, %86, %116 : vector<24x1xf32>
    %118 = vector.shape_cast %117 : vector<24x1xi1> to vector<24x1xi1>
    %119 = vector.broadcast %118 : vector<24x1xi1> to vector<24x32xi1>
    %120 = arith.select %119, %115, %80 : vector<24x32xi1>, vector<24x32xf32>
    %121 = vector.broadcast %86 : vector<24x1xf32> to vector<24x32xf32>
    %122 = arith.mulf %120, %121 : vector<24x32xf32>
    %123 = arith.index_cast %c0_i32 : i32 to index
    %c0_60 = arith.constant 0 : index
    %c0_61 = arith.constant 0 : index
    %124 = vector.load %arg17[%123, %c0_60, %c0_61] : memref<8x24x32xf32, #tpu.memory_space<vmem>>, vector<1x24x32xf32>
    %125 = vector.shape_cast %124 : vector<1x24x32xf32> to vector<24x32xf32>
    %126 = vector.shape_cast %122 : vector<24x32xf32> to vector<1x24x32xf32>
    tpu.vector_store %arg17[%123, %c0_60, %c0_61], %126 {strides = array<i32>} : memref<8x24x32xf32, #tpu.memory_space<vmem>>, vector<1x24x32xf32>,
    %c1_i32 = arith.constant 1 : i32
    %127 = arith.index_cast %c1_i32 : i32 to index
    %c0_62 = arith.constant 0 : index
    %c0_63 = arith.constant 0 : index
    %128 = vector.load %arg15[%127, %c0_62, %c0_63] : memref<8x24x96xf32, #tpu.memory_space<vmem>>, vector<1x24x96xf32>
    %129 = vector.shape_cast %128 : vector<1x24x96xf32> to vector<24x96xf32>
    %130 = arith.index_cast %c1_i32 : i32 to index
    %c0_64 = arith.constant 0 : index
    %c0_65 = arith.constant 0 : index
    %131 = vector.load %arg1[%130, %c0_64, %c0_65] : memref<8x24x1xf32, #tpu.memory_space<vmem>>, vector<1x24x1xf32>
    %132 = vector.shape_cast %131 : vector<1x24x1xf32> to vector<24x1xf32>
    %cst_66 = arith.constant dense<0.000000e+00> : vector<24x96xf32>
    %133 = tpu.matmul %120, %78, %cst_66 {dimension_numbers = #tpu.dot_dimension_numbers<[1], [0], [0], [1], [0, 0, 1, 1], [], []>} : vector<24x32xf32>, vector<32x96xf32>, vector<24x96xf32> -> vector<24x96xf32>
    %134 = vector.broadcast %79 : vector<1x96xf32> to vector<24x96xf32>
    %135 = arith.addf %133, %134 : vector<24x96xf32>
    %136 = vector.extract_strided_slice %129 {offsets = [0, 0], sizes = [24, 32], strides = [1, 1]} : vector<24x96xf32> to vector<24x32xf32>
    %137 = vector.extract_strided_slice %135 {offsets = [0, 0], sizes = [24, 32], strides = [1, 1]} : vector<24x96xf32> to vector<24x32xf32>
    %138 = arith.addf %136, %137 : vector<24x32xf32>
    %139 = arith.negf %138 : vector<24x32xf32>
    %140 = math.exp %139 : vector<24x32xf32>
    %cst_67 = arith.constant 1.000000e+00 : f32
    %141 = vector.broadcast %cst_67 : f32 to vector<24x32xf32>
    %142 = arith.addf %141, %140 : vector<24x32xf32>
    %143 = arith.divf %141, %142 : vector<24x32xf32>
    %144 = vector.extract_strided_slice %129 {offsets = [0, 32], sizes = [24, 32], strides = [1, 1]} : vector<24x96xf32> to vector<24x32xf32>
    %145 = vector.extract_strided_slice %135 {offsets = [0, 32], sizes = [24, 32], strides = [1, 1]} : vector<24x96xf32> to vector<24x32xf32>
    %146 = arith.addf %144, %145 : vector<24x32xf32>
    %147 = arith.negf %146 : vector<24x32xf32>
    %148 = math.exp %147 : vector<24x32xf32>
    %cst_68 = arith.constant 1.000000e+00 : f32
    %149 = vector.broadcast %cst_68 : f32 to vector<24x32xf32>
    %150 = arith.addf %149, %148 : vector<24x32xf32>
    %151 = arith.divf %149, %150 : vector<24x32xf32>
    %152 = vector.extract_strided_slice %129 {offsets = [0, 64], sizes = [24, 32], strides = [1, 1]} : vector<24x96xf32> to vector<24x32xf32>
    %153 = vector.extract_strided_slice %135 {offsets = [0, 64], sizes = [24, 32], strides = [1, 1]} : vector<24x96xf32> to vector<24x32xf32>
    %154 = arith.mulf %143, %153 : vector<24x32xf32>
    %155 = arith.addf %152, %154 : vector<24x32xf32>
    %156 = math.tanh %155 : vector<24x32xf32>
    %cst_69 = arith.constant 1.000000e+00 : f32
    %157 = vector.broadcast %cst_69 : f32 to vector<24x32xf32>
    %158 = arith.subf %157, %151 : vector<24x32xf32>
    %159 = arith.mulf %158, %156 : vector<24x32xf32>
    %160 = arith.mulf %151, %120 : vector<24x32xf32>
    %161 = arith.addf %159, %160 : vector<24x32xf32>
    %cst_70 = arith.constant 0.000000e+00 : f32
    %162 = vector.broadcast %cst_70 : f32 to vector<24x1xf32>
    %163 = arith.cmpf ogt, %132, %162 : vector<24x1xf32>
    %164 = vector.shape_cast %163 : vector<24x1xi1> to vector<24x1xi1>
    %165 = vector.broadcast %164 : vector<24x1xi1> to vector<24x32xi1>
    %166 = arith.select %165, %161, %120 : vector<24x32xi1>, vector<24x32xf32>
    %167 = vector.broadcast %132 : vector<24x1xf32> to vector<24x32xf32>
    %168 = arith.mulf %166, %167 : vector<24x32xf32>
    %169 = arith.index_cast %c1_i32 : i32 to index
    %c0_71 = arith.constant 0 : index
    %c0_72 = arith.constant 0 : index
    %170 = vector.load %arg17[%169, %c0_71, %c0_72] : memref<8x24x32xf32, #tpu.memory_space<vmem>>, vector<1x24x32xf32>
    %171 = vector.shape_cast %170 : vector<1x24x32xf32> to vector<24x32xf32>
    %172 = vector.shape_cast %168 : vector<24x32xf32> to vector<1x24x32xf32>
    tpu.vector_store %arg17[%169, %c0_71, %c0_72], %172 {strides = array<i32>} : memref<8x24x32xf32, #tpu.memory_space<vmem>>, vector<1x24x32xf32>,
    %c2_i32 = arith.constant 2 : i32
    %173 = arith.index_cast %c2_i32 : i32 to index
    %c0_73 = arith.constant 0 : index
    %c0_74 = arith.constant 0 : index
    %174 = vector.load %arg15[%173, %c0_73, %c0_74] : memref<8x24x96xf32, #tpu.memory_space<vmem>>, vector<1x24x96xf32>
    %175 = vector.shape_cast %174 : vector<1x24x96xf32> to vector<24x96xf32>
    %176 = arith.index_cast %c2_i32 : i32 to index
    %c0_75 = arith.constant 0 : index
    %c0_76 = arith.constant 0 : index
    %177 = vector.load %arg1[%176, %c0_75, %c0_76] : memref<8x24x1xf32, #tpu.memory_space<vmem>>, vector<1x24x1xf32>
    %178 = vector.shape_cast %177 : vector<1x24x1xf32> to vector<24x1xf32>
    %cst_77 = arith.constant dense<0.000000e+00> : vector<24x96xf32>
    %179 = tpu.matmul %166, %78, %cst_77 {dimension_numbers = #tpu.dot_dimension_numbers<[1], [0], [0], [1], [0, 0, 1, 1], [], []>} : vector<24x32xf32>, vector<32x96xf32>, vector<24x96xf32> -> vector<24x96xf32>
    %180 = vector.broadcast %79 : vector<1x96xf32> to vector<24x96xf32>
    %181 = arith.addf %179, %180 : vector<24x96xf32>
    %182 = vector.extract_strided_slice %175 {offsets = [0, 0], sizes = [24, 32], strides = [1, 1]} : vector<24x96xf32> to vector<24x32xf32>
    %183 = vector.extract_strided_slice %181 {offsets = [0, 0], sizes = [24, 32], strides = [1, 1]} : vector<24x96xf32> to vector<24x32xf32>
    %184 = arith.addf %182, %183 : vector<24x32xf32>
    %185 = arith.negf %184 : vector<24x32xf32>
    %186 = math.exp %185 : vector<24x32xf32>
    %cst_78 = arith.constant 1.000000e+00 : f32
    %187 = vector.broadcast %cst_78 : f32 to vector<24x32xf32>
    %188 = arith.addf %187, %186 : vector<24x32xf32>
    %189 = arith.divf %187, %188 : vector<24x32xf32>
    %190 = vector.extract_strided_slice %175 {offsets = [0, 32], sizes = [24, 32], strides = [1, 1]} : vector<24x96xf32> to vector<24x32xf32>
    %191 = vector.extract_strided_slice %181 {offsets = [0, 32], sizes = [24, 32], strides = [1, 1]} : vector<24x96xf32> to vector<24x32xf32>
    %192 = arith.addf %190, %191 : vector<24x32xf32>
    %193 = arith.negf %192 : vector<24x32xf32>
    %194 = math.exp %193 : vector<24x32xf32>
    %cst_79 = arith.constant 1.000000e+00 : f32
    %195 = vector.broadcast %cst_79 : f32 to vector<24x32xf32>
    %196 = arith.addf %195, %194 : vector<24x32xf32>
    %197 = arith.divf %195, %196 : vector<24x32xf32>
    %198 = vector.extract_strided_slice %175 {offsets = [0, 64], sizes = [24, 32], strides = [1, 1]} : vector<24x96xf32> to vector<24x32xf32>
    %199 = vector.extract_strided_slice %181 {offsets = [0, 64], sizes = [24, 32], strides = [1, 1]} : vector<24x96xf32> to vector<24x32xf32>
    %200 = arith.mulf %189, %199 : vector<24x32xf32>
    %201 = arith.addf %198, %200 : vector<24x32xf32>
    %202 = math.tanh %201 : vector<24x32xf32>
    %cst_80 = arith.constant 1.000000e+00 : f32
    %203 = vector.broadcast %cst_80 : f32 to vector<24x32xf32>
    %204 = arith.subf %203, %197 : vector<24x32xf32>
    %205 = arith.mulf %204, %202 : vector<24x32xf32>
    %206 = arith.mulf %197, %166 : vector<24x32xf32>
    %207 = arith.addf %205, %206 : vector<24x32xf32>
    %cst_81 = arith.constant 0.000000e+00 : f32
    %208 = vector.broadcast %cst_81 : f32 to vector<24x1xf32>
    %209 = arith.cmpf ogt, %178, %208 : vector<24x1xf32>
    %210 = vector.shape_cast %209 : vector<24x1xi1> to vector<24x1xi1>
    %211 = vector.broadcast %210 : vector<24x1xi1> to vector<24x32xi1>
    %212 = arith.select %211, %207, %166 : vector<24x32xi1>, vector<24x32xf32>
    %213 = vector.broadcast %178 : vector<24x1xf32> to vector<24x32xf32>
    %214 = arith.mulf %212, %213 : vector<24x32xf32>
    %215 = arith.index_cast %c2_i32 : i32 to index
    %c0_82 = arith.constant 0 : index
    %c0_83 = arith.constant 0 : index
    %216 = vector.load %arg17[%215, %c0_82, %c0_83] : memref<8x24x32xf32, #tpu.memory_space<vmem>>, vector<1x24x32xf32>
    %217 = vector.shape_cast %216 : vector<1x24x32xf32> to vector<24x32xf32>
    %218 = vector.shape_cast %214 : vector<24x32xf32> to vector<1x24x32xf32>
    tpu.vector_store %arg17[%215, %c0_82, %c0_83], %218 {strides = array<i32>} : memref<8x24x32xf32, #tpu.memory_space<vmem>>, vector<1x24x32xf32>,
    %c3_i32 = arith.constant 3 : i32
    %219 = arith.index_cast %c3_i32 : i32 to index
    %c0_84 = arith.constant 0 : index
    %c0_85 = arith.constant 0 : index
    %220 = vector.load %arg15[%219, %c0_84, %c0_85] : memref<8x24x96xf32, #tpu.memory_space<vmem>>, vector<1x24x96xf32>
    %221 = vector.shape_cast %220 : vector<1x24x96xf32> to vector<24x96xf32>
    %222 = arith.index_cast %c3_i32 : i32 to index
    %c0_86 = arith.constant 0 : index
    %c0_87 = arith.constant 0 : index
    %223 = vector.load %arg1[%222, %c0_86, %c0_87] : memref<8x24x1xf32, #tpu.memory_space<vmem>>, vector<1x24x1xf32>
    %224 = vector.shape_cast %223 : vector<1x24x1xf32> to vector<24x1xf32>
    %cst_88 = arith.constant dense<0.000000e+00> : vector<24x96xf32>
    %225 = tpu.matmul %212, %78, %cst_88 {dimension_numbers = #tpu.dot_dimension_numbers<[1], [0], [0], [1], [0, 0, 1, 1], [], []>} : vector<24x32xf32>, vector<32x96xf32>, vector<24x96xf32> -> vector<24x96xf32>
    %226 = vector.broadcast %79 : vector<1x96xf32> to vector<24x96xf32>
    %227 = arith.addf %225, %226 : vector<24x96xf32>
    %228 = vector.extract_strided_slice %221 {offsets = [0, 0], sizes = [24, 32], strides = [1, 1]} : vector<24x96xf32> to vector<24x32xf32>
    %229 = vector.extract_strided_slice %227 {offsets = [0, 0], sizes = [24, 32], strides = [1, 1]} : vector<24x96xf32> to vector<24x32xf32>
    %230 = arith.addf %228, %229 : vector<24x32xf32>
    %231 = arith.negf %230 : vector<24x32xf32>
    %232 = math.exp %231 : vector<24x32xf32>
    %cst_89 = arith.constant 1.000000e+00 : f32
    %233 = vector.broadcast %cst_89 : f32 to vector<24x32xf32>
    %234 = arith.addf %233, %232 : vector<24x32xf32>
    %235 = arith.divf %233, %234 : vector<24x32xf32>
    %236 = vector.extract_strided_slice %221 {offsets = [0, 32], sizes = [24, 32], strides = [1, 1]} : vector<24x96xf32> to vector<24x32xf32>
    %237 = vector.extract_strided_slice %227 {offsets = [0, 32], sizes = [24, 32], strides = [1, 1]} : vector<24x96xf32> to vector<24x32xf32>
    %238 = arith.addf %236, %237 : vector<24x32xf32>
    %239 = arith.negf %238 : vector<24x32xf32>
    %240 = math.exp %239 : vector<24x32xf32>
    %cst_90 = arith.constant 1.000000e+00 : f32
    %241 = vector.broadcast %cst_90 : f32 to vector<24x32xf32>
    %242 = arith.addf %241, %240 : vector<24x32xf32>
    %243 = arith.divf %241, %242 : vector<24x32xf32>
    %244 = vector.extract_strided_slice %221 {offsets = [0, 64], sizes = [24, 32], strides = [1, 1]} : vector<24x96xf32> to vector<24x32xf32>
    %245 = vector.extract_strided_slice %227 {offsets = [0, 64], sizes = [24, 32], strides = [1, 1]} : vector<24x96xf32> to vector<24x32xf32>
    %246 = arith.mulf %235, %245 : vector<24x32xf32>
    %247 = arith.addf %244, %246 : vector<24x32xf32>
    %248 = math.tanh %247 : vector<24x32xf32>
    %cst_91 = arith.constant 1.000000e+00 : f32
    %249 = vector.broadcast %cst_91 : f32 to vector<24x32xf32>
    %250 = arith.subf %249, %243 : vector<24x32xf32>
    %251 = arith.mulf %250, %248 : vector<24x32xf32>
    %252 = arith.mulf %243, %212 : vector<24x32xf32>
    %253 = arith.addf %251, %252 : vector<24x32xf32>
    %cst_92 = arith.constant 0.000000e+00 : f32
    %254 = vector.broadcast %cst_92 : f32 to vector<24x1xf32>
    %255 = arith.cmpf ogt, %224, %254 : vector<24x1xf32>
    %256 = vector.shape_cast %255 : vector<24x1xi1> to vector<24x1xi1>
    %257 = vector.broadcast %256 : vector<24x1xi1> to vector<24x32xi1>
    %258 = arith.select %257, %253, %212 : vector<24x32xi1>, vector<24x32xf32>
    %259 = vector.broadcast %224 : vector<24x1xf32> to vector<24x32xf32>
    %260 = arith.mulf %258, %259 : vector<24x32xf32>
    %261 = arith.index_cast %c3_i32 : i32 to index
    %c0_93 = arith.constant 0 : index
    %c0_94 = arith.constant 0 : index
    %262 = vector.load %arg17[%261, %c0_93, %c0_94] : memref<8x24x32xf32, #tpu.memory_space<vmem>>, vector<1x24x32xf32>
    %263 = vector.shape_cast %262 : vector<1x24x32xf32> to vector<24x32xf32>
    %264 = vector.shape_cast %260 : vector<24x32xf32> to vector<1x24x32xf32>
    tpu.vector_store %arg17[%261, %c0_93, %c0_94], %264 {strides = array<i32>} : memref<8x24x32xf32, #tpu.memory_space<vmem>>, vector<1x24x32xf32>,
    %c4_i32 = arith.constant 4 : i32
    %265 = arith.index_cast %c4_i32 : i32 to index
    %c0_95 = arith.constant 0 : index
    %c0_96 = arith.constant 0 : index
    %266 = vector.load %arg15[%265, %c0_95, %c0_96] : memref<8x24x96xf32, #tpu.memory_space<vmem>>, vector<1x24x96xf32>
    %267 = vector.shape_cast %266 : vector<1x24x96xf32> to vector<24x96xf32>
    %268 = arith.index_cast %c4_i32 : i32 to index
    %c0_97 = arith.constant 0 : index
    %c0_98 = arith.constant 0 : index
    %269 = vector.load %arg1[%268, %c0_97, %c0_98] : memref<8x24x1xf32, #tpu.memory_space<vmem>>, vector<1x24x1xf32>
    %270 = vector.shape_cast %269 : vector<1x24x1xf32> to vector<24x1xf32>
    %cst_99 = arith.constant dense<0.000000e+00> : vector<24x96xf32>
    %271 = tpu.matmul %258, %78, %cst_99 {dimension_numbers = #tpu.dot_dimension_numbers<[1], [0], [0], [1], [0, 0, 1, 1], [], []>} : vector<24x32xf32>, vector<32x96xf32>, vector<24x96xf32> -> vector<24x96xf32>
    %272 = vector.broadcast %79 : vector<1x96xf32> to vector<24x96xf32>
    %273 = arith.addf %271, %272 : vector<24x96xf32>
    %274 = vector.extract_strided_slice %267 {offsets = [0, 0], sizes = [24, 32], strides = [1, 1]} : vector<24x96xf32> to vector<24x32xf32>
    %275 = vector.extract_strided_slice %273 {offsets = [0, 0], sizes = [24, 32], strides = [1, 1]} : vector<24x96xf32> to vector<24x32xf32>
    %276 = arith.addf %274, %275 : vector<24x32xf32>
    %277 = arith.negf %276 : vector<24x32xf32>
    %278 = math.exp %277 : vector<24x32xf32>
    %cst_100 = arith.constant 1.000000e+00 : f32
    %279 = vector.broadcast %cst_100 : f32 to vector<24x32xf32>
    %280 = arith.addf %279, %278 : vector<24x32xf32>
    %281 = arith.divf %279, %280 : vector<24x32xf32>
    %282 = vector.extract_strided_slice %267 {offsets = [0, 32], sizes = [24, 32], strides = [1, 1]} : vector<24x96xf32> to vector<24x32xf32>
    %283 = vector.extract_strided_slice %273 {offsets = [0, 32], sizes = [24, 32], strides = [1, 1]} : vector<24x96xf32> to vector<24x32xf32>
    %284 = arith.addf %282, %283 : vector<24x32xf32>
    %285 = arith.negf %284 : vector<24x32xf32>
    %286 = math.exp %285 : vector<24x32xf32>
    %cst_101 = arith.constant 1.000000e+00 : f32
    %287 = vector.broadcast %cst_101 : f32 to vector<24x32xf32>
    %288 = arith.addf %287, %286 : vector<24x32xf32>
    %289 = arith.divf %287, %288 : vector<24x32xf32>
    %290 = vector.extract_strided_slice %267 {offsets = [0, 64], sizes = [24, 32], strides = [1, 1]} : vector<24x96xf32> to vector<24x32xf32>
    %291 = vector.extract_strided_slice %273 {offsets = [0, 64], sizes = [24, 32], strides = [1, 1]} : vector<24x96xf32> to vector<24x32xf32>
    %292 = arith.mulf %281, %291 : vector<24x32xf32>
    %293 = arith.addf %290, %292 : vector<24x32xf32>
    %294 = math.tanh %293 : vector<24x32xf32>
    %cst_102 = arith.constant 1.000000e+00 : f32
    %295 = vector.broadcast %cst_102 : f32 to vector<24x32xf32>
    %296 = arith.subf %295, %289 : vector<24x32xf32>
    %297 = arith.mulf %296, %294 : vector<24x32xf32>
    %298 = arith.mulf %289, %258 : vector<24x32xf32>
    %299 = arith.addf %297, %298 : vector<24x32xf32>
    %cst_103 = arith.constant 0.000000e+00 : f32
    %300 = vector.broadcast %cst_103 : f32 to vector<24x1xf32>
    %301 = arith.cmpf ogt, %270, %300 : vector<24x1xf32>
    %302 = vector.shape_cast %301 : vector<24x1xi1> to vector<24x1xi1>
    %303 = vector.broadcast %302 : vector<24x1xi1> to vector<24x32xi1>
    %304 = arith.select %303, %299, %258 : vector<24x32xi1>, vector<24x32xf32>
    %305 = vector.broadcast %270 : vector<24x1xf32> to vector<24x32xf32>
    %306 = arith.mulf %304, %305 : vector<24x32xf32>
    %307 = arith.index_cast %c4_i32 : i32 to index
    %c0_104 = arith.constant 0 : index
    %c0_105 = arith.constant 0 : index
    %308 = vector.load %arg17[%307, %c0_104, %c0_105] : memref<8x24x32xf32, #tpu.memory_space<vmem>>, vector<1x24x32xf32>
    %309 = vector.shape_cast %308 : vector<1x24x32xf32> to vector<24x32xf32>
    %310 = vector.shape_cast %306 : vector<24x32xf32> to vector<1x24x32xf32>
    tpu.vector_store %arg17[%307, %c0_104, %c0_105], %310 {strides = array<i32>} : memref<8x24x32xf32, #tpu.memory_space<vmem>>, vector<1x24x32xf32>,
    %c5_i32 = arith.constant 5 : i32
    %311 = arith.index_cast %c5_i32 : i32 to index
    %c0_106 = arith.constant 0 : index
    %c0_107 = arith.constant 0 : index
    %312 = vector.load %arg15[%311, %c0_106, %c0_107] : memref<8x24x96xf32, #tpu.memory_space<vmem>>, vector<1x24x96xf32>
    %313 = vector.shape_cast %312 : vector<1x24x96xf32> to vector<24x96xf32>
    %314 = arith.index_cast %c5_i32 : i32 to index
    %c0_108 = arith.constant 0 : index
    %c0_109 = arith.constant 0 : index
    %315 = vector.load %arg1[%314, %c0_108, %c0_109] : memref<8x24x1xf32, #tpu.memory_space<vmem>>, vector<1x24x1xf32>
    %316 = vector.shape_cast %315 : vector<1x24x1xf32> to vector<24x1xf32>
    %cst_110 = arith.constant dense<0.000000e+00> : vector<24x96xf32>
    %317 = tpu.matmul %304, %78, %cst_110 {dimension_numbers = #tpu.dot_dimension_numbers<[1], [0], [0], [1], [0, 0, 1, 1], [], []>} : vector<24x32xf32>, vector<32x96xf32>, vector<24x96xf32> -> vector<24x96xf32>
    %318 = vector.broadcast %79 : vector<1x96xf32> to vector<24x96xf32>
    %319 = arith.addf %317, %318 : vector<24x96xf32>
    %320 = vector.extract_strided_slice %313 {offsets = [0, 0], sizes = [24, 32], strides = [1, 1]} : vector<24x96xf32> to vector<24x32xf32>
    %321 = vector.extract_strided_slice %319 {offsets = [0, 0], sizes = [24, 32], strides = [1, 1]} : vector<24x96xf32> to vector<24x32xf32>
    %322 = arith.addf %320, %321 : vector<24x32xf32>
    %323 = arith.negf %322 : vector<24x32xf32>
    %324 = math.exp %323 : vector<24x32xf32>
    %cst_111 = arith.constant 1.000000e+00 : f32
    %325 = vector.broadcast %cst_111 : f32 to vector<24x32xf32>
    %326 = arith.addf %325, %324 : vector<24x32xf32>
    %327 = arith.divf %325, %326 : vector<24x32xf32>
    %328 = vector.extract_strided_slice %313 {offsets = [0, 32], sizes = [24, 32], strides = [1, 1]} : vector<24x96xf32> to vector<24x32xf32>
    %329 = vector.extract_strided_slice %319 {offsets = [0, 32], sizes = [24, 32], strides = [1, 1]} : vector<24x96xf32> to vector<24x32xf32>
    %330 = arith.addf %328, %329 : vector<24x32xf32>
    %331 = arith.negf %330 : vector<24x32xf32>
    %332 = math.exp %331 : vector<24x32xf32>
    %cst_112 = arith.constant 1.000000e+00 : f32
    %333 = vector.broadcast %cst_112 : f32 to vector<24x32xf32>
    %334 = arith.addf %333, %332 : vector<24x32xf32>
    %335 = arith.divf %333, %334 : vector<24x32xf32>
    %336 = vector.extract_strided_slice %313 {offsets = [0, 64], sizes = [24, 32], strides = [1, 1]} : vector<24x96xf32> to vector<24x32xf32>
    %337 = vector.extract_strided_slice %319 {offsets = [0, 64], sizes = [24, 32], strides = [1, 1]} : vector<24x96xf32> to vector<24x32xf32>
    %338 = arith.mulf %327, %337 : vector<24x32xf32>
    %339 = arith.addf %336, %338 : vector<24x32xf32>
    %340 = math.tanh %339 : vector<24x32xf32>
    %cst_113 = arith.constant 1.000000e+00 : f32
    %341 = vector.broadcast %cst_113 : f32 to vector<24x32xf32>
    %342 = arith.subf %341, %335 : vector<24x32xf32>
    %343 = arith.mulf %342, %340 : vector<24x32xf32>
    %344 = arith.mulf %335, %304 : vector<24x32xf32>
    %345 = arith.addf %343, %344 : vector<24x32xf32>
    %cst_114 = arith.constant 0.000000e+00 : f32
    %346 = vector.broadcast %cst_114 : f32 to vector<24x1xf32>
    %347 = arith.cmpf ogt, %316, %346 : vector<24x1xf32>
    %348 = vector.shape_cast %347 : vector<24x1xi1> to vector<24x1xi1>
    %349 = vector.broadcast %348 : vector<24x1xi1> to vector<24x32xi1>
    %350 = arith.select %349, %345, %304 : vector<24x32xi1>, vector<24x32xf32>
    %351 = vector.broadcast %316 : vector<24x1xf32> to vector<24x32xf32>
    %352 = arith.mulf %350, %351 : vector<24x32xf32>
    %353 = arith.index_cast %c5_i32 : i32 to index
    %c0_115 = arith.constant 0 : index
    %c0_116 = arith.constant 0 : index
    %354 = vector.load %arg17[%353, %c0_115, %c0_116] : memref<8x24x32xf32, #tpu.memory_space<vmem>>, vector<1x24x32xf32>
    %355 = vector.shape_cast %354 : vector<1x24x32xf32> to vector<24x32xf32>
    %356 = vector.shape_cast %352 : vector<24x32xf32> to vector<1x24x32xf32>
    tpu.vector_store %arg17[%353, %c0_115, %c0_116], %356 {strides = array<i32>} : memref<8x24x32xf32, #tpu.memory_space<vmem>>, vector<1x24x32xf32>,
    %c6_i32 = arith.constant 6 : i32
    %357 = arith.index_cast %c6_i32 : i32 to index
    %c0_117 = arith.constant 0 : index
    %c0_118 = arith.constant 0 : index
    %358 = vector.load %arg15[%357, %c0_117, %c0_118] : memref<8x24x96xf32, #tpu.memory_space<vmem>>, vector<1x24x96xf32>
    %359 = vector.shape_cast %358 : vector<1x24x96xf32> to vector<24x96xf32>
    %360 = arith.index_cast %c6_i32 : i32 to index
    %c0_119 = arith.constant 0 : index
    %c0_120 = arith.constant 0 : index
    %361 = vector.load %arg1[%360, %c0_119, %c0_120] : memref<8x24x1xf32, #tpu.memory_space<vmem>>, vector<1x24x1xf32>
    %362 = vector.shape_cast %361 : vector<1x24x1xf32> to vector<24x1xf32>
    %cst_121 = arith.constant dense<0.000000e+00> : vector<24x96xf32>
    %363 = tpu.matmul %350, %78, %cst_121 {dimension_numbers = #tpu.dot_dimension_numbers<[1], [0], [0], [1], [0, 0, 1, 1], [], []>} : vector<24x32xf32>, vector<32x96xf32>, vector<24x96xf32> -> vector<24x96xf32>
    %364 = vector.broadcast %79 : vector<1x96xf32> to vector<24x96xf32>
    %365 = arith.addf %363, %364 : vector<24x96xf32>
    %366 = vector.extract_strided_slice %359 {offsets = [0, 0], sizes = [24, 32], strides = [1, 1]} : vector<24x96xf32> to vector<24x32xf32>
    %367 = vector.extract_strided_slice %365 {offsets = [0, 0], sizes = [24, 32], strides = [1, 1]} : vector<24x96xf32> to vector<24x32xf32>
    %368 = arith.addf %366, %367 : vector<24x32xf32>
    %369 = arith.negf %368 : vector<24x32xf32>
    %370 = math.exp %369 : vector<24x32xf32>
    %cst_122 = arith.constant 1.000000e+00 : f32
    %371 = vector.broadcast %cst_122 : f32 to vector<24x32xf32>
    %372 = arith.addf %371, %370 : vector<24x32xf32>
    %373 = arith.divf %371, %372 : vector<24x32xf32>
    %374 = vector.extract_strided_slice %359 {offsets = [0, 32], sizes = [24, 32], strides = [1, 1]} : vector<24x96xf32> to vector<24x32xf32>
    %375 = vector.extract_strided_slice %365 {offsets = [0, 32], sizes = [24, 32], strides = [1, 1]} : vector<24x96xf32> to vector<24x32xf32>
    %376 = arith.addf %374, %375 : vector<24x32xf32>
    %377 = arith.negf %376 : vector<24x32xf32>
    %378 = math.exp %377 : vector<24x32xf32>
    %cst_123 = arith.constant 1.000000e+00 : f32
    %379 = vector.broadcast %cst_123 : f32 to vector<24x32xf32>
    %380 = arith.addf %379, %378 : vector<24x32xf32>
    %381 = arith.divf %379, %380 : vector<24x32xf32>
    %382 = vector.extract_strided_slice %359 {offsets = [0, 64], sizes = [24, 32], strides = [1, 1]} : vector<24x96xf32> to vector<24x32xf32>
    %383 = vector.extract_strided_slice %365 {offsets = [0, 64], sizes = [24, 32], strides = [1, 1]} : vector<24x96xf32> to vector<24x32xf32>
    %384 = arith.mulf %373, %383 : vector<24x32xf32>
    %385 = arith.addf %382, %384 : vector<24x32xf32>
    %386 = math.tanh %385 : vector<24x32xf32>
    %cst_124 = arith.constant 1.000000e+00 : f32
    %387 = vector.broadcast %cst_124 : f32 to vector<24x32xf32>
    %388 = arith.subf %387, %381 : vector<24x32xf32>
    %389 = arith.mulf %388, %386 : vector<24x32xf32>
    %390 = arith.mulf %381, %350 : vector<24x32xf32>
    %391 = arith.addf %389, %390 : vector<24x32xf32>
    %cst_125 = arith.constant 0.000000e+00 : f32
    %392 = vector.broadcast %cst_125 : f32 to vector<24x1xf32>
    %393 = arith.cmpf ogt, %362, %392 : vector<24x1xf32>
    %394 = vector.shape_cast %393 : vector<24x1xi1> to vector<24x1xi1>
    %395 = vector.broadcast %394 : vector<24x1xi1> to vector<24x32xi1>
    %396 = arith.select %395, %391, %350 : vector<24x32xi1>, vector<24x32xf32>
    %397 = vector.broadcast %362 : vector<24x1xf32> to vector<24x32xf32>
    %398 = arith.mulf %396, %397 : vector<24x32xf32>
    %399 = arith.index_cast %c6_i32 : i32 to index
    %c0_126 = arith.constant 0 : index
    %c0_127 = arith.constant 0 : index
    %400 = vector.load %arg17[%399, %c0_126, %c0_127] : memref<8x24x32xf32, #tpu.memory_space<vmem>>, vector<1x24x32xf32>
    %401 = vector.shape_cast %400 : vector<1x24x32xf32> to vector<24x32xf32>
    %402 = vector.shape_cast %398 : vector<24x32xf32> to vector<1x24x32xf32>
    tpu.vector_store %arg17[%399, %c0_126, %c0_127], %402 {strides = array<i32>} : memref<8x24x32xf32, #tpu.memory_space<vmem>>, vector<1x24x32xf32>,
    %c7_i32 = arith.constant 7 : i32
    %403 = arith.index_cast %c7_i32 : i32 to index
    %c0_128 = arith.constant 0 : index
    %c0_129 = arith.constant 0 : index
    %404 = vector.load %arg15[%403, %c0_128, %c0_129] : memref<8x24x96xf32, #tpu.memory_space<vmem>>, vector<1x24x96xf32>
    %405 = vector.shape_cast %404 : vector<1x24x96xf32> to vector<24x96xf32>
    %406 = arith.index_cast %c7_i32 : i32 to index
    %c0_130 = arith.constant 0 : index
    %c0_131 = arith.constant 0 : index
    %407 = vector.load %arg1[%406, %c0_130, %c0_131] : memref<8x24x1xf32, #tpu.memory_space<vmem>>, vector<1x24x1xf32>
    %408 = vector.shape_cast %407 : vector<1x24x1xf32> to vector<24x1xf32>
    %cst_132 = arith.constant dense<0.000000e+00> : vector<24x96xf32>
    %409 = tpu.matmul %396, %78, %cst_132 {dimension_numbers = #tpu.dot_dimension_numbers<[1], [0], [0], [1], [0, 0, 1, 1], [], []>} : vector<24x32xf32>, vector<32x96xf32>, vector<24x96xf32> -> vector<24x96xf32>
    %410 = vector.broadcast %79 : vector<1x96xf32> to vector<24x96xf32>
    %411 = arith.addf %409, %410 : vector<24x96xf32>
    %412 = vector.extract_strided_slice %405 {offsets = [0, 0], sizes = [24, 32], strides = [1, 1]} : vector<24x96xf32> to vector<24x32xf32>
    %413 = vector.extract_strided_slice %411 {offsets = [0, 0], sizes = [24, 32], strides = [1, 1]} : vector<24x96xf32> to vector<24x32xf32>
    %414 = arith.addf %412, %413 : vector<24x32xf32>
    %415 = arith.negf %414 : vector<24x32xf32>
    %416 = math.exp %415 : vector<24x32xf32>
    %cst_133 = arith.constant 1.000000e+00 : f32
    %417 = vector.broadcast %cst_133 : f32 to vector<24x32xf32>
    %418 = arith.addf %417, %416 : vector<24x32xf32>
    %419 = arith.divf %417, %418 : vector<24x32xf32>
    %420 = vector.extract_strided_slice %405 {offsets = [0, 32], sizes = [24, 32], strides = [1, 1]} : vector<24x96xf32> to vector<24x32xf32>
    %421 = vector.extract_strided_slice %411 {offsets = [0, 32], sizes = [24, 32], strides = [1, 1]} : vector<24x96xf32> to vector<24x32xf32>
    %422 = arith.addf %420, %421 : vector<24x32xf32>
    %423 = arith.negf %422 : vector<24x32xf32>
    %424 = math.exp %423 : vector<24x32xf32>
    %cst_134 = arith.constant 1.000000e+00 : f32
    %425 = vector.broadcast %cst_134 : f32 to vector<24x32xf32>
    %426 = arith.addf %425, %424 : vector<24x32xf32>
    %427 = arith.divf %425, %426 : vector<24x32xf32>
    %428 = vector.extract_strided_slice %405 {offsets = [0, 64], sizes = [24, 32], strides = [1, 1]} : vector<24x96xf32> to vector<24x32xf32>
    %429 = vector.extract_strided_slice %411 {offsets = [0, 64], sizes = [24, 32], strides = [1, 1]} : vector<24x96xf32> to vector<24x32xf32>
    %430 = arith.mulf %419, %429 : vector<24x32xf32>
    %431 = arith.addf %428, %430 : vector<24x32xf32>
    %432 = math.tanh %431 : vector<24x32xf32>
    %cst_135 = arith.constant 1.000000e+00 : f32
    %433 = vector.broadcast %cst_135 : f32 to vector<24x32xf32>
    %434 = arith.subf %433, %427 : vector<24x32xf32>
    %435 = arith.mulf %434, %432 : vector<24x32xf32>
    %436 = arith.mulf %427, %396 : vector<24x32xf32>
    %437 = arith.addf %435, %436 : vector<24x32xf32>
    %cst_136 = arith.constant 0.000000e+00 : f32
    %438 = vector.broadcast %cst_136 : f32 to vector<24x1xf32>
    %439 = arith.cmpf ogt, %408, %438 : vector<24x1xf32>
    %440 = vector.shape_cast %439 : vector<24x1xi1> to vector<24x1xi1>
    %441 = vector.broadcast %440 : vector<24x1xi1> to vector<24x32xi1>
    %442 = arith.select %441, %437, %396 : vector<24x32xi1>, vector<24x32xf32>
    %443 = vector.broadcast %408 : vector<24x1xf32> to vector<24x32xf32>
    %444 = arith.mulf %442, %443 : vector<24x32xf32>
    %445 = arith.index_cast %c7_i32 : i32 to index
    %c0_137 = arith.constant 0 : index
    %c0_138 = arith.constant 0 : index
    %446 = vector.load %arg17[%445, %c0_137, %c0_138] : memref<8x24x32xf32, #tpu.memory_space<vmem>>, vector<1x24x32xf32>
    %447 = vector.shape_cast %446 : vector<1x24x32xf32> to vector<24x32xf32>
    %448 = vector.shape_cast %444 : vector<24x32xf32> to vector<1x24x32xf32>
    tpu.vector_store %arg17[%445, %c0_137, %c0_138], %448 {strides = array<i32>} : memref<8x24x32xf32, #tpu.memory_space<vmem>>, vector<1x24x32xf32>,
    %c8_i32 = arith.constant 8 : i32
    %c0_139 = arith.constant 0 : index
    %c0_140 = arith.constant 0 : index
    %449 = vector.load %arg5[%c0_139, %c0_140] : memref<32x96xf32, #tpu.memory_space<vmem>>, vector<32x96xf32>
    %c0_141 = arith.constant 0 : index
    %c0_142 = arith.constant 0 : index
    %450 = vector.load %arg7[%c0_141, %c0_142] : memref<1x96xf32, #tpu.memory_space<vmem>>, vector<1x96xf32>
    %cst_143 = arith.constant 0.000000e+00 : f32
    %451 = vector.broadcast %cst_143 : f32 to vector<24x32xf32>
    %c0_i32_144 = arith.constant 0 : i32
    %c7_i32_145 = arith.constant 7 : i32
    %452 = arith.subi %c7_i32_145, %c0_i32_144 : i32
    %453 = arith.index_cast %452 : i32 to index
    %c0_146 = arith.constant 0 : index
    %c0_147 = arith.constant 0 : index
    %454 = vector.load %arg16[%453, %c0_146, %c0_147] : memref<8x24x96xf32, #tpu.memory_space<vmem>>, vector<1x24x96xf32>
    %455 = vector.shape_cast %454 : vector<1x24x96xf32> to vector<24x96xf32>
    %456 = arith.index_cast %452 : i32 to index
    %c0_148 = arith.constant 0 : index
    %c0_149 = arith.constant 0 : index
    %457 = vector.load %arg1[%456, %c0_148, %c0_149] : memref<8x24x1xf32, #tpu.memory_space<vmem>>, vector<1x24x1xf32>
    %458 = vector.shape_cast %457 : vector<1x24x1xf32> to vector<24x1xf32>
    %cst_150 = arith.constant dense<0.000000e+00> : vector<24x96xf32>
    %459 = tpu.matmul %451, %449, %cst_150 {dimension_numbers = #tpu.dot_dimension_numbers<[1], [0], [0], [1], [0, 0, 1, 1], [], []>} : vector<24x32xf32>, vector<32x96xf32>, vector<24x96xf32> -> vector<24x96xf32>
    %460 = vector.broadcast %450 : vector<1x96xf32> to vector<24x96xf32>
    %461 = arith.addf %459, %460 : vector<24x96xf32>
    %462 = vector.extract_strided_slice %455 {offsets = [0, 0], sizes = [24, 32], strides = [1, 1]} : vector<24x96xf32> to vector<24x32xf32>
    %463 = vector.extract_strided_slice %461 {offsets = [0, 0], sizes = [24, 32], strides = [1, 1]} : vector<24x96xf32> to vector<24x32xf32>
    %464 = arith.addf %462, %463 : vector<24x32xf32>
    %465 = arith.negf %464 : vector<24x32xf32>
    %466 = math.exp %465 : vector<24x32xf32>
    %cst_151 = arith.constant 1.000000e+00 : f32
    %467 = vector.broadcast %cst_151 : f32 to vector<24x32xf32>
    %468 = arith.addf %467, %466 : vector<24x32xf32>
    %469 = arith.divf %467, %468 : vector<24x32xf32>
    %470 = vector.extract_strided_slice %455 {offsets = [0, 32], sizes = [24, 32], strides = [1, 1]} : vector<24x96xf32> to vector<24x32xf32>
    %471 = vector.extract_strided_slice %461 {offsets = [0, 32], sizes = [24, 32], strides = [1, 1]} : vector<24x96xf32> to vector<24x32xf32>
    %472 = arith.addf %470, %471 : vector<24x32xf32>
    %473 = arith.negf %472 : vector<24x32xf32>
    %474 = math.exp %473 : vector<24x32xf32>
    %cst_152 = arith.constant 1.000000e+00 : f32
    %475 = vector.broadcast %cst_152 : f32 to vector<24x32xf32>
    %476 = arith.addf %475, %474 : vector<24x32xf32>
    %477 = arith.divf %475, %476 : vector<24x32xf32>
    %478 = vector.extract_strided_slice %455 {offsets = [0, 64], sizes = [24, 32], strides = [1, 1]} : vector<24x96xf32> to vector<24x32xf32>
    %479 = vector.extract_strided_slice %461 {offsets = [0, 64], sizes = [24, 32], strides = [1, 1]} : vector<24x96xf32> to vector<24x32xf32>
    %480 = arith.mulf %469, %479 : vector<24x32xf32>
    %481 = arith.addf %478, %480 : vector<24x32xf32>
    %482 = math.tanh %481 : vector<24x32xf32>
    %cst_153 = arith.constant 1.000000e+00 : f32
    %483 = vector.broadcast %cst_153 : f32 to vector<24x32xf32>
    %484 = arith.subf %483, %477 : vector<24x32xf32>
    %485 = arith.mulf %484, %482 : vector<24x32xf32>
    %486 = arith.mulf %477, %451 : vector<24x32xf32>
    %487 = arith.addf %485, %486 : vector<24x32xf32>
    %cst_154 = arith.constant 0.000000e+00 : f32
    %488 = vector.broadcast %cst_154 : f32 to vector<24x1xf32>
    %489 = arith.cmpf ogt, %458, %488 : vector<24x1xf32>
    %490 = vector.shape_cast %489 : vector<24x1xi1> to vector<24x1xi1>
    %491 = vector.broadcast %490 : vector<24x1xi1> to vector<24x32xi1>
    %492 = arith.select %491, %487, %451 : vector<24x32xi1>, vector<24x32xf32>
    %493 = vector.broadcast %458 : vector<24x1xf32> to vector<24x32xf32>
    %494 = arith.mulf %492, %493 : vector<24x32xf32>
    %495 = arith.index_cast %452 : i32 to index
    %c0_155 = arith.constant 0 : index
    %c0_156 = arith.constant 0 : index
    %496 = vector.load %arg18[%495, %c0_155, %c0_156] : memref<8x24x32xf32, #tpu.memory_space<vmem>>, vector<1x24x32xf32>
    %497 = vector.shape_cast %496 : vector<1x24x32xf32> to vector<24x32xf32>
    %498 = vector.shape_cast %494 : vector<24x32xf32> to vector<1x24x32xf32>
    tpu.vector_store %arg18[%495, %c0_155, %c0_156], %498 {strides = array<i32>} : memref<8x24x32xf32, #tpu.memory_space<vmem>>, vector<1x24x32xf32>,
    %c1_i32_157 = arith.constant 1 : i32
    %c7_i32_158 = arith.constant 7 : i32
    %499 = arith.subi %c7_i32_158, %c1_i32_157 : i32
    %500 = arith.index_cast %499 : i32 to index
    %c0_159 = arith.constant 0 : index
    %c0_160 = arith.constant 0 : index
    %501 = vector.load %arg16[%500, %c0_159, %c0_160] : memref<8x24x96xf32, #tpu.memory_space<vmem>>, vector<1x24x96xf32>
    %502 = vector.shape_cast %501 : vector<1x24x96xf32> to vector<24x96xf32>
    %503 = arith.index_cast %499 : i32 to index
    %c0_161 = arith.constant 0 : index
    %c0_162 = arith.constant 0 : index
    %504 = vector.load %arg1[%503, %c0_161, %c0_162] : memref<8x24x1xf32, #tpu.memory_space<vmem>>, vector<1x24x1xf32>
    %505 = vector.shape_cast %504 : vector<1x24x1xf32> to vector<24x1xf32>
    %cst_163 = arith.constant dense<0.000000e+00> : vector<24x96xf32>
    %506 = tpu.matmul %492, %449, %cst_163 {dimension_numbers = #tpu.dot_dimension_numbers<[1], [0], [0], [1], [0, 0, 1, 1], [], []>} : vector<24x32xf32>, vector<32x96xf32>, vector<24x96xf32> -> vector<24x96xf32>
    %507 = vector.broadcast %450 : vector<1x96xf32> to vector<24x96xf32>
    %508 = arith.addf %506, %507 : vector<24x96xf32>
    %509 = vector.extract_strided_slice %502 {offsets = [0, 0], sizes = [24, 32], strides = [1, 1]} : vector<24x96xf32> to vector<24x32xf32>
    %510 = vector.extract_strided_slice %508 {offsets = [0, 0], sizes = [24, 32], strides = [1, 1]} : vector<24x96xf32> to vector<24x32xf32>
    %511 = arith.addf %509, %510 : vector<24x32xf32>
    %512 = arith.negf %511 : vector<24x32xf32>
    %513 = math.exp %512 : vector<24x32xf32>
    %cst_164 = arith.constant 1.000000e+00 : f32
    %514 = vector.broadcast %cst_164 : f32 to vector<24x32xf32>
    %515 = arith.addf %514, %513 : vector<24x32xf32>
    %516 = arith.divf %514, %515 : vector<24x32xf32>
    %517 = vector.extract_strided_slice %502 {offsets = [0, 32], sizes = [24, 32], strides = [1, 1]} : vector<24x96xf32> to vector<24x32xf32>
    %518 = vector.extract_strided_slice %508 {offsets = [0, 32], sizes = [24, 32], strides = [1, 1]} : vector<24x96xf32> to vector<24x32xf32>
    %519 = arith.addf %517, %518 : vector<24x32xf32>
    %520 = arith.negf %519 : vector<24x32xf32>
    %521 = math.exp %520 : vector<24x32xf32>
    %cst_165 = arith.constant 1.000000e+00 : f32
    %522 = vector.broadcast %cst_165 : f32 to vector<24x32xf32>
    %523 = arith.addf %522, %521 : vector<24x32xf32>
    %524 = arith.divf %522, %523 : vector<24x32xf32>
    %525 = vector.extract_strided_slice %502 {offsets = [0, 64], sizes = [24, 32], strides = [1, 1]} : vector<24x96xf32> to vector<24x32xf32>
    %526 = vector.extract_strided_slice %508 {offsets = [0, 64], sizes = [24, 32], strides = [1, 1]} : vector<24x96xf32> to vector<24x32xf32>
    %527 = arith.mulf %516, %526 : vector<24x32xf32>
    %528 = arith.addf %525, %527 : vector<24x32xf32>
    %529 = math.tanh %528 : vector<24x32xf32>
    %cst_166 = arith.constant 1.000000e+00 : f32
    %530 = vector.broadcast %cst_166 : f32 to vector<24x32xf32>
    %531 = arith.subf %530, %524 : vector<24x32xf32>
    %532 = arith.mulf %531, %529 : vector<24x32xf32>
    %533 = arith.mulf %524, %492 : vector<24x32xf32>
    %534 = arith.addf %532, %533 : vector<24x32xf32>
    %cst_167 = arith.constant 0.000000e+00 : f32
    %535 = vector.broadcast %cst_167 : f32 to vector<24x1xf32>
    %536 = arith.cmpf ogt, %505, %535 : vector<24x1xf32>
    %537 = vector.shape_cast %536 : vector<24x1xi1> to vector<24x1xi1>
    %538 = vector.broadcast %537 : vector<24x1xi1> to vector<24x32xi1>
    %539 = arith.select %538, %534, %492 : vector<24x32xi1>, vector<24x32xf32>
    %540 = vector.broadcast %505 : vector<24x1xf32> to vector<24x32xf32>
    %541 = arith.mulf %539, %540 : vector<24x32xf32>
    %542 = arith.index_cast %499 : i32 to index
    %c0_168 = arith.constant 0 : index
    %c0_169 = arith.constant 0 : index
    %543 = vector.load %arg18[%542, %c0_168, %c0_169] : memref<8x24x32xf32, #tpu.memory_space<vmem>>, vector<1x24x32xf32>
    %544 = vector.shape_cast %543 : vector<1x24x32xf32> to vector<24x32xf32>
    %545 = vector.shape_cast %541 : vector<24x32xf32> to vector<1x24x32xf32>
    tpu.vector_store %arg18[%542, %c0_168, %c0_169], %545 {strides = array<i32>} : memref<8x24x32xf32, #tpu.memory_space<vmem>>, vector<1x24x32xf32>,
    %c2_i32_170 = arith.constant 2 : i32
    %c7_i32_171 = arith.constant 7 : i32
    %546 = arith.subi %c7_i32_171, %c2_i32_170 : i32
    %547 = arith.index_cast %546 : i32 to index
    %c0_172 = arith.constant 0 : index
    %c0_173 = arith.constant 0 : index
    %548 = vector.load %arg16[%547, %c0_172, %c0_173] : memref<8x24x96xf32, #tpu.memory_space<vmem>>, vector<1x24x96xf32>
    %549 = vector.shape_cast %548 : vector<1x24x96xf32> to vector<24x96xf32>
    %550 = arith.index_cast %546 : i32 to index
    %c0_174 = arith.constant 0 : index
    %c0_175 = arith.constant 0 : index
    %551 = vector.load %arg1[%550, %c0_174, %c0_175] : memref<8x24x1xf32, #tpu.memory_space<vmem>>, vector<1x24x1xf32>
    %552 = vector.shape_cast %551 : vector<1x24x1xf32> to vector<24x1xf32>
    %cst_176 = arith.constant dense<0.000000e+00> : vector<24x96xf32>
    %553 = tpu.matmul %539, %449, %cst_176 {dimension_numbers = #tpu.dot_dimension_numbers<[1], [0], [0], [1], [0, 0, 1, 1], [], []>} : vector<24x32xf32>, vector<32x96xf32>, vector<24x96xf32> -> vector<24x96xf32>
    %554 = vector.broadcast %450 : vector<1x96xf32> to vector<24x96xf32>
    %555 = arith.addf %553, %554 : vector<24x96xf32>
    %556 = vector.extract_strided_slice %549 {offsets = [0, 0], sizes = [24, 32], strides = [1, 1]} : vector<24x96xf32> to vector<24x32xf32>
    %557 = vector.extract_strided_slice %555 {offsets = [0, 0], sizes = [24, 32], strides = [1, 1]} : vector<24x96xf32> to vector<24x32xf32>
    %558 = arith.addf %556, %557 : vector<24x32xf32>
    %559 = arith.negf %558 : vector<24x32xf32>
    %560 = math.exp %559 : vector<24x32xf32>
    %cst_177 = arith.constant 1.000000e+00 : f32
    %561 = vector.broadcast %cst_177 : f32 to vector<24x32xf32>
    %562 = arith.addf %561, %560 : vector<24x32xf32>
    %563 = arith.divf %561, %562 : vector<24x32xf32>
    %564 = vector.extract_strided_slice %549 {offsets = [0, 32], sizes = [24, 32], strides = [1, 1]} : vector<24x96xf32> to vector<24x32xf32>
    %565 = vector.extract_strided_slice %555 {offsets = [0, 32], sizes = [24, 32], strides = [1, 1]} : vector<24x96xf32> to vector<24x32xf32>
    %566 = arith.addf %564, %565 : vector<24x32xf32>
    %567 = arith.negf %566 : vector<24x32xf32>
    %568 = math.exp %567 : vector<24x32xf32>
    %cst_178 = arith.constant 1.000000e+00 : f32
    %569 = vector.broadcast %cst_178 : f32 to vector<24x32xf32>
    %570 = arith.addf %569, %568 : vector<24x32xf32>
    %571 = arith.divf %569, %570 : vector<24x32xf32>
    %572 = vector.extract_strided_slice %549 {offsets = [0, 64], sizes = [24, 32], strides = [1, 1]} : vector<24x96xf32> to vector<24x32xf32>
    %573 = vector.extract_strided_slice %555 {offsets = [0, 64], sizes = [24, 32], strides = [1, 1]} : vector<24x96xf32> to vector<24x32xf32>
    %574 = arith.mulf %563, %573 : vector<24x32xf32>
    %575 = arith.addf %572, %574 : vector<24x32xf32>
    %576 = math.tanh %575 : vector<24x32xf32>
    %cst_179 = arith.constant 1.000000e+00 : f32
    %577 = vector.broadcast %cst_179 : f32 to vector<24x32xf32>
    %578 = arith.subf %577, %571 : vector<24x32xf32>
    %579 = arith.mulf %578, %576 : vector<24x32xf32>
    %580 = arith.mulf %571, %539 : vector<24x32xf32>
    %581 = arith.addf %579, %580 : vector<24x32xf32>
    %cst_180 = arith.constant 0.000000e+00 : f32
    %582 = vector.broadcast %cst_180 : f32 to vector<24x1xf32>
    %583 = arith.cmpf ogt, %552, %582 : vector<24x1xf32>
    %584 = vector.shape_cast %583 : vector<24x1xi1> to vector<24x1xi1>
    %585 = vector.broadcast %584 : vector<24x1xi1> to vector<24x32xi1>
    %586 = arith.select %585, %581, %539 : vector<24x32xi1>, vector<24x32xf32>
    %587 = vector.broadcast %552 : vector<24x1xf32> to vector<24x32xf32>
    %588 = arith.mulf %586, %587 : vector<24x32xf32>
    %589 = arith.index_cast %546 : i32 to index
    %c0_181 = arith.constant 0 : index
    %c0_182 = arith.constant 0 : index
    %590 = vector.load %arg18[%589, %c0_181, %c0_182] : memref<8x24x32xf32, #tpu.memory_space<vmem>>, vector<1x24x32xf32>
    %591 = vector.shape_cast %590 : vector<1x24x32xf32> to vector<24x32xf32>
    %592 = vector.shape_cast %588 : vector<24x32xf32> to vector<1x24x32xf32>
    tpu.vector_store %arg18[%589, %c0_181, %c0_182], %592 {strides = array<i32>} : memref<8x24x32xf32, #tpu.memory_space<vmem>>, vector<1x24x32xf32>,
    %c3_i32_183 = arith.constant 3 : i32
    %c7_i32_184 = arith.constant 7 : i32
    %593 = arith.subi %c7_i32_184, %c3_i32_183 : i32
    %594 = arith.index_cast %593 : i32 to index
    %c0_185 = arith.constant 0 : index
    %c0_186 = arith.constant 0 : index
    %595 = vector.load %arg16[%594, %c0_185, %c0_186] : memref<8x24x96xf32, #tpu.memory_space<vmem>>, vector<1x24x96xf32>
    %596 = vector.shape_cast %595 : vector<1x24x96xf32> to vector<24x96xf32>
    %597 = arith.index_cast %593 : i32 to index
    %c0_187 = arith.constant 0 : index
    %c0_188 = arith.constant 0 : index
    %598 = vector.load %arg1[%597, %c0_187, %c0_188] : memref<8x24x1xf32, #tpu.memory_space<vmem>>, vector<1x24x1xf32>
    %599 = vector.shape_cast %598 : vector<1x24x1xf32> to vector<24x1xf32>
    %cst_189 = arith.constant dense<0.000000e+00> : vector<24x96xf32>
    %600 = tpu.matmul %586, %449, %cst_189 {dimension_numbers = #tpu.dot_dimension_numbers<[1], [0], [0], [1], [0, 0, 1, 1], [], []>} : vector<24x32xf32>, vector<32x96xf32>, vector<24x96xf32> -> vector<24x96xf32>
    %601 = vector.broadcast %450 : vector<1x96xf32> to vector<24x96xf32>
    %602 = arith.addf %600, %601 : vector<24x96xf32>
    %603 = vector.extract_strided_slice %596 {offsets = [0, 0], sizes = [24, 32], strides = [1, 1]} : vector<24x96xf32> to vector<24x32xf32>
    %604 = vector.extract_strided_slice %602 {offsets = [0, 0], sizes = [24, 32], strides = [1, 1]} : vector<24x96xf32> to vector<24x32xf32>
    %605 = arith.addf %603, %604 : vector<24x32xf32>
    %606 = arith.negf %605 : vector<24x32xf32>
    %607 = math.exp %606 : vector<24x32xf32>
    %cst_190 = arith.constant 1.000000e+00 : f32
    %608 = vector.broadcast %cst_190 : f32 to vector<24x32xf32>
    %609 = arith.addf %608, %607 : vector<24x32xf32>
    %610 = arith.divf %608, %609 : vector<24x32xf32>
    %611 = vector.extract_strided_slice %596 {offsets = [0, 32], sizes = [24, 32], strides = [1, 1]} : vector<24x96xf32> to vector<24x32xf32>
    %612 = vector.extract_strided_slice %602 {offsets = [0, 32], sizes = [24, 32], strides = [1, 1]} : vector<24x96xf32> to vector<24x32xf32>
    %613 = arith.addf %611, %612 : vector<24x32xf32>
    %614 = arith.negf %613 : vector<24x32xf32>
    %615 = math.exp %614 : vector<24x32xf32>
    %cst_191 = arith.constant 1.000000e+00 : f32
    %616 = vector.broadcast %cst_191 : f32 to vector<24x32xf32>
    %617 = arith.addf %616, %615 : vector<24x32xf32>
    %618 = arith.divf %616, %617 : vector<24x32xf32>
    %619 = vector.extract_strided_slice %596 {offsets = [0, 64], sizes = [24, 32], strides = [1, 1]} : vector<24x96xf32> to vector<24x32xf32>
    %620 = vector.extract_strided_slice %602 {offsets = [0, 64], sizes = [24, 32], strides = [1, 1]} : vector<24x96xf32> to vector<24x32xf32>
    %621 = arith.mulf %610, %620 : vector<24x32xf32>
    %622 = arith.addf %619, %621 : vector<24x32xf32>
    %623 = math.tanh %622 : vector<24x32xf32>
    %cst_192 = arith.constant 1.000000e+00 : f32
    %624 = vector.broadcast %cst_192 : f32 to vector<24x32xf32>
    %625 = arith.subf %624, %618 : vector<24x32xf32>
    %626 = arith.mulf %625, %623 : vector<24x32xf32>
    %627 = arith.mulf %618, %586 : vector<24x32xf32>
    %628 = arith.addf %626, %627 : vector<24x32xf32>
    %cst_193 = arith.constant 0.000000e+00 : f32
    %629 = vector.broadcast %cst_193 : f32 to vector<24x1xf32>
    %630 = arith.cmpf ogt, %599, %629 : vector<24x1xf32>
    %631 = vector.shape_cast %630 : vector<24x1xi1> to vector<24x1xi1>
    %632 = vector.broadcast %631 : vector<24x1xi1> to vector<24x32xi1>
    %633 = arith.select %632, %628, %586 : vector<24x32xi1>, vector<24x32xf32>
    %634 = vector.broadcast %599 : vector<24x1xf32> to vector<24x32xf32>
    %635 = arith.mulf %633, %634 : vector<24x32xf32>
    %636 = arith.index_cast %593 : i32 to index
    %c0_194 = arith.constant 0 : index
    %c0_195 = arith.constant 0 : index
    %637 = vector.load %arg18[%636, %c0_194, %c0_195] : memref<8x24x32xf32, #tpu.memory_space<vmem>>, vector<1x24x32xf32>
    %638 = vector.shape_cast %637 : vector<1x24x32xf32> to vector<24x32xf32>
    %639 = vector.shape_cast %635 : vector<24x32xf32> to vector<1x24x32xf32>
    tpu.vector_store %arg18[%636, %c0_194, %c0_195], %639 {strides = array<i32>} : memref<8x24x32xf32, #tpu.memory_space<vmem>>, vector<1x24x32xf32>,
    %c4_i32_196 = arith.constant 4 : i32
    %c7_i32_197 = arith.constant 7 : i32
    %640 = arith.subi %c7_i32_197, %c4_i32_196 : i32
    %641 = arith.index_cast %640 : i32 to index
    %c0_198 = arith.constant 0 : index
    %c0_199 = arith.constant 0 : index
    %642 = vector.load %arg16[%641, %c0_198, %c0_199] : memref<8x24x96xf32, #tpu.memory_space<vmem>>, vector<1x24x96xf32>
    %643 = vector.shape_cast %642 : vector<1x24x96xf32> to vector<24x96xf32>
    %644 = arith.index_cast %640 : i32 to index
    %c0_200 = arith.constant 0 : index
    %c0_201 = arith.constant 0 : index
    %645 = vector.load %arg1[%644, %c0_200, %c0_201] : memref<8x24x1xf32, #tpu.memory_space<vmem>>, vector<1x24x1xf32>
    %646 = vector.shape_cast %645 : vector<1x24x1xf32> to vector<24x1xf32>
    %cst_202 = arith.constant dense<0.000000e+00> : vector<24x96xf32>
    %647 = tpu.matmul %633, %449, %cst_202 {dimension_numbers = #tpu.dot_dimension_numbers<[1], [0], [0], [1], [0, 0, 1, 1], [], []>} : vector<24x32xf32>, vector<32x96xf32>, vector<24x96xf32> -> vector<24x96xf32>
    %648 = vector.broadcast %450 : vector<1x96xf32> to vector<24x96xf32>
    %649 = arith.addf %647, %648 : vector<24x96xf32>
    %650 = vector.extract_strided_slice %643 {offsets = [0, 0], sizes = [24, 32], strides = [1, 1]} : vector<24x96xf32> to vector<24x32xf32>
    %651 = vector.extract_strided_slice %649 {offsets = [0, 0], sizes = [24, 32], strides = [1, 1]} : vector<24x96xf32> to vector<24x32xf32>
    %652 = arith.addf %650, %651 : vector<24x32xf32>
    %653 = arith.negf %652 : vector<24x32xf32>
    %654 = math.exp %653 : vector<24x32xf32>
    %cst_203 = arith.constant 1.000000e+00 : f32
    %655 = vector.broadcast %cst_203 : f32 to vector<24x32xf32>
    %656 = arith.addf %655, %654 : vector<24x32xf32>
    %657 = arith.divf %655, %656 : vector<24x32xf32>
    %658 = vector.extract_strided_slice %643 {offsets = [0, 32], sizes = [24, 32], strides = [1, 1]} : vector<24x96xf32> to vector<24x32xf32>
    %659 = vector.extract_strided_slice %649 {offsets = [0, 32], sizes = [24, 32], strides = [1, 1]} : vector<24x96xf32> to vector<24x32xf32>
    %660 = arith.addf %658, %659 : vector<24x32xf32>
    %661 = arith.negf %660 : vector<24x32xf32>
    %662 = math.exp %661 : vector<24x32xf32>
    %cst_204 = arith.constant 1.000000e+00 : f32
    %663 = vector.broadcast %cst_204 : f32 to vector<24x32xf32>
    %664 = arith.addf %663, %662 : vector<24x32xf32>
    %665 = arith.divf %663, %664 : vector<24x32xf32>
    %666 = vector.extract_strided_slice %643 {offsets = [0, 64], sizes = [24, 32], strides = [1, 1]} : vector<24x96xf32> to vector<24x32xf32>
    %667 = vector.extract_strided_slice %649 {offsets = [0, 64], sizes = [24, 32], strides = [1, 1]} : vector<24x96xf32> to vector<24x32xf32>
    %668 = arith.mulf %657, %667 : vector<24x32xf32>
    %669 = arith.addf %666, %668 : vector<24x32xf32>
    %670 = math.tanh %669 : vector<24x32xf32>
    %cst_205 = arith.constant 1.000000e+00 : f32
    %671 = vector.broadcast %cst_205 : f32 to vector<24x32xf32>
    %672 = arith.subf %671, %665 : vector<24x32xf32>
    %673 = arith.mulf %672, %670 : vector<24x32xf32>
    %674 = arith.mulf %665, %633 : vector<24x32xf32>
    %675 = arith.addf %673, %674 : vector<24x32xf32>
    %cst_206 = arith.constant 0.000000e+00 : f32
    %676 = vector.broadcast %cst_206 : f32 to vector<24x1xf32>
    %677 = arith.cmpf ogt, %646, %676 : vector<24x1xf32>
    %678 = vector.shape_cast %677 : vector<24x1xi1> to vector<24x1xi1>
    %679 = vector.broadcast %678 : vector<24x1xi1> to vector<24x32xi1>
    %680 = arith.select %679, %675, %633 : vector<24x32xi1>, vector<24x32xf32>
    %681 = vector.broadcast %646 : vector<24x1xf32> to vector<24x32xf32>
    %682 = arith.mulf %680, %681 : vector<24x32xf32>
    %683 = arith.index_cast %640 : i32 to index
    %c0_207 = arith.constant 0 : index
    %c0_208 = arith.constant 0 : index
    %684 = vector.load %arg18[%683, %c0_207, %c0_208] : memref<8x24x32xf32, #tpu.memory_space<vmem>>, vector<1x24x32xf32>
    %685 = vector.shape_cast %684 : vector<1x24x32xf32> to vector<24x32xf32>
    %686 = vector.shape_cast %682 : vector<24x32xf32> to vector<1x24x32xf32>
    tpu.vector_store %arg18[%683, %c0_207, %c0_208], %686 {strides = array<i32>} : memref<8x24x32xf32, #tpu.memory_space<vmem>>, vector<1x24x32xf32>,
    %c5_i32_209 = arith.constant 5 : i32
    %c7_i32_210 = arith.constant 7 : i32
    %687 = arith.subi %c7_i32_210, %c5_i32_209 : i32
    %688 = arith.index_cast %687 : i32 to index
    %c0_211 = arith.constant 0 : index
    %c0_212 = arith.constant 0 : index
    %689 = vector.load %arg16[%688, %c0_211, %c0_212] : memref<8x24x96xf32, #tpu.memory_space<vmem>>, vector<1x24x96xf32>
    %690 = vector.shape_cast %689 : vector<1x24x96xf32> to vector<24x96xf32>
    %691 = arith.index_cast %687 : i32 to index
    %c0_213 = arith.constant 0 : index
    %c0_214 = arith.constant 0 : index
    %692 = vector.load %arg1[%691, %c0_213, %c0_214] : memref<8x24x1xf32, #tpu.memory_space<vmem>>, vector<1x24x1xf32>
    %693 = vector.shape_cast %692 : vector<1x24x1xf32> to vector<24x1xf32>
    %cst_215 = arith.constant dense<0.000000e+00> : vector<24x96xf32>
    %694 = tpu.matmul %680, %449, %cst_215 {dimension_numbers = #tpu.dot_dimension_numbers<[1], [0], [0], [1], [0, 0, 1, 1], [], []>} : vector<24x32xf32>, vector<32x96xf32>, vector<24x96xf32> -> vector<24x96xf32>
    %695 = vector.broadcast %450 : vector<1x96xf32> to vector<24x96xf32>
    %696 = arith.addf %694, %695 : vector<24x96xf32>
    %697 = vector.extract_strided_slice %690 {offsets = [0, 0], sizes = [24, 32], strides = [1, 1]} : vector<24x96xf32> to vector<24x32xf32>
    %698 = vector.extract_strided_slice %696 {offsets = [0, 0], sizes = [24, 32], strides = [1, 1]} : vector<24x96xf32> to vector<24x32xf32>
    %699 = arith.addf %697, %698 : vector<24x32xf32>
    %700 = arith.negf %699 : vector<24x32xf32>
    %701 = math.exp %700 : vector<24x32xf32>
    %cst_216 = arith.constant 1.000000e+00 : f32
    %702 = vector.broadcast %cst_216 : f32 to vector<24x32xf32>
    %703 = arith.addf %702, %701 : vector<24x32xf32>
    %704 = arith.divf %702, %703 : vector<24x32xf32>
    %705 = vector.extract_strided_slice %690 {offsets = [0, 32], sizes = [24, 32], strides = [1, 1]} : vector<24x96xf32> to vector<24x32xf32>
    %706 = vector.extract_strided_slice %696 {offsets = [0, 32], sizes = [24, 32], strides = [1, 1]} : vector<24x96xf32> to vector<24x32xf32>
    %707 = arith.addf %705, %706 : vector<24x32xf32>
    %708 = arith.negf %707 : vector<24x32xf32>
    %709 = math.exp %708 : vector<24x32xf32>
    %cst_217 = arith.constant 1.000000e+00 : f32
    %710 = vector.broadcast %cst_217 : f32 to vector<24x32xf32>
    %711 = arith.addf %710, %709 : vector<24x32xf32>
    %712 = arith.divf %710, %711 : vector<24x32xf32>
    %713 = vector.extract_strided_slice %690 {offsets = [0, 64], sizes = [24, 32], strides = [1, 1]} : vector<24x96xf32> to vector<24x32xf32>
    %714 = vector.extract_strided_slice %696 {offsets = [0, 64], sizes = [24, 32], strides = [1, 1]} : vector<24x96xf32> to vector<24x32xf32>
    %715 = arith.mulf %704, %714 : vector<24x32xf32>
    %716 = arith.addf %713, %715 : vector<24x32xf32>
    %717 = math.tanh %716 : vector<24x32xf32>
    %cst_218 = arith.constant 1.000000e+00 : f32
    %718 = vector.broadcast %cst_218 : f32 to vector<24x32xf32>
    %719 = arith.subf %718, %712 : vector<24x32xf32>
    %720 = arith.mulf %719, %717 : vector<24x32xf32>
    %721 = arith.mulf %712, %680 : vector<24x32xf32>
    %722 = arith.addf %720, %721 : vector<24x32xf32>
    %cst_219 = arith.constant 0.000000e+00 : f32
    %723 = vector.broadcast %cst_219 : f32 to vector<24x1xf32>
    %724 = arith.cmpf ogt, %693, %723 : vector<24x1xf32>
    %725 = vector.shape_cast %724 : vector<24x1xi1> to vector<24x1xi1>
    %726 = vector.broadcast %725 : vector<24x1xi1> to vector<24x32xi1>
    %727 = arith.select %726, %722, %680 : vector<24x32xi1>, vector<24x32xf32>
    %728 = vector.broadcast %693 : vector<24x1xf32> to vector<24x32xf32>
    %729 = arith.mulf %727, %728 : vector<24x32xf32>
    %730 = arith.index_cast %687 : i32 to index
    %c0_220 = arith.constant 0 : index
    %c0_221 = arith.constant 0 : index
    %731 = vector.load %arg18[%730, %c0_220, %c0_221] : memref<8x24x32xf32, #tpu.memory_space<vmem>>, vector<1x24x32xf32>
    %732 = vector.shape_cast %731 : vector<1x24x32xf32> to vector<24x32xf32>
    %733 = vector.shape_cast %729 : vector<24x32xf32> to vector<1x24x32xf32>
    tpu.vector_store %arg18[%730, %c0_220, %c0_221], %733 {strides = array<i32>} : memref<8x24x32xf32, #tpu.memory_space<vmem>>, vector<1x24x32xf32>,
    %c6_i32_222 = arith.constant 6 : i32
    %c7_i32_223 = arith.constant 7 : i32
    %734 = arith.subi %c7_i32_223, %c6_i32_222 : i32
    %735 = arith.index_cast %734 : i32 to index
    %c0_224 = arith.constant 0 : index
    %c0_225 = arith.constant 0 : index
    %736 = vector.load %arg16[%735, %c0_224, %c0_225] : memref<8x24x96xf32, #tpu.memory_space<vmem>>, vector<1x24x96xf32>
    %737 = vector.shape_cast %736 : vector<1x24x96xf32> to vector<24x96xf32>
    %738 = arith.index_cast %734 : i32 to index
    %c0_226 = arith.constant 0 : index
    %c0_227 = arith.constant 0 : index
    %739 = vector.load %arg1[%738, %c0_226, %c0_227] : memref<8x24x1xf32, #tpu.memory_space<vmem>>, vector<1x24x1xf32>
    %740 = vector.shape_cast %739 : vector<1x24x1xf32> to vector<24x1xf32>
    %cst_228 = arith.constant dense<0.000000e+00> : vector<24x96xf32>
    %741 = tpu.matmul %727, %449, %cst_228 {dimension_numbers = #tpu.dot_dimension_numbers<[1], [0], [0], [1], [0, 0, 1, 1], [], []>} : vector<24x32xf32>, vector<32x96xf32>, vector<24x96xf32> -> vector<24x96xf32>
    %742 = vector.broadcast %450 : vector<1x96xf32> to vector<24x96xf32>
    %743 = arith.addf %741, %742 : vector<24x96xf32>
    %744 = vector.extract_strided_slice %737 {offsets = [0, 0], sizes = [24, 32], strides = [1, 1]} : vector<24x96xf32> to vector<24x32xf32>
    %745 = vector.extract_strided_slice %743 {offsets = [0, 0], sizes = [24, 32], strides = [1, 1]} : vector<24x96xf32> to vector<24x32xf32>
    %746 = arith.addf %744, %745 : vector<24x32xf32>
    %747 = arith.negf %746 : vector<24x32xf32>
    %748 = math.exp %747 : vector<24x32xf32>
    %cst_229 = arith.constant 1.000000e+00 : f32
    %749 = vector.broadcast %cst_229 : f32 to vector<24x32xf32>
    %750 = arith.addf %749, %748 : vector<24x32xf32>
    %751 = arith.divf %749, %750 : vector<24x32xf32>
    %752 = vector.extract_strided_slice %737 {offsets = [0, 32], sizes = [24, 32], strides = [1, 1]} : vector<24x96xf32> to vector<24x32xf32>
    %753 = vector.extract_strided_slice %743 {offsets = [0, 32], sizes = [24, 32], strides = [1, 1]} : vector<24x96xf32> to vector<24x32xf32>
    %754 = arith.addf %752, %753 : vector<24x32xf32>
    %755 = arith.negf %754 : vector<24x32xf32>
    %756 = math.exp %755 : vector<24x32xf32>
    %cst_230 = arith.constant 1.000000e+00 : f32
    %757 = vector.broadcast %cst_230 : f32 to vector<24x32xf32>
    %758 = arith.addf %757, %756 : vector<24x32xf32>
    %759 = arith.divf %757, %758 : vector<24x32xf32>
    %760 = vector.extract_strided_slice %737 {offsets = [0, 64], sizes = [24, 32], strides = [1, 1]} : vector<24x96xf32> to vector<24x32xf32>
    %761 = vector.extract_strided_slice %743 {offsets = [0, 64], sizes = [24, 32], strides = [1, 1]} : vector<24x96xf32> to vector<24x32xf32>
    %762 = arith.mulf %751, %761 : vector<24x32xf32>
    %763 = arith.addf %760, %762 : vector<24x32xf32>
    %764 = math.tanh %763 : vector<24x32xf32>
    %cst_231 = arith.constant 1.000000e+00 : f32
    %765 = vector.broadcast %cst_231 : f32 to vector<24x32xf32>
    %766 = arith.subf %765, %759 : vector<24x32xf32>
    %767 = arith.mulf %766, %764 : vector<24x32xf32>
    %768 = arith.mulf %759, %727 : vector<24x32xf32>
    %769 = arith.addf %767, %768 : vector<24x32xf32>
    %cst_232 = arith.constant 0.000000e+00 : f32
    %770 = vector.broadcast %cst_232 : f32 to vector<24x1xf32>
    %771 = arith.cmpf ogt, %740, %770 : vector<24x1xf32>
    %772 = vector.shape_cast %771 : vector<24x1xi1> to vector<24x1xi1>
    %773 = vector.broadcast %772 : vector<24x1xi1> to vector<24x32xi1>
    %774 = arith.select %773, %769, %727 : vector<24x32xi1>, vector<24x32xf32>
    %775 = vector.broadcast %740 : vector<24x1xf32> to vector<24x32xf32>
    %776 = arith.mulf %774, %775 : vector<24x32xf32>
    %777 = arith.index_cast %734 : i32 to index
    %c0_233 = arith.constant 0 : index
    %c0_234 = arith.constant 0 : index
    %778 = vector.load %arg18[%777, %c0_233, %c0_234] : memref<8x24x32xf32, #tpu.memory_space<vmem>>, vector<1x24x32xf32>
    %779 = vector.shape_cast %778 : vector<1x24x32xf32> to vector<24x32xf32>
    %780 = vector.shape_cast %776 : vector<24x32xf32> to vector<1x24x32xf32>
    tpu.vector_store %arg18[%777, %c0_233, %c0_234], %780 {strides = array<i32>} : memref<8x24x32xf32, #tpu.memory_space<vmem>>, vector<1x24x32xf32>,
    %c7_i32_235 = arith.constant 7 : i32
    %c7_i32_236 = arith.constant 7 : i32
    %781 = arith.subi %c7_i32_236, %c7_i32_235 : i32
    %782 = arith.index_cast %781 : i32 to index
    %c0_237 = arith.constant 0 : index
    %c0_238 = arith.constant 0 : index
    %783 = vector.load %arg16[%782, %c0_237, %c0_238] : memref<8x24x96xf32, #tpu.memory_space<vmem>>, vector<1x24x96xf32>
    %784 = vector.shape_cast %783 : vector<1x24x96xf32> to vector<24x96xf32>
    %785 = arith.index_cast %781 : i32 to index
    %c0_239 = arith.constant 0 : index
    %c0_240 = arith.constant 0 : index
    %786 = vector.load %arg1[%785, %c0_239, %c0_240] : memref<8x24x1xf32, #tpu.memory_space<vmem>>, vector<1x24x1xf32>
    %787 = vector.shape_cast %786 : vector<1x24x1xf32> to vector<24x1xf32>
    %cst_241 = arith.constant dense<0.000000e+00> : vector<24x96xf32>
    %788 = tpu.matmul %774, %449, %cst_241 {dimension_numbers = #tpu.dot_dimension_numbers<[1], [0], [0], [1], [0, 0, 1, 1], [], []>} : vector<24x32xf32>, vector<32x96xf32>, vector<24x96xf32> -> vector<24x96xf32>
    %789 = vector.broadcast %450 : vector<1x96xf32> to vector<24x96xf32>
    %790 = arith.addf %788, %789 : vector<24x96xf32>
    %791 = vector.extract_strided_slice %784 {offsets = [0, 0], sizes = [24, 32], strides = [1, 1]} : vector<24x96xf32> to vector<24x32xf32>
    %792 = vector.extract_strided_slice %790 {offsets = [0, 0], sizes = [24, 32], strides = [1, 1]} : vector<24x96xf32> to vector<24x32xf32>
    %793 = arith.addf %791, %792 : vector<24x32xf32>
    %794 = arith.negf %793 : vector<24x32xf32>
    %795 = math.exp %794 : vector<24x32xf32>
    %cst_242 = arith.constant 1.000000e+00 : f32
    %796 = vector.broadcast %cst_242 : f32 to vector<24x32xf32>
    %797 = arith.addf %796, %795 : vector<24x32xf32>
    %798 = arith.divf %796, %797 : vector<24x32xf32>
    %799 = vector.extract_strided_slice %784 {offsets = [0, 32], sizes = [24, 32], strides = [1, 1]} : vector<24x96xf32> to vector<24x32xf32>
    %800 = vector.extract_strided_slice %790 {offsets = [0, 32], sizes = [24, 32], strides = [1, 1]} : vector<24x96xf32> to vector<24x32xf32>
    %801 = arith.addf %799, %800 : vector<24x32xf32>
    %802 = arith.negf %801 : vector<24x32xf32>
    %803 = math.exp %802 : vector<24x32xf32>
    %cst_243 = arith.constant 1.000000e+00 : f32
    %804 = vector.broadcast %cst_243 : f32 to vector<24x32xf32>
    %805 = arith.addf %804, %803 : vector<24x32xf32>
    %806 = arith.divf %804, %805 : vector<24x32xf32>
    %807 = vector.extract_strided_slice %784 {offsets = [0, 64], sizes = [24, 32], strides = [1, 1]} : vector<24x96xf32> to vector<24x32xf32>
    %808 = vector.extract_strided_slice %790 {offsets = [0, 64], sizes = [24, 32], strides = [1, 1]} : vector<24x96xf32> to vector<24x32xf32>
    %809 = arith.mulf %798, %808 : vector<24x32xf32>
    %810 = arith.addf %807, %809 : vector<24x32xf32>
    %811 = math.tanh %810 : vector<24x32xf32>
    %cst_244 = arith.constant 1.000000e+00 : f32
    %812 = vector.broadcast %cst_244 : f32 to vector<24x32xf32>
    %813 = arith.subf %812, %806 : vector<24x32xf32>
    %814 = arith.mulf %813, %811 : vector<24x32xf32>
    %815 = arith.mulf %806, %774 : vector<24x32xf32>
    %816 = arith.addf %814, %815 : vector<24x32xf32>
    %cst_245 = arith.constant 0.000000e+00 : f32
    %817 = vector.broadcast %cst_245 : f32 to vector<24x1xf32>
    %818 = arith.cmpf ogt, %787, %817 : vector<24x1xf32>
    %819 = vector.shape_cast %818 : vector<24x1xi1> to vector<24x1xi1>
    %820 = vector.broadcast %819 : vector<24x1xi1> to vector<24x32xi1>
    %821 = arith.select %820, %816, %774 : vector<24x32xi1>, vector<24x32xf32>
    %822 = vector.broadcast %787 : vector<24x1xf32> to vector<24x32xf32>
    %823 = arith.mulf %821, %822 : vector<24x32xf32>
    %824 = arith.index_cast %781 : i32 to index
    %c0_246 = arith.constant 0 : index
    %c0_247 = arith.constant 0 : index
    %825 = vector.load %arg18[%824, %c0_246, %c0_247] : memref<8x24x32xf32, #tpu.memory_space<vmem>>, vector<1x24x32xf32>
    %826 = vector.shape_cast %825 : vector<1x24x32xf32> to vector<24x32xf32>
    %827 = vector.shape_cast %823 : vector<24x32xf32> to vector<1x24x32xf32>
    tpu.vector_store %arg18[%824, %c0_246, %c0_247], %827 {strides = array<i32>} : memref<8x24x32xf32, #tpu.memory_space<vmem>>, vector<1x24x32xf32>,
    %c8_i32_248 = arith.constant 8 : i32
    %c0_249 = arith.constant 0 : index
    %c0_250 = arith.constant 0 : index
    %828 = vector.load %arg8[%c0_249, %c0_250] : memref<1x64xf32, #tpu.memory_space<vmem>>, vector<1x64xf32>
    %c0_251 = arith.constant 0 : index
    %c0_252 = arith.constant 0 : index
    %829 = vector.load %arg9[%c0_251, %c0_252] : memref<1x64xf32, #tpu.memory_space<vmem>>, vector<1x64xf32>
    %c0_253 = arith.constant 0 : index
    %c0_254 = arith.constant 0 : index
    %830 = vector.load %arg10[%c0_253, %c0_254] : memref<64x64xf32, #tpu.memory_space<vmem>>, vector<64x64xf32>
    %c0_255 = arith.constant 0 : index
    %c0_256 = arith.constant 0 : index
    %831 = vector.load %arg11[%c0_255, %c0_256] : memref<1x64xf32, #tpu.memory_space<vmem>>, vector<1x64xf32>
    %c0_257 = arith.constant 0 : index
    %c0_258 = arith.constant 0 : index
    %832 = vector.load %arg12[%c0_257, %c0_258] : memref<1x64xf32, #tpu.memory_space<vmem>>, vector<1x64xf32>
    %cst_259 = arith.constant 0.000000e+00 : f32
    %833 = vector.broadcast %cst_259 : f32 to vector<24x64xf32>
    %cst_260 = arith.constant 0.000000e+00 : f32
    %834 = vector.broadcast %cst_260 : f32 to vector<24x1xf32>
    %c0_261 = arith.constant 0 : index
    %c0_262 = arith.constant 0 : index
    %c0_263 = arith.constant 0 : index
    %835 = vector.load %arg17[%c0_261, %c0_262, %c0_263] : memref<8x24x32xf32, #tpu.memory_space<vmem>>, vector<1x24x32xf32>
    %836 = vector.shape_cast %835 : vector<1x24x32xf32> to vector<24x32xf32>
    %c0_264 = arith.constant 0 : index
    %c0_265 = arith.constant 0 : index
    %c0_266 = arith.constant 0 : index
    %837 = vector.load %arg18[%c0_264, %c0_265, %c0_266] : memref<8x24x32xf32, #tpu.memory_space<vmem>>, vector<1x24x32xf32>
    %838 = vector.shape_cast %837 : vector<1x24x32xf32> to vector<24x32xf32>
    %839 = tpu.concatenate %836, %838 in 1 : vector<24x32xf32>, vector<24x32xf32> -> vector<24x64xf32>
    %cst_267 = arith.constant dense<0.000000e+00> : vector<24xf32>
    %840 = vector.multi_reduction <add>, %839, %cst_267 [1] : vector<24x64xf32> to vector<24xf32>
    %841 = vector.shape_cast %840 : vector<24xf32> to vector<24x1xf32>
    %cst_268 = arith.constant 6.400000e+01 : f32
    %842 = vector.broadcast %cst_268 : f32 to vector<24x1xf32>
    %843 = arith.divf %841, %842 : vector<24x1xf32>
    %844 = vector.broadcast %843 : vector<24x1xf32> to vector<24x64xf32>
    %845 = arith.subf %839, %844 : vector<24x64xf32>
    %846 = arith.mulf %845, %845 : vector<24x64xf32>
    %cst_269 = arith.constant dense<0.000000e+00> : vector<24xf32>
    %847 = vector.multi_reduction <add>, %846, %cst_269 [1] : vector<24x64xf32> to vector<24xf32>
    %848 = vector.shape_cast %847 : vector<24xf32> to vector<24x1xf32>
    %cst_270 = arith.constant 6.400000e+01 : f32
    %849 = vector.broadcast %cst_270 : f32 to vector<24x1xf32>
    %850 = arith.divf %848, %849 : vector<24x1xf32>
    %851 = vector.broadcast %843 : vector<24x1xf32> to vector<24x64xf32>
    %852 = arith.subf %839, %851 : vector<24x64xf32>
    %cst_271 = arith.constant 9.99999974E-6 : f32
    %853 = vector.broadcast %cst_271 : f32 to vector<24x1xf32>
    %854 = arith.addf %850, %853 : vector<24x1xf32>
    %855 = math.rsqrt %854 : vector<24x1xf32>
    %856 = vector.broadcast %855 : vector<24x1xf32> to vector<24x64xf32>
    %857 = arith.mulf %852, %856 : vector<24x64xf32>
    %858 = vector.broadcast %828 : vector<1x64xf32> to vector<24x64xf32>
    %859 = arith.mulf %857, %858 : vector<24x64xf32>
    %860 = vector.broadcast %829 : vector<1x64xf32> to vector<24x64xf32>
    %861 = arith.addf %859, %860 : vector<24x64xf32>
    %cst_272 = arith.constant dense<0.000000e+00> : vector<24x64xf32>
    %862 = tpu.matmul %861, %830, %cst_272 {dimension_numbers = #tpu.dot_dimension_numbers<[1], [0], [0], [1], [0, 0, 1, 1], [], []>} : vector<24x64xf32>, vector<64x64xf32>, vector<24x64xf32> -> vector<24x64xf32>
    %863 = vector.broadcast %831 : vector<1x64xf32> to vector<24x64xf32>
    %864 = arith.addf %862, %863 : vector<24x64xf32>
    %865 = math.tanh %864 : vector<24x64xf32>
    %866 = vector.broadcast %832 : vector<1x64xf32> to vector<24x64xf32>
    %867 = arith.mulf %865, %866 : vector<24x64xf32>
    %cst_273 = arith.constant dense<0.000000e+00> : vector<24xf32>
    %868 = vector.multi_reduction <add>, %867, %cst_273 [1] : vector<24x64xf32> to vector<24xf32>
    %869 = vector.shape_cast %868 : vector<24xf32> to vector<24x1xf32>
    %870 = math.exp %869 : vector<24x1xf32>
    %c0_274 = arith.constant 0 : index
    %c0_275 = arith.constant 0 : index
    %c0_276 = arith.constant 0 : index
    %871 = vector.load %arg1[%c0_274, %c0_275, %c0_276] : memref<8x24x1xf32, #tpu.memory_space<vmem>>, vector<1x24x1xf32>
    %872 = vector.shape_cast %871 : vector<1x24x1xf32> to vector<24x1xf32>
    %873 = arith.mulf %870, %872 : vector<24x1xf32>
    %874 = vector.broadcast %873 : vector<24x1xf32> to vector<24x64xf32>
    %875 = arith.mulf %874, %839 : vector<24x64xf32>
    %876 = arith.addf %833, %875 : vector<24x64xf32>
    %877 = arith.addf %834, %873 : vector<24x1xf32>
    %c1_277 = arith.constant 1 : index
    %c0_278 = arith.constant 0 : index
    %c0_279 = arith.constant 0 : index
    %878 = vector.load %arg17[%c1_277, %c0_278, %c0_279] : memref<8x24x32xf32, #tpu.memory_space<vmem>>, vector<1x24x32xf32>
    %879 = vector.shape_cast %878 : vector<1x24x32xf32> to vector<24x32xf32>
    %c1_280 = arith.constant 1 : index
    %c0_281 = arith.constant 0 : index
    %c0_282 = arith.constant 0 : index
    %880 = vector.load %arg18[%c1_280, %c0_281, %c0_282] : memref<8x24x32xf32, #tpu.memory_space<vmem>>, vector<1x24x32xf32>
    %881 = vector.shape_cast %880 : vector<1x24x32xf32> to vector<24x32xf32>
    %882 = tpu.concatenate %879, %881 in 1 : vector<24x32xf32>, vector<24x32xf32> -> vector<24x64xf32>
    %cst_283 = arith.constant dense<0.000000e+00> : vector<24xf32>
    %883 = vector.multi_reduction <add>, %882, %cst_283 [1] : vector<24x64xf32> to vector<24xf32>
    %884 = vector.shape_cast %883 : vector<24xf32> to vector<24x1xf32>
    %cst_284 = arith.constant 6.400000e+01 : f32
    %885 = vector.broadcast %cst_284 : f32 to vector<24x1xf32>
    %886 = arith.divf %884, %885 : vector<24x1xf32>
    %887 = vector.broadcast %886 : vector<24x1xf32> to vector<24x64xf32>
    %888 = arith.subf %882, %887 : vector<24x64xf32>
    %889 = arith.mulf %888, %888 : vector<24x64xf32>
    %cst_285 = arith.constant dense<0.000000e+00> : vector<24xf32>
    %890 = vector.multi_reduction <add>, %889, %cst_285 [1] : vector<24x64xf32> to vector<24xf32>
    %891 = vector.shape_cast %890 : vector<24xf32> to vector<24x1xf32>
    %cst_286 = arith.constant 6.400000e+01 : f32
    %892 = vector.broadcast %cst_286 : f32 to vector<24x1xf32>
    %893 = arith.divf %891, %892 : vector<24x1xf32>
    %894 = vector.broadcast %886 : vector<24x1xf32> to vector<24x64xf32>
    %895 = arith.subf %882, %894 : vector<24x64xf32>
    %cst_287 = arith.constant 9.99999974E-6 : f32
    %896 = vector.broadcast %cst_287 : f32 to vector<24x1xf32>
    %897 = arith.addf %893, %896 : vector<24x1xf32>
    %898 = math.rsqrt %897 : vector<24x1xf32>
    %899 = vector.broadcast %898 : vector<24x1xf32> to vector<24x64xf32>
    %900 = arith.mulf %895, %899 : vector<24x64xf32>
    %901 = vector.broadcast %828 : vector<1x64xf32> to vector<24x64xf32>
    %902 = arith.mulf %900, %901 : vector<24x64xf32>
    %903 = vector.broadcast %829 : vector<1x64xf32> to vector<24x64xf32>
    %904 = arith.addf %902, %903 : vector<24x64xf32>
    %cst_288 = arith.constant dense<0.000000e+00> : vector<24x64xf32>
    %905 = tpu.matmul %904, %830, %cst_288 {dimension_numbers = #tpu.dot_dimension_numbers<[1], [0], [0], [1], [0, 0, 1, 1], [], []>} : vector<24x64xf32>, vector<64x64xf32>, vector<24x64xf32> -> vector<24x64xf32>
    %906 = vector.broadcast %831 : vector<1x64xf32> to vector<24x64xf32>
    %907 = arith.addf %905, %906 : vector<24x64xf32>
    %908 = math.tanh %907 : vector<24x64xf32>
    %909 = vector.broadcast %832 : vector<1x64xf32> to vector<24x64xf32>
    %910 = arith.mulf %908, %909 : vector<24x64xf32>
    %cst_289 = arith.constant dense<0.000000e+00> : vector<24xf32>
    %911 = vector.multi_reduction <add>, %910, %cst_289 [1] : vector<24x64xf32> to vector<24xf32>
    %912 = vector.shape_cast %911 : vector<24xf32> to vector<24x1xf32>
    %913 = math.exp %912 : vector<24x1xf32>
    %c1_290 = arith.constant 1 : index
    %c0_291 = arith.constant 0 : index
    %c0_292 = arith.constant 0 : index
    %914 = vector.load %arg1[%c1_290, %c0_291, %c0_292] : memref<8x24x1xf32, #tpu.memory_space<vmem>>, vector<1x24x1xf32>
    %915 = vector.shape_cast %914 : vector<1x24x1xf32> to vector<24x1xf32>
    %916 = arith.mulf %913, %915 : vector<24x1xf32>
    %917 = vector.broadcast %916 : vector<24x1xf32> to vector<24x64xf32>
    %918 = arith.mulf %917, %882 : vector<24x64xf32>
    %919 = arith.addf %876, %918 : vector<24x64xf32>
    %920 = arith.addf %877, %916 : vector<24x1xf32>
    %c2_293 = arith.constant 2 : index
    %c0_294 = arith.constant 0 : index
    %c0_295 = arith.constant 0 : index
    %921 = vector.load %arg17[%c2_293, %c0_294, %c0_295] : memref<8x24x32xf32, #tpu.memory_space<vmem>>, vector<1x24x32xf32>
    %922 = vector.shape_cast %921 : vector<1x24x32xf32> to vector<24x32xf32>
    %c2_296 = arith.constant 2 : index
    %c0_297 = arith.constant 0 : index
    %c0_298 = arith.constant 0 : index
    %923 = vector.load %arg18[%c2_296, %c0_297, %c0_298] : memref<8x24x32xf32, #tpu.memory_space<vmem>>, vector<1x24x32xf32>
    %924 = vector.shape_cast %923 : vector<1x24x32xf32> to vector<24x32xf32>
    %925 = tpu.concatenate %922, %924 in 1 : vector<24x32xf32>, vector<24x32xf32> -> vector<24x64xf32>
    %cst_299 = arith.constant dense<0.000000e+00> : vector<24xf32>
    %926 = vector.multi_reduction <add>, %925, %cst_299 [1] : vector<24x64xf32> to vector<24xf32>
    %927 = vector.shape_cast %926 : vector<24xf32> to vector<24x1xf32>
    %cst_300 = arith.constant 6.400000e+01 : f32
    %928 = vector.broadcast %cst_300 : f32 to vector<24x1xf32>
    %929 = arith.divf %927, %928 : vector<24x1xf32>
    %930 = vector.broadcast %929 : vector<24x1xf32> to vector<24x64xf32>
    %931 = arith.subf %925, %930 : vector<24x64xf32>
    %932 = arith.mulf %931, %931 : vector<24x64xf32>
    %cst_301 = arith.constant dense<0.000000e+00> : vector<24xf32>
    %933 = vector.multi_reduction <add>, %932, %cst_301 [1] : vector<24x64xf32> to vector<24xf32>
    %934 = vector.shape_cast %933 : vector<24xf32> to vector<24x1xf32>
    %cst_302 = arith.constant 6.400000e+01 : f32
    %935 = vector.broadcast %cst_302 : f32 to vector<24x1xf32>
    %936 = arith.divf %934, %935 : vector<24x1xf32>
    %937 = vector.broadcast %929 : vector<24x1xf32> to vector<24x64xf32>
    %938 = arith.subf %925, %937 : vector<24x64xf32>
    %cst_303 = arith.constant 9.99999974E-6 : f32
    %939 = vector.broadcast %cst_303 : f32 to vector<24x1xf32>
    %940 = arith.addf %936, %939 : vector<24x1xf32>
    %941 = math.rsqrt %940 : vector<24x1xf32>
    %942 = vector.broadcast %941 : vector<24x1xf32> to vector<24x64xf32>
    %943 = arith.mulf %938, %942 : vector<24x64xf32>
    %944 = vector.broadcast %828 : vector<1x64xf32> to vector<24x64xf32>
    %945 = arith.mulf %943, %944 : vector<24x64xf32>
    %946 = vector.broadcast %829 : vector<1x64xf32> to vector<24x64xf32>
    %947 = arith.addf %945, %946 : vector<24x64xf32>
    %cst_304 = arith.constant dense<0.000000e+00> : vector<24x64xf32>
    %948 = tpu.matmul %947, %830, %cst_304 {dimension_numbers = #tpu.dot_dimension_numbers<[1], [0], [0], [1], [0, 0, 1, 1], [], []>} : vector<24x64xf32>, vector<64x64xf32>, vector<24x64xf32> -> vector<24x64xf32>
    %949 = vector.broadcast %831 : vector<1x64xf32> to vector<24x64xf32>
    %950 = arith.addf %948, %949 : vector<24x64xf32>
    %951 = math.tanh %950 : vector<24x64xf32>
    %952 = vector.broadcast %832 : vector<1x64xf32> to vector<24x64xf32>
    %953 = arith.mulf %951, %952 : vector<24x64xf32>
    %cst_305 = arith.constant dense<0.000000e+00> : vector<24xf32>
    %954 = vector.multi_reduction <add>, %953, %cst_305 [1] : vector<24x64xf32> to vector<24xf32>
    %955 = vector.shape_cast %954 : vector<24xf32> to vector<24x1xf32>
    %956 = math.exp %955 : vector<24x1xf32>
    %c2_306 = arith.constant 2 : index
    %c0_307 = arith.constant 0 : index
    %c0_308 = arith.constant 0 : index
    %957 = vector.load %arg1[%c2_306, %c0_307, %c0_308] : memref<8x24x1xf32, #tpu.memory_space<vmem>>, vector<1x24x1xf32>
    %958 = vector.shape_cast %957 : vector<1x24x1xf32> to vector<24x1xf32>
    %959 = arith.mulf %956, %958 : vector<24x1xf32>
    %960 = vector.broadcast %959 : vector<24x1xf32> to vector<24x64xf32>
    %961 = arith.mulf %960, %925 : vector<24x64xf32>
    %962 = arith.addf %919, %961 : vector<24x64xf32>
    %963 = arith.addf %920, %959 : vector<24x1xf32>
    %c3_309 = arith.constant 3 : index
    %c0_310 = arith.constant 0 : index
    %c0_311 = arith.constant 0 : index
    %964 = vector.load %arg17[%c3_309, %c0_310, %c0_311] : memref<8x24x32xf32, #tpu.memory_space<vmem>>, vector<1x24x32xf32>
    %965 = vector.shape_cast %964 : vector<1x24x32xf32> to vector<24x32xf32>
    %c3_312 = arith.constant 3 : index
    %c0_313 = arith.constant 0 : index
    %c0_314 = arith.constant 0 : index
    %966 = vector.load %arg18[%c3_312, %c0_313, %c0_314] : memref<8x24x32xf32, #tpu.memory_space<vmem>>, vector<1x24x32xf32>
    %967 = vector.shape_cast %966 : vector<1x24x32xf32> to vector<24x32xf32>
    %968 = tpu.concatenate %965, %967 in 1 : vector<24x32xf32>, vector<24x32xf32> -> vector<24x64xf32>
    %cst_315 = arith.constant dense<0.000000e+00> : vector<24xf32>
    %969 = vector.multi_reduction <add>, %968, %cst_315 [1] : vector<24x64xf32> to vector<24xf32>
    %970 = vector.shape_cast %969 : vector<24xf32> to vector<24x1xf32>
    %cst_316 = arith.constant 6.400000e+01 : f32
    %971 = vector.broadcast %cst_316 : f32 to vector<24x1xf32>
    %972 = arith.divf %970, %971 : vector<24x1xf32>
    %973 = vector.broadcast %972 : vector<24x1xf32> to vector<24x64xf32>
    %974 = arith.subf %968, %973 : vector<24x64xf32>
    %975 = arith.mulf %974, %974 : vector<24x64xf32>
    %cst_317 = arith.constant dense<0.000000e+00> : vector<24xf32>
    %976 = vector.multi_reduction <add>, %975, %cst_317 [1] : vector<24x64xf32> to vector<24xf32>
    %977 = vector.shape_cast %976 : vector<24xf32> to vector<24x1xf32>
    %cst_318 = arith.constant 6.400000e+01 : f32
    %978 = vector.broadcast %cst_318 : f32 to vector<24x1xf32>
    %979 = arith.divf %977, %978 : vector<24x1xf32>
    %980 = vector.broadcast %972 : vector<24x1xf32> to vector<24x64xf32>
    %981 = arith.subf %968, %980 : vector<24x64xf32>
    %cst_319 = arith.constant 9.99999974E-6 : f32
    %982 = vector.broadcast %cst_319 : f32 to vector<24x1xf32>
    %983 = arith.addf %979, %982 : vector<24x1xf32>
    %984 = math.rsqrt %983 : vector<24x1xf32>
    %985 = vector.broadcast %984 : vector<24x1xf32> to vector<24x64xf32>
    %986 = arith.mulf %981, %985 : vector<24x64xf32>
    %987 = vector.broadcast %828 : vector<1x64xf32> to vector<24x64xf32>
    %988 = arith.mulf %986, %987 : vector<24x64xf32>
    %989 = vector.broadcast %829 : vector<1x64xf32> to vector<24x64xf32>
    %990 = arith.addf %988, %989 : vector<24x64xf32>
    %cst_320 = arith.constant dense<0.000000e+00> : vector<24x64xf32>
    %991 = tpu.matmul %990, %830, %cst_320 {dimension_numbers = #tpu.dot_dimension_numbers<[1], [0], [0], [1], [0, 0, 1, 1], [], []>} : vector<24x64xf32>, vector<64x64xf32>, vector<24x64xf32> -> vector<24x64xf32>
    %992 = vector.broadcast %831 : vector<1x64xf32> to vector<24x64xf32>
    %993 = arith.addf %991, %992 : vector<24x64xf32>
    %994 = math.tanh %993 : vector<24x64xf32>
    %995 = vector.broadcast %832 : vector<1x64xf32> to vector<24x64xf32>
    %996 = arith.mulf %994, %995 : vector<24x64xf32>
    %cst_321 = arith.constant dense<0.000000e+00> : vector<24xf32>
    %997 = vector.multi_reduction <add>, %996, %cst_321 [1] : vector<24x64xf32> to vector<24xf32>
    %998 = vector.shape_cast %997 : vector<24xf32> to vector<24x1xf32>
    %999 = math.exp %998 : vector<24x1xf32>
    %c3_322 = arith.constant 3 : index
    %c0_323 = arith.constant 0 : index
    %c0_324 = arith.constant 0 : index
    %1000 = vector.load %arg1[%c3_322, %c0_323, %c0_324] : memref<8x24x1xf32, #tpu.memory_space<vmem>>, vector<1x24x1xf32>
    %1001 = vector.shape_cast %1000 : vector<1x24x1xf32> to vector<24x1xf32>
    %1002 = arith.mulf %999, %1001 : vector<24x1xf32>
    %1003 = vector.broadcast %1002 : vector<24x1xf32> to vector<24x64xf32>
    %1004 = arith.mulf %1003, %968 : vector<24x64xf32>
    %1005 = arith.addf %962, %1004 : vector<24x64xf32>
    %1006 = arith.addf %963, %1002 : vector<24x1xf32>
    %c4_325 = arith.constant 4 : index
    %c0_326 = arith.constant 0 : index
    %c0_327 = arith.constant 0 : index
    %1007 = vector.load %arg17[%c4_325, %c0_326, %c0_327] : memref<8x24x32xf32, #tpu.memory_space<vmem>>, vector<1x24x32xf32>
    %1008 = vector.shape_cast %1007 : vector<1x24x32xf32> to vector<24x32xf32>
    %c4_328 = arith.constant 4 : index
    %c0_329 = arith.constant 0 : index
    %c0_330 = arith.constant 0 : index
    %1009 = vector.load %arg18[%c4_328, %c0_329, %c0_330] : memref<8x24x32xf32, #tpu.memory_space<vmem>>, vector<1x24x32xf32>
    %1010 = vector.shape_cast %1009 : vector<1x24x32xf32> to vector<24x32xf32>
    %1011 = tpu.concatenate %1008, %1010 in 1 : vector<24x32xf32>, vector<24x32xf32> -> vector<24x64xf32>
    %cst_331 = arith.constant dense<0.000000e+00> : vector<24xf32>
    %1012 = vector.multi_reduction <add>, %1011, %cst_331 [1] : vector<24x64xf32> to vector<24xf32>
    %1013 = vector.shape_cast %1012 : vector<24xf32> to vector<24x1xf32>
    %cst_332 = arith.constant 6.400000e+01 : f32
    %1014 = vector.broadcast %cst_332 : f32 to vector<24x1xf32>
    %1015 = arith.divf %1013, %1014 : vector<24x1xf32>
    %1016 = vector.broadcast %1015 : vector<24x1xf32> to vector<24x64xf32>
    %1017 = arith.subf %1011, %1016 : vector<24x64xf32>
    %1018 = arith.mulf %1017, %1017 : vector<24x64xf32>
    %cst_333 = arith.constant dense<0.000000e+00> : vector<24xf32>
    %1019 = vector.multi_reduction <add>, %1018, %cst_333 [1] : vector<24x64xf32> to vector<24xf32>
    %1020 = vector.shape_cast %1019 : vector<24xf32> to vector<24x1xf32>
    %cst_334 = arith.constant 6.400000e+01 : f32
    %1021 = vector.broadcast %cst_334 : f32 to vector<24x1xf32>
    %1022 = arith.divf %1020, %1021 : vector<24x1xf32>
    %1023 = vector.broadcast %1015 : vector<24x1xf32> to vector<24x64xf32>
    %1024 = arith.subf %1011, %1023 : vector<24x64xf32>
    %cst_335 = arith.constant 9.99999974E-6 : f32
    %1025 = vector.broadcast %cst_335 : f32 to vector<24x1xf32>
    %1026 = arith.addf %1022, %1025 : vector<24x1xf32>
    %1027 = math.rsqrt %1026 : vector<24x1xf32>
    %1028 = vector.broadcast %1027 : vector<24x1xf32> to vector<24x64xf32>
    %1029 = arith.mulf %1024, %1028 : vector<24x64xf32>
    %1030 = vector.broadcast %828 : vector<1x64xf32> to vector<24x64xf32>
    %1031 = arith.mulf %1029, %1030 : vector<24x64xf32>
    %1032 = vector.broadcast %829 : vector<1x64xf32> to vector<24x64xf32>
    %1033 = arith.addf %1031, %1032 : vector<24x64xf32>
    %cst_336 = arith.constant dense<0.000000e+00> : vector<24x64xf32>
    %1034 = tpu.matmul %1033, %830, %cst_336 {dimension_numbers = #tpu.dot_dimension_numbers<[1], [0], [0], [1], [0, 0, 1, 1], [], []>} : vector<24x64xf32>, vector<64x64xf32>, vector<24x64xf32> -> vector<24x64xf32>
    %1035 = vector.broadcast %831 : vector<1x64xf32> to vector<24x64xf32>
    %1036 = arith.addf %1034, %1035 : vector<24x64xf32>
    %1037 = math.tanh %1036 : vector<24x64xf32>
    %1038 = vector.broadcast %832 : vector<1x64xf32> to vector<24x64xf32>
    %1039 = arith.mulf %1037, %1038 : vector<24x64xf32>
    %cst_337 = arith.constant dense<0.000000e+00> : vector<24xf32>
    %1040 = vector.multi_reduction <add>, %1039, %cst_337 [1] : vector<24x64xf32> to vector<24xf32>
    %1041 = vector.shape_cast %1040 : vector<24xf32> to vector<24x1xf32>
    %1042 = math.exp %1041 : vector<24x1xf32>
    %c4_338 = arith.constant 4 : index
    %c0_339 = arith.constant 0 : index
    %c0_340 = arith.constant 0 : index
    %1043 = vector.load %arg1[%c4_338, %c0_339, %c0_340] : memref<8x24x1xf32, #tpu.memory_space<vmem>>, vector<1x24x1xf32>
    %1044 = vector.shape_cast %1043 : vector<1x24x1xf32> to vector<24x1xf32>
    %1045 = arith.mulf %1042, %1044 : vector<24x1xf32>
    %1046 = vector.broadcast %1045 : vector<24x1xf32> to vector<24x64xf32>
    %1047 = arith.mulf %1046, %1011 : vector<24x64xf32>
    %1048 = arith.addf %1005, %1047 : vector<24x64xf32>
    %1049 = arith.addf %1006, %1045 : vector<24x1xf32>
    %c5_341 = arith.constant 5 : index
    %c0_342 = arith.constant 0 : index
    %c0_343 = arith.constant 0 : index
    %1050 = vector.load %arg17[%c5_341, %c0_342, %c0_343] : memref<8x24x32xf32, #tpu.memory_space<vmem>>, vector<1x24x32xf32>
    %1051 = vector.shape_cast %1050 : vector<1x24x32xf32> to vector<24x32xf32>
    %c5_344 = arith.constant 5 : index
    %c0_345 = arith.constant 0 : index
    %c0_346 = arith.constant 0 : index
    %1052 = vector.load %arg18[%c5_344, %c0_345, %c0_346] : memref<8x24x32xf32, #tpu.memory_space<vmem>>, vector<1x24x32xf32>
    %1053 = vector.shape_cast %1052 : vector<1x24x32xf32> to vector<24x32xf32>
    %1054 = tpu.concatenate %1051, %1053 in 1 : vector<24x32xf32>, vector<24x32xf32> -> vector<24x64xf32>
    %cst_347 = arith.constant dense<0.000000e+00> : vector<24xf32>
    %1055 = vector.multi_reduction <add>, %1054, %cst_347 [1] : vector<24x64xf32> to vector<24xf32>
    %1056 = vector.shape_cast %1055 : vector<24xf32> to vector<24x1xf32>
    %cst_348 = arith.constant 6.400000e+01 : f32
    %1057 = vector.broadcast %cst_348 : f32 to vector<24x1xf32>
    %1058 = arith.divf %1056, %1057 : vector<24x1xf32>
    %1059 = vector.broadcast %1058 : vector<24x1xf32> to vector<24x64xf32>
    %1060 = arith.subf %1054, %1059 : vector<24x64xf32>
    %1061 = arith.mulf %1060, %1060 : vector<24x64xf32>
    %cst_349 = arith.constant dense<0.000000e+00> : vector<24xf32>
    %1062 = vector.multi_reduction <add>, %1061, %cst_349 [1] : vector<24x64xf32> to vector<24xf32>
    %1063 = vector.shape_cast %1062 : vector<24xf32> to vector<24x1xf32>
    %cst_350 = arith.constant 6.400000e+01 : f32
    %1064 = vector.broadcast %cst_350 : f32 to vector<24x1xf32>
    %1065 = arith.divf %1063, %1064 : vector<24x1xf32>
    %1066 = vector.broadcast %1058 : vector<24x1xf32> to vector<24x64xf32>
    %1067 = arith.subf %1054, %1066 : vector<24x64xf32>
    %cst_351 = arith.constant 9.99999974E-6 : f32
    %1068 = vector.broadcast %cst_351 : f32 to vector<24x1xf32>
    %1069 = arith.addf %1065, %1068 : vector<24x1xf32>
    %1070 = math.rsqrt %1069 : vector<24x1xf32>
    %1071 = vector.broadcast %1070 : vector<24x1xf32> to vector<24x64xf32>
    %1072 = arith.mulf %1067, %1071 : vector<24x64xf32>
    %1073 = vector.broadcast %828 : vector<1x64xf32> to vector<24x64xf32>
    %1074 = arith.mulf %1072, %1073 : vector<24x64xf32>
    %1075 = vector.broadcast %829 : vector<1x64xf32> to vector<24x64xf32>
    %1076 = arith.addf %1074, %1075 : vector<24x64xf32>
    %cst_352 = arith.constant dense<0.000000e+00> : vector<24x64xf32>
    %1077 = tpu.matmul %1076, %830, %cst_352 {dimension_numbers = #tpu.dot_dimension_numbers<[1], [0], [0], [1], [0, 0, 1, 1], [], []>} : vector<24x64xf32>, vector<64x64xf32>, vector<24x64xf32> -> vector<24x64xf32>
    %1078 = vector.broadcast %831 : vector<1x64xf32> to vector<24x64xf32>
    %1079 = arith.addf %1077, %1078 : vector<24x64xf32>
    %1080 = math.tanh %1079 : vector<24x64xf32>
    %1081 = vector.broadcast %832 : vector<1x64xf32> to vector<24x64xf32>
    %1082 = arith.mulf %1080, %1081 : vector<24x64xf32>
    %cst_353 = arith.constant dense<0.000000e+00> : vector<24xf32>
    %1083 = vector.multi_reduction <add>, %1082, %cst_353 [1] : vector<24x64xf32> to vector<24xf32>
    %1084 = vector.shape_cast %1083 : vector<24xf32> to vector<24x1xf32>
    %1085 = math.exp %1084 : vector<24x1xf32>
    %c5_354 = arith.constant 5 : index
    %c0_355 = arith.constant 0 : index
    %c0_356 = arith.constant 0 : index
    %1086 = vector.load %arg1[%c5_354, %c0_355, %c0_356] : memref<8x24x1xf32, #tpu.memory_space<vmem>>, vector<1x24x1xf32>
    %1087 = vector.shape_cast %1086 : vector<1x24x1xf32> to vector<24x1xf32>
    %1088 = arith.mulf %1085, %1087 : vector<24x1xf32>
    %1089 = vector.broadcast %1088 : vector<24x1xf32> to vector<24x64xf32>
    %1090 = arith.mulf %1089, %1054 : vector<24x64xf32>
    %1091 = arith.addf %1048, %1090 : vector<24x64xf32>
    %1092 = arith.addf %1049, %1088 : vector<24x1xf32>
    %c6_357 = arith.constant 6 : index
    %c0_358 = arith.constant 0 : index
    %c0_359 = arith.constant 0 : index
    %1093 = vector.load %arg17[%c6_357, %c0_358, %c0_359] : memref<8x24x32xf32, #tpu.memory_space<vmem>>, vector<1x24x32xf32>
    %1094 = vector.shape_cast %1093 : vector<1x24x32xf32> to vector<24x32xf32>
    %c6_360 = arith.constant 6 : index
    %c0_361 = arith.constant 0 : index
    %c0_362 = arith.constant 0 : index
    %1095 = vector.load %arg18[%c6_360, %c0_361, %c0_362] : memref<8x24x32xf32, #tpu.memory_space<vmem>>, vector<1x24x32xf32>
    %1096 = vector.shape_cast %1095 : vector<1x24x32xf32> to vector<24x32xf32>
    %1097 = tpu.concatenate %1094, %1096 in 1 : vector<24x32xf32>, vector<24x32xf32> -> vector<24x64xf32>
    %cst_363 = arith.constant dense<0.000000e+00> : vector<24xf32>
    %1098 = vector.multi_reduction <add>, %1097, %cst_363 [1] : vector<24x64xf32> to vector<24xf32>
    %1099 = vector.shape_cast %1098 : vector<24xf32> to vector<24x1xf32>
    %cst_364 = arith.constant 6.400000e+01 : f32
    %1100 = vector.broadcast %cst_364 : f32 to vector<24x1xf32>
    %1101 = arith.divf %1099, %1100 : vector<24x1xf32>
    %1102 = vector.broadcast %1101 : vector<24x1xf32> to vector<24x64xf32>
    %1103 = arith.subf %1097, %1102 : vector<24x64xf32>
    %1104 = arith.mulf %1103, %1103 : vector<24x64xf32>
    %cst_365 = arith.constant dense<0.000000e+00> : vector<24xf32>
    %1105 = vector.multi_reduction <add>, %1104, %cst_365 [1] : vector<24x64xf32> to vector<24xf32>
    %1106 = vector.shape_cast %1105 : vector<24xf32> to vector<24x1xf32>
    %cst_366 = arith.constant 6.400000e+01 : f32
    %1107 = vector.broadcast %cst_366 : f32 to vector<24x1xf32>
    %1108 = arith.divf %1106, %1107 : vector<24x1xf32>
    %1109 = vector.broadcast %1101 : vector<24x1xf32> to vector<24x64xf32>
    %1110 = arith.subf %1097, %1109 : vector<24x64xf32>
    %cst_367 = arith.constant 9.99999974E-6 : f32
    %1111 = vector.broadcast %cst_367 : f32 to vector<24x1xf32>
    %1112 = arith.addf %1108, %1111 : vector<24x1xf32>
    %1113 = math.rsqrt %1112 : vector<24x1xf32>
    %1114 = vector.broadcast %1113 : vector<24x1xf32> to vector<24x64xf32>
    %1115 = arith.mulf %1110, %1114 : vector<24x64xf32>
    %1116 = vector.broadcast %828 : vector<1x64xf32> to vector<24x64xf32>
    %1117 = arith.mulf %1115, %1116 : vector<24x64xf32>
    %1118 = vector.broadcast %829 : vector<1x64xf32> to vector<24x64xf32>
    %1119 = arith.addf %1117, %1118 : vector<24x64xf32>
    %cst_368 = arith.constant dense<0.000000e+00> : vector<24x64xf32>
    %1120 = tpu.matmul %1119, %830, %cst_368 {dimension_numbers = #tpu.dot_dimension_numbers<[1], [0], [0], [1], [0, 0, 1, 1], [], []>} : vector<24x64xf32>, vector<64x64xf32>, vector<24x64xf32> -> vector<24x64xf32>
    %1121 = vector.broadcast %831 : vector<1x64xf32> to vector<24x64xf32>
    %1122 = arith.addf %1120, %1121 : vector<24x64xf32>
    %1123 = math.tanh %1122 : vector<24x64xf32>
    %1124 = vector.broadcast %832 : vector<1x64xf32> to vector<24x64xf32>
    %1125 = arith.mulf %1123, %1124 : vector<24x64xf32>
    %cst_369 = arith.constant dense<0.000000e+00> : vector<24xf32>
    %1126 = vector.multi_reduction <add>, %1125, %cst_369 [1] : vector<24x64xf32> to vector<24xf32>
    %1127 = vector.shape_cast %1126 : vector<24xf32> to vector<24x1xf32>
    %1128 = math.exp %1127 : vector<24x1xf32>
    %c6_370 = arith.constant 6 : index
    %c0_371 = arith.constant 0 : index
    %c0_372 = arith.constant 0 : index
    %1129 = vector.load %arg1[%c6_370, %c0_371, %c0_372] : memref<8x24x1xf32, #tpu.memory_space<vmem>>, vector<1x24x1xf32>
    %1130 = vector.shape_cast %1129 : vector<1x24x1xf32> to vector<24x1xf32>
    %1131 = arith.mulf %1128, %1130 : vector<24x1xf32>
    %1132 = vector.broadcast %1131 : vector<24x1xf32> to vector<24x64xf32>
    %1133 = arith.mulf %1132, %1097 : vector<24x64xf32>
    %1134 = arith.addf %1091, %1133 : vector<24x64xf32>
    %1135 = arith.addf %1092, %1131 : vector<24x1xf32>
    %c7_373 = arith.constant 7 : index
    %c0_374 = arith.constant 0 : index
    %c0_375 = arith.constant 0 : index
    %1136 = vector.load %arg17[%c7_373, %c0_374, %c0_375] : memref<8x24x32xf32, #tpu.memory_space<vmem>>, vector<1x24x32xf32>
    %1137 = vector.shape_cast %1136 : vector<1x24x32xf32> to vector<24x32xf32>
    %c7_376 = arith.constant 7 : index
    %c0_377 = arith.constant 0 : index
    %c0_378 = arith.constant 0 : index
    %1138 = vector.load %arg18[%c7_376, %c0_377, %c0_378] : memref<8x24x32xf32, #tpu.memory_space<vmem>>, vector<1x24x32xf32>
    %1139 = vector.shape_cast %1138 : vector<1x24x32xf32> to vector<24x32xf32>
    %1140 = tpu.concatenate %1137, %1139 in 1 : vector<24x32xf32>, vector<24x32xf32> -> vector<24x64xf32>
    %cst_379 = arith.constant dense<0.000000e+00> : vector<24xf32>
    %1141 = vector.multi_reduction <add>, %1140, %cst_379 [1] : vector<24x64xf32> to vector<24xf32>
    %1142 = vector.shape_cast %1141 : vector<24xf32> to vector<24x1xf32>
    %cst_380 = arith.constant 6.400000e+01 : f32
    %1143 = vector.broadcast %cst_380 : f32 to vector<24x1xf32>
    %1144 = arith.divf %1142, %1143 : vector<24x1xf32>
    %1145 = vector.broadcast %1144 : vector<24x1xf32> to vector<24x64xf32>
    %1146 = arith.subf %1140, %1145 : vector<24x64xf32>
    %1147 = arith.mulf %1146, %1146 : vector<24x64xf32>
    %cst_381 = arith.constant dense<0.000000e+00> : vector<24xf32>
    %1148 = vector.multi_reduction <add>, %1147, %cst_381 [1] : vector<24x64xf32> to vector<24xf32>
    %1149 = vector.shape_cast %1148 : vector<24xf32> to vector<24x1xf32>
    %cst_382 = arith.constant 6.400000e+01 : f32
    %1150 = vector.broadcast %cst_382 : f32 to vector<24x1xf32>
    %1151 = arith.divf %1149, %1150 : vector<24x1xf32>
    %1152 = vector.broadcast %1144 : vector<24x1xf32> to vector<24x64xf32>
    %1153 = arith.subf %1140, %1152 : vector<24x64xf32>
    %cst_383 = arith.constant 9.99999974E-6 : f32
    %1154 = vector.broadcast %cst_383 : f32 to vector<24x1xf32>
    %1155 = arith.addf %1151, %1154 : vector<24x1xf32>
    %1156 = math.rsqrt %1155 : vector<24x1xf32>
    %1157 = vector.broadcast %1156 : vector<24x1xf32> to vector<24x64xf32>
    %1158 = arith.mulf %1153, %1157 : vector<24x64xf32>
    %1159 = vector.broadcast %828 : vector<1x64xf32> to vector<24x64xf32>
    %1160 = arith.mulf %1158, %1159 : vector<24x64xf32>
    %1161 = vector.broadcast %829 : vector<1x64xf32> to vector<24x64xf32>
    %1162 = arith.addf %1160, %1161 : vector<24x64xf32>
    %cst_384 = arith.constant dense<0.000000e+00> : vector<24x64xf32>
    %1163 = tpu.matmul %1162, %830, %cst_384 {dimension_numbers = #tpu.dot_dimension_numbers<[1], [0], [0], [1], [0, 0, 1, 1], [], []>} : vector<24x64xf32>, vector<64x64xf32>, vector<24x64xf32> -> vector<24x64xf32>
    %1164 = vector.broadcast %831 : vector<1x64xf32> to vector<24x64xf32>
    %1165 = arith.addf %1163, %1164 : vector<24x64xf32>
    %1166 = math.tanh %1165 : vector<24x64xf32>
    %1167 = vector.broadcast %832 : vector<1x64xf32> to vector<24x64xf32>
    %1168 = arith.mulf %1166, %1167 : vector<24x64xf32>
    %cst_385 = arith.constant dense<0.000000e+00> : vector<24xf32>
    %1169 = vector.multi_reduction <add>, %1168, %cst_385 [1] : vector<24x64xf32> to vector<24xf32>
    %1170 = vector.shape_cast %1169 : vector<24xf32> to vector<24x1xf32>
    %1171 = math.exp %1170 : vector<24x1xf32>
    %c7_386 = arith.constant 7 : index
    %c0_387 = arith.constant 0 : index
    %c0_388 = arith.constant 0 : index
    %1172 = vector.load %arg1[%c7_386, %c0_387, %c0_388] : memref<8x24x1xf32, #tpu.memory_space<vmem>>, vector<1x24x1xf32>
    %1173 = vector.shape_cast %1172 : vector<1x24x1xf32> to vector<24x1xf32>
    %1174 = arith.mulf %1171, %1173 : vector<24x1xf32>
    %1175 = vector.broadcast %1174 : vector<24x1xf32> to vector<24x64xf32>
    %1176 = arith.mulf %1175, %1140 : vector<24x64xf32>
    %1177 = arith.addf %1134, %1176 : vector<24x64xf32>
    %1178 = arith.addf %1135, %1174 : vector<24x1xf32>
    %cst_389 = arith.constant 0.000000e+00 : f32
    %1179 = vector.broadcast %cst_389 : f32 to vector<24x1xf32>
    %1180 = arith.cmpf ogt, %1178, %1179 : vector<24x1xf32>
    %cst_390 = arith.constant 1.000000e+00 : f32
    %1181 = vector.broadcast %cst_390 : f32 to vector<24x1xf32>
    %1182 = arith.select %1180, %1178, %1181 : vector<24x1xi1>, vector<24x1xf32>
    %cst_391 = arith.constant 0.000000e+00 : f32
    %1183 = vector.broadcast %cst_391 : f32 to vector<24x1xf32>
    %1184 = arith.cmpf ogt, %1178, %1183 : vector<24x1xf32>
    %cst_392 = arith.constant 1.000000e+00 : f32
    %1185 = vector.broadcast %cst_392 : f32 to vector<24x1xf32>
    %1186 = arith.divf %1185, %1182 : vector<24x1xf32>
    %cst_393 = arith.constant 0.000000e+00 : f32
    %1187 = vector.broadcast %cst_393 : f32 to vector<24x1xf32>
    %1188 = arith.select %1184, %1186, %1187 : vector<24x1xi1>, vector<24x1xf32>
    %1189 = vector.broadcast %1188 : vector<24x1xf32> to vector<24x64xf32>
    %1190 = arith.mulf %1177, %1189 : vector<24x64xf32>
    %c0_394 = arith.constant 0 : index
    %c0_395 = arith.constant 0 : index
    %1191 = vector.load %arg13[%c0_394, %c0_395] : memref<24x64xf32, #tpu.memory_space<vmem>>, vector<24x64xf32>
    tpu.vector_store %arg13[%c0_394, %c0_395], %1190 {strides = array<i32>} : memref<24x64xf32, #tpu.memory_space<vmem>>, vector<24x64xf32>,
    %1192 = tpu.concatenate %873, %916, %959, %1002, %1045, %1088, %1131, %1174 in 1 : vector<24x1xf32>, vector<24x1xf32>, vector<24x1xf32>, vector<24x1xf32>, vector<24x1xf32>, vector<24x1xf32>, vector<24x1xf32>, vector<24x1xf32> -> vector<24x8xf32>
    %1193 = vector.broadcast %1188 : vector<24x1xf32> to vector<24x8xf32>
    %1194 = arith.mulf %1192, %1193 : vector<24x8xf32>
    %c0_396 = arith.constant 0 : index
    %c0_397 = arith.constant 0 : index
    %1195 = vector.load %arg14[%c0_396, %c0_397] : memref<24x8xf32, #tpu.memory_space<vmem>>, vector<24x8xf32>
    tpu.vector_store %arg14[%c0_396, %c0_397], %1194 {strides = array<i32>} : memref<24x8xf32, #tpu.memory_space<vmem>>, vector<24x8xf32>,
    return
  }
}

</mosaic_0001>

<llo_original>
// kernel: tpu_custom_call.1
$region0: #{tpu_custom_call.1}
  #allocation0 [shape = 'u32[]', space=smem, size = 0x4, offset = 0x4, fixed_abs, tag = 'smem constant byte address 0x4 - core index']
  #allocation1 [shape = 'u32[144,128]{1,0:T(1,128)}', space=vmem, size = 0x12000, scoped, tag = 'internal scratch']
  #allocation2 [shape = 'f32[8,24,96]{2,1,0:T(8,128)}', space=vmem, size = 0x18000, scoped, tag = 'scratch operand']
  #allocation3 [shape = 'f32[8,24,96]{2,1,0:T(8,128)}', space=vmem, size = 0x18000, scoped, tag = 'scratch operand']
  #allocation4 [shape = 'f32[8,24,32]{2,1,0:T(8,128)}', space=vmem, size = 0x18000, scoped, tag = 'scratch operand']
  #allocation5 [shape = 'f32[8,24,32]{2,1,0:T(8,128)}', space=vmem, size = 0x18000, scoped, tag = 'scratch operand']
  %s0 = inlined_call_operand.vmem [shape: f32[192,32], index: 0, kind: input, shape index: {}]
  %s1 = inlined_call_operand.vmem [shape: f32[8,24,1], index: 1, kind: input, shape index: {}]
  %s2 = inlined_call_operand.vmem [shape: f32[32,192], index: 2, kind: input, shape index: {}]
  %s3 = inlined_call_operand.vmem [shape: f32[1,192], index: 3, kind: input, shape index: {}]
  %s4 = inlined_call_operand.vmem [shape: f32[32,96], index: 4, kind: input, shape index: {}]
  %s5 = inlined_call_operand.vmem [shape: f32[32,96], index: 5, kind: input, shape index: {}]
  %s6 = inlined_call_operand.vmem [shape: f32[1,96], index: 6, kind: input, shape index: {}]
  %s7 = inlined_call_operand.vmem [shape: f32[1,96], index: 7, kind: input, shape index: {}]
  %s8 = inlined_call_operand.vmem [shape: f32[1,64], index: 8, kind: input, shape index: {}]
  %s9 = inlined_call_operand.vmem [shape: f32[1,64], index: 9, kind: input, shape index: {}]
  %s10 = inlined_call_operand.vmem [shape: f32[64,64], index: 10, kind: input, shape index: {}]
  %s11 = inlined_call_operand.vmem [shape: f32[1,64], index: 11, kind: input, shape index: {}]
  %s12 = inlined_call_operand.vmem [shape: f32[1,64], index: 12, kind: input, shape index: {}]
  %s13 = inlined_call_operand.hbm [shape: f32[24,64], index: 13, kind: output, shape index: {0}]
  %s14 = inlined_call_operand.vmem [shape: f32[24,8], index: 14, kind: output, shape index: {1}]
  %15 = xla_tuple %s13, %s14
  %s16 = sld [smem:[#allocation0]]
  $region70: #{tpu_custom_call.1} parent=0
    _
  %s18 = ssub.s32 1, %s16
  %s19 = scalar_select 0, %s18, %s16
  $region1: #{tpu_custom_call.1} parent=0
    #allocation6 [shape = 'u8[12288]{0}', space=vmem, size = 0x3000, scoped, tag = 'output window, operand 0, single buffered']
    #allocation7 [shape = 's32[1]{0}', space=sflag, size = 0x4, scoped, tag = 'scoped memory for tpu_custom_call.1']
    %20 = vsyncpa [#allocation7], 0
    // Predicated region
    $region2: #{tpu_custom_call.1} parent=1 // pred_check
      _
    $region3: #{tpu_custom_call.1} parent=1 // pred_check_branch
      %22 = sbr.rel (0) target = $region5
    $region4: #{tpu_custom_call.1} parent=1 // pred_region
      _
    $region5: #{tpu_custom_call.1} parent=1 // pred_fallthru
      _
    // Predicated region
    $region6: #{tpu_custom_call.1} parent=1 // pred_check
      _
    $region7: #{tpu_custom_call.1} parent=1 // pred_check_branch
      %24 = sbr.rel (0) target = $region9
    $region8: #{tpu_custom_call.1} parent=1 // pred_region
      _
    $region9: #{tpu_custom_call.1} parent=1 // pred_fallthru
      _
    // Predicated region
    $region10: #{tpu_custom_call.1} parent=1 // pred_check
      _
    $region11: #{tpu_custom_call.1} parent=1 // pred_check_branch
      %26 = sbr.rel (0) target = $region13
    $region12: #{tpu_custom_call.1} parent=1 // pred_region
      _
    $region13: #{tpu_custom_call.1} parent=1 // pred_fallthru
      _
    // Predicated region
    $region14: #{tpu_custom_call.1} parent=1 // pred_check
      _
    $region15: #{tpu_custom_call.1} parent=1 // pred_check_branch
      %28 = sbr.rel (0) target = $region17
    $region16: #{tpu_custom_call.1} parent=1 // pred_region
      _
    $region17: #{tpu_custom_call.1} parent=1 // pred_fallthru
      _
    // Predicated region
    $region18: #{tpu_custom_call.1} parent=1 // pred_check
      _
    $region19: #{tpu_custom_call.1} parent=1 // pred_check_branch
      %30 = sbr.rel (0) target = $region21
    $region20: #{tpu_custom_call.1} parent=1 // pred_region
      _
    $region21: #{tpu_custom_call.1} parent=1 // pred_fallthru
      _
    // Predicated region
    $region22: #{tpu_custom_call.1} parent=1 // pred_check
      _
    $region23: #{tpu_custom_call.1} parent=1 // pred_check_branch
      %32 = sbr.rel (0) target = $region25
    $region24: #{tpu_custom_call.1} parent=1 // pred_region
      _
    $region25: #{tpu_custom_call.1} parent=1 // pred_fallthru
      _
    // Predicated region
    $region26: #{tpu_custom_call.1} parent=1 // pred_check
      _
    $region27: #{tpu_custom_call.1} parent=1 // pred_check_branch
      %34 = sbr.rel (0) target = $region29
    $region28: #{tpu_custom_call.1} parent=1 // pred_region
      _
    $region29: #{tpu_custom_call.1} parent=1 // pred_fallthru
      _
    // Predicated region
    $region30: #{tpu_custom_call.1} parent=1 // pred_check
      _
    $region31: #{tpu_custom_call.1} parent=1 // pred_check_branch
      %36 = sbr.rel (0) target = $region33
    $region32: #{tpu_custom_call.1} parent=1 // pred_region
      _
    $region33: #{tpu_custom_call.1} parent=1 // pred_fallthru
      _
    // Predicated region
    $region34: #{tpu_custom_call.1} parent=1 // pred_check
      _
    $region35: #{tpu_custom_call.1} parent=1 // pred_check_branch
      %38 = sbr.rel (0) target = $region37
    $region36: #{tpu_custom_call.1} parent=1 // pred_region
      _
    $region37: #{tpu_custom_call.1} parent=1 // pred_fallthru
      _
    // Predicated region
    $region38: #{tpu_custom_call.1} parent=1 // pred_check
      _
    $region39: #{tpu_custom_call.1} parent=1 // pred_check_branch
      %40 = sbr.rel (0) target = $region41
    $region40: #{tpu_custom_call.1} parent=1 // pred_region
      _
    $region41: #{tpu_custom_call.1} parent=1 // pred_fallthru
      _
    // Predicated region
    $region42: #{tpu_custom_call.1} parent=1 // pred_check
      _
    $region43: #{tpu_custom_call.1} parent=1 // pred_check_branch
      %42 = sbr.rel (0) target = $region45
    $region44: #{tpu_custom_call.1} parent=1 // pred_region
      _
    $region45: #{tpu_custom_call.1} parent=1 // pred_fallthru
      _
    // Predicated region
    $region46: #{tpu_custom_call.1} parent=1 // pred_check
      _
    $region47: #{tpu_custom_call.1} parent=1 // pred_check_branch
      %44 = sbr.rel (0) target = $region49
    $region48: #{tpu_custom_call.1} parent=1 // pred_region
      _
    $region49: #{tpu_custom_call.1} parent=1 // pred_fallthru
      _
    // Predicated region
    $region50: #{tpu_custom_call.1} parent=1 // pred_check
      _
    $region51: #{tpu_custom_call.1} parent=1 // pred_check_branch
      %46 = sbr.rel (0) target = $region53
    $region52: #{tpu_custom_call.1} parent=1 // pred_region
      _
    $region53: #{tpu_custom_call.1} parent=1 // pred_fallthru
      _
    %v47 = vld [vmem:[%s0] sm:$0xff]
    %v48 = vld [vmem:[%s0 + $0x8] sm:$0xff]
    %v49 = vld [vmem:[%s0 + $0x10] sm:$0xff]
    %v50 = vld [vmem:[%s0 + $0x18] sm:$0xff]
    %v51 = vld [vmem:[%s0 + $0x20] sm:$0xff]
    %v52 = vld [vmem:[%s0 + $0x28] sm:$0xff]
    %v53 = vld [vmem:[%s0 + $0x30] sm:$0xff]
    %v54 = vld [vmem:[%s0 + $0x38] sm:$0xff]
    %v55 = vld [vmem:[%s0 + $0x40] sm:$0xff]
    %v56 = vld [vmem:[%s0 + $0x48] sm:$0xff]
    %v57 = vld [vmem:[%s0 + $0x50] sm:$0xff]
    %v58 = vld [vmem:[%s0 + $0x58] sm:$0xff]
    %v59 = vld [vmem:[%s0 + $0x60] sm:$0xff]
    %v60 = vld [vmem:[%s0 + $0x68] sm:$0xff]
    %v61 = vld [vmem:[%s0 + $0x70] sm:$0xff]
    %v62 = vld [vmem:[%s0 + $0x78] sm:$0xff]
    %v63 = vld [vmem:[%s0 + $0x80] sm:$0xff]
    %v64 = vld [vmem:[%s0 + $0x88] sm:$0xff]
    %v65 = vld [vmem:[%s0 + $0x90] sm:$0xff]
    %v66 = vld [vmem:[%s0 + $0x98] sm:$0xff]
    %v67 = vld [vmem:[%s0 + $0xa0] sm:$0xff]
    %v68 = vld [vmem:[%s0 + $0xa8] sm:$0xff]
    %v69 = vld [vmem:[%s0 + $0xb0] sm:$0xff]
    %v70 = vld [vmem:[%s0 + $0xb8] sm:$0xff]
    %v71 = vld [vmem:[%s2] sm:$0xff]
    %v72 = vld [vmem:[%s2 + $0x8] sm:$0xff]
    %v73 = vld [vmem:[%s2 + $0x10] sm:$0xff]
    %v74 = vld [vmem:[%s2 + $0x18] sm:$0xff]
    %v75 = vld [vmem:[%s2 + $0x20] sm:$0xff]
    %v76 = vld [vmem:[%s2 + $0x28] sm:$0xff]
    %v77 = vld [vmem:[%s2 + $0x30] sm:$0xff]
    %v78 = vld [vmem:[%s2 + $0x38] sm:$0xff]
    %v79 = vld [vmem:[%s3] sm:$0x3]
    %v81 = vlaneseq
    %v82 = vshrl.u32 %v81, 7
    %v83 = vsub.s32 0, %v82
    %v84 = vrot.slane %v79, %v83
    %v85 = vlaneseq
    %v86 = vshrl.u32 %v85, 7
    %v87 = vsub.s32 1, %v86
    %v88 = vrot.slane %v79, %v87
    %vm91 = vcmask 261120
    %v93 = vsel %vm91, %v47, 0
    %v96 = vsel %vm91, %v48, 0
    %v99 = vsel %vm91, %v49, 0
    %v102 = vsel %vm91, %v50, 0
    %v105 = vsel %vm91, %v51, 0
    %v108 = vsel %vm91, %v52, 0
    %v111 = vsel %vm91, %v53, 0
    %v114 = vsel %vm91, %v54, 0
    %v117 = vsel %vm91, %v55, 0
    %v120 = vsel %vm91, %v56, 0
    %v123 = vsel %vm91, %v57, 0
    %v126 = vsel %vm91, %v58, 0
    %v129 = vsel %vm91, %v59, 0
    %v132 = vsel %vm91, %v60, 0
    %v135 = vsel %vm91, %v61, 0
    %v138 = vsel %vm91, %v62, 0
    %v141 = vsel %vm91, %v63, 0
    %v144 = vsel %vm91, %v64, 0
    %v147 = vsel %vm91, %v65, 0
    %v150 = vsel %vm91, %v66, 0
    %v153 = vsel %vm91, %v67, 0
    %v156 = vsel %vm91, %v68, 0
    %v159 = vsel %vm91, %v69, 0
    %v162 = vsel %vm91, %v70, 0
    %164 = vmatprep.subr.mxu0 %v72
    %165 = vmatpush1.msra.mxu0 %v71
    %166 = vmatprep.subr.mxu0 %v74
    %167 = vmatpush1.msra.mxu0 %v73
    %168 = vmatprep.subr.mxu0 %v76
    %169 = vmatpush1.msra.mxu0 %v75
    %170 = vmatprep.subr.mxu0 %v78
    %171 = vmatpush1.msra.mxu0 %v77
    %172 = vmatprep.subr.mxu0 0.0
    %173 = vmatpush1.msra.mxu0 0.0
    %174 = vmatprep.subr.mxu0 0.0
    %175 = vmatpush1.msra.mxu0 0.0
    %176 = vmatprep.subr.mxu0 0.0
    %177 = vmatpush1.msra.mxu0 0.0
    %178 = vmatprep.subr.mxu0 0.0
    %179 = vmatpush1.msra.mxu0 0.0
    %180 = vmatprep.subr.mxu0 0.0
    %181 = vmatpush1.msra.mxu0 0.0
    %182 = vmatprep.subr.mxu0 0.0
    %183 = vmatpush1.msra.mxu0 0.0
    %184 = vmatprep.subr.mxu0 0.0
    %185 = vmatpush1.msra.mxu0 0.0
    %186 = vmatprep.subr.mxu0 0.0
    %187 = vmatpush1.msra.mxu0 0.0
    %188 = vmatprep.subr.mxu0 0.0
    %189 = vmatpush1.msra.mxu0 0.0
    %190 = vmatprep.subr.mxu0 0.0
    %191 = vmatpush1.msra.mxu0 0.0
    %192 = vmatprep.subr.mxu0 0.0
    %193 = vmatpush1.msra.mxu0 0.0
    %194 = vmatprep.subr.mxu0 0.0
    %195 = vmatpush1.msra.mxu0 0.0
    %196 = vmatprep.subr.mxu0 0.0
    %197 = vmatpush1.msra.mxu0 0.0
    %198 = vmatprep.subr.mxu0 0.0
    %199 = vmatpush1.msra.mxu0 0.0
    %200 = vmatprep.subr.mxu0 0.0
    %201 = vmatpush1.msra.mxu0 0.0
    %202 = vmatprep.subr.mxu0 0.0
    %203 = vmatpush1.msra.mxu0 0.0
    %204 = vmatprep.subr.mxu0 0.0
    %205 = vmatpush1.msra.mxu0 0.0
    %206 = vmatprep.subr.mxu0 0.0
    %207 = vmatpush1.msra.mxu0 0.0
    %208 = vmatprep.subr.mxu0 0.0
    %209 = vmatpush1.msra.mxu0 0.0
    %210 = vmatprep.subr.mxu0 0.0
    %211 = vmatpush1.msra.mxu0 0.0
    %212 = vmatprep.subr.mxu0 0.0
    %213 = vmatpush1.msra.mxu0 0.0
    %214 = vmatprep.subr.mxu0 0.0
    %215 = vmatpush1.msra.mxu0 0.0
    %216 = vmatprep.subr.mxu0 0.0
    %217 = vmatpush1.msra.mxu0 0.0
    %218 = vmatprep.subr.mxu0 0.0
    %219 = vmatpush1.msra.mxu0 0.0
    %220 = vmatprep.subr.mxu0 0.0
    %221 = vmatpush1.msra.mxu0 0.0
    %222 = vmatprep.subr.mxu0 0.0
    %223 = vmatpush1.msra.mxu0 0.0
    %224 = vmatprep.subr.mxu0 0.0
    %225 = vmatpush1.msra.mxu0 0.0
    %226 = vmatprep.subr.mxu0 0.0
    %227 = vmatpush1.msra.mxu0 0.0
    %228 = vmatprep.mubr.f32.mxu0 0.0
    %229 = vmatmul.mubr.f32.gmra.mrb[0].mxu0 %v93
    %v230 = vpop.f32.mrb[0].mxu0
    %v231 = vadd.f32 %v84, %v230
    %v232 = vpop.f32.mrb[0].mxu0
    %v233 = vadd.f32 %v88, %v232
    %234 = vmatprep.mubr.f32.mxu0 0.0
    %235 = vmatmul.mubr.f32.gmra.mrb[0].mxu0 %v96
    %v236 = vpop.f32.mrb[0].mxu0
    %v237 = vadd.f32 %v84, %v236
    %v238 = vpop.f32.mrb[0].mxu0
    %v239 = vadd.f32 %v88, %v238
    %240 = vmatprep.mubr.f32.mxu0 0.0
    %241 = vmatmul.mubr.f32.gmra.mrb[0].mxu0 %v99
    %v242 = vpop.f32.mrb[0].mxu0
    %v243 = vadd.f32 %v84, %v242
    %v244 = vpop.f32.mrb[0].mxu0
    %v245 = vadd.f32 %v88, %v244
    %246 = vmatprep.mubr.f32.mxu0 0.0
    %247 = vmatmul.mubr.f32.gmra.mrb[0].mxu0 %v102
    %v248 = vpop.f32.mrb[0].mxu0
    %v249 = vadd.f32 %v84, %v248
    %v250 = vpop.f32.mrb[0].mxu0
    %v251 = vadd.f32 %v88, %v250
    %252 = vmatprep.mubr.f32.mxu0 0.0
    %253 = vmatmul.mubr.f32.gmra.mrb[0].mxu0 %v105
    %v254 = vpop.f32.mrb[0].mxu0
    %v255 = vadd.f32 %v84, %v254
    %v256 = vpop.f32.mrb[0].mxu0
    %v257 = vadd.f32 %v88, %v256
    %258 = vmatprep.mubr.f32.mxu0 0.0
    %259 = vmatmul.mubr.f32.gmra.mrb[0].mxu0 %v108
    %v260 = vpop.f32.mrb[0].mxu0
    %v261 = vadd.f32 %v84, %v260
    %v262 = vpop.f32.mrb[0].mxu0
    %v263 = vadd.f32 %v88, %v262
    %264 = vmatprep.mubr.f32.mxu0 0.0
    %265 = vmatmul.mubr.f32.gmra.mrb[0].mxu0 %v111
    %v266 = vpop.f32.mrb[0].mxu0
    %v267 = vadd.f32 %v84, %v266
    %v268 = vpop.f32.mrb[0].mxu0
    %v269 = vadd.f32 %v88, %v268
    %270 = vmatprep.mubr.f32.mxu0 0.0
    %271 = vmatmul.mubr.f32.gmra.mrb[0].mxu0 %v114
    %v272 = vpop.f32.mrb[0].mxu0
    %v273 = vadd.f32 %v84, %v272
    %v274 = vpop.f32.mrb[0].mxu0
    %v275 = vadd.f32 %v88, %v274
    %276 = vmatprep.mubr.f32.mxu0 0.0
    %277 = vmatmul.mubr.f32.gmra.mrb[0].mxu0 %v117
    %v278 = vpop.f32.mrb[0].mxu0
    %v279 = vadd.f32 %v84, %v278
    %v280 = vpop.f32.mrb[0].mxu0
    %v281 = vadd.f32 %v88, %v280
    %282 = vmatprep.mubr.f32.mxu0 0.0
    %283 = vmatmul.mubr.f32.gmra.mrb[0].mxu0 %v120
    %v284 = vpop.f32.mrb[0].mxu0
    %v285 = vadd.f32 %v84, %v284
    %v286 = vpop.f32.mrb[0].mxu0
    %v287 = vadd.f32 %v88, %v286
    %288 = vmatprep.mubr.f32.mxu0 0.0
    %289 = vmatmul.mubr.f32.gmra.mrb[0].mxu0 %v123
    %v290 = vpop.f32.mrb[0].mxu0
    %v291 = vadd.f32 %v84, %v290
    %v292 = vpop.f32.mrb[0].mxu0
    %v293 = vadd.f32 %v88, %v292
    %294 = vmatprep.mubr.f32.mxu0 0.0
    %295 = vmatmul.mubr.f32.gmra.mrb[0].mxu0 %v126
    %v296 = vpop.f32.mrb[0].mxu0
    %v297 = vadd.f32 %v84, %v296
    %v298 = vpop.f32.mrb[0].mxu0
    %v299 = vadd.f32 %v88, %v298
    %300 = vmatprep.mubr.f32.mxu0 0.0
    %301 = vmatmul.mubr.f32.gmra.mrb[0].mxu0 %v129
    %v302 = vpop.f32.mrb[0].mxu0
    %v303 = vadd.f32 %v84, %v302
    %v304 = vpop.f32.mrb[0].mxu0
    %v305 = vadd.f32 %v88, %v304
    %306 = vmatprep.mubr.f32.mxu0 0.0
    %307 = vmatmul.mubr.f32.gmra.mrb[0].mxu0 %v132
    %v308 = vpop.f32.mrb[0].mxu0
    %v309 = vadd.f32 %v84, %v308
    %v310 = vpop.f32.mrb[0].mxu0
    %v311 = vadd.f32 %v88, %v310
    %312 = vmatprep.mubr.f32.mxu0 0.0
    %313 = vmatmul.mubr.f32.gmra.mrb[0].mxu0 %v135
    %v314 = vpop.f32.mrb[0].mxu0
    %v315 = vadd.f32 %v84, %v314
    %v316 = vpop.f32.mrb[0].mxu0
    %v317 = vadd.f32 %v88, %v316
    %318 = vmatprep.mubr.f32.mxu0 0.0
    %319 = vmatmul.mubr.f32.gmra.mrb[0].mxu0 %v138
    %v320 = vpop.f32.mrb[0].mxu0
    %v321 = vadd.f32 %v84, %v320
    %v322 = vpop.f32.mrb[0].mxu0
    %v323 = vadd.f32 %v88, %v322
    %324 = vmatprep.mubr.f32.mxu0 0.0
    %325 = vmatmul.mubr.f32.gmra.mrb[0].mxu0 %v141
    %v326 = vpop.f32.mrb[0].mxu0
    %v327 = vadd.f32 %v84, %v326
    %v328 = vpop.f32.mrb[0].mxu0
    %v329 = vadd.f32 %v88, %v328
    %330 = vmatprep.mubr.f32.mxu0 0.0
    %331 = vmatmul.mubr.f32.gmra.mrb[0].mxu0 %v144
    %v332 = vpop.f32.mrb[0].mxu0
    %v333 = vadd.f32 %v84, %v332
    %v334 = vpop.f32.mrb[0].mxu0
    %v335 = vadd.f32 %v88, %v334
    %336 = vmatprep.mubr.f32.mxu0 0.0
    %337 = vmatmul.mubr.f32.gmra.mrb[0].mxu0 %v147
    %v338 = vpop.f32.mrb[0].mxu0
    %v339 = vadd.f32 %v84, %v338
    %v340 = vpop.f32.mrb[0].mxu0
    %v341 = vadd.f32 %v88, %v340
    %342 = vmatprep.mubr.f32.mxu0 0.0
    %343 = vmatmul.mubr.f32.gmra.mrb[0].mxu0 %v150
    %v344 = vpop.f32.mrb[0].mxu0
    %v345 = vadd.f32 %v84, %v344
    %v346 = vpop.f32.mrb[0].mxu0
    %v347 = vadd.f32 %v88, %v346
    %348 = vmatprep.mubr.f32.mxu0 0.0
    %349 = vmatmul.mubr.f32.gmra.mrb[0].mxu0 %v153
    %v350 = vpop.f32.mrb[0].mxu0
    %v351 = vadd.f32 %v84, %v350
    %v352 = vpop.f32.mrb[0].mxu0
    %v353 = vadd.f32 %v88, %v352
    %354 = vmatprep.mubr.f32.mxu0 0.0
    %355 = vmatmul.mubr.f32.gmra.mrb[0].mxu0 %v156
    %v356 = vpop.f32.mrb[0].mxu0
    %v357 = vadd.f32 %v84, %v356
    %v358 = vpop.f32.mrb[0].mxu0
    %v359 = vadd.f32 %v88, %v358
    %360 = vmatprep.mubr.f32.mxu0 0.0
    %361 = vmatmul.mubr.f32.gmra.mrb[0].mxu0 %v159
    %v362 = vpop.f32.mrb[0].mxu0
    %v363 = vadd.f32 %v84, %v362
    %v364 = vpop.f32.mrb[0].mxu0
    %v365 = vadd.f32 %v88, %v364
    %366 = vmatprep.mubr.f32.mxu0 0.0
    %367 = vmatmul.mubr.f32.gmra.mrb[0].mxu0 %v162
    %v368 = vpop.f32.mrb[0].mxu0
    %v369 = vadd.f32 %v84, %v368
    %v370 = vpop.f32.mrb[0].mxu0
    %v371 = vadd.f32 %v88, %v370
    %372 = vdwg.mxu0
    %vm373 = vcmask 785408
    %374 = vst.msk [vmem:[#allocation2] sm:$0xff] %vm373, %v231
    %375 = vst.msk [vmem:[#allocation2 + $0x8] sm:$0xff] %vm373, %v237
    %376 = vst.msk [vmem:[#allocation2 + $0x10] sm:$0xff] %vm373, %v243
    %383 = vrot.lane.b32.xlu0 %v231, 32
    %v384 = vpop.permute.xlu0 %383
    %385 = vrot.lane.b32.xlu0 %v233, 32
    %v386 = vpop.permute.xlu0 %385
    %387 = vrot.lane.b32.xlu0 %v237, 32
    %v388 = vpop.permute.xlu0 %387
    %389 = vrot.lane.b32.xlu0 %v239, 32
    %v390 = vpop.permute.xlu0 %389
    %391 = vrot.lane.b32.xlu0 %v243, 32
    %v392 = vpop.permute.xlu0 %391
    %393 = vrot.lane.b32.xlu0 %v245, 32
    %v394 = vpop.permute.xlu0 %393
    %v395 = vsel %vm91, %v384, %v386
    %v396 = vsel %vm91, %v388, %v390
    %v397 = vsel %vm91, %v392, %v394
    %401 = vst.msk [vmem:[#allocation3] sm:$0xff] %vm373, %v395
    %402 = vst.msk [vmem:[#allocation3 + $0x8] sm:$0xff] %vm373, %v396
    %403 = vst.msk [vmem:[#allocation3 + $0x10] sm:$0xff] %vm373, %v397
    %s404 = scalar_lea.vmem [#allocation2], 24
    %405 = vst.msk [vmem:[%s404] sm:$0xff] %vm373, %v249
    %406 = vst.msk [vmem:[%s404 + $0x8] sm:$0xff] %vm373, %v255
    %407 = vst.msk [vmem:[%s404 + $0x10] sm:$0xff] %vm373, %v261
    %414 = vrot.lane.b32.xlu0 %v249, 32
    %v415 = vpop.permute.xlu0 %414
    %416 = vrot.lane.b32.xlu0 %v251, 32
    %v417 = vpop.permute.xlu0 %416
    %418 = vrot.lane.b32.xlu0 %v255, 32
    %v419 = vpop.permute.xlu0 %418
    %420 = vrot.lane.b32.xlu0 %v257, 32
    %v421 = vpop.permute.xlu0 %420
    %422 = vrot.lane.b32.xlu0 %v261, 32
    %v423 = vpop.permute.xlu0 %422
    %424 = vrot.lane.b32.xlu0 %v263, 32
    %v425 = vpop.permute.xlu0 %424
    %v426 = vsel %vm91, %v415, %v417
    %v427 = vsel %vm91, %v419, %v421
    %v428 = vsel %vm91, %v423, %v425
    %s432 = scalar_lea.vmem [#allocation3], 24
    %433 = vst.msk [vmem:[%s432] sm:$0xff] %vm373, %v426
    %434 = vst.msk [vmem:[%s432 + $0x8] sm:$0xff] %vm373, %v427
    %435 = vst.msk [vmem:[%s432 + $0x10] sm:$0xff] %vm373, %v428
    %s436 = scalar_lea.vmem [#allocation2], 48
    %437 = vst.msk [vmem:[%s436] sm:$0xff] %vm373, %v267
    %438 = vst.msk [vmem:[%s436 + $0x8] sm:$0xff] %vm373, %v273
    %439 = vst.msk [vmem:[%s436 + $0x10] sm:$0xff] %vm373, %v279
    %446 = vrot.lane.b32.xlu0 %v267, 32
    %v447 = vpop.permute.xlu0 %446
    %448 = vrot.lane.b32.xlu0 %v269, 32
    %v449 = vpop.permute.xlu0 %448
    %450 = vrot.lane.b32.xlu0 %v273, 32
    %v451 = vpop.permute.xlu0 %450
    %452 = vrot.lane.b32.xlu0 %v275, 32
    %v453 = vpop.permute.xlu0 %452
    %454 = vrot.lane.b32.xlu0 %v279, 32
    %v455 = vpop.permute.xlu0 %454
    %456 = vrot.lane.b32.xlu0 %v281, 32
    %v457 = vpop.permute.xlu0 %456
    %v458 = vsel %vm91, %v447, %v449
    %v459 = vsel %vm91, %v451, %v453
    %v460 = vsel %vm91, %v455, %v457
    %s464 = scalar_lea.vmem [#allocation3], 48
    %465 = vst.msk [vmem:[%s464] sm:$0xff] %vm373, %v458
    %466 = vst.msk [vmem:[%s464 + $0x8] sm:$0xff] %vm373, %v459
    %467 = vst.msk [vmem:[%s464 + $0x10] sm:$0xff] %vm373, %v460
    %s468 = scalar_lea.vmem [#allocation2], 72
    %469 = vst.msk [vmem:[%s468] sm:$0xff] %vm373, %v285
    %470 = vst.msk [vmem:[%s468 + $0x8] sm:$0xff] %vm373, %v291
    %471 = vst.msk [vmem:[%s468 + $0x10] sm:$0xff] %vm373, %v297
    %478 = vrot.lane.b32.xlu0 %v285, 32
    %v479 = vpop.permute.xlu0 %478
    %480 = vrot.lane.b32.xlu0 %v287, 32
    %v481 = vpop.permute.xlu0 %480
    %482 = vrot.lane.b32.xlu0 %v291, 32
    %v483 = vpop.permute.xlu0 %482
    %484 = vrot.lane.b32.xlu0 %v293, 32
    %v485 = vpop.permute.xlu0 %484
    %486 = vrot.lane.b32.xlu0 %v297, 32
    %v487 = vpop.permute.xlu0 %486
    %488 = vrot.lane.b32.xlu0 %v299, 32
    %v489 = vpop.permute.xlu0 %488
    %v490 = vsel %vm91, %v479, %v481
    %v491 = vsel %vm91, %v483, %v485
    %v492 = vsel %vm91, %v487, %v489
    %s496 = scalar_lea.vmem [#allocation3], 72
    %497 = vst.msk [vmem:[%s496] sm:$0xff] %vm373, %v490
    %498 = vst.msk [vmem:[%s496 + $0x8] sm:$0xff] %vm373, %v491
    %499 = vst.msk [vmem:[%s496 + $0x10] sm:$0xff] %vm373, %v492
    %s500 = scalar_lea.vmem [#allocation2], 96
    %501 = vst.msk [vmem:[%s500] sm:$0xff] %vm373, %v303
    %502 = vst.msk [vmem:[%s500 + $0x8] sm:$0xff] %vm373, %v309
    %503 = vst.msk [vmem:[%s500 + $0x10] sm:$0xff] %vm373, %v315
    %510 = vrot.lane.b32.xlu0 %v303, 32
    %v511 = vpop.permute.xlu0 %510
    %512 = vrot.lane.b32.xlu0 %v305, 32
    %v513 = vpop.permute.xlu0 %512
    %514 = vrot.lane.b32.xlu0 %v309, 32
    %v515 = vpop.permute.xlu0 %514
    %516 = vrot.lane.b32.xlu0 %v311, 32
    %v517 = vpop.permute.xlu0 %516
    %518 = vrot.lane.b32.xlu0 %v315, 32
    %v519 = vpop.permute.xlu0 %518
    %520 = vrot.lane.b32.xlu0 %v317, 32
    %v521 = vpop.permute.xlu0 %520
    %v522 = vsel %vm91, %v511, %v513
    %v523 = vsel %vm91, %v515, %v517
    %v524 = vsel %vm91, %v519, %v521
    %s528 = scalar_lea.vmem [#allocation3], 96
    %529 = vst.msk [vmem:[%s528] sm:$0xff] %vm373, %v522
    %530 = vst.msk [vmem:[%s528 + $0x8] sm:$0xff] %vm373, %v523
    %531 = vst.msk [vmem:[%s528 + $0x10] sm:$0xff] %vm373, %v524
    %s532 = scalar_lea.vmem [#allocation2], 120
    %533 = vst.msk [vmem:[%s532] sm:$0xff] %vm373, %v321
    %534 = vst.msk [vmem:[%s532 + $0x8] sm:$0xff] %vm373, %v327
    %535 = vst.msk [vmem:[%s532 + $0x10] sm:$0xff] %vm373, %v333
    %542 = vrot.lane.b32.xlu0 %v321, 32
    %v543 = vpop.permute.xlu0 %542
    %544 = vrot.lane.b32.xlu0 %v323, 32
    %v545 = vpop.permute.xlu0 %544
    %546 = vrot.lane.b32.xlu0 %v327, 32
    %v547 = vpop.permute.xlu0 %546
    %548 = vrot.lane.b32.xlu0 %v329, 32
    %v549 = vpop.permute.xlu0 %548
    %550 = vrot.lane.b32.xlu0 %v333, 32
    %v551 = vpop.permute.xlu0 %550
    %552 = vrot.lane.b32.xlu0 %v335, 32
    %v553 = vpop.permute.xlu0 %552
    %v554 = vsel %vm91, %v543, %v545
    %v555 = vsel %vm91, %v547, %v549
    %v556 = vsel %vm91, %v551, %v553
    %s560 = scalar_lea.vmem [#allocation3], 120
    %561 = vst.msk [vmem:[%s560] sm:$0xff] %vm373, %v554
    %562 = vst.msk [vmem:[%s560 + $0x8] sm:$0xff] %vm373, %v555
    %563 = vst.msk [vmem:[%s560 + $0x10] sm:$0xff] %vm373, %v556
    %s564 = scalar_lea.vmem [#allocation2], 144
    %565 = vst.msk [vmem:[%s564] sm:$0xff] %vm373, %v339
    %566 = vst.msk [vmem:[%s564 + $0x8] sm:$0xff] %vm373, %v345
    %567 = vst.msk [vmem:[%s564 + $0x10] sm:$0xff] %vm373, %v351
    %574 = vrot.lane.b32.xlu0 %v339, 32
    %v575 = vpop.permute.xlu0 %574
    %576 = vrot.lane.b32.xlu0 %v341, 32
    %v577 = vpop.permute.xlu0 %576
    %578 = vrot.lane.b32.xlu0 %v345, 32
    %v579 = vpop.permute.xlu0 %578
    %580 = vrot.lane.b32.xlu0 %v347, 32
    %v581 = vpop.permute.xlu0 %580
    %582 = vrot.lane.b32.xlu0 %v351, 32
    %v583 = vpop.permute.xlu0 %582
    %584 = vrot.lane.b32.xlu0 %v353, 32
    %v585 = vpop.permute.xlu0 %584
    %v586 = vsel %vm91, %v575, %v577
    %v587 = vsel %vm91, %v579, %v581
    %v588 = vsel %vm91, %v583, %v585
    %s592 = scalar_lea.vmem [#allocation3], 144
    %593 = vst.msk [vmem:[%s592] sm:$0xff] %vm373, %v586
    %594 = vst.msk [vmem:[%s592 + $0x8] sm:$0xff] %vm373, %v587
    %595 = vst.msk [vmem:[%s592 + $0x10] sm:$0xff] %vm373, %v588
    %s596 = scalar_lea.vmem [#allocation2], 168
    %597 = vst.msk [vmem:[%s596] sm:$0xff] %vm373, %v357
    %598 = vst.msk [vmem:[%s596 + $0x8] sm:$0xff] %vm373, %v363
    %599 = vst.msk [vmem:[%s596 + $0x10] sm:$0xff] %vm373, %v369
    %606 = vrot.lane.b32.xlu0 %v357, 32
    %v607 = vpop.permute.xlu0 %606
    %608 = vrot.lane.b32.xlu0 %v359, 32
    %v609 = vpop.permute.xlu0 %608
    %610 = vrot.lane.b32.xlu0 %v363, 32
    %v611 = vpop.permute.xlu0 %610
    %612 = vrot.lane.b32.xlu0 %v365, 32
    %v613 = vpop.permute.xlu0 %612
    %614 = vrot.lane.b32.xlu0 %v369, 32
    %v615 = vpop.permute.xlu0 %614
    %616 = vrot.lane.b32.xlu0 %v371, 32
    %v617 = vpop.permute.xlu0 %616
    %v618 = vsel %vm91, %v607, %v609
    %v619 = vsel %vm91, %v611, %v613
    %v620 = vsel %vm91, %v615, %v617
    %s624 = scalar_lea.vmem [#allocation3], 168
    %625 = vst.msk [vmem:[%s624] sm:$0xff] %vm373, %v618
    %626 = vst.msk [vmem:[%s624 + $0x8] sm:$0xff] %vm373, %v619
    %627 = vst.msk [vmem:[%s624 + $0x10] sm:$0xff] %vm373, %v620
    %v628 = vld [vmem:[%s4] sm:$0xff]
    %v629 = vld [vmem:[%s4 + $0x8] sm:$0xff]
    %v630 = vld [vmem:[%s4 + $0x10] sm:$0xff]
    %v631 = vld [vmem:[%s4 + $0x18] sm:$0xff]
    %v632 = vld [vmem:[%s6] sm:$0x1]
    %v633 = vld [vmem:[#allocation2] sm:$0xff]
    %v634 = vld [vmem:[#allocation2 + $0x8] sm:$0xff]
    %v635 = vld [vmem:[#allocation2 + $0x10] sm:$0xff]
    %v636 = vld [vmem:[%s1] sm:$0xff]
    %v637 = vld [vmem:[%s1 + $0x8] sm:$0xff]
    %v638 = vld [vmem:[%s1 + $0x10] sm:$0xff]
    %v640 = vlaneseq
    %v641 = vshrl.u32 %v640, 7
    %v642 = vsub.s32 0, %v641
    %v643 = vrot.slane %v632, %v642
    %v646 = vsel %vm91, 0.0, 0
    %648 = vmatprep.subr.mxu0 0.0
    %649 = vmatpush1.msra.mxu0 %v628
    %650 = vmatprep.subr.mxu0 0.0
    %651 = vmatpush1.msra.mxu0 %v629
    %652 = vmatprep.subr.mxu0 0.0
    %653 = vmatpush1.msra.mxu0 %v630
    %654 = vmatprep.subr.mxu0 0.0
    %655 = vmatpush1.msra.mxu0 %v631
    %656 = vmatprep.subr.mxu0 0.0
    %657 = vmatpush1.msra.mxu0 0.0
    %658 = vmatprep.subr.mxu0 0.0
    %659 = vmatpush1.msra.mxu0 0.0
    %660 = vmatprep.subr.mxu0 0.0
    %661 = vmatpush1.msra.mxu0 0.0
    %662 = vmatprep.subr.mxu0 0.0
    %663 = vmatpush1.msra.mxu0 0.0
    %664 = vmatprep.subr.mxu0 0.0
    %665 = vmatpush1.msra.mxu0 0.0
    %666 = vmatprep.subr.mxu0 0.0
    %667 = vmatpush1.msra.mxu0 0.0
    %668 = vmatprep.subr.mxu0 0.0
    %669 = vmatpush1.msra.mxu0 0.0
    %670 = vmatprep.subr.mxu0 0.0
    %671 = vmatpush1.msra.mxu0 0.0
    %672 = vmatprep.subr.mxu0 0.0
    %673 = vmatpush1.msra.mxu0 0.0
    %674 = vmatprep.subr.mxu0 0.0
    %675 = vmatpush1.msra.mxu0 0.0
    %676 = vmatprep.subr.mxu0 0.0
    %677 = vmatpush1.msra.mxu0 0.0
    %678 = vmatprep.subr.mxu0 0.0
    %679 = vmatpush1.msra.mxu0 0.0
    %680 = vmatprep.subr.mxu0 0.0
    %681 = vmatpush1.msra.mxu0 0.0
    %682 = vmatprep.subr.mxu0 0.0
    %683 = vmatpush1.msra.mxu0 0.0
    %684 = vmatprep.subr.mxu0 0.0
    %685 = vmatpush1.msra.mxu0 0.0
    %686 = vmatprep.subr.mxu0 0.0
    %687 = vmatpush1.msra.mxu0 0.0
    %688 = vmatprep.subr.mxu0 0.0
    %689 = vmatpush1.msra.mxu0 0.0
    %690 = vmatprep.subr.mxu0 0.0
    %691 = vmatpush1.msra.mxu0 0.0
    %692 = vmatprep.subr.mxu0 0.0
    %693 = vmatpush1.msra.mxu0 0.0
    %694 = vmatprep.subr.mxu0 0.0
    %695 = vmatpush1.msra.mxu0 0.0
    %696 = vmatprep.subr.mxu0 0.0
    %697 = vmatpush1.msra.mxu0 0.0
    %698 = vmatprep.subr.mxu0 0.0
    %699 = vmatpush1.msra.mxu0 0.0
    %700 = vmatprep.subr.mxu0 0.0
    %701 = vmatpush1.msra.mxu0 0.0
    %702 = vmatprep.subr.mxu0 0.0
    %703 = vmatpush1.msra.mxu0 0.0
    %704 = vmatprep.subr.mxu0 0.0
    %705 = vmatpush1.msra.mxu0 0.0
    %706 = vmatprep.subr.mxu0 0.0
    %707 = vmatpush1.msra.mxu0 0.0
    %708 = vmatprep.subr.mxu0 0.0
    %709 = vmatpush1.msra.mxu0 0.0
    %710 = vmatprep.subr.mxu0 0.0
    %711 = vmatpush1.msra.mxu0 0.0
    %712 = vmatprep.mubr.f32.mxu0 0.0
    %713 = vmatmul.mubr.f32.gmra.mrb[0].mxu0 %v646
    %v714 = vpop.f32.mrb[0].mxu0
    %v715 = vadd.f32 %v643, %v714
    %v716 = vpop.f32.mrb[0].mxu0
    %717 = vmatprep.mubr.f32.mxu0 0.0
    %718 = vmatmul.mubr.f32.gmra.mrb[0].mxu0 %v646
    %v719 = vpop.f32.mrb[0].mxu0
    %v720 = vadd.f32 %v643, %v719
    %v721 = vpop.f32.mrb[0].mxu0
    %722 = vmatprep.mubr.f32.mxu0 0.0
    %723 = vmatmul.mubr.f32.gmra.mrb[0].mxu0 %v646
    %v724 = vpop.f32.mrb[0].mxu0
    %v725 = vadd.f32 %v643, %v724
    %v726 = vpop.f32.mrb[0].mxu0
    %727 = vdwg.mxu0
    %v728 = vadd.f32 %v633, %v715
    %v729 = vadd.f32 %v634, %v720
    %v730 = vadd.f32 %v635, %v725
    %v731 = vxor.u32 %v728, 2147483648
    %v732 = vxor.u32 %v729, 2147483648
    %v733 = vxor.u32 %v730, 2147483648
    %v734 = vmul.f32 %v731, 1.442695
    %v735 = vpow.pop %v734
    %v736 = vmul.f32 %v732, 1.442695
    %v737 = vpow.pop %v736
    %v738 = vmul.f32 %v733, 1.442695
    %v739 = vpow.pop %v738
    %v740 = vadd.f32 %v735, 1.0
    %v741 = vadd.f32 %v737, 1.0
    %v742 = vadd.f32 %v739, 1.0
    %v743 = vrcp.pop %v740
    %v744 = vmul.f32 1.0, %v743
    %v745 = vrcp.pop %v741
    %v746 = vmul.f32 1.0, %v745
    %v747 = vrcp.pop %v742
    %v748 = vmul.f32 1.0, %v747
    %752 = vrot.lane.b32.xlu0 %v715, 64
    %v753 = vpop.permute.xlu0 %752
    %754 = vrot.lane.b32.xlu0 %v720, 64
    %v755 = vpop.permute.xlu0 %754
    %756 = vrot.lane.b32.xlu0 %v725, 64
    %v757 = vpop.permute.xlu0 %756
    %v761 = vmul.f32 %v744, %v753
    %v762 = vmul.f32 %v746, %v755
    %v763 = vmul.f32 %v748, %v757
    %767 = vrot.lane.b32.xlu0 %v761, 64
    %v768 = vpop.permute.xlu0 %767
    %769 = vrot.lane.b32.xlu0 %v762, 64
    %v770 = vpop.permute.xlu0 %769
    %771 = vrot.lane.b32.xlu0 %v763, 64
    %v772 = vpop.permute.xlu0 %771
    %v776 = vadd.f32 %v633, %v768
    %v777 = vadd.f32 %v634, %v770
    %v778 = vadd.f32 %v635, %v772
    %v779 = vtanh.pop %v776
    %v780 = vtanh.pop %v777
    %v781 = vtanh.pop %v778
    %v782 = vsub.f32 1.0, %v744
    %v783 = vsub.f32 1.0, %v746
    %v784 = vsub.f32 1.0, %v748
    %788 = vrot.lane.b32.xlu0 %v779, 96
    %v789 = vpop.permute.xlu0 %788
    %790 = vrot.lane.b32.xlu0 %v780, 96
    %v791 = vpop.permute.xlu0 %790
    %792 = vrot.lane.b32.xlu0 %v781, 96
    %v793 = vpop.permute.xlu0 %792
    %v797 = vmul.f32 %v782, %v789
    %v798 = vmul.f32 %v783, %v791
    %v799 = vmul.f32 %v784, %v793
    %v800 = vmul.f32 %v744, 0.0
    %v801 = vmul.f32 %v746, 0.0
    %v802 = vmul.f32 %v748, 0.0
    %v803 = vadd.f32 %v797, %v800
    %v804 = vadd.f32 %v798, %v801
    %v805 = vadd.f32 %v799, %v802
    %vm806 = vcmp.gt.f32.partialorder %v636, 0.0
    %vm807 = vcmp.gt.f32.partialorder %v637, 0.0
    %vm808 = vcmp.gt.f32.partialorder %v638, 0.0
    %v809 = vsel %vm806, 1, 0
    %v810 = vsel %vm807, 1, 0
    %v811 = vsel %vm808, 1, 0
    %812 = vset.pattern.permute.xlu0 0
    %813 = vperm.xlu0 %812, %v809
    %v814 = vpop.permute.xlu0 %813
    %815 = vset.pattern.permute.xlu0 0
    %816 = vperm.xlu0 %815, %v810
    %v817 = vpop.permute.xlu0 %816
    %818 = vset.pattern.permute.xlu0 0
    %819 = vperm.xlu0 %818, %v811
    %v820 = vpop.permute.xlu0 %819
    %vm821 = vcmp.eq.s32.totalorder %v814, 1
    %vm822 = vcmp.eq.s32.totalorder %v817, 1
    %vm823 = vcmp.eq.s32.totalorder %v820, 1
    %v824 = vsel %vm821, %v803, 0.0
    %v825 = vsel %vm822, %v804, 0.0
    %v826 = vsel %vm823, %v805, 0.0
    %828 = vset.pattern.permute.xlu0 0
    %829 = vperm.xlu0 %828, %v636
    %v830 = vpop.permute.xlu0 %829
    %833 = vset.pattern.permute.xlu0 0
    %834 = vperm.xlu0 %833, %v637
    %v835 = vpop.permute.xlu0 %834
    %838 = vset.pattern.permute.xlu0 0
    %839 = vperm.xlu0 %838, %v638
    %v840 = vpop.permute.xlu0 %839
    %v842 = vmul.f32 %v824, %v830
    %v843 = vmul.f32 %v825, %v835
    %v844 = vmul.f32 %v826, %v840
    %848 = vrot.lane.b32.xlu0 %v842, 96
    %v849 = vpop.permute.xlu0 %848
    %850 = vrot.lane.b32.xlu0 %v843, 96
    %v851 = vpop.permute.xlu0 %850
    %852 = vrot.lane.b32.xlu0 %v844, 96
    %v853 = vpop.permute.xlu0 %852
    %857 = vst.msk [vmem:[#allocation4] sm:$0xff] %vm91, %v849
    %858 = vst.msk [vmem:[#allocation4 + $0x8] sm:$0xff] %vm91, %v851
    %859 = vst.msk [vmem:[#allocation4 + $0x10] sm:$0xff] %vm91, %v853
    %v860 = vld [vmem:[%s404] sm:$0xff]
    %v861 = vld [vmem:[%s404 + $0x8] sm:$0xff]
    %v862 = vld [vmem:[%s404 + $0x10] sm:$0xff]
    %s863 = scalar_lea.vmem %s1, 24
    %v864 = vld [vmem:[%s863] sm:$0xff]
    %v865 = vld [vmem:[%s863 + $0x8] sm:$0xff]
    %v866 = vld [vmem:[%s863 + $0x10] sm:$0xff]
    %870 = vrot.lane.b32.xlu0 %v824, 96
    %v871 = vpop.permute.xlu0 %870
    %872 = vrot.lane.b32.xlu0 %v825, 96
    %v873 = vpop.permute.xlu0 %872
    %874 = vrot.lane.b32.xlu0 %v826, 96
    %v875 = vpop.permute.xlu0 %874
    %v876 = vsel %vm91, %v871, 0
    %v878 = vsel %vm91, %v873, 0
    %v880 = vsel %vm91, %v875, 0
    %882 = vmatprep.subr.mxu0 0.0
    %883 = vmatpush1.msra.mxu0 %v628
    %884 = vmatprep.subr.mxu0 0.0
    %885 = vmatpush1.msra.mxu0 %v629
    %886 = vmatprep.subr.mxu0 0.0
    %887 = vmatpush1.msra.mxu0 %v630
    %888 = vmatprep.subr.mxu0 0.0
    %889 = vmatpush1.msra.mxu0 %v631
    %890 = vmatprep.subr.mxu0 0.0
    %891 = vmatpush1.msra.mxu0 0.0
    %892 = vmatprep.subr.mxu0 0.0
    %893 = vmatpush1.msra.mxu0 0.0
    %894 = vmatprep.subr.mxu0 0.0
    %895 = vmatpush1.msra.mxu0 0.0
    %896 = vmatprep.subr.mxu0 0.0
    %897 = vmatpush1.msra.mxu0 0.0
    %898 = vmatprep.subr.mxu0 0.0
    %899 = vmatpush1.msra.mxu0 0.0
    %900 = vmatprep.subr.mxu0 0.0
    %901 = vmatpush1.msra.mxu0 0.0
    %902 = vmatprep.subr.mxu0 0.0
    %903 = vmatpush1.msra.mxu0 0.0
    %904 = vmatprep.subr.mxu0 0.0
    %905 = vmatpush1.msra.mxu0 0.0
    %906 = vmatprep.subr.mxu0 0.0
    %907 = vmatpush1.msra.mxu0 0.0
    %908 = vmatprep.subr.mxu0 0.0
    %909 = vmatpush1.msra.mxu0 0.0
    %910 = vmatprep.subr.mxu0 0.0
    %911 = vmatpush1.msra.mxu0 0.0
    %912 = vmatprep.subr.mxu0 0.0
    %913 = vmatpush1.msra.mxu0 0.0
    %914 = vmatprep.subr.mxu0 0.0
    %915 = vmatpush1.msra.mxu0 0.0
    %916 = vmatprep.subr.mxu0 0.0
    %917 = vmatpush1.msra.mxu0 0.0
    %918 = vmatprep.subr.mxu0 0.0
    %919 = vmatpush1.msra.mxu0 0.0
    %920 = vmatprep.subr.mxu0 0.0
    %921 = vmatpush1.msra.mxu0 0.0
    %922 = vmatprep.subr.mxu0 0.0
    %923 = vmatpush1.msra.mxu0 0.0
    %924 = vmatprep.subr.mxu0 0.0
    %925 = vmatpush1.msra.mxu0 0.0
    %926 = vmatprep.subr.mxu0 0.0
    %927 = vmatpush1.msra.mxu0 0.0
    %928 = vmatprep.subr.mxu0 0.0
    %929 = vmatpush1.msra.mxu0 0.0
    %930 = vmatprep.subr.mxu0 0.0
    %931 = vmatpush1.msra.mxu0 0.0
    %932 = vmatprep.subr.mxu0 0.0
    %933 = vmatpush1.msra.mxu0 0.0
    %934 = vmatprep.subr.mxu0 0.0
    %935 = vmatpush1.msra.mxu0 0.0
    %936 = vmatprep.subr.mxu0 0.0
    %937 = vmatpush1.msra.mxu0 0.0
    %938 = vmatprep.subr.mxu0 0.0
    %939 = vmatpush1.msra.mxu0 0.0
    %940 = vmatprep.subr.mxu0 0.0
    %941 = vmatpush1.msra.mxu0 0.0
    %942 = vmatprep.subr.mxu0 0.0
    %943 = vmatpush1.msra.mxu0 0.0
    %944 = vmatprep.subr.mxu0 0.0
    %945 = vmatpush1.msra.mxu0 0.0
    %946 = vmatprep.mubr.f32.mxu0 0.0
    %947 = vmatmul.mubr.f32.gmra.mrb[0].mxu0 %v876
    %v948 = vpop.f32.mrb[0].mxu0
    %v949 = vadd.f32 %v643, %v948
    %v950 = vpop.f32.mrb[0].mxu0
    %951 = vmatprep.mubr.f32.mxu0 0.0
    %952 = vmatmul.mubr.f32.gmra.mrb[0].mxu0 %v878
    %v953 = vpop.f32.mrb[0].mxu0
    %v954 = vadd.f32 %v643, %v953
    %v955 = vpop.f32.mrb[0].mxu0
    %956 = vmatprep.mubr.f32.mxu0 0.0
    %957 = vmatmul.mubr.f32.gmra.mrb[0].mxu0 %v880
    %v958 = vpop.f32.mrb[0].mxu0
    %v959 = vadd.f32 %v643, %v958
    %v960 = vpop.f32.mrb[0].mxu0
    %961 = vdwg.mxu0
    %v962 = vadd.f32 %v860, %v949
    %v963 = vadd.f32 %v861, %v954
    %v964 = vadd.f32 %v862, %v959
    %v965 = vxor.u32 %v962, 2147483648
    %v966 = vxor.u32 %v963, 2147483648
    %v967 = vxor.u32 %v964, 2147483648
    %v968 = vmul.f32 %v965, 1.442695
    %v969 = vpow.pop %v968
    %v970 = vmul.f32 %v966, 1.442695
    %v971 = vpow.pop %v970
    %v972 = vmul.f32 %v967, 1.442695
    %v973 = vpow.pop %v972
    %v974 = vadd.f32 %v969, 1.0
    %v975 = vadd.f32 %v971, 1.0
    %v976 = vadd.f32 %v973, 1.0
    %v977 = vrcp.pop %v974
    %v978 = vmul.f32 1.0, %v977
    %v979 = vrcp.pop %v975
    %v980 = vmul.f32 1.0, %v979
    %v981 = vrcp.pop %v976
    %v982 = vmul.f32 1.0, %v981
    %986 = vrot.lane.b32.xlu0 %v949, 64
    %v987 = vpop.permute.xlu0 %986
    %988 = vrot.lane.b32.xlu0 %v954, 64
    %v989 = vpop.permute.xlu0 %988
    %990 = vrot.lane.b32.xlu0 %v959, 64
    %v991 = vpop.permute.xlu0 %990
    %v995 = vmul.f32 %v978, %v987
    %v996 = vmul.f32 %v980, %v989
    %v997 = vmul.f32 %v982, %v991
    %1001 = vrot.lane.b32.xlu0 %v995, 64
    %v1002 = vpop.permute.xlu0 %1001
    %1003 = vrot.lane.b32.xlu0 %v996, 64
    %v1004 = vpop.permute.xlu0 %1003
    %1005 = vrot.lane.b32.xlu0 %v997, 64
    %v1006 = vpop.permute.xlu0 %1005
    %v1010 = vadd.f32 %v860, %v1002
    %v1011 = vadd.f32 %v861, %v1004
    %v1012 = vadd.f32 %v862, %v1006
    %v1013 = vtanh.pop %v1010
    %v1014 = vtanh.pop %v1011
    %v1015 = vtanh.pop %v1012
    %v1016 = vsub.f32 1.0, %v978
    %v1017 = vsub.f32 1.0, %v980
    %v1018 = vsub.f32 1.0, %v982
    %1022 = vrot.lane.b32.xlu0 %v1013, 96
    %v1023 = vpop.permute.xlu0 %1022
    %1024 = vrot.lane.b32.xlu0 %v1014, 96
    %v1025 = vpop.permute.xlu0 %1024
    %1026 = vrot.lane.b32.xlu0 %v1015, 96
    %v1027 = vpop.permute.xlu0 %1026
    %v1031 = vmul.f32 %v1016, %v1023
    %v1032 = vmul.f32 %v1017, %v1025
    %v1033 = vmul.f32 %v1018, %v1027
    %v1034 = vmul.f32 %v978, %v824
    %v1035 = vmul.f32 %v980, %v825
    %v1036 = vmul.f32 %v982, %v826
    %v1037 = vadd.f32 %v1031, %v1034
    %v1038 = vadd.f32 %v1032, %v1035
    %v1039 = vadd.f32 %v1033, %v1036
    %vm1040 = vcmp.gt.f32.partialorder %v864, 0.0
    %vm1041 = vcmp.gt.f32.partialorder %v865, 0.0
    %vm1042 = vcmp.gt.f32.partialorder %v866, 0.0
    %v1043 = vsel %vm1040, 1, 0
    %v1044 = vsel %vm1041, 1, 0
    %v1045 = vsel %vm1042, 1, 0
    %1046 = vset.pattern.permute.xlu0 0
    %1047 = vperm.xlu0 %1046, %v1043
    %v1048 = vpop.permute.xlu0 %1047
    %1049 = vset.pattern.permute.xlu0 0
    %1050 = vperm.xlu0 %1049, %v1044
    %v1051 = vpop.permute.xlu0 %1050
    %1052 = vset.pattern.permute.xlu0 0
    %1053 = vperm.xlu0 %1052, %v1045
    %v1054 = vpop.permute.xlu0 %1053
    %vm1055 = vcmp.eq.s32.totalorder %v1048, 1
    %vm1056 = vcmp.eq.s32.totalorder %v1051, 1
    %vm1057 = vcmp.eq.s32.totalorder %v1054, 1
    %v1058 = vsel %vm1055, %v1037, %v824
    %v1059 = vsel %vm1056, %v1038, %v825
    %v1060 = vsel %vm1057, %v1039, %v826
    %1062 = vset.pattern.permute.xlu0 0
    %1063 = vperm.xlu0 %1062, %v864
    %v1064 = vpop.permute.xlu0 %1063
    %1067 = vset.pattern.permute.xlu0 0
    %1068 = vperm.xlu0 %1067, %v865
    %v1069 = vpop.permute.xlu0 %1068
    %1072 = vset.pattern.permute.xlu0 0
    %1073 = vperm.xlu0 %1072, %v866
    %v1074 = vpop.permute.xlu0 %1073
    %v1076 = vmul.f32 %v1058, %v1064
    %v1077 = vmul.f32 %v1059, %v1069
    %v1078 = vmul.f32 %v1060, %v1074
    %1082 = vrot.lane.b32.xlu0 %v1076, 96
    %v1083 = vpop.permute.xlu0 %1082
    %1084 = vrot.lane.b32.xlu0 %v1077, 96
    %v1085 = vpop.permute.xlu0 %1084
    %1086 = vrot.lane.b32.xlu0 %v1078, 96
    %v1087 = vpop.permute.xlu0 %1086
    %s1091 = scalar_lea.vmem [#allocation4], 24
    %1092 = vst.msk [vmem:[%s1091] sm:$0xff] %vm91, %v1083
    %1093 = vst.msk [vmem:[%s1091 + $0x8] sm:$0xff] %vm91, %v1085
    %1094 = vst.msk [vmem:[%s1091 + $0x10] sm:$0xff] %vm91, %v1087
    %v1095 = vld [vmem:[%s436] sm:$0xff]
    %v1096 = vld [vmem:[%s436 + $0x8] sm:$0xff]
    %v1097 = vld [vmem:[%s436 + $0x10] sm:$0xff]
    %s1098 = scalar_lea.vmem %s1, 48
    %v1099 = vld [vmem:[%s1098] sm:$0xff]
    %v1100 = vld [vmem:[%s1098 + $0x8] sm:$0xff]
    %v1101 = vld [vmem:[%s1098 + $0x10] sm:$0xff]
    %1105 = vrot.lane.b32.xlu0 %v1058, 96
    %v1106 = vpop.permute.xlu0 %1105
    %1107 = vrot.lane.b32.xlu0 %v1059, 96
    %v1108 = vpop.permute.xlu0 %1107
    %1109 = vrot.lane.b32.xlu0 %v1060, 96
    %v1110 = vpop.permute.xlu0 %1109
    %v1111 = vsel %vm91, %v1106, 0
    %v1113 = vsel %vm91, %v1108, 0
    %v1115 = vsel %vm91, %v1110, 0
    %1117 = vmatprep.subr.mxu0 0.0
    %1118 = vmatpush1.msra.mxu0 %v628
    %1119 = vmatprep.subr.mxu0 0.0
    %1120 = vmatpush1.msra.mxu0 %v629
    %1121 = vmatprep.subr.mxu0 0.0
    %1122 = vmatpush1.msra.mxu0 %v630
    %1123 = vmatprep.subr.mxu0 0.0
    %1124 = vmatpush1.msra.mxu0 %v631
    %1125 = vmatprep.subr.mxu0 0.0
    %1126 = vmatpush1.msra.mxu0 0.0
    %1127 = vmatprep.subr.mxu0 0.0
    %1128 = vmatpush1.msra.mxu0 0.0
    %1129 = vmatprep.subr.mxu0 0.0
    %1130 = vmatpush1.msra.mxu0 0.0
    %1131 = vmatprep.subr.mxu0 0.0
    %1132 = vmatpush1.msra.mxu0 0.0
    %1133 = vmatprep.subr.mxu0 0.0
    %1134 = vmatpush1.msra.mxu0 0.0
    %1135 = vmatprep.subr.mxu0 0.0
    %1136 = vmatpush1.msra.mxu0 0.0
    %1137 = vmatprep.subr.mxu0 0.0
    %1138 = vmatpush1.msra.mxu0 0.0
    %1139 = vmatprep.subr.mxu0 0.0
    %1140 = vmatpush1.msra.mxu0 0.0
    %1141 = vmatprep.subr.mxu0 0.0
    %1142 = vmatpush1.msra.mxu0 0.0
    %1143 = vmatprep.subr.mxu0 0.0
    %1144 = vmatpush1.msra.mxu0 0.0
    %1145 = vmatprep.subr.mxu0 0.0
    %1146 = vmatpush1.msra.mxu0 0.0
    %1147 = vmatprep.subr.mxu0 0.0
    %1148 = vmatpush1.msra.mxu0 0.0
    %1149 = vmatprep.subr.mxu0 0.0
    %1150 = vmatpush1.msra.mxu0 0.0
    %1151 = vmatprep.subr.mxu0 0.0
    %1152 = vmatpush1.msra.mxu0 0.0
    %1153 = vmatprep.subr.mxu0 0.0
    %1154 = vmatpush1.msra.mxu0 0.0
    %1155 = vmatprep.subr.mxu0 0.0
    %1156 = vmatpush1.msra.mxu0 0.0
    %1157 = vmatprep.subr.mxu0 0.0
    %1158 = vmatpush1.msra.mxu0 0.0
    %1159 = vmatprep.subr.mxu0 0.0
    %1160 = vmatpush1.msra.mxu0 0.0
    %1161 = vmatprep.subr.mxu0 0.0
    %1162 = vmatpush1.msra.mxu0 0.0
    %1163 = vmatprep.subr.mxu0 0.0
    %1164 = vmatpush1.msra.mxu0 0.0
    %1165 = vmatprep.subr.mxu0 0.0
    %1166 = vmatpush1.msra.mxu0 0.0
    %1167 = vmatprep.subr.mxu0 0.0
    %1168 = vmatpush1.msra.mxu0 0.0
    %1169 = vmatprep.subr.mxu0 0.0
    %1170 = vmatpush1.msra.mxu0 0.0
    %1171 = vmatprep.subr.mxu0 0.0
    %1172 = vmatpush1.msra.mxu0 0.0
    %1173 = vmatprep.subr.mxu0 0.0
    %1174 = vmatpush1.msra.mxu0 0.0
    %1175 = vmatprep.subr.mxu0 0.0
    %1176 = vmatpush1.msra.mxu0 0.0
    %1177 = vmatprep.subr.mxu0 0.0
    %1178 = vmatpush1.msra.mxu0 0.0
    %1179 = vmatprep.subr.mxu0 0.0
    %1180 = vmatpush1.msra.mxu0 0.0
    %1181 = vmatprep.mubr.f32.mxu0 0.0
    %1182 = vmatmul.mubr.f32.gmra.mrb[0].mxu0 %v1111
    %v1183 = vpop.f32.mrb[0].mxu0
    %v1184 = vadd.f32 %v643, %v1183
    %v1185 = vpop.f32.mrb[0].mxu0
    %1186 = vmatprep.mubr.f32.mxu0 0.0
    %1187 = vmatmul.mubr.f32.gmra.mrb[0].mxu0 %v1113
    %v1188 = vpop.f32.mrb[0].mxu0
    %v1189 = vadd.f32 %v643, %v1188
    %v1190 = vpop.f32.mrb[0].mxu0
    %1191 = vmatprep.mubr.f32.mxu0 0.0
    %1192 = vmatmul.mubr.f32.gmra.mrb[0].mxu0 %v1115
    %v1193 = vpop.f32.mrb[0].mxu0
    %v1194 = vadd.f32 %v643, %v1193
    %v1195 = vpop.f32.mrb[0].mxu0
    %1196 = vdwg.mxu0
    %v1197 = vadd.f32 %v1095, %v1184
    %v1198 = vadd.f32 %v1096, %v1189
    %v1199 = vadd.f32 %v1097, %v1194
    %v1200 = vxor.u32 %v1197, 2147483648
    %v1201 = vxor.u32 %v1198, 2147483648
    %v1202 = vxor.u32 %v1199, 2147483648
    %v1203 = vmul.f32 %v1200, 1.442695
    %v1204 = vpow.pop %v1203
    %v1205 = vmul.f32 %v1201, 1.442695
    %v1206 = vpow.pop %v1205
    %v1207 = vmul.f32 %v1202, 1.442695
    %v1208 = vpow.pop %v1207
    %v1209 = vadd.f32 %v1204, 1.0
    %v1210 = vadd.f32 %v1206, 1.0
    %v1211 = vadd.f32 %v1208, 1.0
    %v1212 = vrcp.pop %v1209
    %v1213 = vmul.f32 1.0, %v1212
    %v1214 = vrcp.pop %v1210
    %v1215 = vmul.f32 1.0, %v1214
    %v1216 = vrcp.pop %v1211
    %v1217 = vmul.f32 1.0, %v1216
    %1221 = vrot.lane.b32.xlu0 %v1184, 64
    %v1222 = vpop.permute.xlu0 %1221
    %1223 = vrot.lane.b32.xlu0 %v1189, 64
    %v1224 = vpop.permute.xlu0 %1223
    %1225 = vrot.lane.b32.xlu0 %v1194, 64
    %v1226 = vpop.permute.xlu0 %1225
    %v1230 = vmul.f32 %v1213, %v1222
    %v1231 = vmul.f32 %v1215, %v1224
    %v1232 = vmul.f32 %v1217, %v1226
    %1236 = vrot.lane.b32.xlu0 %v1230, 64
    %v1237 = vpop.permute.xlu0 %1236
    %1238 = vrot.lane.b32.xlu0 %v1231, 64
    %v1239 = vpop.permute.xlu0 %1238
    %1240 = vrot.lane.b32.xlu0 %v1232, 64
    %v1241 = vpop.permute.xlu0 %1240
    %v1245 = vadd.f32 %v1095, %v1237
    %v1246 = vadd.f32 %v1096, %v1239
    %v1247 = vadd.f32 %v1097, %v1241
    %v1248 = vtanh.pop %v1245
    %v1249 = vtanh.pop %v1246
    %v1250 = vtanh.pop %v1247
    %v1251 = vsub.f32 1.0, %v1213
    %v1252 = vsub.f32 1.0, %v1215
    %v1253 = vsub.f32 1.0, %v1217
    %1257 = vrot.lane.b32.xlu0 %v1248, 96
    %v1258 = vpop.permute.xlu0 %1257
    %1259 = vrot.lane.b32.xlu0 %v1249, 96
    %v1260 = vpop.permute.xlu0 %1259
    %1261 = vrot.lane.b32.xlu0 %v1250, 96
    %v1262 = vpop.permute.xlu0 %1261
    %v1266 = vmul.f32 %v1251, %v1258
    %v1267 = vmul.f32 %v1252, %v1260
    %v1268 = vmul.f32 %v1253, %v1262
    %v1269 = vmul.f32 %v1213, %v1058
    %v1270 = vmul.f32 %v1215, %v1059
    %v1271 = vmul.f32 %v1217, %v1060
    %v1272 = vadd.f32 %v1266, %v1269
    %v1273 = vadd.f32 %v1267, %v1270
    %v1274 = vadd.f32 %v1268, %v1271
    %vm1275 = vcmp.gt.f32.partialorder %v1099, 0.0
    %vm1276 = vcmp.gt.f32.partialorder %v1100, 0.0
    %vm1277 = vcmp.gt.f32.partialorder %v1101, 0.0
    %v1278 = vsel %vm1275, 1, 0
    %v1279 = vsel %vm1276, 1, 0
    %v1280 = vsel %vm1277, 1, 0
    %1281 = vset.pattern.permute.xlu0 0
    %1282 = vperm.xlu0 %1281, %v1278
    %v1283 = vpop.permute.xlu0 %1282
    %1284 = vset.pattern.permute.xlu0 0
    %1285 = vperm.xlu0 %1284, %v1279
    %v1286 = vpop.permute.xlu0 %1285
    %1287 = vset.pattern.permute.xlu0 0
    %1288 = vperm.xlu0 %1287, %v1280
    %v1289 = vpop.permute.xlu0 %1288
    %vm1290 = vcmp.eq.s32.totalorder %v1283, 1
    %vm1291 = vcmp.eq.s32.totalorder %v1286, 1
    %vm1292 = vcmp.eq.s32.totalorder %v1289, 1
    %v1293 = vsel %vm1290, %v1272, %v1058
    %v1294 = vsel %vm1291, %v1273, %v1059
    %v1295 = vsel %vm1292, %v1274, %v1060
    %1297 = vset.pattern.permute.xlu0 0
    %1298 = vperm.xlu0 %1297, %v1099
    %v1299 = vpop.permute.xlu0 %1298
    %1302 = vset.pattern.permute.xlu0 0
    %1303 = vperm.xlu0 %1302, %v1100
    %v1304 = vpop.permute.xlu0 %1303
    %1307 = vset.pattern.permute.xlu0 0
    %1308 = vperm.xlu0 %1307, %v1101
    %v1309 = vpop.permute.xlu0 %1308
    %v1311 = vmul.f32 %v1293, %v1299
    %v1312 = vmul.f32 %v1294, %v1304
    %v1313 = vmul.f32 %v1295, %v1309
    %1317 = vrot.lane.b32.xlu0 %v1311, 96
    %v1318 = vpop.permute.xlu0 %1317
    %1319 = vrot.lane.b32.xlu0 %v1312, 96
    %v1320 = vpop.permute.xlu0 %1319
    %1321 = vrot.lane.b32.xlu0 %v1313, 96
    %v1322 = vpop.permute.xlu0 %1321
    %s1326 = scalar_lea.vmem [#allocation4], 48
    %1327 = vst.msk [vmem:[%s1326] sm:$0xff] %vm91, %v1318
    %1328 = vst.msk [vmem:[%s1326 + $0x8] sm:$0xff] %vm91, %v1320
    %1329 = vst.msk [vmem:[%s1326 + $0x10] sm:$0xff] %vm91, %v1322
    %v1330 = vld [vmem:[%s468] sm:$0xff]
    %v1331 = vld [vmem:[%s468 + $0x8] sm:$0xff]
    %v1332 = vld [vmem:[%s468 + $0x10] sm:$0xff]
    %s1333 = scalar_lea.vmem %s1, 72
    %v1334 = vld [vmem:[%s1333] sm:$0xff]
    %v1335 = vld [vmem:[%s1333 + $0x8] sm:$0xff]
    %v1336 = vld [vmem:[%s1333 + $0x10] sm:$0xff]
    %1340 = vrot.lane.b32.xlu0 %v1293, 96
    %v1341 = vpop.permute.xlu0 %1340
    %1342 = vrot.lane.b32.xlu0 %v1294, 96
    %v1343 = vpop.permute.xlu0 %1342
    %1344 = vrot.lane.b32.xlu0 %v1295, 96
    %v1345 = vpop.permute.xlu0 %1344
    %v1346 = vsel %vm91, %v1341, 0
    %v1348 = vsel %vm91, %v1343, 0
    %v1350 = vsel %vm91, %v1345, 0
    %1352 = vmatprep.subr.mxu0 0.0
    %1353 = vmatpush1.msra.mxu0 %v628
    %1354 = vmatprep.subr.mxu0 0.0
    %1355 = vmatpush1.msra.mxu0 %v629
    %1356 = vmatprep.subr.mxu0 0.0
    %1357 = vmatpush1.msra.mxu0 %v630
    %1358 = vmatprep.subr.mxu0 0.0
    %1359 = vmatpush1.msra.mxu0 %v631
    %1360 = vmatprep.subr.mxu0 0.0
    %1361 = vmatpush1.msra.mxu0 0.0
    %1362 = vmatprep.subr.mxu0 0.0
    %1363 = vmatpush1.msra.mxu0 0.0
    %1364 = vmatprep.subr.mxu0 0.0
    %1365 = vmatpush1.msra.mxu0 0.0
    %1366 = vmatprep.subr.mxu0 0.0
    %1367 = vmatpush1.msra.mxu0 0.0
    %1368 = vmatprep.subr.mxu0 0.0
    %1369 = vmatpush1.msra.mxu0 0.0
    %1370 = vmatprep.subr.mxu0 0.0
    %1371 = vmatpush1.msra.mxu0 0.0
    %1372 = vmatprep.subr.mxu0 0.0
    %1373 = vmatpush1.msra.mxu0 0.0
    %1374 = vmatprep.subr.mxu0 0.0
    %1375 = vmatpush1.msra.mxu0 0.0
    %1376 = vmatprep.subr.mxu0 0.0
    %1377 = vmatpush1.msra.mxu0 0.0
    %1378 = vmatprep.subr.mxu0 0.0
    %1379 = vmatpush1.msra.mxu0 0.0
    %1380 = vmatprep.subr.mxu0 0.0
    %1381 = vmatpush1.msra.mxu0 0.0
    %1382 = vmatprep.subr.mxu0 0.0
    %1383 = vmatpush1.msra.mxu0 0.0
    %1384 = vmatprep.subr.mxu0 0.0
    %1385 = vmatpush1.msra.mxu0 0.0
    %1386 = vmatprep.subr.mxu0 0.0
    %1387 = vmatpush1.msra.mxu0 0.0
    %1388 = vmatprep.subr.mxu0 0.0
    %1389 = vmatpush1.msra.mxu0 0.0
    %1390 = vmatprep.subr.mxu0 0.0
    %1391 = vmatpush1.msra.mxu0 0.0
    %1392 = vmatprep.subr.mxu0 0.0
    %1393 = vmatpush1.msra.mxu0 0.0
    %1394 = vmatprep.subr.mxu0 0.0
    %1395 = vmatpush1.msra.mxu0 0.0
    %1396 = vmatprep.subr.mxu0 0.0
    %1397 = vmatpush1.msra.mxu0 0.0
    %1398 = vmatprep.subr.mxu0 0.0
    %1399 = vmatpush1.msra.mxu0 0.0
    %1400 = vmatprep.subr.mxu0 0.0
    %1401 = vmatpush1.msra.mxu0 0.0
    %1402 = vmatprep.subr.mxu0 0.0
    %1403 = vmatpush1.msra.mxu0 0.0
    %1404 = vmatprep.subr.mxu0 0.0
    %1405 = vmatpush1.msra.mxu0 0.0
    %1406 = vmatprep.subr.mxu0 0.0
    %1407 = vmatpush1.msra.mxu0 0.0
    %1408 = vmatprep.subr.mxu0 0.0
    %1409 = vmatpush1.msra.mxu0 0.0
    %1410 = vmatprep.subr.mxu0 0.0
    %1411 = vmatpush1.msra.mxu0 0.0
    %1412 = vmatprep.subr.mxu0 0.0
    %1413 = vmatpush1.msra.mxu0 0.0
    %1414 = vmatprep.subr.mxu0 0.0
    %1415 = vmatpush1.msra.mxu0 0.0
    %1416 = vmatprep.mubr.f32.mxu0 0.0
    %1417 = vmatmul.mubr.f32.gmra.mrb[0].mxu0 %v1346
    %v1418 = vpop.f32.mrb[0].mxu0
    %v1419 = vadd.f32 %v643, %v1418
    %v1420 = vpop.f32.mrb[0].mxu0
    %1421 = vmatprep.mubr.f32.mxu0 0.0
    %1422 = vmatmul.mubr.f32.gmra.mrb[0].mxu0 %v1348
    %v1423 = vpop.f32.mrb[0].mxu0
    %v1424 = vadd.f32 %v643, %v1423
    %v1425 = vpop.f32.mrb[0].mxu0
    %1426 = vmatprep.mubr.f32.mxu0 0.0
    %1427 = vmatmul.mubr.f32.gmra.mrb[0].mxu0 %v1350
    %v1428 = vpop.f32.mrb[0].mxu0
    %v1429 = vadd.f32 %v643, %v1428
    %v1430 = vpop.f32.mrb[0].mxu0
    %1431 = vdwg.mxu0
    %v1432 = vadd.f32 %v1330, %v1419
    %v1433 = vadd.f32 %v1331, %v1424
    %v1434 = vadd.f32 %v1332, %v1429
    %v1435 = vxor.u32 %v1432, 2147483648
    %v1436 = vxor.u32 %v1433, 2147483648
    %v1437 = vxor.u32 %v1434, 2147483648
    %v1438 = vmul.f32 %v1435, 1.442695
    %v1439 = vpow.pop %v1438
    %v1440 = vmul.f32 %v1436, 1.442695
    %v1441 = vpow.pop %v1440
    %v1442 = vmul.f32 %v1437, 1.442695
    %v1443 = vpow.pop %v1442
    %v1444 = vadd.f32 %v1439, 1.0
    %v1445 = vadd.f32 %v1441, 1.0
    %v1446 = vadd.f32 %v1443, 1.0
    %v1447 = vrcp.pop %v1444
    %v1448 = vmul.f32 1.0, %v1447
    %v1449 = vrcp.pop %v1445
    %v1450 = vmul.f32 1.0, %v1449
    %v1451 = vrcp.pop %v1446
    %v1452 = vmul.f32 1.0, %v1451
    %1456 = vrot.lane.b32.xlu0 %v1419, 64
    %v1457 = vpop.permute.xlu0 %1456
    %1458 = vrot.lane.b32.xlu0 %v1424, 64
    %v1459 = vpop.permute.xlu0 %1458
    %1460 = vrot.lane.b32.xlu0 %v1429, 64
    %v1461 = vpop.permute.xlu0 %1460
    %v1465 = vmul.f32 %v1448, %v1457
    %v1466 = vmul.f32 %v1450, %v1459
    %v1467 = vmul.f32 %v1452, %v1461
    %1471 = vrot.lane.b32.xlu0 %v1465, 64
    %v1472 = vpop.permute.xlu0 %1471
    %1473 = vrot.lane.b32.xlu0 %v1466, 64
    %v1474 = vpop.permute.xlu0 %1473
    %1475 = vrot.lane.b32.xlu0 %v1467, 64
    %v1476 = vpop.permute.xlu0 %1475
    %v1480 = vadd.f32 %v1330, %v1472
    %v1481 = vadd.f32 %v1331, %v1474
    %v1482 = vadd.f32 %v1332, %v1476
    %v1483 = vtanh.pop %v1480
    %v1484 = vtanh.pop %v1481
    %v1485 = vtanh.pop %v1482
    %v1486 = vsub.f32 1.0, %v1448
    %v1487 = vsub.f32 1.0, %v1450
    %v1488 = vsub.f32 1.0, %v1452
    %1492 = vrot.lane.b32.xlu0 %v1483, 96
    %v1493 = vpop.permute.xlu0 %1492
    %1494 = vrot.lane.b32.xlu0 %v1484, 96
    %v1495 = vpop.permute.xlu0 %1494
    %1496 = vrot.lane.b32.xlu0 %v1485, 96
    %v1497 = vpop.permute.xlu0 %1496
    %v1501 = vmul.f32 %v1486, %v1493
    %v1502 = vmul.f32 %v1487, %v1495
    %v1503 = vmul.f32 %v1488, %v1497
    %v1504 = vmul.f32 %v1448, %v1293
    %v1505 = vmul.f32 %v1450, %v1294
    %v1506 = vmul.f32 %v1452, %v1295
    %v1507 = vadd.f32 %v1501, %v1504
    %v1508 = vadd.f32 %v1502, %v1505
    %v1509 = vadd.f32 %v1503, %v1506
    %vm1510 = vcmp.gt.f32.partialorder %v1334, 0.0
    %vm1511 = vcmp.gt.f32.partialorder %v1335, 0.0
    %vm1512 = vcmp.gt.f32.partialorder %v1336, 0.0
    %v1513 = vsel %vm1510, 1, 0
    %v1514 = vsel %vm1511, 1, 0
    %v1515 = vsel %vm1512, 1, 0
    %1516 = vset.pattern.permute.xlu0 0
    %1517 = vperm.xlu0 %1516, %v1513
    %v1518 = vpop.permute.xlu0 %1517
    %1519 = vset.pattern.permute.xlu0 0
    %1520 = vperm.xlu0 %1519, %v1514
    %v1521 = vpop.permute.xlu0 %1520
    %1522 = vset.pattern.permute.xlu0 0
    %1523 = vperm.xlu0 %1522, %v1515
    %v1524 = vpop.permute.xlu0 %1523
    %vm1525 = vcmp.eq.s32.totalorder %v1518, 1
    %vm1526 = vcmp.eq.s32.totalorder %v1521, 1
    %vm1527 = vcmp.eq.s32.totalorder %v1524, 1
    %v1528 = vsel %vm1525, %v1507, %v1293
    %v1529 = vsel %vm1526, %v1508, %v1294
    %v1530 = vsel %vm1527, %v1509, %v1295
    %1532 = vset.pattern.permute.xlu0 0
    %1533 = vperm.xlu0 %1532, %v1334
    %v1534 = vpop.permute.xlu0 %1533
    %1537 = vset.pattern.permute.xlu0 0
    %1538 = vperm.xlu0 %1537, %v1335
    %v1539 = vpop.permute.xlu0 %1538
    %1542 = vset.pattern.permute.xlu0 0
    %1543 = vperm.xlu0 %1542, %v1336
    %v1544 = vpop.permute.xlu0 %1543
    %v1546 = vmul.f32 %v1528, %v1534
    %v1547 = vmul.f32 %v1529, %v1539
    %v1548 = vmul.f32 %v1530, %v1544
    %1552 = vrot.lane.b32.xlu0 %v1546, 96
    %v1553 = vpop.permute.xlu0 %1552
    %1554 = vrot.lane.b32.xlu0 %v1547, 96
    %v1555 = vpop.permute.xlu0 %1554
    %1556 = vrot.lane.b32.xlu0 %v1548, 96
    %v1557 = vpop.permute.xlu0 %1556
    %s1561 = scalar_lea.vmem [#allocation4], 72
    %1562 = vst.msk [vmem:[%s1561] sm:$0xff] %vm91, %v1553
    %1563 = vst.msk [vmem:[%s1561 + $0x8] sm:$0xff] %vm91, %v1555
    %1564 = vst.msk [vmem:[%s1561 + $0x10] sm:$0xff] %vm91, %v1557
    %v1565 = vld [vmem:[%s500] sm:$0xff]
    %v1566 = vld [vmem:[%s500 + $0x8] sm:$0xff]
    %v1567 = vld [vmem:[%s500 + $0x10] sm:$0xff]
    %s1568 = scalar_lea.vmem %s1, 96
    %v1569 = vld [vmem:[%s1568] sm:$0xff]
    %v1570 = vld [vmem:[%s1568 + $0x8] sm:$0xff]
    %v1571 = vld [vmem:[%s1568 + $0x10] sm:$0xff]
    %1575 = vrot.lane.b32.xlu0 %v1528, 96
    %v1576 = vpop.permute.xlu0 %1575
    %1577 = vrot.lane.b32.xlu0 %v1529, 96
    %v1578 = vpop.permute.xlu0 %1577
    %1579 = vrot.lane.b32.xlu0 %v1530, 96
    %v1580 = vpop.permute.xlu0 %1579
    %v1581 = vsel %vm91, %v1576, 0
    %v1583 = vsel %vm91, %v1578, 0
    %v1585 = vsel %vm91, %v1580, 0
    %1587 = vmatprep.subr.mxu0 0.0
    %1588 = vmatpush1.msra.mxu0 %v628
    %1589 = vmatprep.subr.mxu0 0.0
    %1590 = vmatpush1.msra.mxu0 %v629
    %1591 = vmatprep.subr.mxu0 0.0
    %1592 = vmatpush1.msra.mxu0 %v630
    %1593 = vmatprep.subr.mxu0 0.0
    %1594 = vmatpush1.msra.mxu0 %v631
    %1595 = vmatprep.subr.mxu0 0.0
    %1596 = vmatpush1.msra.mxu0 0.0
    %1597 = vmatprep.subr.mxu0 0.0
    %1598 = vmatpush1.msra.mxu0 0.0
    %1599 = vmatprep.subr.mxu0 0.0
    %1600 = vmatpush1.msra.mxu0 0.0
    %1601 = vmatprep.subr.mxu0 0.0
    %1602 = vmatpush1.msra.mxu0 0.0
    %1603 = vmatprep.subr.mxu0 0.0
    %1604 = vmatpush1.msra.mxu0 0.0
    %1605 = vmatprep.subr.mxu0 0.0
    %1606 = vmatpush1.msra.mxu0 0.0
    %1607 = vmatprep.subr.mxu0 0.0
    %1608 = vmatpush1.msra.mxu0 0.0
    %1609 = vmatprep.subr.mxu0 0.0
    %1610 = vmatpush1.msra.mxu0 0.0
    %1611 = vmatprep.subr.mxu0 0.0
    %1612 = vmatpush1.msra.mxu0 0.0
    %1613 = vmatprep.subr.mxu0 0.0
    %1614 = vmatpush1.msra.mxu0 0.0
    %1615 = vmatprep.subr.mxu0 0.0
    %1616 = vmatpush1.msra.mxu0 0.0
    %1617 = vmatprep.subr.mxu0 0.0
    %1618 = vmatpush1.msra.mxu0 0.0
    %1619 = vmatprep.subr.mxu0 0.0
    %1620 = vmatpush1.msra.mxu0 0.0
    %1621 = vmatprep.subr.mxu0 0.0
    %1622 = vmatpush1.msra.mxu0 0.0
    %1623 = vmatprep.subr.mxu0 0.0
    %1624 = vmatpush1.msra.mxu0 0.0
    %1625 = vmatprep.subr.mxu0 0.0
    %1626 = vmatpush1.msra.mxu0 0.0
    %1627 = vmatprep.subr.mxu0 0.0
    %1628 = vmatpush1.msra.mxu0 0.0
    %1629 = vmatprep.subr.mxu0 0.0
    %1630 = vmatpush1.msra.mxu0 0.0
    %1631 = vmatprep.subr.mxu0 0.0
    %1632 = vmatpush1.msra.mxu0 0.0
    %1633 = vmatprep.subr.mxu0 0.0
    %1634 = vmatpush1.msra.mxu0 0.0
    %1635 = vmatprep.subr.mxu0 0.0
    %1636 = vmatpush1.msra.mxu0 0.0
    %1637 = vmatprep.subr.mxu0 0.0
    %1638 = vmatpush1.msra.mxu0 0.0
    %1639 = vmatprep.subr.mxu0 0.0
    %1640 = vmatpush1.msra.mxu0 0.0
    %1641 = vmatprep.subr.mxu0 0.0
    %1642 = vmatpush1.msra.mxu0 0.0
    %1643 = vmatprep.subr.mxu0 0.0
    %1644 = vmatpush1.msra.mxu0 0.0
    %1645 = vmatprep.subr.mxu0 0.0
    %1646 = vmatpush1.msra.mxu0 0.0
    %1647 = vmatprep.subr.mxu0 0.0
    %1648 = vmatpush1.msra.mxu0 0.0
    %1649 = vmatprep.subr.mxu0 0.0
    %1650 = vmatpush1.msra.mxu0 0.0
    %1651 = vmatprep.mubr.f32.mxu0 0.0
    %1652 = vmatmul.mubr.f32.gmra.mrb[0].mxu0 %v1581
    %v1653 = vpop.f32.mrb[0].mxu0
    %v1654 = vadd.f32 %v643, %v1653
    %v1655 = vpop.f32.mrb[0].mxu0
    %1656 = vmatprep.mubr.f32.mxu0 0.0
    %1657 = vmatmul.mubr.f32.gmra.mrb[0].mxu0 %v1583
    %v1658 = vpop.f32.mrb[0].mxu0
    %v1659 = vadd.f32 %v643, %v1658
    %v1660 = vpop.f32.mrb[0].mxu0
    %1661 = vmatprep.mubr.f32.mxu0 0.0
    %1662 = vmatmul.mubr.f32.gmra.mrb[0].mxu0 %v1585
    %v1663 = vpop.f32.mrb[0].mxu0
    %v1664 = vadd.f32 %v643, %v1663
    %v1665 = vpop.f32.mrb[0].mxu0
    %1666 = vdwg.mxu0
    %v1667 = vadd.f32 %v1565, %v1654
    %v1668 = vadd.f32 %v1566, %v1659
    %v1669 = vadd.f32 %v1567, %v1664
    %v1670 = vxor.u32 %v1667, 2147483648
    %v1671 = vxor.u32 %v1668, 2147483648
    %v1672 = vxor.u32 %v1669, 2147483648
    %v1673 = vmul.f32 %v1670, 1.442695
    %v1674 = vpow.pop %v1673
    %v1675 = vmul.f32 %v1671, 1.442695
    %v1676 = vpow.pop %v1675
    %v1677 = vmul.f32 %v1672, 1.442695
    %v1678 = vpow.pop %v1677
    %v1679 = vadd.f32 %v1674, 1.0
    %v1680 = vadd.f32 %v1676, 1.0
    %v1681 = vadd.f32 %v1678, 1.0
    %v1682 = vrcp.pop %v1679
    %v1683 = vmul.f32 1.0, %v1682
    %v1684 = vrcp.pop %v1680
    %v1685 = vmul.f32 1.0, %v1684
    %v1686 = vrcp.pop %v1681
    %v1687 = vmul.f32 1.0, %v1686
    %1691 = vrot.lane.b32.xlu0 %v1654, 64
    %v1692 = vpop.permute.xlu0 %1691
    %1693 = vrot.lane.b32.xlu0 %v1659, 64
    %v1694 = vpop.permute.xlu0 %1693
    %1695 = vrot.lane.b32.xlu0 %v1664, 64
    %v1696 = vpop.permute.xlu0 %1695
    %v1700 = vmul.f32 %v1683, %v1692
    %v1701 = vmul.f32 %v1685, %v1694
    %v1702 = vmul.f32 %v1687, %v1696
    %1706 = vrot.lane.b32.xlu0 %v1700, 64
    %v1707 = vpop.permute.xlu0 %1706
    %1708 = vrot.lane.b32.xlu0 %v1701, 64
    %v1709 = vpop.permute.xlu0 %1708
    %1710 = vrot.lane.b32.xlu0 %v1702, 64
    %v1711 = vpop.permute.xlu0 %1710
    %v1715 = vadd.f32 %v1565, %v1707
    %v1716 = vadd.f32 %v1566, %v1709
    %v1717 = vadd.f32 %v1567, %v1711
    %v1718 = vtanh.pop %v1715
    %v1719 = vtanh.pop %v1716
    %v1720 = vtanh.pop %v1717
    %v1721 = vsub.f32 1.0, %v1683
    %v1722 = vsub.f32 1.0, %v1685
    %v1723 = vsub.f32 1.0, %v1687
    %1727 = vrot.lane.b32.xlu0 %v1718, 96
    %v1728 = vpop.permute.xlu0 %1727
    %1729 = vrot.lane.b32.xlu0 %v1719, 96
    %v1730 = vpop.permute.xlu0 %1729
    %1731 = vrot.lane.b32.xlu0 %v1720, 96
    %v1732 = vpop.permute.xlu0 %1731
    %v1736 = vmul.f32 %v1721, %v1728
    %v1737 = vmul.f32 %v1722, %v1730
    %v1738 = vmul.f32 %v1723, %v1732
    %v1739 = vmul.f32 %v1683, %v1528
    %v1740 = vmul.f32 %v1685, %v1529
    %v1741 = vmul.f32 %v1687, %v1530
    %v1742 = vadd.f32 %v1736, %v1739
    %v1743 = vadd.f32 %v1737, %v1740
    %v1744 = vadd.f32 %v1738, %v1741
    %vm1745 = vcmp.gt.f32.partialorder %v1569, 0.0
    %vm1746 = vcmp.gt.f32.partialorder %v1570, 0.0
    %vm1747 = vcmp.gt.f32.partialorder %v1571, 0.0
    %v1748 = vsel %vm1745, 1, 0
    %v1749 = vsel %vm1746, 1, 0
    %v1750 = vsel %vm1747, 1, 0
    %1751 = vset.pattern.permute.xlu0 0
    %1752 = vperm.xlu0 %1751, %v1748
    %v1753 = vpop.permute.xlu0 %1752
    %1754 = vset.pattern.permute.xlu0 0
    %1755 = vperm.xlu0 %1754, %v1749
    %v1756 = vpop.permute.xlu0 %1755
    %1757 = vset.pattern.permute.xlu0 0
    %1758 = vperm.xlu0 %1757, %v1750
    %v1759 = vpop.permute.xlu0 %1758
    %vm1760 = vcmp.eq.s32.totalorder %v1753, 1
    %vm1761 = vcmp.eq.s32.totalorder %v1756, 1
    %vm1762 = vcmp.eq.s32.totalorder %v1759, 1
    %v1763 = vsel %vm1760, %v1742, %v1528
    %v1764 = vsel %vm1761, %v1743, %v1529
    %v1765 = vsel %vm1762, %v1744, %v1530
    %1767 = vset.pattern.permute.xlu0 0
    %1768 = vperm.xlu0 %1767, %v1569
    %v1769 = vpop.permute.xlu0 %1768
    %1772 = vset.pattern.permute.xlu0 0
    %1773 = vperm.xlu0 %1772, %v1570
    %v1774 = vpop.permute.xlu0 %1773
    %1777 = vset.pattern.permute.xlu0 0
    %1778 = vperm.xlu0 %1777, %v1571
    %v1779 = vpop.permute.xlu0 %1778
    %v1781 = vmul.f32 %v1763, %v1769
    %v1782 = vmul.f32 %v1764, %v1774
    %v1783 = vmul.f32 %v1765, %v1779
    %1787 = vrot.lane.b32.xlu0 %v1781, 96
    %v1788 = vpop.permute.xlu0 %1787
    %1789 = vrot.lane.b32.xlu0 %v1782, 96
    %v1790 = vpop.permute.xlu0 %1789
    %1791 = vrot.lane.b32.xlu0 %v1783, 96
    %v1792 = vpop.permute.xlu0 %1791
    %s1796 = scalar_lea.vmem [#allocation4], 96
    %1797 = vst.msk [vmem:[%s1796] sm:$0xff] %vm91, %v1788
    %1798 = vst.msk [vmem:[%s1796 + $0x8] sm:$0xff] %vm91, %v1790
    %1799 = vst.msk [vmem:[%s1796 + $0x10] sm:$0xff] %vm91, %v1792
    %v1800 = vld [vmem:[%s532] sm:$0xff]
    %v1801 = vld [vmem:[%s532 + $0x8] sm:$0xff]
    %v1802 = vld [vmem:[%s532 + $0x10] sm:$0xff]
    %s1803 = scalar_lea.vmem %s1, 120
    %v1804 = vld [vmem:[%s1803] sm:$0xff]
    %v1805 = vld [vmem:[%s1803 + $0x8] sm:$0xff]
    %v1806 = vld [vmem:[%s1803 + $0x10] sm:$0xff]
    %1810 = vrot.lane.b32.xlu0 %v1763, 96
    %v1811 = vpop.permute.xlu0 %1810
    %1812 = vrot.lane.b32.xlu0 %v1764, 96
    %v1813 = vpop.permute.xlu0 %1812
    %1814 = vrot.lane.b32.xlu0 %v1765, 96
    %v1815 = vpop.permute.xlu0 %1814
    %v1816 = vsel %vm91, %v1811, 0
    %v1818 = vsel %vm91, %v1813, 0
    %v1820 = vsel %vm91, %v1815, 0
    %1822 = vmatprep.subr.mxu0 0.0
    %1823 = vmatpush1.msra.mxu0 %v628
    %1824 = vmatprep.subr.mxu0 0.0
    %1825 = vmatpush1.msra.mxu0 %v629
    %1826 = vmatprep.subr.mxu0 0.0
    %1827 = vmatpush1.msra.mxu0 %v630
    %1828 = vmatprep.subr.mxu0 0.0
    %1829 = vmatpush1.msra.mxu0 %v631
    %1830 = vmatprep.subr.mxu0 0.0
    %1831 = vmatpush1.msra.mxu0 0.0
    %1832 = vmatprep.subr.mxu0 0.0
    %1833 = vmatpush1.msra.mxu0 0.0
    %1834 = vmatprep.subr.mxu0 0.0
    %1835 = vmatpush1.msra.mxu0 0.0
    %1836 = vmatprep.subr.mxu0 0.0
    %1837 = vmatpush1.msra.mxu0 0.0
    %1838 = vmatprep.subr.mxu0 0.0
    %1839 = vmatpush1.msra.mxu0 0.0
    %1840 = vmatprep.subr.mxu0 0.0
    %1841 = vmatpush1.msra.mxu0 0.0
    %1842 = vmatprep.subr.mxu0 0.0
    %1843 = vmatpush1.msra.mxu0 0.0
    %1844 = vmatprep.subr.mxu0 0.0
    %1845 = vmatpush1.msra.mxu0 0.0
    %1846 = vmatprep.subr.mxu0 0.0
    %1847 = vmatpush1.msra.mxu0 0.0
    %1848 = vmatprep.subr.mxu0 0.0
    %1849 = vmatpush1.msra.mxu0 0.0
    %1850 = vmatprep.subr.mxu0 0.0
    %1851 = vmatpush1.msra.mxu0 0.0
    %1852 = vmatprep.subr.mxu0 0.0
    %1853 = vmatpush1.msra.mxu0 0.0
    %1854 = vmatprep.subr.mxu0 0.0
    %1855 = vmatpush1.msra.mxu0 0.0
    %1856 = vmatprep.subr.mxu0 0.0
    %1857 = vmatpush1.msra.mxu0 0.0
    %1858 = vmatprep.subr.mxu0 0.0
    %1859 = vmatpush1.msra.mxu0 0.0
    %1860 = vmatprep.subr.mxu0 0.0
    %1861 = vmatpush1.msra.mxu0 0.0
    %1862 = vmatprep.subr.mxu0 0.0
    %1863 = vmatpush1.msra.mxu0 0.0
    %1864 = vmatprep.subr.mxu0 0.0
    %1865 = vmatpush1.msra.mxu0 0.0
    %1866 = vmatprep.subr.mxu0 0.0
    %1867 = vmatpush1.msra.mxu0 0.0
    %1868 = vmatprep.subr.mxu0 0.0
    %1869 = vmatpush1.msra.mxu0 0.0
    %1870 = vmatprep.subr.mxu0 0.0
    %1871 = vmatpush1.msra.mxu0 0.0
    %1872 = vmatprep.subr.mxu0 0.0
    %1873 = vmatpush1.msra.mxu0 0.0
    %1874 = vmatprep.subr.mxu0 0.0
    %1875 = vmatpush1.msra.mxu0 0.0
    %1876 = vmatprep.subr.mxu0 0.0
    %1877 = vmatpush1.msra.mxu0 0.0
    %1878 = vmatprep.subr.mxu0 0.0
    %1879 = vmatpush1.msra.mxu0 0.0
    %1880 = vmatprep.subr.mxu0 0.0
    %1881 = vmatpush1.msra.mxu0 0.0
    %1882 = vmatprep.subr.mxu0 0.0
    %1883 = vmatpush1.msra.mxu0 0.0
    %1884 = vmatprep.subr.mxu0 0.0
    %1885 = vmatpush1.msra.mxu0 0.0
    %1886 = vmatprep.mubr.f32.mxu0 0.0
    %1887 = vmatmul.mubr.f32.gmra.mrb[0].mxu0 %v1816
    %v1888 = vpop.f32.mrb[0].mxu0
    %v1889 = vadd.f32 %v643, %v1888
    %v1890 = vpop.f32.mrb[0].mxu0
    %1891 = vmatprep.mubr.f32.mxu0 0.0
    %1892 = vmatmul.mubr.f32.gmra.mrb[0].mxu0 %v1818
    %v1893 = vpop.f32.mrb[0].mxu0
    %v1894 = vadd.f32 %v643, %v1893
    %v1895 = vpop.f32.mrb[0].mxu0
    %1896 = vmatprep.mubr.f32.mxu0 0.0
    %1897 = vmatmul.mubr.f32.gmra.mrb[0].mxu0 %v1820
    %v1898 = vpop.f32.mrb[0].mxu0
    %v1899 = vadd.f32 %v643, %v1898
    %v1900 = vpop.f32.mrb[0].mxu0
    %1901 = vdwg.mxu0
    %v1902 = vadd.f32 %v1800, %v1889
    %v1903 = vadd.f32 %v1801, %v1894
    %v1904 = vadd.f32 %v1802, %v1899
    %v1905 = vxor.u32 %v1902, 2147483648
    %v1906 = vxor.u32 %v1903, 2147483648
    %v1907 = vxor.u32 %v1904, 2147483648
    %v1908 = vmul.f32 %v1905, 1.442695
    %v1909 = vpow.pop %v1908
    %v1910 = vmul.f32 %v1906, 1.442695
    %v1911 = vpow.pop %v1910
    %v1912 = vmul.f32 %v1907, 1.442695
    %v1913 = vpow.pop %v1912
    %v1914 = vadd.f32 %v1909, 1.0
    %v1915 = vadd.f32 %v1911, 1.0
    %v1916 = vadd.f32 %v1913, 1.0
    %v1917 = vrcp.pop %v1914
    %v1918 = vmul.f32 1.0, %v1917
    %v1919 = vrcp.pop %v1915
    %v1920 = vmul.f32 1.0, %v1919
    %v1921 = vrcp.pop %v1916
    %v1922 = vmul.f32 1.0, %v1921
    %1926 = vrot.lane.b32.xlu0 %v1889, 64
    %v1927 = vpop.permute.xlu0 %1926
    %1928 = vrot.lane.b32.xlu0 %v1894, 64
    %v1929 = vpop.permute.xlu0 %1928
    %1930 = vrot.lane.b32.xlu0 %v1899, 64
    %v1931 = vpop.permute.xlu0 %1930
    %v1935 = vmul.f32 %v1918, %v1927
    %v1936 = vmul.f32 %v1920, %v1929
    %v1937 = vmul.f32 %v1922, %v1931
    %1941 = vrot.lane.b32.xlu0 %v1935, 64
    %v1942 = vpop.permute.xlu0 %1941
    %1943 = vrot.lane.b32.xlu0 %v1936, 64
    %v1944 = vpop.permute.xlu0 %1943
    %1945 = vrot.lane.b32.xlu0 %v1937, 64
    %v1946 = vpop.permute.xlu0 %1945
    %v1950 = vadd.f32 %v1800, %v1942
    %v1951 = vadd.f32 %v1801, %v1944
    %v1952 = vadd.f32 %v1802, %v1946
    %v1953 = vtanh.pop %v1950
    %v1954 = vtanh.pop %v1951
    %v1955 = vtanh.pop %v1952
    %v1956 = vsub.f32 1.0, %v1918
    %v1957 = vsub.f32 1.0, %v1920
    %v1958 = vsub.f32 1.0, %v1922
    %1962 = vrot.lane.b32.xlu0 %v1953, 96
    %v1963 = vpop.permute.xlu0 %1962
    %1964 = vrot.lane.b32.xlu0 %v1954, 96
    %v1965 = vpop.permute.xlu0 %1964
    %1966 = vrot.lane.b32.xlu0 %v1955, 96
    %v1967 = vpop.permute.xlu0 %1966
    %v1971 = vmul.f32 %v1956, %v1963
    %v1972 = vmul.f32 %v1957, %v1965
    %v1973 = vmul.f32 %v1958, %v1967
    %v1974 = vmul.f32 %v1918, %v1763
    %v1975 = vmul.f32 %v1920, %v1764
    %v1976 = vmul.f32 %v1922, %v1765
    %v1977 = vadd.f32 %v1971, %v1974
    %v1978 = vadd.f32 %v1972, %v1975
    %v1979 = vadd.f32 %v1973, %v1976
    %vm1980 = vcmp.gt.f32.partialorder %v1804, 0.0
    %vm1981 = vcmp.gt.f32.partialorder %v1805, 0.0
    %vm1982 = vcmp.gt.f32.partialorder %v1806, 0.0
    %v1983 = vsel %vm1980, 1, 0
    %v1984 = vsel %vm1981, 1, 0
    %v1985 = vsel %vm1982, 1, 0
    %1986 = vset.pattern.permute.xlu0 0
    %1987 = vperm.xlu0 %1986, %v1983
    %v1988 = vpop.permute.xlu0 %1987
    %1989 = vset.pattern.permute.xlu0 0
    %1990 = vperm.xlu0 %1989, %v1984
    %v1991 = vpop.permute.xlu0 %1990
    %1992 = vset.pattern.permute.xlu0 0
    %1993 = vperm.xlu0 %1992, %v1985
    %v1994 = vpop.permute.xlu0 %1993
    %vm1995 = vcmp.eq.s32.totalorder %v1988, 1
    %vm1996 = vcmp.eq.s32.totalorder %v1991, 1
    %vm1997 = vcmp.eq.s32.totalorder %v1994, 1
    %v1998 = vsel %vm1995, %v1977, %v1763
    %v1999 = vsel %vm1996, %v1978, %v1764
    %v2000 = vsel %vm1997, %v1979, %v1765
    %2002 = vset.pattern.permute.xlu0 0
    %2003 = vperm.xlu0 %2002, %v1804
    %v2004 = vpop.permute.xlu0 %2003
    %2007 = vset.pattern.permute.xlu0 0
    %2008 = vperm.xlu0 %2007, %v1805
    %v2009 = vpop.permute.xlu0 %2008
    %2012 = vset.pattern.permute.xlu0 0
    %2013 = vperm.xlu0 %2012, %v1806
    %v2014 = vpop.permute.xlu0 %2013
    %v2016 = vmul.f32 %v1998, %v2004
    %v2017 = vmul.f32 %v1999, %v2009
    %v2018 = vmul.f32 %v2000, %v2014
    %2022 = vrot.lane.b32.xlu0 %v2016, 96
    %v2023 = vpop.permute.xlu0 %2022
    %2024 = vrot.lane.b32.xlu0 %v2017, 96
    %v2025 = vpop.permute.xlu0 %2024
    %2026 = vrot.lane.b32.xlu0 %v2018, 96
    %v2027 = vpop.permute.xlu0 %2026
    %s2031 = scalar_lea.vmem [#allocation4], 120
    %2032 = vst.msk [vmem:[%s2031] sm:$0xff] %vm91, %v2023
    %2033 = vst.msk [vmem:[%s2031 + $0x8] sm:$0xff] %vm91, %v2025
    %2034 = vst.msk [vmem:[%s2031 + $0x10] sm:$0xff] %vm91, %v2027
    %v2035 = vld [vmem:[%s564] sm:$0xff]
    %v2036 = vld [vmem:[%s564 + $0x8] sm:$0xff]
    %v2037 = vld [vmem:[%s564 + $0x10] sm:$0xff]
    %s2038 = scalar_lea.vmem %s1, 144
    %v2039 = vld [vmem:[%s2038] sm:$0xff]
    %v2040 = vld [vmem:[%s2038 + $0x8] sm:$0xff]
    %v2041 = vld [vmem:[%s2038 + $0x10] sm:$0xff]
    %2045 = vrot.lane.b32.xlu0 %v1998, 96
    %v2046 = vpop.permute.xlu0 %2045
    %2047 = vrot.lane.b32.xlu0 %v1999, 96
    %v2048 = vpop.permute.xlu0 %2047
    %2049 = vrot.lane.b32.xlu0 %v2000, 96
    %v2050 = vpop.permute.xlu0 %2049
    %v2051 = vsel %vm91, %v2046, 0
    %v2053 = vsel %vm91, %v2048, 0
    %v2055 = vsel %vm91, %v2050, 0
    %2057 = vmatprep.subr.mxu0 0.0
    %2058 = vmatpush1.msra.mxu0 %v628
    %2059 = vmatprep.subr.mxu0 0.0
    %2060 = vmatpush1.msra.mxu0 %v629
    %2061 = vmatprep.subr.mxu0 0.0
    %2062 = vmatpush1.msra.mxu0 %v630
    %2063 = vmatprep.subr.mxu0 0.0
    %2064 = vmatpush1.msra.mxu0 %v631
    %2065 = vmatprep.subr.mxu0 0.0
    %2066 = vmatpush1.msra.mxu0 0.0
    %2067 = vmatprep.subr.mxu0 0.0
    %2068 = vmatpush1.msra.mxu0 0.0
    %2069 = vmatprep.subr.mxu0 0.0
    %2070 = vmatpush1.msra.mxu0 0.0
    %2071 = vmatprep.subr.mxu0 0.0
    %2072 = vmatpush1.msra.mxu0 0.0
    %2073 = vmatprep.subr.mxu0 0.0
    %2074 = vmatpush1.msra.mxu0 0.0
    %2075 = vmatprep.subr.mxu0 0.0
    %2076 = vmatpush1.msra.mxu0 0.0
    %2077 = vmatprep.subr.mxu0 0.0
    %2078 = vmatpush1.msra.mxu0 0.0
    %2079 = vmatprep.subr.mxu0 0.0
    %2080 = vmatpush1.msra.mxu0 0.0
    %2081 = vmatprep.subr.mxu0 0.0
    %2082 = vmatpush1.msra.mxu0 0.0
    %2083 = vmatprep.subr.mxu0 0.0
    %2084 = vmatpush1.msra.mxu0 0.0
    %2085 = vmatprep.subr.mxu0 0.0
    %2086 = vmatpush1.msra.mxu0 0.0
    %2087 = vmatprep.subr.mxu0 0.0
    %2088 = vmatpush1.msra.mxu0 0.0
    %2089 = vmatprep.subr.mxu0 0.0
    %2090 = vmatpush1.msra.mxu0 0.0
    %2091 = vmatprep.subr.mxu0 0.0
    %2092 = vmatpush1.msra.mxu0 0.0
    %2093 = vmatprep.subr.mxu0 0.0
    %2094 = vmatpush1.msra.mxu0 0.0
    %2095 = vmatprep.subr.mxu0 0.0
    %2096 = vmatpush1.msra.mxu0 0.0
    %2097 = vmatprep.subr.mxu0 0.0
    %2098 = vmatpush1.msra.mxu0 0.0
    %2099 = vmatprep.subr.mxu0 0.0
    %2100 = vmatpush1.msra.mxu0 0.0
    %2101 = vmatprep.subr.mxu0 0.0
    %2102 = vmatpush1.msra.mxu0 0.0
    %2103 = vmatprep.subr.mxu0 0.0
    %2104 = vmatpush1.msra.mxu0 0.0
    %2105 = vmatprep.subr.mxu0 0.0
    %2106 = vmatpush1.msra.mxu0 0.0
    %2107 = vmatprep.subr.mxu0 0.0
    %2108 = vmatpush1.msra.mxu0 0.0
    %2109 = vmatprep.subr.mxu0 0.0
    %2110 = vmatpush1.msra.mxu0 0.0
    %2111 = vmatprep.subr.mxu0 0.0
    %2112 = vmatpush1.msra.mxu0 0.0
    %2113 = vmatprep.subr.mxu0 0.0
    %2114 = vmatpush1.msra.mxu0 0.0
    %2115 = vmatprep.subr.mxu0 0.0
    %2116 = vmatpush1.msra.mxu0 0.0
    %2117 = vmatprep.subr.mxu0 0.0
    %2118 = vmatpush1.msra.mxu0 0.0
    %2119 = vmatprep.subr.mxu0 0.0
    %2120 = vmatpush1.msra.mxu0 0.0
    %2121 = vmatprep.mubr.f32.mxu0 0.0
    %2122 = vmatmul.mubr.f32.gmra.mrb[0].mxu0 %v2051
    %v2123 = vpop.f32.mrb[0].mxu0
    %v2124 = vadd.f32 %v643, %v2123
    %v2125 = vpop.f32.mrb[0].mxu0
    %2126 = vmatprep.mubr.f32.mxu0 0.0
    %2127 = vmatmul.mubr.f32.gmra.mrb[0].mxu0 %v2053
    %v2128 = vpop.f32.mrb[0].mxu0
    %v2129 = vadd.f32 %v643, %v2128
    %v2130 = vpop.f32.mrb[0].mxu0
    %2131 = vmatprep.mubr.f32.mxu0 0.0
    %2132 = vmatmul.mubr.f32.gmra.mrb[0].mxu0 %v2055
    %v2133 = vpop.f32.mrb[0].mxu0
    %v2134 = vadd.f32 %v643, %v2133
    %v2135 = vpop.f32.mrb[0].mxu0
    %2136 = vdwg.mxu0
    %v2137 = vadd.f32 %v2035, %v2124
    %v2138 = vadd.f32 %v2036, %v2129
    %v2139 = vadd.f32 %v2037, %v2134
    %v2140 = vxor.u32 %v2137, 2147483648
    %v2141 = vxor.u32 %v2138, 2147483648
    %v2142 = vxor.u32 %v2139, 2147483648
    %v2143 = vmul.f32 %v2140, 1.442695
    %v2144 = vpow.pop %v2143
    %v2145 = vmul.f32 %v2141, 1.442695
    %v2146 = vpow.pop %v2145
    %v2147 = vmul.f32 %v2142, 1.442695
    %v2148 = vpow.pop %v2147
    %v2149 = vadd.f32 %v2144, 1.0
    %v2150 = vadd.f32 %v2146, 1.0
    %v2151 = vadd.f32 %v2148, 1.0
    %v2152 = vrcp.pop %v2149
    %v2153 = vmul.f32 1.0, %v2152
    %v2154 = vrcp.pop %v2150
    %v2155 = vmul.f32 1.0, %v2154
    %v2156 = vrcp.pop %v2151
    %v2157 = vmul.f32 1.0, %v2156
    %2161 = vrot.lane.b32.xlu0 %v2124, 64
    %v2162 = vpop.permute.xlu0 %2161
    %2163 = vrot.lane.b32.xlu0 %v2129, 64
    %v2164 = vpop.permute.xlu0 %2163
    %2165 = vrot.lane.b32.xlu0 %v2134, 64
    %v2166 = vpop.permute.xlu0 %2165
    %v2170 = vmul.f32 %v2153, %v2162
    %v2171 = vmul.f32 %v2155, %v2164
    %v2172 = vmul.f32 %v2157, %v2166
    %2176 = vrot.lane.b32.xlu0 %v2170, 64
    %v2177 = vpop.permute.xlu0 %2176
    %2178 = vrot.lane.b32.xlu0 %v2171, 64
    %v2179 = vpop.permute.xlu0 %2178
    %2180 = vrot.lane.b32.xlu0 %v2172, 64
    %v2181 = vpop.permute.xlu0 %2180
    %v2185 = vadd.f32 %v2035, %v2177
    %v2186 = vadd.f32 %v2036, %v2179
    %v2187 = vadd.f32 %v2037, %v2181
    %v2188 = vtanh.pop %v2185
    %v2189 = vtanh.pop %v2186
    %v2190 = vtanh.pop %v2187
    %v2191 = vsub.f32 1.0, %v2153
    %v2192 = vsub.f32 1.0, %v2155
    %v2193 = vsub.f32 1.0, %v2157
    %2197 = vrot.lane.b32.xlu0 %v2188, 96
    %v2198 = vpop.permute.xlu0 %2197
    %2199 = vrot.lane.b32.xlu0 %v2189, 96
    %v2200 = vpop.permute.xlu0 %2199
    %2201 = vrot.lane.b32.xlu0 %v2190, 96
    %v2202 = vpop.permute.xlu0 %2201
    %v2206 = vmul.f32 %v2191, %v2198
    %v2207 = vmul.f32 %v2192, %v2200
    %v2208 = vmul.f32 %v2193, %v2202
    %v2209 = vmul.f32 %v2153, %v1998
    %v2210 = vmul.f32 %v2155, %v1999
    %v2211 = vmul.f32 %v2157, %v2000
    %v2212 = vadd.f32 %v2206, %v2209
    %v2213 = vadd.f32 %v2207, %v2210
    %v2214 = vadd.f32 %v2208, %v2211
    %vm2215 = vcmp.gt.f32.partialorder %v2039, 0.0
    %vm2216 = vcmp.gt.f32.partialorder %v2040, 0.0
    %vm2217 = vcmp.gt.f32.partialorder %v2041, 0.0
    %v2218 = vsel %vm2215, 1, 0
    %v2219 = vsel %vm2216, 1, 0
    %v2220 = vsel %vm2217, 1, 0
    %2221 = vset.pattern.permute.xlu0 0
    %2222 = vperm.xlu0 %2221, %v2218
    %v2223 = vpop.permute.xlu0 %2222
    %2224 = vset.pattern.permute.xlu0 0
    %2225 = vperm.xlu0 %2224, %v2219
    %v2226 = vpop.permute.xlu0 %2225
    %2227 = vset.pattern.permute.xlu0 0
    %2228 = vperm.xlu0 %2227, %v2220
    %v2229 = vpop.permute.xlu0 %2228
    %vm2230 = vcmp.eq.s32.totalorder %v2223, 1
    %vm2231 = vcmp.eq.s32.totalorder %v2226, 1
    %vm2232 = vcmp.eq.s32.totalorder %v2229, 1
    %v2233 = vsel %vm2230, %v2212, %v1998
    %v2234 = vsel %vm2231, %v2213, %v1999
    %v2235 = vsel %vm2232, %v2214, %v2000
    %2237 = vset.pattern.permute.xlu0 0
    %2238 = vperm.xlu0 %2237, %v2039
    %v2239 = vpop.permute.xlu0 %2238
    %2242 = vset.pattern.permute.xlu0 0
    %2243 = vperm.xlu0 %2242, %v2040
    %v2244 = vpop.permute.xlu0 %2243
    %2247 = vset.pattern.permute.xlu0 0
    %2248 = vperm.xlu0 %2247, %v2041
    %v2249 = vpop.permute.xlu0 %2248
    %v2251 = vmul.f32 %v2233, %v2239
    %v2252 = vmul.f32 %v2234, %v2244
    %v2253 = vmul.f32 %v2235, %v2249
    %2257 = vrot.lane.b32.xlu0 %v2251, 96
    %v2258 = vpop.permute.xlu0 %2257
    %2259 = vrot.lane.b32.xlu0 %v2252, 96
    %v2260 = vpop.permute.xlu0 %2259
    %2261 = vrot.lane.b32.xlu0 %v2253, 96
    %v2262 = vpop.permute.xlu0 %2261
    %s2266 = scalar_lea.vmem [#allocation4], 144
    %2267 = vst.msk [vmem:[%s2266] sm:$0xff] %vm91, %v2258
    %2268 = vst.msk [vmem:[%s2266 + $0x8] sm:$0xff] %vm91, %v2260
    %2269 = vst.msk [vmem:[%s2266 + $0x10] sm:$0xff] %vm91, %v2262
    %v2270 = vld [vmem:[%s596] sm:$0xff]
    %v2271 = vld [vmem:[%s596 + $0x8] sm:$0xff]
    %v2272 = vld [vmem:[%s596 + $0x10] sm:$0xff]
    %s2273 = scalar_lea.vmem %s1, 168
    %v2274 = vld [vmem:[%s2273] sm:$0xff]
    %v2275 = vld [vmem:[%s2273 + $0x8] sm:$0xff]
    %v2276 = vld [vmem:[%s2273 + $0x10] sm:$0xff]
    %2280 = vrot.lane.b32.xlu0 %v2233, 96
    %v2281 = vpop.permute.xlu0 %2280
    %2282 = vrot.lane.b32.xlu0 %v2234, 96
    %v2283 = vpop.permute.xlu0 %2282
    %2284 = vrot.lane.b32.xlu0 %v2235, 96
    %v2285 = vpop.permute.xlu0 %2284
    %v2286 = vsel %vm91, %v2281, 0
    %v2288 = vsel %vm91, %v2283, 0
    %v2290 = vsel %vm91, %v2285, 0
    %2292 = vmatprep.subr.mxu0 0.0
    %2293 = vmatpush1.msra.mxu0 %v628
    %2294 = vmatprep.subr.mxu0 0.0
    %2295 = vmatpush1.msra.mxu0 %v629
    %2296 = vmatprep.subr.mxu0 0.0
    %2297 = vmatpush1.msra.mxu0 %v630
    %2298 = vmatprep.subr.mxu0 0.0
    %2299 = vmatpush1.msra.mxu0 %v631
    %2300 = vmatprep.subr.mxu0 0.0
    %2301 = vmatpush1.msra.mxu0 0.0
    %2302 = vmatprep.subr.mxu0 0.0
    %2303 = vmatpush1.msra.mxu0 0.0
    %2304 = vmatprep.subr.mxu0 0.0
    %2305 = vmatpush1.msra.mxu0 0.0
    %2306 = vmatprep.subr.mxu0 0.0
    %2307 = vmatpush1.msra.mxu0 0.0
    %2308 = vmatprep.subr.mxu0 0.0
    %2309 = vmatpush1.msra.mxu0 0.0
    %2310 = vmatprep.subr.mxu0 0.0
    %2311 = vmatpush1.msra.mxu0 0.0
    %2312 = vmatprep.subr.mxu0 0.0
    %2313 = vmatpush1.msra.mxu0 0.0
    %2314 = vmatprep.subr.mxu0 0.0
    %2315 = vmatpush1.msra.mxu0 0.0
    %2316 = vmatprep.subr.mxu0 0.0
    %2317 = vmatpush1.msra.mxu0 0.0
    %2318 = vmatprep.subr.mxu0 0.0
    %2319 = vmatpush1.msra.mxu0 0.0
    %2320 = vmatprep.subr.mxu0 0.0
    %2321 = vmatpush1.msra.mxu0 0.0
    %2322 = vmatprep.subr.mxu0 0.0
    %2323 = vmatpush1.msra.mxu0 0.0
    %2324 = vmatprep.subr.mxu0 0.0
    %2325 = vmatpush1.msra.mxu0 0.0
    %2326 = vmatprep.subr.mxu0 0.0
    %2327 = vmatpush1.msra.mxu0 0.0
    %2328 = vmatprep.subr.mxu0 0.0
    %2329 = vmatpush1.msra.mxu0 0.0
    %2330 = vmatprep.subr.mxu0 0.0
    %2331 = vmatpush1.msra.mxu0 0.0
    %2332 = vmatprep.subr.mxu0 0.0
    %2333 = vmatpush1.msra.mxu0 0.0
    %2334 = vmatprep.subr.mxu0 0.0
    %2335 = vmatpush1.msra.mxu0 0.0
    %2336 = vmatprep.subr.mxu0 0.0
    %2337 = vmatpush1.msra.mxu0 0.0
    %2338 = vmatprep.subr.mxu0 0.0
    %2339 = vmatpush1.msra.mxu0 0.0
    %2340 = vmatprep.subr.mxu0 0.0
    %2341 = vmatpush1.msra.mxu0 0.0
    %2342 = vmatprep.subr.mxu0 0.0
    %2343 = vmatpush1.msra.mxu0 0.0
    %2344 = vmatprep.subr.mxu0 0.0
    %2345 = vmatpush1.msra.mxu0 0.0
    %2346 = vmatprep.subr.mxu0 0.0
    %2347 = vmatpush1.msra.mxu0 0.0
    %2348 = vmatprep.subr.mxu0 0.0
    %2349 = vmatpush1.msra.mxu0 0.0
    %2350 = vmatprep.subr.mxu0 0.0
    %2351 = vmatpush1.msra.mxu0 0.0
    %2352 = vmatprep.subr.mxu0 0.0
    %2353 = vmatpush1.msra.mxu0 0.0
    %2354 = vmatprep.subr.mxu0 0.0
    %2355 = vmatpush1.msra.mxu0 0.0
    %2356 = vmatprep.mubr.f32.mxu0 0.0
    %2357 = vmatmul.mubr.f32.gmra.mrb[0].mxu0 %v2286
    %v2358 = vpop.f32.mrb[0].mxu0
    %v2359 = vadd.f32 %v643, %v2358
    %v2360 = vpop.f32.mrb[0].mxu0
    %2361 = vmatprep.mubr.f32.mxu0 0.0
    %2362 = vmatmul.mubr.f32.gmra.mrb[0].mxu0 %v2288
    %v2363 = vpop.f32.mrb[0].mxu0
    %v2364 = vadd.f32 %v643, %v2363
    %v2365 = vpop.f32.mrb[0].mxu0
    %2366 = vmatprep.mubr.f32.mxu0 0.0
    %2367 = vmatmul.mubr.f32.gmra.mrb[0].mxu0 %v2290
    %v2368 = vpop.f32.mrb[0].mxu0
    %v2369 = vadd.f32 %v643, %v2368
    %v2370 = vpop.f32.mrb[0].mxu0
    %2371 = vdwg.mxu0
    %v2372 = vadd.f32 %v2270, %v2359
    %v2373 = vadd.f32 %v2271, %v2364
    %v2374 = vadd.f32 %v2272, %v2369
    %v2375 = vxor.u32 %v2372, 2147483648
    %v2376 = vxor.u32 %v2373, 2147483648
    %v2377 = vxor.u32 %v2374, 2147483648
    %v2378 = vmul.f32 %v2375, 1.442695
    %v2379 = vpow.pop %v2378
    %v2380 = vmul.f32 %v2376, 1.442695
    %v2381 = vpow.pop %v2380
    %v2382 = vmul.f32 %v2377, 1.442695
    %v2383 = vpow.pop %v2382
    %v2384 = vadd.f32 %v2379, 1.0
    %v2385 = vadd.f32 %v2381, 1.0
    %v2386 = vadd.f32 %v2383, 1.0
    %v2387 = vrcp.pop %v2384
    %v2388 = vmul.f32 1.0, %v2387
    %v2389 = vrcp.pop %v2385
    %v2390 = vmul.f32 1.0, %v2389
    %v2391 = vrcp.pop %v2386
    %v2392 = vmul.f32 1.0, %v2391
    %2396 = vrot.lane.b32.xlu0 %v2359, 64
    %v2397 = vpop.permute.xlu0 %2396
    %2398 = vrot.lane.b32.xlu0 %v2364, 64
    %v2399 = vpop.permute.xlu0 %2398
    %2400 = vrot.lane.b32.xlu0 %v2369, 64
    %v2401 = vpop.permute.xlu0 %2400
    %v2405 = vmul.f32 %v2388, %v2397
    %v2406 = vmul.f32 %v2390, %v2399
    %v2407 = vmul.f32 %v2392, %v2401
    %2411 = vrot.lane.b32.xlu0 %v2405, 64
    %v2412 = vpop.permute.xlu0 %2411
    %2413 = vrot.lane.b32.xlu0 %v2406, 64
    %v2414 = vpop.permute.xlu0 %2413
    %2415 = vrot.lane.b32.xlu0 %v2407, 64
    %v2416 = vpop.permute.xlu0 %2415
    %v2420 = vadd.f32 %v2270, %v2412
    %v2421 = vadd.f32 %v2271, %v2414
    %v2422 = vadd.f32 %v2272, %v2416
    %v2423 = vtanh.pop %v2420
    %v2424 = vtanh.pop %v2421
    %v2425 = vtanh.pop %v2422
    %v2426 = vsub.f32 1.0, %v2388
    %v2427 = vsub.f32 1.0, %v2390
    %v2428 = vsub.f32 1.0, %v2392
    %2432 = vrot.lane.b32.xlu0 %v2423, 96
    %v2433 = vpop.permute.xlu0 %2432
    %2434 = vrot.lane.b32.xlu0 %v2424, 96
    %v2435 = vpop.permute.xlu0 %2434
    %2436 = vrot.lane.b32.xlu0 %v2425, 96
    %v2437 = vpop.permute.xlu0 %2436
    %v2441 = vmul.f32 %v2426, %v2433
    %v2442 = vmul.f32 %v2427, %v2435
    %v2443 = vmul.f32 %v2428, %v2437
    %v2444 = vmul.f32 %v2388, %v2233
    %v2445 = vmul.f32 %v2390, %v2234
    %v2446 = vmul.f32 %v2392, %v2235
    %v2447 = vadd.f32 %v2441, %v2444
    %v2448 = vadd.f32 %v2442, %v2445
    %v2449 = vadd.f32 %v2443, %v2446
    %vm2450 = vcmp.gt.f32.partialorder %v2274, 0.0
    %vm2451 = vcmp.gt.f32.partialorder %v2275, 0.0
    %vm2452 = vcmp.gt.f32.partialorder %v2276, 0.0
    %v2453 = vsel %vm2450, 1, 0
    %v2454 = vsel %vm2451, 1, 0
    %v2455 = vsel %vm2452, 1, 0
    %2456 = vset.pattern.permute.xlu0 0
    %2457 = vperm.xlu0 %2456, %v2453
    %v2458 = vpop.permute.xlu0 %2457
    %2459 = vset.pattern.permute.xlu0 0
    %2460 = vperm.xlu0 %2459, %v2454
    %v2461 = vpop.permute.xlu0 %2460
    %2462 = vset.pattern.permute.xlu0 0
    %2463 = vperm.xlu0 %2462, %v2455
    %v2464 = vpop.permute.xlu0 %2463
    %vm2465 = vcmp.eq.s32.totalorder %v2458, 1
    %vm2466 = vcmp.eq.s32.totalorder %v2461, 1
    %vm2467 = vcmp.eq.s32.totalorder %v2464, 1
    %v2468 = vsel %vm2465, %v2447, %v2233
    %v2469 = vsel %vm2466, %v2448, %v2234
    %v2470 = vsel %vm2467, %v2449, %v2235
    %2472 = vset.pattern.permute.xlu0 0
    %2473 = vperm.xlu0 %2472, %v2274
    %v2474 = vpop.permute.xlu0 %2473
    %2477 = vset.pattern.permute.xlu0 0
    %2478 = vperm.xlu0 %2477, %v2275
    %v2479 = vpop.permute.xlu0 %2478
    %2482 = vset.pattern.permute.xlu0 0
    %2483 = vperm.xlu0 %2482, %v2276
    %v2484 = vpop.permute.xlu0 %2483
    %v2486 = vmul.f32 %v2468, %v2474
    %v2487 = vmul.f32 %v2469, %v2479
    %v2488 = vmul.f32 %v2470, %v2484
    %2492 = vrot.lane.b32.xlu0 %v2486, 96
    %v2493 = vpop.permute.xlu0 %2492
    %2494 = vrot.lane.b32.xlu0 %v2487, 96
    %v2495 = vpop.permute.xlu0 %2494
    %2496 = vrot.lane.b32.xlu0 %v2488, 96
    %v2497 = vpop.permute.xlu0 %2496
    %s2501 = scalar_lea.vmem [#allocation4], 168
    %2502 = vst.msk [vmem:[%s2501] sm:$0xff] %vm91, %v2493
    %2503 = vst.msk [vmem:[%s2501 + $0x8] sm:$0xff] %vm91, %v2495
    %2504 = vst.msk [vmem:[%s2501 + $0x10] sm:$0xff] %vm91, %v2497
    %v2505 = vld [vmem:[%s5] sm:$0xff]
    %v2506 = vld [vmem:[%s5 + $0x8] sm:$0xff]
    %v2507 = vld [vmem:[%s5 + $0x10] sm:$0xff]
    %v2508 = vld [vmem:[%s5 + $0x18] sm:$0xff]
    %v2509 = vld [vmem:[%s7] sm:$0x1]
    %v2510 = vld [vmem:[%s624] sm:$0xff]
    %v2511 = vld [vmem:[%s624 + $0x8] sm:$0xff]
    %v2512 = vld [vmem:[%s624 + $0x10] sm:$0xff]
    %v2513 = vld [vmem:[%s2273] sm:$0xff]
    %v2514 = vld [vmem:[%s2273 + $0x8] sm:$0xff]
    %v2515 = vld [vmem:[%s2273 + $0x10] sm:$0xff]
    %v2517 = vlaneseq
    %v2518 = vshrl.u32 %v2517, 7
    %v2519 = vsub.s32 0, %v2518
    %v2520 = vrot.slane %v2509, %v2519
    %2522 = vmatprep.subr.mxu0 0.0
    %2523 = vmatpush1.msra.mxu0 %v2505
    %2524 = vmatprep.subr.mxu0 0.0
    %2525 = vmatpush1.msra.mxu0 %v2506
    %2526 = vmatprep.subr.mxu0 0.0
    %2527 = vmatpush1.msra.mxu0 %v2507
    %2528 = vmatprep.subr.mxu0 0.0
    %2529 = vmatpush1.msra.mxu0 %v2508
    %2530 = vmatprep.subr.mxu0 0.0
    %2531 = vmatpush1.msra.mxu0 0.0
    %2532 = vmatprep.subr.mxu0 0.0
    %2533 = vmatpush1.msra.mxu0 0.0
    %2534 = vmatprep.subr.mxu0 0.0
    %2535 = vmatpush1.msra.mxu0 0.0
    %2536 = vmatprep.subr.mxu0 0.0
    %2537 = vmatpush1.msra.mxu0 0.0
    %2538 = vmatprep.subr.mxu0 0.0
    %2539 = vmatpush1.msra.mxu0 0.0
    %2540 = vmatprep.subr.mxu0 0.0
    %2541 = vmatpush1.msra.mxu0 0.0
    %2542 = vmatprep.subr.mxu0 0.0
    %2543 = vmatpush1.msra.mxu0 0.0
    %2544 = vmatprep.subr.mxu0 0.0
    %2545 = vmatpush1.msra.mxu0 0.0
    %2546 = vmatprep.subr.mxu0 0.0
    %2547 = vmatpush1.msra.mxu0 0.0
    %2548 = vmatprep.subr.mxu0 0.0
    %2549 = vmatpush1.msra.mxu0 0.0
    %2550 = vmatprep.subr.mxu0 0.0
    %2551 = vmatpush1.msra.mxu0 0.0
    %2552 = vmatprep.subr.mxu0 0.0
    %2553 = vmatpush1.msra.mxu0 0.0
    %2554 = vmatprep.subr.mxu0 0.0
    %2555 = vmatpush1.msra.mxu0 0.0
    %2556 = vmatprep.subr.mxu0 0.0
    %2557 = vmatpush1.msra.mxu0 0.0
    %2558 = vmatprep.subr.mxu0 0.0
    %2559 = vmatpush1.msra.mxu0 0.0
    %2560 = vmatprep.subr.mxu0 0.0
    %2561 = vmatpush1.msra.mxu0 0.0
    %2562 = vmatprep.subr.mxu0 0.0
    %2563 = vmatpush1.msra.mxu0 0.0
    %2564 = vmatprep.subr.mxu0 0.0
    %2565 = vmatpush1.msra.mxu0 0.0
    %2566 = vmatprep.subr.mxu0 0.0
    %2567 = vmatpush1.msra.mxu0 0.0
    %2568 = vmatprep.subr.mxu0 0.0
    %2569 = vmatpush1.msra.mxu0 0.0
    %2570 = vmatprep.subr.mxu0 0.0
    %2571 = vmatpush1.msra.mxu0 0.0
    %2572 = vmatprep.subr.mxu0 0.0
    %2573 = vmatpush1.msra.mxu0 0.0
    %2574 = vmatprep.subr.mxu0 0.0
    %2575 = vmatpush1.msra.mxu0 0.0
    %2576 = vmatprep.subr.mxu0 0.0
    %2577 = vmatpush1.msra.mxu0 0.0
    %2578 = vmatprep.subr.mxu0 0.0
    %2579 = vmatpush1.msra.mxu0 0.0
    %2580 = vmatprep.subr.mxu0 0.0
    %2581 = vmatpush1.msra.mxu0 0.0
    %2582 = vmatprep.subr.mxu0 0.0
    %2583 = vmatpush1.msra.mxu0 0.0
    %2584 = vmatprep.subr.mxu0 0.0
    %2585 = vmatpush1.msra.mxu0 0.0
    %2586 = vmatprep.mubr.f32.mxu0 0.0
    %2587 = vmatmul.mubr.f32.gmra.mrb[0].mxu0 %v646
    %v2588 = vpop.f32.mrb[0].mxu0
    %v2589 = vadd.f32 %v2520, %v2588
    %v2590 = vpop.f32.mrb[0].mxu0
    %2591 = vmatprep.mubr.f32.mxu0 0.0
    %2592 = vmatmul.mubr.f32.gmra.mrb[0].mxu0 %v646
    %v2593 = vpop.f32.mrb[0].mxu0
    %v2594 = vadd.f32 %v2520, %v2593
    %v2595 = vpop.f32.mrb[0].mxu0
    %2596 = vmatprep.mubr.f32.mxu0 0.0
    %2597 = vmatmul.mubr.f32.gmra.mrb[0].mxu0 %v646
    %v2598 = vpop.f32.mrb[0].mxu0
    %v2599 = vadd.f32 %v2520, %v2598
    %v2600 = vpop.f32.mrb[0].mxu0
    %2601 = vdwg.mxu0
    %v2602 = vadd.f32 %v2510, %v2589
    %v2603 = vadd.f32 %v2511, %v2594
    %v2604 = vadd.f32 %v2512, %v2599
    %v2605 = vxor.u32 %v2602, 2147483648
    %v2606 = vxor.u32 %v2603, 2147483648
    %v2607 = vxor.u32 %v2604, 2147483648
    %v2608 = vmul.f32 %v2605, 1.442695
    %v2609 = vpow.pop %v2608
    %v2610 = vmul.f32 %v2606, 1.442695
    %v2611 = vpow.pop %v2610
    %v2612 = vmul.f32 %v2607, 1.442695
    %v2613 = vpow.pop %v2612
    %v2614 = vadd.f32 %v2609, 1.0
    %v2615 = vadd.f32 %v2611, 1.0
    %v2616 = vadd.f32 %v2613, 1.0
    %v2617 = vrcp.pop %v2614
    %v2618 = vmul.f32 1.0, %v2617
    %v2619 = vrcp.pop %v2615
    %v2620 = vmul.f32 1.0, %v2619
    %v2621 = vrcp.pop %v2616
    %v2622 = vmul.f32 1.0, %v2621
    %2626 = vrot.lane.b32.xlu0 %v2589, 64
    %v2627 = vpop.permute.xlu0 %2626
    %2628 = vrot.lane.b32.xlu0 %v2594, 64
    %v2629 = vpop.permute.xlu0 %2628
    %2630 = vrot.lane.b32.xlu0 %v2599, 64
    %v2631 = vpop.permute.xlu0 %2630
    %v2635 = vmul.f32 %v2618, %v2627
    %v2636 = vmul.f32 %v2620, %v2629
    %v2637 = vmul.f32 %v2622, %v2631
    %2641 = vrot.lane.b32.xlu0 %v2635, 64
    %v2642 = vpop.permute.xlu0 %2641
    %2643 = vrot.lane.b32.xlu0 %v2636, 64
    %v2644 = vpop.permute.xlu0 %2643
    %2645 = vrot.lane.b32.xlu0 %v2637, 64
    %v2646 = vpop.permute.xlu0 %2645
    %v2650 = vadd.f32 %v2510, %v2642
    %v2651 = vadd.f32 %v2511, %v2644
    %v2652 = vadd.f32 %v2512, %v2646
    %v2653 = vtanh.pop %v2650
    %v2654 = vtanh.pop %v2651
    %v2655 = vtanh.pop %v2652
    %v2656 = vsub.f32 1.0, %v2618
    %v2657 = vsub.f32 1.0, %v2620
    %v2658 = vsub.f32 1.0, %v2622
    %2662 = vrot.lane.b32.xlu0 %v2653, 96
    %v2663 = vpop.permute.xlu0 %2662
    %2664 = vrot.lane.b32.xlu0 %v2654, 96
    %v2665 = vpop.permute.xlu0 %2664
    %2666 = vrot.lane.b32.xlu0 %v2655, 96
    %v2667 = vpop.permute.xlu0 %2666
    %v2671 = vmul.f32 %v2656, %v2663
    %v2672 = vmul.f32 %v2657, %v2665
    %v2673 = vmul.f32 %v2658, %v2667
    %v2674 = vmul.f32 %v2618, 0.0
    %v2675 = vmul.f32 %v2620, 0.0
    %v2676 = vmul.f32 %v2622, 0.0
    %v2677 = vadd.f32 %v2671, %v2674
    %v2678 = vadd.f32 %v2672, %v2675
    %v2679 = vadd.f32 %v2673, %v2676
    %vm2680 = vcmp.gt.f32.partialorder %v2513, 0.0
    %vm2681 = vcmp.gt.f32.partialorder %v2514, 0.0
    %vm2682 = vcmp.gt.f32.partialorder %v2515, 0.0
    %v2683 = vsel %vm2680, 1, 0
    %v2684 = vsel %vm2681, 1, 0
    %v2685 = vsel %vm2682, 1, 0
    %2686 = vset.pattern.permute.xlu0 0
    %2687 = vperm.xlu0 %2686, %v2683
    %v2688 = vpop.permute.xlu0 %2687
    %2689 = vset.pattern.permute.xlu0 0
    %2690 = vperm.xlu0 %2689, %v2684
    %v2691 = vpop.permute.xlu0 %2690
    %2692 = vset.pattern.permute.xlu0 0
    %2693 = vperm.xlu0 %2692, %v2685
    %v2694 = vpop.permute.xlu0 %2693
    %vm2695 = vcmp.eq.s32.totalorder %v2688, 1
    %vm2696 = vcmp.eq.s32.totalorder %v2691, 1
    %vm2697 = vcmp.eq.s32.totalorder %v2694, 1
    %v2698 = vsel %vm2695, %v2677, 0.0
    %v2699 = vsel %vm2696, %v2678, 0.0
    %v2700 = vsel %vm2697, %v2679, 0.0
    %2702 = vset.pattern.permute.xlu0 0
    %2703 = vperm.xlu0 %2702, %v2513
    %v2704 = vpop.permute.xlu0 %2703
    %2707 = vset.pattern.permute.xlu0 0
    %2708 = vperm.xlu0 %2707, %v2514
    %v2709 = vpop.permute.xlu0 %2708
    %2712 = vset.pattern.permute.xlu0 0
    %2713 = vperm.xlu0 %2712, %v2515
    %v2714 = vpop.permute.xlu0 %2713
    %v2716 = vmul.f32 %v2698, %v2704
    %v2717 = vmul.f32 %v2699, %v2709
    %v2718 = vmul.f32 %v2700, %v2714
    %2722 = vrot.lane.b32.xlu0 %v2716, 96
    %v2723 = vpop.permute.xlu0 %2722
    %2724 = vrot.lane.b32.xlu0 %v2717, 96
    %v2725 = vpop.permute.xlu0 %2724
    %2726 = vrot.lane.b32.xlu0 %v2718, 96
    %v2727 = vpop.permute.xlu0 %2726
    %s2731 = scalar_lea.vmem [#allocation5], 168
    %2732 = vst.msk [vmem:[%s2731] sm:$0xff] %vm91, %v2723
    %2733 = vst.msk [vmem:[%s2731 + $0x8] sm:$0xff] %vm91, %v2725
    %2734 = vst.msk [vmem:[%s2731 + $0x10] sm:$0xff] %vm91, %v2727
    %v2735 = vld [vmem:[%s592] sm:$0xff]
    %v2736 = vld [vmem:[%s592 + $0x8] sm:$0xff]
    %v2737 = vld [vmem:[%s592 + $0x10] sm:$0xff]
    %v2738 = vld [vmem:[%s2038] sm:$0xff]
    %v2739 = vld [vmem:[%s2038 + $0x8] sm:$0xff]
    %v2740 = vld [vmem:[%s2038 + $0x10] sm:$0xff]
    %2744 = vrot.lane.b32.xlu0 %v2698, 96
    %v2745 = vpop.permute.xlu0 %2744
    %2746 = vrot.lane.b32.xlu0 %v2699, 96
    %v2747 = vpop.permute.xlu0 %2746
    %2748 = vrot.lane.b32.xlu0 %v2700, 96
    %v2749 = vpop.permute.xlu0 %2748
    %v2750 = vsel %vm91, %v2745, 0
    %v2752 = vsel %vm91, %v2747, 0
    %v2754 = vsel %vm91, %v2749, 0
    %2756 = vmatprep.subr.mxu0 0.0
    %2757 = vmatpush1.msra.mxu0 %v2505
    %2758 = vmatprep.subr.mxu0 0.0
    %2759 = vmatpush1.msra.mxu0 %v2506
    %2760 = vmatprep.subr.mxu0 0.0
    %2761 = vmatpush1.msra.mxu0 %v2507
    %2762 = vmatprep.subr.mxu0 0.0
    %2763 = vmatpush1.msra.mxu0 %v2508
    %2764 = vmatprep.subr.mxu0 0.0
    %2765 = vmatpush1.msra.mxu0 0.0
    %2766 = vmatprep.subr.mxu0 0.0
    %2767 = vmatpush1.msra.mxu0 0.0
    %2768 = vmatprep.subr.mxu0 0.0
    %2769 = vmatpush1.msra.mxu0 0.0
    %2770 = vmatprep.subr.mxu0 0.0
    %2771 = vmatpush1.msra.mxu0 0.0
    %2772 = vmatprep.subr.mxu0 0.0
    %2773 = vmatpush1.msra.mxu0 0.0
    %2774 = vmatprep.subr.mxu0 0.0
    %2775 = vmatpush1.msra.mxu0 0.0
    %2776 = vmatprep.subr.mxu0 0.0
    %2777 = vmatpush1.msra.mxu0 0.0
    %2778 = vmatprep.subr.mxu0 0.0
    %2779 = vmatpush1.msra.mxu0 0.0
    %2780 = vmatprep.subr.mxu0 0.0
    %2781 = vmatpush1.msra.mxu0 0.0
    %2782 = vmatprep.subr.mxu0 0.0
    %2783 = vmatpush1.msra.mxu0 0.0
    %2784 = vmatprep.subr.mxu0 0.0
    %2785 = vmatpush1.msra.mxu0 0.0
    %2786 = vmatprep.subr.mxu0 0.0
    %2787 = vmatpush1.msra.mxu0 0.0
    %2788 = vmatprep.subr.mxu0 0.0
    %2789 = vmatpush1.msra.mxu0 0.0
    %2790 = vmatprep.subr.mxu0 0.0
    %2791 = vmatpush1.msra.mxu0 0.0
    %2792 = vmatprep.subr.mxu0 0.0
    %2793 = vmatpush1.msra.mxu0 0.0
    %2794 = vmatprep.subr.mxu0 0.0
    %2795 = vmatpush1.msra.mxu0 0.0
    %2796 = vmatprep.subr.mxu0 0.0
    %2797 = vmatpush1.msra.mxu0 0.0
    %2798 = vmatprep.subr.mxu0 0.0
    %2799 = vmatpush1.msra.mxu0 0.0
    %2800 = vmatprep.subr.mxu0 0.0
    %2801 = vmatpush1.msra.mxu0 0.0
    %2802 = vmatprep.subr.mxu0 0.0
    %2803 = vmatpush1.msra.mxu0 0.0
    %2804 = vmatprep.subr.mxu0 0.0
    %2805 = vmatpush1.msra.mxu0 0.0
    %2806 = vmatprep.subr.mxu0 0.0
    %2807 = vmatpush1.msra.mxu0 0.0
    %2808 = vmatprep.subr.mxu0 0.0
    %2809 = vmatpush1.msra.mxu0 0.0
    %2810 = vmatprep.subr.mxu0 0.0
    %2811 = vmatpush1.msra.mxu0 0.0
    %2812 = vmatprep.subr.mxu0 0.0
    %2813 = vmatpush1.msra.mxu0 0.0
    %2814 = vmatprep.subr.mxu0 0.0
    %2815 = vmatpush1.msra.mxu0 0.0
    %2816 = vmatprep.subr.mxu0 0.0
    %2817 = vmatpush1.msra.mxu0 0.0
    %2818 = vmatprep.subr.mxu0 0.0
    %2819 = vmatpush1.msra.mxu0 0.0
    %2820 = vmatprep.mubr.f32.mxu0 0.0
    %2821 = vmatmul.mubr.f32.gmra.mrb[0].mxu0 %v2750
    %v2822 = vpop.f32.mrb[0].mxu0
    %v2823 = vadd.f32 %v2520, %v2822
    %v2824 = vpop.f32.mrb[0].mxu0
    %2825 = vmatprep.mubr.f32.mxu0 0.0
    %2826 = vmatmul.mubr.f32.gmra.mrb[0].mxu0 %v2752
    %v2827 = vpop.f32.mrb[0].mxu0
    %v2828 = vadd.f32 %v2520, %v2827
    %v2829 = vpop.f32.mrb[0].mxu0
    %2830 = vmatprep.mubr.f32.mxu0 0.0
    %2831 = vmatmul.mubr.f32.gmra.mrb[0].mxu0 %v2754
    %v2832 = vpop.f32.mrb[0].mxu0
    %v2833 = vadd.f32 %v2520, %v2832
    %v2834 = vpop.f32.mrb[0].mxu0
    %2835 = vdwg.mxu0
    %v2836 = vadd.f32 %v2735, %v2823
    %v2837 = vadd.f32 %v2736, %v2828
    %v2838 = vadd.f32 %v2737, %v2833
    %v2839 = vxor.u32 %v2836, 2147483648
    %v2840 = vxor.u32 %v2837, 2147483648
    %v2841 = vxor.u32 %v2838, 2147483648
    %v2842 = vmul.f32 %v2839, 1.442695
    %v2843 = vpow.pop %v2842
    %v2844 = vmul.f32 %v2840, 1.442695
    %v2845 = vpow.pop %v2844
    %v2846 = vmul.f32 %v2841, 1.442695
    %v2847 = vpow.pop %v2846
    %v2848 = vadd.f32 %v2843, 1.0
    %v2849 = vadd.f32 %v2845, 1.0
    %v2850 = vadd.f32 %v2847, 1.0
    %v2851 = vrcp.pop %v2848
    %v2852 = vmul.f32 1.0, %v2851
    %v2853 = vrcp.pop %v2849
    %v2854 = vmul.f32 1.0, %v2853
    %v2855 = vrcp.pop %v2850
    %v2856 = vmul.f32 1.0, %v2855
    %2860 = vrot.lane.b32.xlu0 %v2823, 64
    %v2861 = vpop.permute.xlu0 %2860
    %2862 = vrot.lane.b32.xlu0 %v2828, 64
    %v2863 = vpop.permute.xlu0 %2862
    %2864 = vrot.lane.b32.xlu0 %v2833, 64
    %v2865 = vpop.permute.xlu0 %2864
    %v2869 = vmul.f32 %v2852, %v2861
    %v2870 = vmul.f32 %v2854, %v2863
    %v2871 = vmul.f32 %v2856, %v2865
    %2875 = vrot.lane.b32.xlu0 %v2869, 64
    %v2876 = vpop.permute.xlu0 %2875
    %2877 = vrot.lane.b32.xlu0 %v2870, 64
    %v2878 = vpop.permute.xlu0 %2877
    %2879 = vrot.lane.b32.xlu0 %v2871, 64
    %v2880 = vpop.permute.xlu0 %2879
    %v2884 = vadd.f32 %v2735, %v2876
    %v2885 = vadd.f32 %v2736, %v2878
    %v2886 = vadd.f32 %v2737, %v2880
    %v2887 = vtanh.pop %v2884
    %v2888 = vtanh.pop %v2885
    %v2889 = vtanh.pop %v2886
    %v2890 = vsub.f32 1.0, %v2852
    %v2891 = vsub.f32 1.0, %v2854
    %v2892 = vsub.f32 1.0, %v2856
    %2896 = vrot.lane.b32.xlu0 %v2887, 96
    %v2897 = vpop.permute.xlu0 %2896
    %2898 = vrot.lane.b32.xlu0 %v2888, 96
    %v2899 = vpop.permute.xlu0 %2898
    %2900 = vrot.lane.b32.xlu0 %v2889, 96
    %v2901 = vpop.permute.xlu0 %2900
    %v2905 = vmul.f32 %v2890, %v2897
    %v2906 = vmul.f32 %v2891, %v2899
    %v2907 = vmul.f32 %v2892, %v2901
    %v2908 = vmul.f32 %v2852, %v2698
    %v2909 = vmul.f32 %v2854, %v2699
    %v2910 = vmul.f32 %v2856, %v2700
    %v2911 = vadd.f32 %v2905, %v2908
    %v2912 = vadd.f32 %v2906, %v2909
    %v2913 = vadd.f32 %v2907, %v2910
    %vm2914 = vcmp.gt.f32.partialorder %v2738, 0.0
    %vm2915 = vcmp.gt.f32.partialorder %v2739, 0.0
    %vm2916 = vcmp.gt.f32.partialorder %v2740, 0.0
    %v2917 = vsel %vm2914, 1, 0
    %v2918 = vsel %vm2915, 1, 0
    %v2919 = vsel %vm2916, 1, 0
    %2920 = vset.pattern.permute.xlu0 0
    %2921 = vperm.xlu0 %2920, %v2917
    %v2922 = vpop.permute.xlu0 %2921
    %2923 = vset.pattern.permute.xlu0 0
    %2924 = vperm.xlu0 %2923, %v2918
    %v2925 = vpop.permute.xlu0 %2924
    %2926 = vset.pattern.permute.xlu0 0
    %2927 = vperm.xlu0 %2926, %v2919
    %v2928 = vpop.permute.xlu0 %2927
    %vm2929 = vcmp.eq.s32.totalorder %v2922, 1
    %vm2930 = vcmp.eq.s32.totalorder %v2925, 1
    %vm2931 = vcmp.eq.s32.totalorder %v2928, 1
    %v2932 = vsel %vm2929, %v2911, %v2698
    %v2933 = vsel %vm2930, %v2912, %v2699
    %v2934 = vsel %vm2931, %v2913, %v2700
    %2936 = vset.pattern.permute.xlu0 0
    %2937 = vperm.xlu0 %2936, %v2738
    %v2938 = vpop.permute.xlu0 %2937
    %2941 = vset.pattern.permute.xlu0 0
    %2942 = vperm.xlu0 %2941, %v2739
    %v2943 = vpop.permute.xlu0 %2942
    %2946 = vset.pattern.permute.xlu0 0
    %2947 = vperm.xlu0 %2946, %v2740
    %v2948 = vpop.permute.xlu0 %2947
    %v2950 = vmul.f32 %v2932, %v2938
    %v2951 = vmul.f32 %v2933, %v2943
    %v2952 = vmul.f32 %v2934, %v2948
    %2956 = vrot.lane.b32.xlu0 %v2950, 96
    %v2957 = vpop.permute.xlu0 %2956
    %2958 = vrot.lane.b32.xlu0 %v2951, 96
    %v2959 = vpop.permute.xlu0 %2958
    %2960 = vrot.lane.b32.xlu0 %v2952, 96
    %v2961 = vpop.permute.xlu0 %2960
    %s2965 = scalar_lea.vmem [#allocation5], 144
    %2966 = vst.msk [vmem:[%s2965] sm:$0xff] %vm91, %v2957
    %2967 = vst.msk [vmem:[%s2965 + $0x8] sm:$0xff] %vm91, %v2959
    %2968 = vst.msk [vmem:[%s2965 + $0x10] sm:$0xff] %vm91, %v2961
    %v2969 = vld [vmem:[%s560] sm:$0xff]
    %v2970 = vld [vmem:[%s560 + $0x8] sm:$0xff]
    %v2971 = vld [vmem:[%s560 + $0x10] sm:$0xff]
    %v2972 = vld [vmem:[%s1803] sm:$0xff]
    %v2973 = vld [vmem:[%s1803 + $0x8] sm:$0xff]
    %v2974 = vld [vmem:[%s1803 + $0x10] sm:$0xff]
    %2978 = vrot.lane.b32.xlu0 %v2932, 96
    %v2979 = vpop.permute.xlu0 %2978
    %2980 = vrot.lane.b32.xlu0 %v2933, 96
    %v2981 = vpop.permute.xlu0 %2980
    %2982 = vrot.lane.b32.xlu0 %v2934, 96
    %v2983 = vpop.permute.xlu0 %2982
    %v2984 = vsel %vm91, %v2979, 0
    %v2986 = vsel %vm91, %v2981, 0
    %v2988 = vsel %vm91, %v2983, 0
    %2990 = vmatprep.subr.mxu0 0.0
    %2991 = vmatpush1.msra.mxu0 %v2505
    %2992 = vmatprep.subr.mxu0 0.0
    %2993 = vmatpush1.msra.mxu0 %v2506
    %2994 = vmatprep.subr.mxu0 0.0
    %2995 = vmatpush1.msra.mxu0 %v2507
    %2996 = vmatprep.subr.mxu0 0.0
    %2997 = vmatpush1.msra.mxu0 %v2508
    %2998 = vmatprep.subr.mxu0 0.0
    %2999 = vmatpush1.msra.mxu0 0.0
    %3000 = vmatprep.subr.mxu0 0.0
    %3001 = vmatpush1.msra.mxu0 0.0
    %3002 = vmatprep.subr.mxu0 0.0
    %3003 = vmatpush1.msra.mxu0 0.0
    %3004 = vmatprep.subr.mxu0 0.0
    %3005 = vmatpush1.msra.mxu0 0.0
    %3006 = vmatprep.subr.mxu0 0.0
    %3007 = vmatpush1.msra.mxu0 0.0
    %3008 = vmatprep.subr.mxu0 0.0
    %3009 = vmatpush1.msra.mxu0 0.0
    %3010 = vmatprep.subr.mxu0 0.0
    %3011 = vmatpush1.msra.mxu0 0.0
    %3012 = vmatprep.subr.mxu0 0.0
    %3013 = vmatpush1.msra.mxu0 0.0
    %3014 = vmatprep.subr.mxu0 0.0
    %3015 = vmatpush1.msra.mxu0 0.0
    %3016 = vmatprep.subr.mxu0 0.0
    %3017 = vmatpush1.msra.mxu0 0.0
    %3018 = vmatprep.subr.mxu0 0.0
    %3019 = vmatpush1.msra.mxu0 0.0
    %3020 = vmatprep.subr.mxu0 0.0
    %3021 = vmatpush1.msra.mxu0 0.0
    %3022 = vmatprep.subr.mxu0 0.0
    %3023 = vmatpush1.msra.mxu0 0.0
    %3024 = vmatprep.subr.mxu0 0.0
    %3025 = vmatpush1.msra.mxu0 0.0
    %3026 = vmatprep.subr.mxu0 0.0
    %3027 = vmatpush1.msra.mxu0 0.0
    %3028 = vmatprep.subr.mxu0 0.0
    %3029 = vmatpush1.msra.mxu0 0.0
    %3030 = vmatprep.subr.mxu0 0.0
    %3031 = vmatpush1.msra.mxu0 0.0
    %3032 = vmatprep.subr.mxu0 0.0
    %3033 = vmatpush1.msra.mxu0 0.0
    %3034 = vmatprep.subr.mxu0 0.0
    %3035 = vmatpush1.msra.mxu0 0.0
    %3036 = vmatprep.subr.mxu0 0.0
    %3037 = vmatpush1.msra.mxu0 0.0
    %3038 = vmatprep.subr.mxu0 0.0
    %3039 = vmatpush1.msra.mxu0 0.0
    %3040 = vmatprep.subr.mxu0 0.0
    %3041 = vmatpush1.msra.mxu0 0.0
    %3042 = vmatprep.subr.mxu0 0.0
    %3043 = vmatpush1.msra.mxu0 0.0
    %3044 = vmatprep.subr.mxu0 0.0
    %3045 = vmatpush1.msra.mxu0 0.0
    %3046 = vmatprep.subr.mxu0 0.0
    %3047 = vmatpush1.msra.mxu0 0.0
    %3048 = vmatprep.subr.mxu0 0.0
    %3049 = vmatpush1.msra.mxu0 0.0
    %3050 = vmatprep.subr.mxu0 0.0
    %3051 = vmatpush1.msra.mxu0 0.0
    %3052 = vmatprep.subr.mxu0 0.0
    %3053 = vmatpush1.msra.mxu0 0.0
    %3054 = vmatprep.mubr.f32.mxu0 0.0
    %3055 = vmatmul.mubr.f32.gmra.mrb[0].mxu0 %v2984
    %v3056 = vpop.f32.mrb[0].mxu0
    %v3057 = vadd.f32 %v2520, %v3056
    %v3058 = vpop.f32.mrb[0].mxu0
    %3059 = vmatprep.mubr.f32.mxu0 0.0
    %3060 = vmatmul.mubr.f32.gmra.mrb[0].mxu0 %v2986
    %v3061 = vpop.f32.mrb[0].mxu0
    %v3062 = vadd.f32 %v2520, %v3061
    %v3063 = vpop.f32.mrb[0].mxu0
    %3064 = vmatprep.mubr.f32.mxu0 0.0
    %3065 = vmatmul.mubr.f32.gmra.mrb[0].mxu0 %v2988
    %v3066 = vpop.f32.mrb[0].mxu0
    %v3067 = vadd.f32 %v2520, %v3066
    %v3068 = vpop.f32.mrb[0].mxu0
    %3069 = vdwg.mxu0
    %v3070 = vadd.f32 %v2969, %v3057
    %v3071 = vadd.f32 %v2970, %v3062
    %v3072 = vadd.f32 %v2971, %v3067
    %v3073 = vxor.u32 %v3070, 2147483648
    %v3074 = vxor.u32 %v3071, 2147483648
    %v3075 = vxor.u32 %v3072, 2147483648
    %v3076 = vmul.f32 %v3073, 1.442695
    %v3077 = vpow.pop %v3076
    %v3078 = vmul.f32 %v3074, 1.442695
    %v3079 = vpow.pop %v3078
    %v3080 = vmul.f32 %v3075, 1.442695
    %v3081 = vpow.pop %v3080
    %v3082 = vadd.f32 %v3077, 1.0
    %v3083 = vadd.f32 %v3079, 1.0
    %v3084 = vadd.f32 %v3081, 1.0
    %v3085 = vrcp.pop %v3082
    %v3086 = vmul.f32 1.0, %v3085
    %v3087 = vrcp.pop %v3083
    %v3088 = vmul.f32 1.0, %v3087
    %v3089 = vrcp.pop %v3084
    %v3090 = vmul.f32 1.0, %v3089
    %3094 = vrot.lane.b32.xlu0 %v3057, 64
    %v3095 = vpop.permute.xlu0 %3094
    %3096 = vrot.lane.b32.xlu0 %v3062, 64
    %v3097 = vpop.permute.xlu0 %3096
    %3098 = vrot.lane.b32.xlu0 %v3067, 64
    %v3099 = vpop.permute.xlu0 %3098
    %v3103 = vmul.f32 %v3086, %v3095
    %v3104 = vmul.f32 %v3088, %v3097
    %v3105 = vmul.f32 %v3090, %v3099
    %3109 = vrot.lane.b32.xlu0 %v3103, 64
    %v3110 = vpop.permute.xlu0 %3109
    %3111 = vrot.lane.b32.xlu0 %v3104, 64
    %v3112 = vpop.permute.xlu0 %3111
    %3113 = vrot.lane.b32.xlu0 %v3105, 64
    %v3114 = vpop.permute.xlu0 %3113
    %v3118 = vadd.f32 %v2969, %v3110
    %v3119 = vadd.f32 %v2970, %v3112
    %v3120 = vadd.f32 %v2971, %v3114
    %v3121 = vtanh.pop %v3118
    %v3122 = vtanh.pop %v3119
    %v3123 = vtanh.pop %v3120
    %v3124 = vsub.f32 1.0, %v3086
    %v3125 = vsub.f32 1.0, %v3088
    %v3126 = vsub.f32 1.0, %v3090
    %3130 = vrot.lane.b32.xlu0 %v3121, 96
    %v3131 = vpop.permute.xlu0 %3130
    %3132 = vrot.lane.b32.xlu0 %v3122, 96
    %v3133 = vpop.permute.xlu0 %3132
    %3134 = vrot.lane.b32.xlu0 %v3123, 96
    %v3135 = vpop.permute.xlu0 %3134
    %v3139 = vmul.f32 %v3124, %v3131
    %v3140 = vmul.f32 %v3125, %v3133
    %v3141 = vmul.f32 %v3126, %v3135
    %v3142 = vmul.f32 %v3086, %v2932
    %v3143 = vmul.f32 %v3088, %v2933
    %v3144 = vmul.f32 %v3090, %v2934
    %v3145 = vadd.f32 %v3139, %v3142
    %v3146 = vadd.f32 %v3140, %v3143
    %v3147 = vadd.f32 %v3141, %v3144
    %vm3148 = vcmp.gt.f32.partialorder %v2972, 0.0
    %vm3149 = vcmp.gt.f32.partialorder %v2973, 0.0
    %vm3150 = vcmp.gt.f32.partialorder %v2974, 0.0
    %v3151 = vsel %vm3148, 1, 0
    %v3152 = vsel %vm3149, 1, 0
    %v3153 = vsel %vm3150, 1, 0
    %3154 = vset.pattern.permute.xlu0 0
    %3155 = vperm.xlu0 %3154, %v3151
    %v3156 = vpop.permute.xlu0 %3155
    %3157 = vset.pattern.permute.xlu0 0
    %3158 = vperm.xlu0 %3157, %v3152
    %v3159 = vpop.permute.xlu0 %3158
    %3160 = vset.pattern.permute.xlu0 0
    %3161 = vperm.xlu0 %3160, %v3153
    %v3162 = vpop.permute.xlu0 %3161
    %vm3163 = vcmp.eq.s32.totalorder %v3156, 1
    %vm3164 = vcmp.eq.s32.totalorder %v3159, 1
    %vm3165 = vcmp.eq.s32.totalorder %v3162, 1
    %v3166 = vsel %vm3163, %v3145, %v2932
    %v3167 = vsel %vm3164, %v3146, %v2933
    %v3168 = vsel %vm3165, %v3147, %v2934
    %3170 = vset.pattern.permute.xlu0 0
    %3171 = vperm.xlu0 %3170, %v2972
    %v3172 = vpop.permute.xlu0 %3171
    %3175 = vset.pattern.permute.xlu0 0
    %3176 = vperm.xlu0 %3175, %v2973
    %v3177 = vpop.permute.xlu0 %3176
    %3180 = vset.pattern.permute.xlu0 0
    %3181 = vperm.xlu0 %3180, %v2974
    %v3182 = vpop.permute.xlu0 %3181
    %v3184 = vmul.f32 %v3166, %v3172
    %v3185 = vmul.f32 %v3167, %v3177
    %v3186 = vmul.f32 %v3168, %v3182
    %3190 = vrot.lane.b32.xlu0 %v3184, 96
    %v3191 = vpop.permute.xlu0 %3190
    %3192 = vrot.lane.b32.xlu0 %v3185, 96
    %v3193 = vpop.permute.xlu0 %3192
    %3194 = vrot.lane.b32.xlu0 %v3186, 96
    %v3195 = vpop.permute.xlu0 %3194
    %s3199 = scalar_lea.vmem [#allocation5], 120
    %3200 = vst.msk [vmem:[%s3199] sm:$0xff] %vm91, %v3191
    %3201 = vst.msk [vmem:[%s3199 + $0x8] sm:$0xff] %vm91, %v3193
    %3202 = vst.msk [vmem:[%s3199 + $0x10] sm:$0xff] %vm91, %v3195
    %v3203 = vld [vmem:[%s528] sm:$0xff]
    %v3204 = vld [vmem:[%s528 + $0x8] sm:$0xff]
    %v3205 = vld [vmem:[%s528 + $0x10] sm:$0xff]
    %v3206 = vld [vmem:[%s1568] sm:$0xff]
    %v3207 = vld [vmem:[%s1568 + $0x8] sm:$0xff]
    %v3208 = vld [vmem:[%s1568 + $0x10] sm:$0xff]
    %3212 = vrot.lane.b32.xlu0 %v3166, 96
    %v3213 = vpop.permute.xlu0 %3212
    %3214 = vrot.lane.b32.xlu0 %v3167, 96
    %v3215 = vpop.permute.xlu0 %3214
    %3216 = vrot.lane.b32.xlu0 %v3168, 96
    %v3217 = vpop.permute.xlu0 %3216
    %v3218 = vsel %vm91, %v3213, 0
    %v3220 = vsel %vm91, %v3215, 0
    %v3222 = vsel %vm91, %v3217, 0
    %3224 = vmatprep.subr.mxu0 0.0
    %3225 = vmatpush1.msra.mxu0 %v2505
    %3226 = vmatprep.subr.mxu0 0.0
    %3227 = vmatpush1.msra.mxu0 %v2506
    %3228 = vmatprep.subr.mxu0 0.0
    %3229 = vmatpush1.msra.mxu0 %v2507
    %3230 = vmatprep.subr.mxu0 0.0
    %3231 = vmatpush1.msra.mxu0 %v2508
    %3232 = vmatprep.subr.mxu0 0.0
    %3233 = vmatpush1.msra.mxu0 0.0
    %3234 = vmatprep.subr.mxu0 0.0
    %3235 = vmatpush1.msra.mxu0 0.0
    %3236 = vmatprep.subr.mxu0 0.0
    %3237 = vmatpush1.msra.mxu0 0.0
    %3238 = vmatprep.subr.mxu0 0.0
    %3239 = vmatpush1.msra.mxu0 0.0
    %3240 = vmatprep.subr.mxu0 0.0
    %3241 = vmatpush1.msra.mxu0 0.0
    %3242 = vmatprep.subr.mxu0 0.0
    %3243 = vmatpush1.msra.mxu0 0.0
    %3244 = vmatprep.subr.mxu0 0.0
    %3245 = vmatpush1.msra.mxu0 0.0
    %3246 = vmatprep.subr.mxu0 0.0
    %3247 = vmatpush1.msra.mxu0 0.0
    %3248 = vmatprep.subr.mxu0 0.0
    %3249 = vmatpush1.msra.mxu0 0.0
    %3250 = vmatprep.subr.mxu0 0.0
    %3251 = vmatpush1.msra.mxu0 0.0
    %3252 = vmatprep.subr.mxu0 0.0
    %3253 = vmatpush1.msra.mxu0 0.0
    %3254 = vmatprep.subr.mxu0 0.0
    %3255 = vmatpush1.msra.mxu0 0.0
    %3256 = vmatprep.subr.mxu0 0.0
    %3257 = vmatpush1.msra.mxu0 0.0
    %3258 = vmatprep.subr.mxu0 0.0
    %3259 = vmatpush1.msra.mxu0 0.0
    %3260 = vmatprep.subr.mxu0 0.0
    %3261 = vmatpush1.msra.mxu0 0.0
    %3262 = vmatprep.subr.mxu0 0.0
    %3263 = vmatpush1.msra.mxu0 0.0
    %3264 = vmatprep.subr.mxu0 0.0
    %3265 = vmatpush1.msra.mxu0 0.0
    %3266 = vmatprep.subr.mxu0 0.0
    %3267 = vmatpush1.msra.mxu0 0.0
    %3268 = vmatprep.subr.mxu0 0.0
    %3269 = vmatpush1.msra.mxu0 0.0
    %3270 = vmatprep.subr.mxu0 0.0
    %3271 = vmatpush1.msra.mxu0 0.0
    %3272 = vmatprep.subr.mxu0 0.0
    %3273 = vmatpush1.msra.mxu0 0.0
    %3274 = vmatprep.subr.mxu0 0.0
    %3275 = vmatpush1.msra.mxu0 0.0
    %3276 = vmatprep.subr.mxu0 0.0
    %3277 = vmatpush1.msra.mxu0 0.0
    %3278 = vmatprep.subr.mxu0 0.0
    %3279 = vmatpush1.msra.mxu0 0.0
    %3280 = vmatprep.subr.mxu0 0.0
    %3281 = vmatpush1.msra.mxu0 0.0
    %3282 = vmatprep.subr.mxu0 0.0
    %3283 = vmatpush1.msra.mxu0 0.0
    %3284 = vmatprep.subr.mxu0 0.0
    %3285 = vmatpush1.msra.mxu0 0.0
    %3286 = vmatprep.subr.mxu0 0.0
    %3287 = vmatpush1.msra.mxu0 0.0
    %3288 = vmatprep.mubr.f32.mxu0 0.0
    %3289 = vmatmul.mubr.f32.gmra.mrb[0].mxu0 %v3218
    %v3290 = vpop.f32.mrb[0].mxu0
    %v3291 = vadd.f32 %v2520, %v3290
    %v3292 = vpop.f32.mrb[0].mxu0
    %3293 = vmatprep.mubr.f32.mxu0 0.0
    %3294 = vmatmul.mubr.f32.gmra.mrb[0].mxu0 %v3220
    %v3295 = vpop.f32.mrb[0].mxu0
    %v3296 = vadd.f32 %v2520, %v3295
    %v3297 = vpop.f32.mrb[0].mxu0
    %3298 = vmatprep.mubr.f32.mxu0 0.0
    %3299 = vmatmul.mubr.f32.gmra.mrb[0].mxu0 %v3222
    %v3300 = vpop.f32.mrb[0].mxu0
    %v3301 = vadd.f32 %v2520, %v3300
    %v3302 = vpop.f32.mrb[0].mxu0
    %3303 = vdwg.mxu0
    %v3304 = vadd.f32 %v3203, %v3291
    %v3305 = vadd.f32 %v3204, %v3296
    %v3306 = vadd.f32 %v3205, %v3301
    %v3307 = vxor.u32 %v3304, 2147483648
    %v3308 = vxor.u32 %v3305, 2147483648
    %v3309 = vxor.u32 %v3306, 2147483648
    %v3310 = vmul.f32 %v3307, 1.442695
    %v3311 = vpow.pop %v3310
    %v3312 = vmul.f32 %v3308, 1.442695
    %v3313 = vpow.pop %v3312
    %v3314 = vmul.f32 %v3309, 1.442695
    %v3315 = vpow.pop %v3314
    %v3316 = vadd.f32 %v3311, 1.0
    %v3317 = vadd.f32 %v3313, 1.0
    %v3318 = vadd.f32 %v3315, 1.0
    %v3319 = vrcp.pop %v3316
    %v3320 = vmul.f32 1.0, %v3319
    %v3321 = vrcp.pop %v3317
    %v3322 = vmul.f32 1.0, %v3321
    %v3323 = vrcp.pop %v3318
    %v3324 = vmul.f32 1.0, %v3323
    %3328 = vrot.lane.b32.xlu0 %v3291, 64
    %v3329 = vpop.permute.xlu0 %3328
    %3330 = vrot.lane.b32.xlu0 %v3296, 64
    %v3331 = vpop.permute.xlu0 %3330
    %3332 = vrot.lane.b32.xlu0 %v3301, 64
    %v3333 = vpop.permute.xlu0 %3332
    %v3337 = vmul.f32 %v3320, %v3329
    %v3338 = vmul.f32 %v3322, %v3331
    %v3339 = vmul.f32 %v3324, %v3333
    %3343 = vrot.lane.b32.xlu0 %v3337, 64
    %v3344 = vpop.permute.xlu0 %3343
    %3345 = vrot.lane.b32.xlu0 %v3338, 64
    %v3346 = vpop.permute.xlu0 %3345
    %3347 = vrot.lane.b32.xlu0 %v3339, 64
    %v3348 = vpop.permute.xlu0 %3347
    %v3352 = vadd.f32 %v3203, %v3344
    %v3353 = vadd.f32 %v3204, %v3346
    %v3354 = vadd.f32 %v3205, %v3348
    %v3355 = vtanh.pop %v3352
    %v3356 = vtanh.pop %v3353
    %v3357 = vtanh.pop %v3354
    %v3358 = vsub.f32 1.0, %v3320
    %v3359 = vsub.f32 1.0, %v3322
    %v3360 = vsub.f32 1.0, %v3324
    %3364 = vrot.lane.b32.xlu0 %v3355, 96
    %v3365 = vpop.permute.xlu0 %3364
    %3366 = vrot.lane.b32.xlu0 %v3356, 96
    %v3367 = vpop.permute.xlu0 %3366
    %3368 = vrot.lane.b32.xlu0 %v3357, 96
    %v3369 = vpop.permute.xlu0 %3368
    %v3373 = vmul.f32 %v3358, %v3365
    %v3374 = vmul.f32 %v3359, %v3367
    %v3375 = vmul.f32 %v3360, %v3369
    %v3376 = vmul.f32 %v3320, %v3166
    %v3377 = vmul.f32 %v3322, %v3167
    %v3378 = vmul.f32 %v3324, %v3168
    %v3379 = vadd.f32 %v3373, %v3376
    %v3380 = vadd.f32 %v3374, %v3377
    %v3381 = vadd.f32 %v3375, %v3378
    %vm3382 = vcmp.gt.f32.partialorder %v3206, 0.0
    %vm3383 = vcmp.gt.f32.partialorder %v3207, 0.0
    %vm3384 = vcmp.gt.f32.partialorder %v3208, 0.0
    %v3385 = vsel %vm3382, 1, 0
    %v3386 = vsel %vm3383, 1, 0
    %v3387 = vsel %vm3384, 1, 0
    %3388 = vset.pattern.permute.xlu0 0
    %3389 = vperm.xlu0 %3388, %v3385
    %v3390 = vpop.permute.xlu0 %3389
    %3391 = vset.pattern.permute.xlu0 0
    %3392 = vperm.xlu0 %3391, %v3386
    %v3393 = vpop.permute.xlu0 %3392
    %3394 = vset.pattern.permute.xlu0 0
    %3395 = vperm.xlu0 %3394, %v3387
    %v3396 = vpop.permute.xlu0 %3395
    %vm3397 = vcmp.eq.s32.totalorder %v3390, 1
    %vm3398 = vcmp.eq.s32.totalorder %v3393, 1
    %vm3399 = vcmp.eq.s32.totalorder %v3396, 1
    %v3400 = vsel %vm3397, %v3379, %v3166
    %v3401 = vsel %vm3398, %v3380, %v3167
    %v3402 = vsel %vm3399, %v3381, %v3168
    %3404 = vset.pattern.permute.xlu0 0
    %3405 = vperm.xlu0 %3404, %v3206
    %v3406 = vpop.permute.xlu0 %3405
    %3409 = vset.pattern.permute.xlu0 0
    %3410 = vperm.xlu0 %3409, %v3207
    %v3411 = vpop.permute.xlu0 %3410
    %3414 = vset.pattern.permute.xlu0 0
    %3415 = vperm.xlu0 %3414, %v3208
    %v3416 = vpop.permute.xlu0 %3415
    %v3418 = vmul.f32 %v3400, %v3406
    %v3419 = vmul.f32 %v3401, %v3411
    %v3420 = vmul.f32 %v3402, %v3416
    %3424 = vrot.lane.b32.xlu0 %v3418, 96
    %v3425 = vpop.permute.xlu0 %3424
    %3426 = vrot.lane.b32.xlu0 %v3419, 96
    %v3427 = vpop.permute.xlu0 %3426
    %3428 = vrot.lane.b32.xlu0 %v3420, 96
    %v3429 = vpop.permute.xlu0 %3428
    %s3433 = scalar_lea.vmem [#allocation5], 96
    %3434 = vst.msk [vmem:[%s3433] sm:$0xff] %vm91, %v3425
    %3435 = vst.msk [vmem:[%s3433 + $0x8] sm:$0xff] %vm91, %v3427
    %3436 = vst.msk [vmem:[%s3433 + $0x10] sm:$0xff] %vm91, %v3429
    %v3437 = vld [vmem:[%s496] sm:$0xff]
    %v3438 = vld [vmem:[%s496 + $0x8] sm:$0xff]
    %v3439 = vld [vmem:[%s496 + $0x10] sm:$0xff]
    %v3440 = vld [vmem:[%s1333] sm:$0xff]
    %v3441 = vld [vmem:[%s1333 + $0x8] sm:$0xff]
    %v3442 = vld [vmem:[%s1333 + $0x10] sm:$0xff]
    %3446 = vrot.lane.b32.xlu0 %v3400, 96
    %v3447 = vpop.permute.xlu0 %3446
    %3448 = vrot.lane.b32.xlu0 %v3401, 96
    %v3449 = vpop.permute.xlu0 %3448
    %3450 = vrot.lane.b32.xlu0 %v3402, 96
    %v3451 = vpop.permute.xlu0 %3450
    %v3452 = vsel %vm91, %v3447, 0
    %v3454 = vsel %vm91, %v3449, 0
    %v3456 = vsel %vm91, %v3451, 0
    %3458 = vmatprep.subr.mxu0 0.0
    %3459 = vmatpush1.msra.mxu0 %v2505
    %3460 = vmatprep.subr.mxu0 0.0
    %3461 = vmatpush1.msra.mxu0 %v2506
    %3462 = vmatprep.subr.mxu0 0.0
    %3463 = vmatpush1.msra.mxu0 %v2507
    %3464 = vmatprep.subr.mxu0 0.0
    %3465 = vmatpush1.msra.mxu0 %v2508
    %3466 = vmatprep.subr.mxu0 0.0
    %3467 = vmatpush1.msra.mxu0 0.0
    %3468 = vmatprep.subr.mxu0 0.0
    %3469 = vmatpush1.msra.mxu0 0.0
    %3470 = vmatprep.subr.mxu0 0.0
    %3471 = vmatpush1.msra.mxu0 0.0
    %3472 = vmatprep.subr.mxu0 0.0
    %3473 = vmatpush1.msra.mxu0 0.0
    %3474 = vmatprep.subr.mxu0 0.0
    %3475 = vmatpush1.msra.mxu0 0.0
    %3476 = vmatprep.subr.mxu0 0.0
    %3477 = vmatpush1.msra.mxu0 0.0
    %3478 = vmatprep.subr.mxu0 0.0
    %3479 = vmatpush1.msra.mxu0 0.0
    %3480 = vmatprep.subr.mxu0 0.0
    %3481 = vmatpush1.msra.mxu0 0.0
    %3482 = vmatprep.subr.mxu0 0.0
    %3483 = vmatpush1.msra.mxu0 0.0
    %3484 = vmatprep.subr.mxu0 0.0
    %3485 = vmatpush1.msra.mxu0 0.0
    %3486 = vmatprep.subr.mxu0 0.0
    %3487 = vmatpush1.msra.mxu0 0.0
    %3488 = vmatprep.subr.mxu0 0.0
    %3489 = vmatpush1.msra.mxu0 0.0
    %3490 = vmatprep.subr.mxu0 0.0
    %3491 = vmatpush1.msra.mxu0 0.0
    %3492 = vmatprep.subr.mxu0 0.0
    %3493 = vmatpush1.msra.mxu0 0.0
    %3494 = vmatprep.subr.mxu0 0.0
    %3495 = vmatpush1.msra.mxu0 0.0
    %3496 = vmatprep.subr.mxu0 0.0
    %3497 = vmatpush1.msra.mxu0 0.0
    %3498 = vmatprep.subr.mxu0 0.0
    %3499 = vmatpush1.msra.mxu0 0.0
    %3500 = vmatprep.subr.mxu0 0.0
    %3501 = vmatpush1.msra.mxu0 0.0
    %3502 = vmatprep.subr.mxu0 0.0
    %3503 = vmatpush1.msra.mxu0 0.0
    %3504 = vmatprep.subr.mxu0 0.0
    %3505 = vmatpush1.msra.mxu0 0.0
    %3506 = vmatprep.subr.mxu0 0.0
    %3507 = vmatpush1.msra.mxu0 0.0
    %3508 = vmatprep.subr.mxu0 0.0
    %3509 = vmatpush1.msra.mxu0 0.0
    %3510 = vmatprep.subr.mxu0 0.0
    %3511 = vmatpush1.msra.mxu0 0.0
    %3512 = vmatprep.subr.mxu0 0.0
    %3513 = vmatpush1.msra.mxu0 0.0
    %3514 = vmatprep.subr.mxu0 0.0
    %3515 = vmatpush1.msra.mxu0 0.0
    %3516 = vmatprep.subr.mxu0 0.0
    %3517 = vmatpush1.msra.mxu0 0.0
    %3518 = vmatprep.subr.mxu0 0.0
    %3519 = vmatpush1.msra.mxu0 0.0
    %3520 = vmatprep.subr.mxu0 0.0
    %3521 = vmatpush1.msra.mxu0 0.0
    %3522 = vmatprep.mubr.f32.mxu0 0.0
    %3523 = vmatmul.mubr.f32.gmra.mrb[0].mxu0 %v3452
    %v3524 = vpop.f32.mrb[0].mxu0
    %v3525 = vadd.f32 %v2520, %v3524
    %v3526 = vpop.f32.mrb[0].mxu0
    %3527 = vmatprep.mubr.f32.mxu0 0.0
    %3528 = vmatmul.mubr.f32.gmra.mrb[0].mxu0 %v3454
    %v3529 = vpop.f32.mrb[0].mxu0
    %v3530 = vadd.f32 %v2520, %v3529
    %v3531 = vpop.f32.mrb[0].mxu0
    %3532 = vmatprep.mubr.f32.mxu0 0.0
    %3533 = vmatmul.mubr.f32.gmra.mrb[0].mxu0 %v3456
    %v3534 = vpop.f32.mrb[0].mxu0
    %v3535 = vadd.f32 %v2520, %v3534
    %v3536 = vpop.f32.mrb[0].mxu0
    %3537 = vdwg.mxu0
    %v3538 = vadd.f32 %v3437, %v3525
    %v3539 = vadd.f32 %v3438, %v3530
    %v3540 = vadd.f32 %v3439, %v3535
    %v3541 = vxor.u32 %v3538, 2147483648
    %v3542 = vxor.u32 %v3539, 2147483648
    %v3543 = vxor.u32 %v3540, 2147483648
    %v3544 = vmul.f32 %v3541, 1.442695
    %v3545 = vpow.pop %v3544
    %v3546 = vmul.f32 %v3542, 1.442695
    %v3547 = vpow.pop %v3546
    %v3548 = vmul.f32 %v3543, 1.442695
    %v3549 = vpow.pop %v3548
    %v3550 = vadd.f32 %v3545, 1.0
    %v3551 = vadd.f32 %v3547, 1.0
    %v3552 = vadd.f32 %v3549, 1.0
    %v3553 = vrcp.pop %v3550
    %v3554 = vmul.f32 1.0, %v3553
    %v3555 = vrcp.pop %v3551
    %v3556 = vmul.f32 1.0, %v3555
    %v3557 = vrcp.pop %v3552
    %v3558 = vmul.f32 1.0, %v3557
    %3562 = vrot.lane.b32.xlu0 %v3525, 64
    %v3563 = vpop.permute.xlu0 %3562
    %3564 = vrot.lane.b32.xlu0 %v3530, 64
    %v3565 = vpop.permute.xlu0 %3564
    %3566 = vrot.lane.b32.xlu0 %v3535, 64
    %v3567 = vpop.permute.xlu0 %3566
    %v3571 = vmul.f32 %v3554, %v3563
    %v3572 = vmul.f32 %v3556, %v3565
    %v3573 = vmul.f32 %v3558, %v3567
    %3577 = vrot.lane.b32.xlu0 %v3571, 64
    %v3578 = vpop.permute.xlu0 %3577
    %3579 = vrot.lane.b32.xlu0 %v3572, 64
    %v3580 = vpop.permute.xlu0 %3579
    %3581 = vrot.lane.b32.xlu0 %v3573, 64
    %v3582 = vpop.permute.xlu0 %3581
    %v3586 = vadd.f32 %v3437, %v3578
    %v3587 = vadd.f32 %v3438, %v3580
    %v3588 = vadd.f32 %v3439, %v3582
    %v3589 = vtanh.pop %v3586
    %v3590 = vtanh.pop %v3587
    %v3591 = vtanh.pop %v3588
    %v3592 = vsub.f32 1.0, %v3554
    %v3593 = vsub.f32 1.0, %v3556
    %v3594 = vsub.f32 1.0, %v3558
    %3598 = vrot.lane.b32.xlu0 %v3589, 96
    %v3599 = vpop.permute.xlu0 %3598
    %3600 = vrot.lane.b32.xlu0 %v3590, 96
    %v3601 = vpop.permute.xlu0 %3600
    %3602 = vrot.lane.b32.xlu0 %v3591, 96
    %v3603 = vpop.permute.xlu0 %3602
    %v3607 = vmul.f32 %v3592, %v3599
    %v3608 = vmul.f32 %v3593, %v3601
    %v3609 = vmul.f32 %v3594, %v3603
    %v3610 = vmul.f32 %v3554, %v3400
    %v3611 = vmul.f32 %v3556, %v3401
    %v3612 = vmul.f32 %v3558, %v3402
    %v3613 = vadd.f32 %v3607, %v3610
    %v3614 = vadd.f32 %v3608, %v3611
    %v3615 = vadd.f32 %v3609, %v3612
    %vm3616 = vcmp.gt.f32.partialorder %v3440, 0.0
    %vm3617 = vcmp.gt.f32.partialorder %v3441, 0.0
    %vm3618 = vcmp.gt.f32.partialorder %v3442, 0.0
    %v3619 = vsel %vm3616, 1, 0
    %v3620 = vsel %vm3617, 1, 0
    %v3621 = vsel %vm3618, 1, 0
    %3622 = vset.pattern.permute.xlu0 0
    %3623 = vperm.xlu0 %3622, %v3619
    %v3624 = vpop.permute.xlu0 %3623
    %3625 = vset.pattern.permute.xlu0 0
    %3626 = vperm.xlu0 %3625, %v3620
    %v3627 = vpop.permute.xlu0 %3626
    %3628 = vset.pattern.permute.xlu0 0
    %3629 = vperm.xlu0 %3628, %v3621
    %v3630 = vpop.permute.xlu0 %3629
    %vm3631 = vcmp.eq.s32.totalorder %v3624, 1
    %vm3632 = vcmp.eq.s32.totalorder %v3627, 1
    %vm3633 = vcmp.eq.s32.totalorder %v3630, 1
    %v3634 = vsel %vm3631, %v3613, %v3400
    %v3635 = vsel %vm3632, %v3614, %v3401
    %v3636 = vsel %vm3633, %v3615, %v3402
    %3638 = vset.pattern.permute.xlu0 0
    %3639 = vperm.xlu0 %3638, %v3440
    %v3640 = vpop.permute.xlu0 %3639
    %3643 = vset.pattern.permute.xlu0 0
    %3644 = vperm.xlu0 %3643, %v3441
    %v3645 = vpop.permute.xlu0 %3644
    %3648 = vset.pattern.permute.xlu0 0
    %3649 = vperm.xlu0 %3648, %v3442
    %v3650 = vpop.permute.xlu0 %3649
    %v3652 = vmul.f32 %v3634, %v3640
    %v3653 = vmul.f32 %v3635, %v3645
    %v3654 = vmul.f32 %v3636, %v3650
    %3658 = vrot.lane.b32.xlu0 %v3652, 96
    %v3659 = vpop.permute.xlu0 %3658
    %3660 = vrot.lane.b32.xlu0 %v3653, 96
    %v3661 = vpop.permute.xlu0 %3660
    %3662 = vrot.lane.b32.xlu0 %v3654, 96
    %v3663 = vpop.permute.xlu0 %3662
    %s3667 = scalar_lea.vmem [#allocation5], 72
    %3668 = vst.msk [vmem:[%s3667] sm:$0xff] %vm91, %v3659
    %3669 = vst.msk [vmem:[%s3667 + $0x8] sm:$0xff] %vm91, %v3661
    %3670 = vst.msk [vmem:[%s3667 + $0x10] sm:$0xff] %vm91, %v3663
    %v3671 = vld [vmem:[%s464] sm:$0xff]
    %v3672 = vld [vmem:[%s464 + $0x8] sm:$0xff]
    %v3673 = vld [vmem:[%s464 + $0x10] sm:$0xff]
    %v3674 = vld [vmem:[%s1098] sm:$0xff]
    %v3675 = vld [vmem:[%s1098 + $0x8] sm:$0xff]
    %v3676 = vld [vmem:[%s1098 + $0x10] sm:$0xff]
    %3680 = vrot.lane.b32.xlu0 %v3634, 96
    %v3681 = vpop.permute.xlu0 %3680
    %3682 = vrot.lane.b32.xlu0 %v3635, 96
    %v3683 = vpop.permute.xlu0 %3682
    %3684 = vrot.lane.b32.xlu0 %v3636, 96
    %v3685 = vpop.permute.xlu0 %3684
    %v3686 = vsel %vm91, %v3681, 0
    %v3688 = vsel %vm91, %v3683, 0
    %v3690 = vsel %vm91, %v3685, 0
    %3692 = vmatprep.subr.mxu0 0.0
    %3693 = vmatpush1.msra.mxu0 %v2505
    %3694 = vmatprep.subr.mxu0 0.0
    %3695 = vmatpush1.msra.mxu0 %v2506
    %3696 = vmatprep.subr.mxu0 0.0
    %3697 = vmatpush1.msra.mxu0 %v2507
    %3698 = vmatprep.subr.mxu0 0.0
    %3699 = vmatpush1.msra.mxu0 %v2508
    %3700 = vmatprep.subr.mxu0 0.0
    %3701 = vmatpush1.msra.mxu0 0.0
    %3702 = vmatprep.subr.mxu0 0.0
    %3703 = vmatpush1.msra.mxu0 0.0
    %3704 = vmatprep.subr.mxu0 0.0
    %3705 = vmatpush1.msra.mxu0 0.0
    %3706 = vmatprep.subr.mxu0 0.0
    %3707 = vmatpush1.msra.mxu0 0.0
    %3708 = vmatprep.subr.mxu0 0.0
    %3709 = vmatpush1.msra.mxu0 0.0
    %3710 = vmatprep.subr.mxu0 0.0
    %3711 = vmatpush1.msra.mxu0 0.0
    %3712 = vmatprep.subr.mxu0 0.0
    %3713 = vmatpush1.msra.mxu0 0.0
    %3714 = vmatprep.subr.mxu0 0.0
    %3715 = vmatpush1.msra.mxu0 0.0
    %3716 = vmatprep.subr.mxu0 0.0
    %3717 = vmatpush1.msra.mxu0 0.0
    %3718 = vmatprep.subr.mxu0 0.0
    %3719 = vmatpush1.msra.mxu0 0.0
    %3720 = vmatprep.subr.mxu0 0.0
    %3721 = vmatpush1.msra.mxu0 0.0
    %3722 = vmatprep.subr.mxu0 0.0
    %3723 = vmatpush1.msra.mxu0 0.0
    %3724 = vmatprep.subr.mxu0 0.0
    %3725 = vmatpush1.msra.mxu0 0.0
    %3726 = vmatprep.subr.mxu0 0.0
    %3727 = vmatpush1.msra.mxu0 0.0
    %3728 = vmatprep.subr.mxu0 0.0
    %3729 = vmatpush1.msra.mxu0 0.0
    %3730 = vmatprep.subr.mxu0 0.0
    %3731 = vmatpush1.msra.mxu0 0.0
    %3732 = vmatprep.subr.mxu0 0.0
    %3733 = vmatpush1.msra.mxu0 0.0
    %3734 = vmatprep.subr.mxu0 0.0
    %3735 = vmatpush1.msra.mxu0 0.0
    %3736 = vmatprep.subr.mxu0 0.0
    %3737 = vmatpush1.msra.mxu0 0.0
    %3738 = vmatprep.subr.mxu0 0.0
    %3739 = vmatpush1.msra.mxu0 0.0
    %3740 = vmatprep.subr.mxu0 0.0
    %3741 = vmatpush1.msra.mxu0 0.0
    %3742 = vmatprep.subr.mxu0 0.0
    %3743 = vmatpush1.msra.mxu0 0.0
    %3744 = vmatprep.subr.mxu0 0.0
    %3745 = vmatpush1.msra.mxu0 0.0
    %3746 = vmatprep.subr.mxu0 0.0
    %3747 = vmatpush1.msra.mxu0 0.0
    %3748 = vmatprep.subr.mxu0 0.0
    %3749 = vmatpush1.msra.mxu0 0.0
    %3750 = vmatprep.subr.mxu0 0.0
    %3751 = vmatpush1.msra.mxu0 0.0
    %3752 = vmatprep.subr.mxu0 0.0
    %3753 = vmatpush1.msra.mxu0 0.0
    %3754 = vmatprep.subr.mxu0 0.0
    %3755 = vmatpush1.msra.mxu0 0.0
    %3756 = vmatprep.mubr.f32.mxu0 0.0
    %3757 = vmatmul.mubr.f32.gmra.mrb[0].mxu0 %v3686
    %v3758 = vpop.f32.mrb[0].mxu0
    %v3759 = vadd.f32 %v2520, %v3758
    %v3760 = vpop.f32.mrb[0].mxu0
    %3761 = vmatprep.mubr.f32.mxu0 0.0
    %3762 = vmatmul.mubr.f32.gmra.mrb[0].mxu0 %v3688
    %v3763 = vpop.f32.mrb[0].mxu0
    %v3764 = vadd.f32 %v2520, %v3763
    %v3765 = vpop.f32.mrb[0].mxu0
    %3766 = vmatprep.mubr.f32.mxu0 0.0
    %3767 = vmatmul.mubr.f32.gmra.mrb[0].mxu0 %v3690
    %v3768 = vpop.f32.mrb[0].mxu0
    %v3769 = vadd.f32 %v2520, %v3768
    %v3770 = vpop.f32.mrb[0].mxu0
    %3771 = vdwg.mxu0
    %v3772 = vadd.f32 %v3671, %v3759
    %v3773 = vadd.f32 %v3672, %v3764
    %v3774 = vadd.f32 %v3673, %v3769
    %v3775 = vxor.u32 %v3772, 2147483648
    %v3776 = vxor.u32 %v3773, 2147483648
    %v3777 = vxor.u32 %v3774, 2147483648
    %v3778 = vmul.f32 %v3775, 1.442695
    %v3779 = vpow.pop %v3778
    %v3780 = vmul.f32 %v3776, 1.442695
    %v3781 = vpow.pop %v3780
    %v3782 = vmul.f32 %v3777, 1.442695
    %v3783 = vpow.pop %v3782
    %v3784 = vadd.f32 %v3779, 1.0
    %v3785 = vadd.f32 %v3781, 1.0
    %v3786 = vadd.f32 %v3783, 1.0
    %v3787 = vrcp.pop %v3784
    %v3788 = vmul.f32 1.0, %v3787
    %v3789 = vrcp.pop %v3785
    %v3790 = vmul.f32 1.0, %v3789
    %v3791 = vrcp.pop %v3786
    %v3792 = vmul.f32 1.0, %v3791
    %3796 = vrot.lane.b32.xlu0 %v3759, 64
    %v3797 = vpop.permute.xlu0 %3796
    %3798 = vrot.lane.b32.xlu0 %v3764, 64
    %v3799 = vpop.permute.xlu0 %3798
    %3800 = vrot.lane.b32.xlu0 %v3769, 64
    %v3801 = vpop.permute.xlu0 %3800
    %v3805 = vmul.f32 %v3788, %v3797
    %v3806 = vmul.f32 %v3790, %v3799
    %v3807 = vmul.f32 %v3792, %v3801
    %3811 = vrot.lane.b32.xlu0 %v3805, 64
    %v3812 = vpop.permute.xlu0 %3811
    %3813 = vrot.lane.b32.xlu0 %v3806, 64
    %v3814 = vpop.permute.xlu0 %3813
    %3815 = vrot.lane.b32.xlu0 %v3807, 64
    %v3816 = vpop.permute.xlu0 %3815
    %v3820 = vadd.f32 %v3671, %v3812
    %v3821 = vadd.f32 %v3672, %v3814
    %v3822 = vadd.f32 %v3673, %v3816
    %v3823 = vtanh.pop %v3820
    %v3824 = vtanh.pop %v3821
    %v3825 = vtanh.pop %v3822
    %v3826 = vsub.f32 1.0, %v3788
    %v3827 = vsub.f32 1.0, %v3790
    %v3828 = vsub.f32 1.0, %v3792
    %3832 = vrot.lane.b32.xlu0 %v3823, 96
    %v3833 = vpop.permute.xlu0 %3832
    %3834 = vrot.lane.b32.xlu0 %v3824, 96
    %v3835 = vpop.permute.xlu0 %3834
    %3836 = vrot.lane.b32.xlu0 %v3825, 96
    %v3837 = vpop.permute.xlu0 %3836
    %v3841 = vmul.f32 %v3826, %v3833
    %v3842 = vmul.f32 %v3827, %v3835
    %v3843 = vmul.f32 %v3828, %v3837
    %v3844 = vmul.f32 %v3788, %v3634
    %v3845 = vmul.f32 %v3790, %v3635
    %v3846 = vmul.f32 %v3792, %v3636
    %v3847 = vadd.f32 %v3841, %v3844
    %v3848 = vadd.f32 %v3842, %v3845
    %v3849 = vadd.f32 %v3843, %v3846
    %vm3850 = vcmp.gt.f32.partialorder %v3674, 0.0
    %vm3851 = vcmp.gt.f32.partialorder %v3675, 0.0
    %vm3852 = vcmp.gt.f32.partialorder %v3676, 0.0
    %v3853 = vsel %vm3850, 1, 0
    %v3854 = vsel %vm3851, 1, 0
    %v3855 = vsel %vm3852, 1, 0
    %3856 = vset.pattern.permute.xlu0 0
    %3857 = vperm.xlu0 %3856, %v3853
    %v3858 = vpop.permute.xlu0 %3857
    %3859 = vset.pattern.permute.xlu0 0
    %3860 = vperm.xlu0 %3859, %v3854
    %v3861 = vpop.permute.xlu0 %3860
    %3862 = vset.pattern.permute.xlu0 0
    %3863 = vperm.xlu0 %3862, %v3855
    %v3864 = vpop.permute.xlu0 %3863
    %vm3865 = vcmp.eq.s32.totalorder %v3858, 1
    %vm3866 = vcmp.eq.s32.totalorder %v3861, 1
    %vm3867 = vcmp.eq.s32.totalorder %v3864, 1
    %v3868 = vsel %vm3865, %v3847, %v3634
    %v3869 = vsel %vm3866, %v3848, %v3635
    %v3870 = vsel %vm3867, %v3849, %v3636
    %3872 = vset.pattern.permute.xlu0 0
    %3873 = vperm.xlu0 %3872, %v3674
    %v3874 = vpop.permute.xlu0 %3873
    %3877 = vset.pattern.permute.xlu0 0
    %3878 = vperm.xlu0 %3877, %v3675
    %v3879 = vpop.permute.xlu0 %3878
    %3882 = vset.pattern.permute.xlu0 0
    %3883 = vperm.xlu0 %3882, %v3676
    %v3884 = vpop.permute.xlu0 %3883
    %v3886 = vmul.f32 %v3868, %v3874
    %v3887 = vmul.f32 %v3869, %v3879
    %v3888 = vmul.f32 %v3870, %v3884
    %3892 = vrot.lane.b32.xlu0 %v3886, 96
    %v3893 = vpop.permute.xlu0 %3892
    %3894 = vrot.lane.b32.xlu0 %v3887, 96
    %v3895 = vpop.permute.xlu0 %3894
    %3896 = vrot.lane.b32.xlu0 %v3888, 96
    %v3897 = vpop.permute.xlu0 %3896
    %s3901 = scalar_lea.vmem [#allocation5], 48
    %3902 = vst.msk [vmem:[%s3901] sm:$0xff] %vm91, %v3893
    %3903 = vst.msk [vmem:[%s3901 + $0x8] sm:$0xff] %vm91, %v3895
    %3904 = vst.msk [vmem:[%s3901 + $0x10] sm:$0xff] %vm91, %v3897
    %v3905 = vld [vmem:[%s432] sm:$0xff]
    %v3906 = vld [vmem:[%s432 + $0x8] sm:$0xff]
    %v3907 = vld [vmem:[%s432 + $0x10] sm:$0xff]
    %v3908 = vld [vmem:[%s863] sm:$0xff]
    %v3909 = vld [vmem:[%s863 + $0x8] sm:$0xff]
    %v3910 = vld [vmem:[%s863 + $0x10] sm:$0xff]
    %3914 = vrot.lane.b32.xlu0 %v3868, 96
    %v3915 = vpop.permute.xlu0 %3914
    %3916 = vrot.lane.b32.xlu0 %v3869, 96
    %v3917 = vpop.permute.xlu0 %3916
    %3918 = vrot.lane.b32.xlu0 %v3870, 96
    %v3919 = vpop.permute.xlu0 %3918
    %v3920 = vsel %vm91, %v3915, 0
    %v3922 = vsel %vm91, %v3917, 0
    %v3924 = vsel %vm91, %v3919, 0
    %3926 = vmatprep.subr.mxu0 0.0
    %3927 = vmatpush1.msra.mxu0 %v2505
    %3928 = vmatprep.subr.mxu0 0.0
    %3929 = vmatpush1.msra.mxu0 %v2506
    %3930 = vmatprep.subr.mxu0 0.0
    %3931 = vmatpush1.msra.mxu0 %v2507
    %3932 = vmatprep.subr.mxu0 0.0
    %3933 = vmatpush1.msra.mxu0 %v2508
    %3934 = vmatprep.subr.mxu0 0.0
    %3935 = vmatpush1.msra.mxu0 0.0
    %3936 = vmatprep.subr.mxu0 0.0
    %3937 = vmatpush1.msra.mxu0 0.0
    %3938 = vmatprep.subr.mxu0 0.0
    %3939 = vmatpush1.msra.mxu0 0.0
    %3940 = vmatprep.subr.mxu0 0.0
    %3941 = vmatpush1.msra.mxu0 0.0
    %3942 = vmatprep.subr.mxu0 0.0
    %3943 = vmatpush1.msra.mxu0 0.0
    %3944 = vmatprep.subr.mxu0 0.0
    %3945 = vmatpush1.msra.mxu0 0.0
    %3946 = vmatprep.subr.mxu0 0.0
    %3947 = vmatpush1.msra.mxu0 0.0
    %3948 = vmatprep.subr.mxu0 0.0
    %3949 = vmatpush1.msra.mxu0 0.0
    %3950 = vmatprep.subr.mxu0 0.0
    %3951 = vmatpush1.msra.mxu0 0.0
    %3952 = vmatprep.subr.mxu0 0.0
    %3953 = vmatpush1.msra.mxu0 0.0
    %3954 = vmatprep.subr.mxu0 0.0
    %3955 = vmatpush1.msra.mxu0 0.0
    %3956 = vmatprep.subr.mxu0 0.0
    %3957 = vmatpush1.msra.mxu0 0.0
    %3958 = vmatprep.subr.mxu0 0.0
    %3959 = vmatpush1.msra.mxu0 0.0
    %3960 = vmatprep.subr.mxu0 0.0
    %3961 = vmatpush1.msra.mxu0 0.0
    %3962 = vmatprep.subr.mxu0 0.0
    %3963 = vmatpush1.msra.mxu0 0.0
    %3964 = vmatprep.subr.mxu0 0.0
    %3965 = vmatpush1.msra.mxu0 0.0
    %3966 = vmatprep.subr.mxu0 0.0
    %3967 = vmatpush1.msra.mxu0 0.0
    %3968 = vmatprep.subr.mxu0 0.0
    %3969 = vmatpush1.msra.mxu0 0.0
    %3970 = vmatprep.subr.mxu0 0.0
    %3971 = vmatpush1.msra.mxu0 0.0
    %3972 = vmatprep.subr.mxu0 0.0
    %3973 = vmatpush1.msra.mxu0 0.0
    %3974 = vmatprep.subr.mxu0 0.0
    %3975 = vmatpush1.msra.mxu0 0.0
    %3976 = vmatprep.subr.mxu0 0.0
    %3977 = vmatpush1.msra.mxu0 0.0
    %3978 = vmatprep.subr.mxu0 0.0
    %3979 = vmatpush1.msra.mxu0 0.0
    %3980 = vmatprep.subr.mxu0 0.0
    %3981 = vmatpush1.msra.mxu0 0.0
    %3982 = vmatprep.subr.mxu0 0.0
    %3983 = vmatpush1.msra.mxu0 0.0
    %3984 = vmatprep.subr.mxu0 0.0
    %3985 = vmatpush1.msra.mxu0 0.0
    %3986 = vmatprep.subr.mxu0 0.0
    %3987 = vmatpush1.msra.mxu0 0.0
    %3988 = vmatprep.subr.mxu0 0.0
    %3989 = vmatpush1.msra.mxu0 0.0
    %3990 = vmatprep.mubr.f32.mxu0 0.0
    %3991 = vmatmul.mubr.f32.gmra.mrb[0].mxu0 %v3920
    %v3992 = vpop.f32.mrb[0].mxu0
    %v3993 = vadd.f32 %v2520, %v3992
    %v3994 = vpop.f32.mrb[0].mxu0
    %3995 = vmatprep.mubr.f32.mxu0 0.0
    %3996 = vmatmul.mubr.f32.gmra.mrb[0].mxu0 %v3922
    %v3997 = vpop.f32.mrb[0].mxu0
    %v3998 = vadd.f32 %v2520, %v3997
    %v3999 = vpop.f32.mrb[0].mxu0
    %4000 = vmatprep.mubr.f32.mxu0 0.0
    %4001 = vmatmul.mubr.f32.gmra.mrb[0].mxu0 %v3924
    %v4002 = vpop.f32.mrb[0].mxu0
    %v4003 = vadd.f32 %v2520, %v4002
    %v4004 = vpop.f32.mrb[0].mxu0
    %4005 = vdwg.mxu0
    %v4006 = vadd.f32 %v3905, %v3993
    %v4007 = vadd.f32 %v3906, %v3998
    %v4008 = vadd.f32 %v3907, %v4003
    %v4009 = vxor.u32 %v4006, 2147483648
    %v4010 = vxor.u32 %v4007, 2147483648
    %v4011 = vxor.u32 %v4008, 2147483648
    %v4012 = vmul.f32 %v4009, 1.442695
    %v4013 = vpow.pop %v4012
    %v4014 = vmul.f32 %v4010, 1.442695
    %v4015 = vpow.pop %v4014
    %v4016 = vmul.f32 %v4011, 1.442695
    %v4017 = vpow.pop %v4016
    %v4018 = vadd.f32 %v4013, 1.0
    %v4019 = vadd.f32 %v4015, 1.0
    %v4020 = vadd.f32 %v4017, 1.0
    %v4021 = vrcp.pop %v4018
    %v4022 = vmul.f32 1.0, %v4021
    %v4023 = vrcp.pop %v4019
    %v4024 = vmul.f32 1.0, %v4023
    %v4025 = vrcp.pop %v4020
    %v4026 = vmul.f32 1.0, %v4025
    %4030 = vrot.lane.b32.xlu0 %v3993, 64
    %v4031 = vpop.permute.xlu0 %4030
    %4032 = vrot.lane.b32.xlu0 %v3998, 64
    %v4033 = vpop.permute.xlu0 %4032
    %4034 = vrot.lane.b32.xlu0 %v4003, 64
    %v4035 = vpop.permute.xlu0 %4034
    %v4039 = vmul.f32 %v4022, %v4031
    %v4040 = vmul.f32 %v4024, %v4033
    %v4041 = vmul.f32 %v4026, %v4035
    %4045 = vrot.lane.b32.xlu0 %v4039, 64
    %v4046 = vpop.permute.xlu0 %4045
    %4047 = vrot.lane.b32.xlu0 %v4040, 64
    %v4048 = vpop.permute.xlu0 %4047
    %4049 = vrot.lane.b32.xlu0 %v4041, 64
    %v4050 = vpop.permute.xlu0 %4049
    %v4054 = vadd.f32 %v3905, %v4046
    %v4055 = vadd.f32 %v3906, %v4048
    %v4056 = vadd.f32 %v3907, %v4050
    %v4057 = vtanh.pop %v4054
    %v4058 = vtanh.pop %v4055
    %v4059 = vtanh.pop %v4056
    %v4060 = vsub.f32 1.0, %v4022
    %v4061 = vsub.f32 1.0, %v4024
    %v4062 = vsub.f32 1.0, %v4026
    %4066 = vrot.lane.b32.xlu0 %v4057, 96
    %v4067 = vpop.permute.xlu0 %4066
    %4068 = vrot.lane.b32.xlu0 %v4058, 96
    %v4069 = vpop.permute.xlu0 %4068
    %4070 = vrot.lane.b32.xlu0 %v4059, 96
    %v4071 = vpop.permute.xlu0 %4070
    %v4075 = vmul.f32 %v4060, %v4067
    %v4076 = vmul.f32 %v4061, %v4069
    %v4077 = vmul.f32 %v4062, %v4071
    %v4078 = vmul.f32 %v4022, %v3868
    %v4079 = vmul.f32 %v4024, %v3869
    %v4080 = vmul.f32 %v4026, %v3870
    %v4081 = vadd.f32 %v4075, %v4078
    %v4082 = vadd.f32 %v4076, %v4079
    %v4083 = vadd.f32 %v4077, %v4080
    %vm4084 = vcmp.gt.f32.partialorder %v3908, 0.0
    %vm4085 = vcmp.gt.f32.partialorder %v3909, 0.0
    %vm4086 = vcmp.gt.f32.partialorder %v3910, 0.0
    %v4087 = vsel %vm4084, 1, 0
    %v4088 = vsel %vm4085, 1, 0
    %v4089 = vsel %vm4086, 1, 0
    %4090 = vset.pattern.permute.xlu0 0
    %4091 = vperm.xlu0 %4090, %v4087
    %v4092 = vpop.permute.xlu0 %4091
    %4093 = vset.pattern.permute.xlu0 0
    %4094 = vperm.xlu0 %4093, %v4088
    %v4095 = vpop.permute.xlu0 %4094
    %4096 = vset.pattern.permute.xlu0 0
    %4097 = vperm.xlu0 %4096, %v4089
    %v4098 = vpop.permute.xlu0 %4097
    %vm4099 = vcmp.eq.s32.totalorder %v4092, 1
    %vm4100 = vcmp.eq.s32.totalorder %v4095, 1
    %vm4101 = vcmp.eq.s32.totalorder %v4098, 1
    %v4102 = vsel %vm4099, %v4081, %v3868
    %v4103 = vsel %vm4100, %v4082, %v3869
    %v4104 = vsel %vm4101, %v4083, %v3870
    %4106 = vset.pattern.permute.xlu0 0
    %4107 = vperm.xlu0 %4106, %v3908
    %v4108 = vpop.permute.xlu0 %4107
    %4111 = vset.pattern.permute.xlu0 0
    %4112 = vperm.xlu0 %4111, %v3909
    %v4113 = vpop.permute.xlu0 %4112
    %4116 = vset.pattern.permute.xlu0 0
    %4117 = vperm.xlu0 %4116, %v3910
    %v4118 = vpop.permute.xlu0 %4117
    %v4120 = vmul.f32 %v4102, %v4108
    %v4121 = vmul.f32 %v4103, %v4113
    %v4122 = vmul.f32 %v4104, %v4118
    %4126 = vrot.lane.b32.xlu0 %v4120, 96
    %v4127 = vpop.permute.xlu0 %4126
    %4128 = vrot.lane.b32.xlu0 %v4121, 96
    %v4129 = vpop.permute.xlu0 %4128
    %4130 = vrot.lane.b32.xlu0 %v4122, 96
    %v4131 = vpop.permute.xlu0 %4130
    %s4135 = scalar_lea.vmem [#allocation5], 24
    %4136 = vst.msk [vmem:[%s4135] sm:$0xff] %vm91, %v4127
    %4137 = vst.msk [vmem:[%s4135 + $0x8] sm:$0xff] %vm91, %v4129
    %4138 = vst.msk [vmem:[%s4135 + $0x10] sm:$0xff] %vm91, %v4131
    %v4139 = vld [vmem:[#allocation3] sm:$0xff]
    %v4140 = vld [vmem:[#allocation3 + $0x8] sm:$0xff]
    %v4141 = vld [vmem:[#allocation3 + $0x10] sm:$0xff]
    %v4142 = vld [vmem:[%s1] sm:$0xff]
    %v4143 = vld [vmem:[%s1 + $0x8] sm:$0xff]
    %v4144 = vld [vmem:[%s1 + $0x10] sm:$0xff]
    %4148 = vrot.lane.b32.xlu0 %v4102, 96
    %v4149 = vpop.permute.xlu0 %4148
    %4150 = vrot.lane.b32.xlu0 %v4103, 96
    %v4151 = vpop.permute.xlu0 %4150
    %4152 = vrot.lane.b32.xlu0 %v4104, 96
    %v4153 = vpop.permute.xlu0 %4152
    %v4154 = vsel %vm91, %v4149, 0
    %v4156 = vsel %vm91, %v4151, 0
    %v4158 = vsel %vm91, %v4153, 0
    %4160 = vmatprep.subr.mxu0 0.0
    %4161 = vmatpush1.msra.mxu0 %v2505
    %4162 = vmatprep.subr.mxu0 0.0
    %4163 = vmatpush1.msra.mxu0 %v2506
    %4164 = vmatprep.subr.mxu0 0.0
    %4165 = vmatpush1.msra.mxu0 %v2507
    %4166 = vmatprep.subr.mxu0 0.0
    %4167 = vmatpush1.msra.mxu0 %v2508
    %4168 = vmatprep.subr.mxu0 0.0
    %4169 = vmatpush1.msra.mxu0 0.0
    %4170 = vmatprep.subr.mxu0 0.0
    %4171 = vmatpush1.msra.mxu0 0.0
    %4172 = vmatprep.subr.mxu0 0.0
    %4173 = vmatpush1.msra.mxu0 0.0
    %4174 = vmatprep.subr.mxu0 0.0
    %4175 = vmatpush1.msra.mxu0 0.0
    %4176 = vmatprep.subr.mxu0 0.0
    %4177 = vmatpush1.msra.mxu0 0.0
    %4178 = vmatprep.subr.mxu0 0.0
    %4179 = vmatpush1.msra.mxu0 0.0
    %4180 = vmatprep.subr.mxu0 0.0
    %4181 = vmatpush1.msra.mxu0 0.0
    %4182 = vmatprep.subr.mxu0 0.0
    %4183 = vmatpush1.msra.mxu0 0.0
    %4184 = vmatprep.subr.mxu0 0.0
    %4185 = vmatpush1.msra.mxu0 0.0
    %4186 = vmatprep.subr.mxu0 0.0
    %4187 = vmatpush1.msra.mxu0 0.0
    %4188 = vmatprep.subr.mxu0 0.0
    %4189 = vmatpush1.msra.mxu0 0.0
    %4190 = vmatprep.subr.mxu0 0.0
    %4191 = vmatpush1.msra.mxu0 0.0
    %4192 = vmatprep.subr.mxu0 0.0
    %4193 = vmatpush1.msra.mxu0 0.0
    %4194 = vmatprep.subr.mxu0 0.0
    %4195 = vmatpush1.msra.mxu0 0.0
    %4196 = vmatprep.subr.mxu0 0.0
    %4197 = vmatpush1.msra.mxu0 0.0
    %4198 = vmatprep.subr.mxu0 0.0
    %4199 = vmatpush1.msra.mxu0 0.0
    %4200 = vmatprep.subr.mxu0 0.0
    %4201 = vmatpush1.msra.mxu0 0.0
    %4202 = vmatprep.subr.mxu0 0.0
    %4203 = vmatpush1.msra.mxu0 0.0
    %4204 = vmatprep.subr.mxu0 0.0
    %4205 = vmatpush1.msra.mxu0 0.0
    %4206 = vmatprep.subr.mxu0 0.0
    %4207 = vmatpush1.msra.mxu0 0.0
    %4208 = vmatprep.subr.mxu0 0.0
    %4209 = vmatpush1.msra.mxu0 0.0
    %4210 = vmatprep.subr.mxu0 0.0
    %4211 = vmatpush1.msra.mxu0 0.0
    %4212 = vmatprep.subr.mxu0 0.0
    %4213 = vmatpush1.msra.mxu0 0.0
    %4214 = vmatprep.subr.mxu0 0.0
    %4215 = vmatpush1.msra.mxu0 0.0
    %4216 = vmatprep.subr.mxu0 0.0
    %4217 = vmatpush1.msra.mxu0 0.0
    %4218 = vmatprep.subr.mxu0 0.0
    %4219 = vmatpush1.msra.mxu0 0.0
    %4220 = vmatprep.subr.mxu0 0.0
    %4221 = vmatpush1.msra.mxu0 0.0
    %4222 = vmatprep.subr.mxu0 0.0
    %4223 = vmatpush1.msra.mxu0 0.0
    %4224 = vmatprep.mubr.f32.mxu0 0.0
    %4225 = vmatmul.mubr.f32.gmra.mrb[0].mxu0 %v4154
    %v4226 = vpop.f32.mrb[0].mxu0
    %v4227 = vadd.f32 %v2520, %v4226
    %v4228 = vpop.f32.mrb[0].mxu0
    %4229 = vmatprep.mubr.f32.mxu0 0.0
    %4230 = vmatmul.mubr.f32.gmra.mrb[0].mxu0 %v4156
    %v4231 = vpop.f32.mrb[0].mxu0
    %v4232 = vadd.f32 %v2520, %v4231
    %v4233 = vpop.f32.mrb[0].mxu0
    %4234 = vmatprep.mubr.f32.mxu0 0.0
    %4235 = vmatmul.mubr.f32.gmra.mrb[0].mxu0 %v4158
    %v4236 = vpop.f32.mrb[0].mxu0
    %v4237 = vadd.f32 %v2520, %v4236
    %v4238 = vpop.f32.mrb[0].mxu0
    %4239 = vdwg.mxu0
    %v4240 = vadd.f32 %v4139, %v4227
    %v4241 = vadd.f32 %v4140, %v4232
    %v4242 = vadd.f32 %v4141, %v4237
    %v4243 = vxor.u32 %v4240, 2147483648
    %v4244 = vxor.u32 %v4241, 2147483648
    %v4245 = vxor.u32 %v4242, 2147483648
    %v4246 = vmul.f32 %v4243, 1.442695
    %v4247 = vpow.pop %v4246
    %v4248 = vmul.f32 %v4244, 1.442695
    %v4249 = vpow.pop %v4248
    %v4250 = vmul.f32 %v4245, 1.442695
    %v4251 = vpow.pop %v4250
    %v4252 = vadd.f32 %v4247, 1.0
    %v4253 = vadd.f32 %v4249, 1.0
    %v4254 = vadd.f32 %v4251, 1.0
    %v4255 = vrcp.pop %v4252
    %v4256 = vmul.f32 1.0, %v4255
    %v4257 = vrcp.pop %v4253
    %v4258 = vmul.f32 1.0, %v4257
    %v4259 = vrcp.pop %v4254
    %v4260 = vmul.f32 1.0, %v4259
    %4264 = vrot.lane.b32.xlu0 %v4227, 64
    %v4265 = vpop.permute.xlu0 %4264
    %4266 = vrot.lane.b32.xlu0 %v4232, 64
    %v4267 = vpop.permute.xlu0 %4266
    %4268 = vrot.lane.b32.xlu0 %v4237, 64
    %v4269 = vpop.permute.xlu0 %4268
    %v4273 = vmul.f32 %v4256, %v4265
    %v4274 = vmul.f32 %v4258, %v4267
    %v4275 = vmul.f32 %v4260, %v4269
    %4279 = vrot.lane.b32.xlu0 %v4273, 64
    %v4280 = vpop.permute.xlu0 %4279
    %4281 = vrot.lane.b32.xlu0 %v4274, 64
    %v4282 = vpop.permute.xlu0 %4281
    %4283 = vrot.lane.b32.xlu0 %v4275, 64
    %v4284 = vpop.permute.xlu0 %4283
    %v4288 = vadd.f32 %v4139, %v4280
    %v4289 = vadd.f32 %v4140, %v4282
    %v4290 = vadd.f32 %v4141, %v4284
    %v4291 = vtanh.pop %v4288
    %v4292 = vtanh.pop %v4289
    %v4293 = vtanh.pop %v4290
    %v4294 = vsub.f32 1.0, %v4256
    %v4295 = vsub.f32 1.0, %v4258
    %v4296 = vsub.f32 1.0, %v4260
    %4300 = vrot.lane.b32.xlu0 %v4291, 96
    %v4301 = vpop.permute.xlu0 %4300
    %4302 = vrot.lane.b32.xlu0 %v4292, 96
    %v4303 = vpop.permute.xlu0 %4302
    %4304 = vrot.lane.b32.xlu0 %v4293, 96
    %v4305 = vpop.permute.xlu0 %4304
    %v4309 = vmul.f32 %v4294, %v4301
    %v4310 = vmul.f32 %v4295, %v4303
    %v4311 = vmul.f32 %v4296, %v4305
    %v4312 = vmul.f32 %v4256, %v4102
    %v4313 = vmul.f32 %v4258, %v4103
    %v4314 = vmul.f32 %v4260, %v4104
    %v4315 = vadd.f32 %v4309, %v4312
    %v4316 = vadd.f32 %v4310, %v4313
    %v4317 = vadd.f32 %v4311, %v4314
    %vm4318 = vcmp.gt.f32.partialorder %v4142, 0.0
    %vm4319 = vcmp.gt.f32.partialorder %v4143, 0.0
    %vm4320 = vcmp.gt.f32.partialorder %v4144, 0.0
    %v4321 = vsel %vm4318, 1, 0
    %v4322 = vsel %vm4319, 1, 0
    %v4323 = vsel %vm4320, 1, 0
    %4324 = vset.pattern.permute.xlu0 0
    %4325 = vperm.xlu0 %4324, %v4321
    %v4326 = vpop.permute.xlu0 %4325
    %4327 = vset.pattern.permute.xlu0 0
    %4328 = vperm.xlu0 %4327, %v4322
    %v4329 = vpop.permute.xlu0 %4328
    %4330 = vset.pattern.permute.xlu0 0
    %4331 = vperm.xlu0 %4330, %v4323
    %v4332 = vpop.permute.xlu0 %4331
    %vm4333 = vcmp.eq.s32.totalorder %v4326, 1
    %vm4334 = vcmp.eq.s32.totalorder %v4329, 1
    %vm4335 = vcmp.eq.s32.totalorder %v4332, 1
    %v4336 = vsel %vm4333, %v4315, %v4102
    %v4337 = vsel %vm4334, %v4316, %v4103
    %v4338 = vsel %vm4335, %v4317, %v4104
    %4340 = vset.pattern.permute.xlu0 0
    %4341 = vperm.xlu0 %4340, %v4142
    %v4342 = vpop.permute.xlu0 %4341
    %4345 = vset.pattern.permute.xlu0 0
    %4346 = vperm.xlu0 %4345, %v4143
    %v4347 = vpop.permute.xlu0 %4346
    %4350 = vset.pattern.permute.xlu0 0
    %4351 = vperm.xlu0 %4350, %v4144
    %v4352 = vpop.permute.xlu0 %4351
    %v4354 = vmul.f32 %v4336, %v4342
    %v4355 = vmul.f32 %v4337, %v4347
    %v4356 = vmul.f32 %v4338, %v4352
    %4360 = vrot.lane.b32.xlu0 %v4354, 96
    %v4361 = vpop.permute.xlu0 %4360
    %4362 = vrot.lane.b32.xlu0 %v4355, 96
    %v4363 = vpop.permute.xlu0 %4362
    %4364 = vrot.lane.b32.xlu0 %v4356, 96
    %v4365 = vpop.permute.xlu0 %4364
    %4369 = vst.msk [vmem:[#allocation5] sm:$0xff] %vm91, %v4361
    %4370 = vst.msk [vmem:[#allocation5 + $0x8] sm:$0xff] %vm91, %v4363
    %4371 = vst.msk [vmem:[#allocation5 + $0x10] sm:$0xff] %vm91, %v4365
    %v4372 = vld [vmem:[%s8] sm:$0x1]
    %v4373 = vld [vmem:[%s9] sm:$0x1]
    %v4374 = vld [vmem:[%s10] sm:$0xff]
    %v4375 = vld [vmem:[%s10 + $0x8] sm:$0xff]
    %v4376 = vld [vmem:[%s10 + $0x10] sm:$0xff]
    %v4377 = vld [vmem:[%s10 + $0x18] sm:$0xff]
    %v4378 = vld [vmem:[%s10 + $0x20] sm:$0xff]
    %v4379 = vld [vmem:[%s10 + $0x28] sm:$0xff]
    %v4380 = vld [vmem:[%s10 + $0x30] sm:$0xff]
    %v4381 = vld [vmem:[%s10 + $0x38] sm:$0xff]
    %v4382 = vld [vmem:[%s11] sm:$0x1]
    %v4383 = vld [vmem:[%s12] sm:$0x1]
    %v4384 = vld [vmem:[#allocation4] sm:$0xff]
    %v4385 = vld [vmem:[#allocation4 + $0x8] sm:$0xff]
    %v4386 = vld [vmem:[#allocation4 + $0x10] sm:$0xff]
    %v4387 = vld [vmem:[#allocation5] sm:$0xff]
    %v4388 = vld [vmem:[#allocation5 + $0x8] sm:$0xff]
    %v4389 = vld [vmem:[#allocation5 + $0x10] sm:$0xff]
    %4393 = vrot.lane.b32.xlu0 %v4387, 32
    %v4394 = vpop.permute.xlu0 %4393
    %4395 = vrot.lane.b32.xlu0 %v4388, 32
    %v4396 = vpop.permute.xlu0 %4395
    %4397 = vrot.lane.b32.xlu0 %v4389, 32
    %v4398 = vpop.permute.xlu0 %4397
    %v4402 = vsel %vm91, %v4384, %v4394
    %v4403 = vsel %vm91, %v4385, %v4396
    %v4404 = vsel %vm91, %v4386, %v4398
    %vm4405 = vcmask 523264
    %v4406 = vsel %vm4405, %v4402, 0.0
    %4407 = vadd.xlane.f32.xlu0 %v4406
    %v4408 = vpop.xlane.xlu0 %4407
    %v4409 = vsel %vm4405, %v4403, 0.0
    %4410 = vadd.xlane.f32.xlu0 %v4409
    %v4411 = vpop.xlane.xlu0 %4410
    %v4412 = vsel %vm4405, %v4404, 0.0
    %4413 = vadd.xlane.f32.xlu0 %v4412
    %v4414 = vpop.xlane.xlu0 %4413
    %v4415 = vrcp.pop 64.0
    %v4416 = vmul.f32 %v4408, %v4415
    %v4417 = vmul.f32 %v4411, %v4415
    %v4418 = vmul.f32 %v4414, %v4415
    %v4419 = vsub.f32 %v4402, %v4416
    %v4420 = vsub.f32 %v4403, %v4417
    %v4421 = vsub.f32 %v4404, %v4418
    %v4422 = vmul.f32 %v4419, %v4419
    %v4423 = vmul.f32 %v4420, %v4420
    %v4424 = vmul.f32 %v4421, %v4421
    %v4425 = vsel %vm4405, %v4422, 0.0
    %4426 = vadd.xlane.f32.xlu0 %v4425
    %v4427 = vpop.xlane.xlu0 %4426
    %v4428 = vsel %vm4405, %v4423, 0.0
    %4429 = vadd.xlane.f32.xlu0 %v4428
    %v4430 = vpop.xlane.xlu0 %4429
    %v4431 = vsel %vm4405, %v4424, 0.0
    %4432 = vadd.xlane.f32.xlu0 %v4431
    %v4433 = vpop.xlane.xlu0 %4432
    %v4434 = vmul.f32 %v4427, %v4415
    %v4435 = vmul.f32 %v4430, %v4415
    %v4436 = vmul.f32 %v4433, %v4415
    %v4437 = vadd.f32 %v4434, 1e-05
    %v4438 = vadd.f32 %v4435, 1e-05
    %v4439 = vadd.f32 %v4436, 1e-05
    %v4440 = vrsqrt.pop %v4437
    %v4441 = vrsqrt.pop %v4438
    %v4442 = vrsqrt.pop %v4439
    %v4443 = vmul.f32 %v4419, %v4440
    %v4444 = vmul.f32 %v4420, %v4441
    %v4445 = vmul.f32 %v4421, %v4442
    %v4447 = vlaneseq
    %v4448 = vshrl.u32 %v4447, 7
    %v4449 = vsub.s32 0, %v4448
    %v4450 = vrot.slane %v4372, %v4449
    %v4452 = vmul.f32 %v4443, %v4450
    %v4453 = vmul.f32 %v4444, %v4450
    %v4454 = vmul.f32 %v4445, %v4450
    %v4456 = vlaneseq
    %v4457 = vshrl.u32 %v4456, 7
    %v4458 = vsub.s32 0, %v4457
    %v4459 = vrot.slane %v4373, %v4458
    %v4461 = vadd.f32 %v4452, %v4459
    %v4462 = vadd.f32 %v4453, %v4459
    %v4463 = vadd.f32 %v4454, %v4459
    %v4465 = vlaneseq
    %v4466 = vshrl.u32 %v4465, 7
    %v4467 = vsub.s32 0, %v4466
    %v4468 = vrot.slane %v4382, %v4467
    %v4471 = vsel %vm4405, %v4461, 0
    %v4474 = vsel %vm4405, %v4462, 0
    %v4477 = vsel %vm4405, %v4463, 0
    %4479 = vmatprep.subr.mxu0 0.0
    %4480 = vmatpush1.msra.mxu0 %v4374
    %4481 = vmatprep.subr.mxu0 0.0
    %4482 = vmatpush1.msra.mxu0 %v4375
    %4483 = vmatprep.subr.mxu0 0.0
    %4484 = vmatpush1.msra.mxu0 %v4376
    %4485 = vmatprep.subr.mxu0 0.0
    %4486 = vmatpush1.msra.mxu0 %v4377
    %4487 = vmatprep.subr.mxu0 0.0
    %4488 = vmatpush1.msra.mxu0 %v4378
    %4489 = vmatprep.subr.mxu0 0.0
    %4490 = vmatpush1.msra.mxu0 %v4379
    %4491 = vmatprep.subr.mxu0 0.0
    %4492 = vmatpush1.msra.mxu0 %v4380
    %4493 = vmatprep.subr.mxu0 0.0
    %4494 = vmatpush1.msra.mxu0 %v4381
    %4495 = vmatprep.subr.mxu0 0.0
    %4496 = vmatpush1.msra.mxu0 0.0
    %4497 = vmatprep.subr.mxu0 0.0
    %4498 = vmatpush1.msra.mxu0 0.0
    %4499 = vmatprep.subr.mxu0 0.0
    %4500 = vmatpush1.msra.mxu0 0.0
    %4501 = vmatprep.subr.mxu0 0.0
    %4502 = vmatpush1.msra.mxu0 0.0
    %4503 = vmatprep.subr.mxu0 0.0
    %4504 = vmatpush1.msra.mxu0 0.0
    %4505 = vmatprep.subr.mxu0 0.0
    %4506 = vmatpush1.msra.mxu0 0.0
    %4507 = vmatprep.subr.mxu0 0.0
    %4508 = vmatpush1.msra.mxu0 0.0
    %4509 = vmatprep.subr.mxu0 0.0
    %4510 = vmatpush1.msra.mxu0 0.0
    %4511 = vmatprep.subr.mxu0 0.0
    %4512 = vmatpush1.msra.mxu0 0.0
    %4513 = vmatprep.subr.mxu0 0.0
    %4514 = vmatpush1.msra.mxu0 0.0
    %4515 = vmatprep.subr.mxu0 0.0
    %4516 = vmatpush1.msra.mxu0 0.0
    %4517 = vmatprep.subr.mxu0 0.0
    %4518 = vmatpush1.msra.mxu0 0.0
    %4519 = vmatprep.subr.mxu0 0.0
    %4520 = vmatpush1.msra.mxu0 0.0
    %4521 = vmatprep.subr.mxu0 0.0
    %4522 = vmatpush1.msra.mxu0 0.0
    %4523 = vmatprep.subr.mxu0 0.0
    %4524 = vmatpush1.msra.mxu0 0.0
    %4525 = vmatprep.subr.mxu0 0.0
    %4526 = vmatpush1.msra.mxu0 0.0
    %4527 = vmatprep.subr.mxu0 0.0
    %4528 = vmatpush1.msra.mxu0 0.0
    %4529 = vmatprep.subr.mxu0 0.0
    %4530 = vmatpush1.msra.mxu0 0.0
    %4531 = vmatprep.subr.mxu0 0.0
    %4532 = vmatpush1.msra.mxu0 0.0
    %4533 = vmatprep.subr.mxu0 0.0
    %4534 = vmatpush1.msra.mxu0 0.0
    %4535 = vmatprep.subr.mxu0 0.0
    %4536 = vmatpush1.msra.mxu0 0.0
    %4537 = vmatprep.subr.mxu0 0.0
    %4538 = vmatpush1.msra.mxu0 0.0
    %4539 = vmatprep.subr.mxu0 0.0
    %4540 = vmatpush1.msra.mxu0 0.0
    %4541 = vmatprep.subr.mxu0 0.0
    %4542 = vmatpush1.msra.mxu0 0.0
    %4543 = vmatprep.mubr.f32.mxu0 0.0
    %4544 = vmatmul.mubr.f32.gmra.mrb[0].mxu0 %v4471
    %v4545 = vpop.f32.mrb[0].mxu0
    %v4546 = vadd.f32 %v4468, %v4545
    %v4547 = vpop.f32.mrb[0].mxu0
    %4548 = vmatprep.mubr.f32.mxu0 0.0
    %4549 = vmatmul.mubr.f32.gmra.mrb[0].mxu0 %v4474
    %v4550 = vpop.f32.mrb[0].mxu0
    %v4551 = vadd.f32 %v4468, %v4550
    %v4552 = vpop.f32.mrb[0].mxu0
    %4553 = vmatprep.mubr.f32.mxu0 0.0
    %4554 = vmatmul.mubr.f32.gmra.mrb[0].mxu0 %v4477
    %v4555 = vpop.f32.mrb[0].mxu0
    %v4556 = vadd.f32 %v4468, %v4555
    %v4557 = vpop.f32.mrb[0].mxu0
    %4558 = vdwg.mxu0
    %v4559 = vtanh.pop %v4546
    %v4560 = vtanh.pop %v4551
    %v4561 = vtanh.pop %v4556
    %v4563 = vlaneseq
    %v4564 = vshrl.u32 %v4563, 7
    %v4565 = vsub.s32 0, %v4564
    %v4566 = vrot.slane %v4383, %v4565
    %v4568 = vmul.f32 %v4559, %v4566
    %v4569 = vmul.f32 %v4560, %v4566
    %v4570 = vmul.f32 %v4561, %v4566
    %v4571 = vsel %vm4405, %v4568, 0.0
    %4572 = vadd.xlane.f32.xlu0 %v4571
    %v4573 = vpop.xlane.xlu0 %4572
    %v4574 = vsel %vm4405, %v4569, 0.0
    %4575 = vadd.xlane.f32.xlu0 %v4574
    %v4576 = vpop.xlane.xlu0 %4575
    %v4577 = vsel %vm4405, %v4570, 0.0
    %4578 = vadd.xlane.f32.xlu0 %v4577
    %v4579 = vpop.xlane.xlu0 %4578
    %v4580 = vmul.f32 %v4573, 1.442695
    %v4581 = vpow.pop %v4580
    %v4582 = vmul.f32 %v4576, 1.442695
    %v4583 = vpow.pop %v4582
    %v4584 = vmul.f32 %v4579, 1.442695
    %v4585 = vpow.pop %v4584
    %v4586 = vld [vmem:[%s1] sm:$0xff]
    %v4587 = vld [vmem:[%s1 + $0x8] sm:$0xff]
    %v4588 = vld [vmem:[%s1 + $0x10] sm:$0xff]
    %v4589 = vmul.f32 %v4581, %v4586
    %v4590 = vmul.f32 %v4583, %v4587
    %v4591 = vmul.f32 %v4585, %v4588
    %4593 = vset.pattern.permute.xlu0 0
    %4594 = vperm.xlu0 %4593, %v4589
    %v4595 = vpop.permute.xlu0 %4594
    %4598 = vset.pattern.permute.xlu0 0
    %4599 = vperm.xlu0 %4598, %v4590
    %v4600 = vpop.permute.xlu0 %4599
    %4603 = vset.pattern.permute.xlu0 0
    %4604 = vperm.xlu0 %4603, %v4591
    %v4605 = vpop.permute.xlu0 %4604
    %v4607 = vmul.f32 %v4595, %v4402
    %v4608 = vmul.f32 %v4600, %v4403
    %v4609 = vmul.f32 %v4605, %v4404
    %v4610 = vadd.f32 %v4607, 0.0
    %v4611 = vadd.f32 %v4608, 0.0
    %v4612 = vadd.f32 %v4609, 0.0
    %v4613 = vadd.f32 %v4589, 0.0
    %v4614 = vadd.f32 %v4590, 0.0
    %v4615 = vadd.f32 %v4591, 0.0
    %v4616 = vld [vmem:[%s1091] sm:$0xff]
    %v4617 = vld [vmem:[%s1091 + $0x8] sm:$0xff]
    %v4618 = vld [vmem:[%s1091 + $0x10] sm:$0xff]
    %v4619 = vld [vmem:[%s4135] sm:$0xff]
    %v4620 = vld [vmem:[%s4135 + $0x8] sm:$0xff]
    %v4621 = vld [vmem:[%s4135 + $0x10] sm:$0xff]
    %4625 = vrot.lane.b32.xlu0 %v4619, 32
    %v4626 = vpop.permute.xlu0 %4625
    %4627 = vrot.lane.b32.xlu0 %v4620, 32
    %v4628 = vpop.permute.xlu0 %4627
    %4629 = vrot.lane.b32.xlu0 %v4621, 32
    %v4630 = vpop.permute.xlu0 %4629
    %v4634 = vsel %vm91, %v4616, %v4626
    %v4635 = vsel %vm91, %v4617, %v4628
    %v4636 = vsel %vm91, %v4618, %v4630
    %v4637 = vsel %vm4405, %v4634, 0.0
    %4638 = vadd.xlane.f32.xlu0 %v4637
    %v4639 = vpop.xlane.xlu0 %4638
    %v4640 = vsel %vm4405, %v4635, 0.0
    %4641 = vadd.xlane.f32.xlu0 %v4640
    %v4642 = vpop.xlane.xlu0 %4641
    %v4643 = vsel %vm4405, %v4636, 0.0
    %4644 = vadd.xlane.f32.xlu0 %v4643
    %v4645 = vpop.xlane.xlu0 %4644
    %v4646 = vmul.f32 %v4639, %v4415
    %v4647 = vmul.f32 %v4642, %v4415
    %v4648 = vmul.f32 %v4645, %v4415
    %v4649 = vsub.f32 %v4634, %v4646
    %v4650 = vsub.f32 %v4635, %v4647
    %v4651 = vsub.f32 %v4636, %v4648
    %v4652 = vmul.f32 %v4649, %v4649
    %v4653 = vmul.f32 %v4650, %v4650
    %v4654 = vmul.f32 %v4651, %v4651
    %v4655 = vsel %vm4405, %v4652, 0.0
    %4656 = vadd.xlane.f32.xlu0 %v4655
    %v4657 = vpop.xlane.xlu0 %4656
    %v4658 = vsel %vm4405, %v4653, 0.0
    %4659 = vadd.xlane.f32.xlu0 %v4658
    %v4660 = vpop.xlane.xlu0 %4659
    %v4661 = vsel %vm4405, %v4654, 0.0
    %4662 = vadd.xlane.f32.xlu0 %v4661
    %v4663 = vpop.xlane.xlu0 %4662
    %v4664 = vmul.f32 %v4657, %v4415
    %v4665 = vmul.f32 %v4660, %v4415
    %v4666 = vmul.f32 %v4663, %v4415
    %v4667 = vadd.f32 %v4664, 1e-05
    %v4668 = vadd.f32 %v4665, 1e-05
    %v4669 = vadd.f32 %v4666, 1e-05
    %v4670 = vrsqrt.pop %v4667
    %v4671 = vrsqrt.pop %v4668
    %v4672 = vrsqrt.pop %v4669
    %v4673 = vmul.f32 %v4649, %v4670
    %v4674 = vmul.f32 %v4650, %v4671
    %v4675 = vmul.f32 %v4651, %v4672
    %v4676 = vmul.f32 %v4673, %v4450
    %v4677 = vmul.f32 %v4674, %v4450
    %v4678 = vmul.f32 %v4675, %v4450
    %v4679 = vadd.f32 %v4676, %v4459
    %v4680 = vadd.f32 %v4677, %v4459
    %v4681 = vadd.f32 %v4678, %v4459
    %v4683 = vsel %vm4405, %v4679, 0
    %v4686 = vsel %vm4405, %v4680, 0
    %v4689 = vsel %vm4405, %v4681, 0
    %4691 = vmatprep.subr.mxu0 0.0
    %4692 = vmatpush1.msra.mxu0 %v4374
    %4693 = vmatprep.subr.mxu0 0.0
    %4694 = vmatpush1.msra.mxu0 %v4375
    %4695 = vmatprep.subr.mxu0 0.0
    %4696 = vmatpush1.msra.mxu0 %v4376
    %4697 = vmatprep.subr.mxu0 0.0
    %4698 = vmatpush1.msra.mxu0 %v4377
    %4699 = vmatprep.subr.mxu0 0.0
    %4700 = vmatpush1.msra.mxu0 %v4378
    %4701 = vmatprep.subr.mxu0 0.0
    %4702 = vmatpush1.msra.mxu0 %v4379
    %4703 = vmatprep.subr.mxu0 0.0
    %4704 = vmatpush1.msra.mxu0 %v4380
    %4705 = vmatprep.subr.mxu0 0.0
    %4706 = vmatpush1.msra.mxu0 %v4381
    %4707 = vmatprep.subr.mxu0 0.0
    %4708 = vmatpush1.msra.mxu0 0.0
    %4709 = vmatprep.subr.mxu0 0.0
    %4710 = vmatpush1.msra.mxu0 0.0
    %4711 = vmatprep.subr.mxu0 0.0
    %4712 = vmatpush1.msra.mxu0 0.0
    %4713 = vmatprep.subr.mxu0 0.0
    %4714 = vmatpush1.msra.mxu0 0.0
    %4715 = vmatprep.subr.mxu0 0.0
    %4716 = vmatpush1.msra.mxu0 0.0
    %4717 = vmatprep.subr.mxu0 0.0
    %4718 = vmatpush1.msra.mxu0 0.0
    %4719 = vmatprep.subr.mxu0 0.0
    %4720 = vmatpush1.msra.mxu0 0.0
    %4721 = vmatprep.subr.mxu0 0.0
    %4722 = vmatpush1.msra.mxu0 0.0
    %4723 = vmatprep.subr.mxu0 0.0
    %4724 = vmatpush1.msra.mxu0 0.0
    %4725 = vmatprep.subr.mxu0 0.0
    %4726 = vmatpush1.msra.mxu0 0.0
    %4727 = vmatprep.subr.mxu0 0.0
    %4728 = vmatpush1.msra.mxu0 0.0
    %4729 = vmatprep.subr.mxu0 0.0
    %4730 = vmatpush1.msra.mxu0 0.0
    %4731 = vmatprep.subr.mxu0 0.0
    %4732 = vmatpush1.msra.mxu0 0.0
    %4733 = vmatprep.subr.mxu0 0.0
    %4734 = vmatpush1.msra.mxu0 0.0
    %4735 = vmatprep.subr.mxu0 0.0
    %4736 = vmatpush1.msra.mxu0 0.0
    %4737 = vmatprep.subr.mxu0 0.0
    %4738 = vmatpush1.msra.mxu0 0.0
    %4739 = vmatprep.subr.mxu0 0.0
    %4740 = vmatpush1.msra.mxu0 0.0
    %4741 = vmatprep.subr.mxu0 0.0
    %4742 = vmatpush1.msra.mxu0 0.0
    %4743 = vmatprep.subr.mxu0 0.0
    %4744 = vmatpush1.msra.mxu0 0.0
    %4745 = vmatprep.subr.mxu0 0.0
    %4746 = vmatpush1.msra.mxu0 0.0
    %4747 = vmatprep.subr.mxu0 0.0
    %4748 = vmatpush1.msra.mxu0 0.0
    %4749 = vmatprep.subr.mxu0 0.0
    %4750 = vmatpush1.msra.mxu0 0.0
    %4751 = vmatprep.subr.mxu0 0.0
    %4752 = vmatpush1.msra.mxu0 0.0
    %4753 = vmatprep.subr.mxu0 0.0
    %4754 = vmatpush1.msra.mxu0 0.0
    %4755 = vmatprep.mubr.f32.mxu0 0.0
    %4756 = vmatmul.mubr.f32.gmra.mrb[0].mxu0 %v4683
    %v4757 = vpop.f32.mrb[0].mxu0
    %v4758 = vadd.f32 %v4468, %v4757
    %v4759 = vpop.f32.mrb[0].mxu0
    %4760 = vmatprep.mubr.f32.mxu0 0.0
    %4761 = vmatmul.mubr.f32.gmra.mrb[0].mxu0 %v4686
    %v4762 = vpop.f32.mrb[0].mxu0
    %v4763 = vadd.f32 %v4468, %v4762
    %v4764 = vpop.f32.mrb[0].mxu0
    %4765 = vmatprep.mubr.f32.mxu0 0.0
    %4766 = vmatmul.mubr.f32.gmra.mrb[0].mxu0 %v4689
    %v4767 = vpop.f32.mrb[0].mxu0
    %v4768 = vadd.f32 %v4468, %v4767
    %v4769 = vpop.f32.mrb[0].mxu0
    %4770 = vdwg.mxu0
    %v4771 = vtanh.pop %v4758
    %v4772 = vtanh.pop %v4763
    %v4773 = vtanh.pop %v4768
    %v4774 = vmul.f32 %v4771, %v4566
    %v4775 = vmul.f32 %v4772, %v4566
    %v4776 = vmul.f32 %v4773, %v4566
    %v4777 = vsel %vm4405, %v4774, 0.0
    %4778 = vadd.xlane.f32.xlu0 %v4777
    %v4779 = vpop.xlane.xlu0 %4778
    %v4780 = vsel %vm4405, %v4775, 0.0
    %4781 = vadd.xlane.f32.xlu0 %v4780
    %v4782 = vpop.xlane.xlu0 %4781
    %v4783 = vsel %vm4405, %v4776, 0.0
    %4784 = vadd.xlane.f32.xlu0 %v4783
    %v4785 = vpop.xlane.xlu0 %4784
    %v4786 = vmul.f32 %v4779, 1.442695
    %v4787 = vpow.pop %v4786
    %v4788 = vmul.f32 %v4782, 1.442695
    %v4789 = vpow.pop %v4788
    %v4790 = vmul.f32 %v4785, 1.442695
    %v4791 = vpow.pop %v4790
    %v4792 = vld [vmem:[%s863] sm:$0xff]
    %v4793 = vld [vmem:[%s863 + $0x8] sm:$0xff]
    %v4794 = vld [vmem:[%s863 + $0x10] sm:$0xff]
    %v4795 = vmul.f32 %v4787, %v4792
    %v4796 = vmul.f32 %v4789, %v4793
    %v4797 = vmul.f32 %v4791, %v4794
    %4799 = vset.pattern.permute.xlu0 0
    %4800 = vperm.xlu0 %4799, %v4795
    %v4801 = vpop.permute.xlu0 %4800
    %4804 = vset.pattern.permute.xlu0 0
    %4805 = vperm.xlu0 %4804, %v4796
    %v4806 = vpop.permute.xlu0 %4805
    %4809 = vset.pattern.permute.xlu0 0
    %4810 = vperm.xlu0 %4809, %v4797
    %v4811 = vpop.permute.xlu0 %4810
    %v4813 = vmul.f32 %v4801, %v4634
    %v4814 = vmul.f32 %v4806, %v4635
    %v4815 = vmul.f32 %v4811, %v4636
    %v4816 = vadd.f32 %v4610, %v4813
    %v4817 = vadd.f32 %v4611, %v4814
    %v4818 = vadd.f32 %v4612, %v4815
    %v4819 = vadd.f32 %v4613, %v4795
    %v4820 = vadd.f32 %v4614, %v4796
    %v4821 = vadd.f32 %v4615, %v4797
    %v4822 = vld [vmem:[%s1326] sm:$0xff]
    %v4823 = vld [vmem:[%s1326 + $0x8] sm:$0xff]
    %v4824 = vld [vmem:[%s1326 + $0x10] sm:$0xff]
    %v4825 = vld [vmem:[%s3901] sm:$0xff]
    %v4826 = vld [vmem:[%s3901 + $0x8] sm:$0xff]
    %v4827 = vld [vmem:[%s3901 + $0x10] sm:$0xff]
    %4831 = vrot.lane.b32.xlu0 %v4825, 32
    %v4832 = vpop.permute.xlu0 %4831
    %4833 = vrot.lane.b32.xlu0 %v4826, 32
    %v4834 = vpop.permute.xlu0 %4833
    %4835 = vrot.lane.b32.xlu0 %v4827, 32
    %v4836 = vpop.permute.xlu0 %4835
    %v4840 = vsel %vm91, %v4822, %v4832
    %v4841 = vsel %vm91, %v4823, %v4834
    %v4842 = vsel %vm91, %v4824, %v4836
    %v4843 = vsel %vm4405, %v4840, 0.0
    %4844 = vadd.xlane.f32.xlu0 %v4843
    %v4845 = vpop.xlane.xlu0 %4844
    %v4846 = vsel %vm4405, %v4841, 0.0
    %4847 = vadd.xlane.f32.xlu0 %v4846
    %v4848 = vpop.xlane.xlu0 %4847
    %v4849 = vsel %vm4405, %v4842, 0.0
    %4850 = vadd.xlane.f32.xlu0 %v4849
    %v4851 = vpop.xlane.xlu0 %4850
    %v4852 = vmul.f32 %v4845, %v4415
    %v4853 = vmul.f32 %v4848, %v4415
    %v4854 = vmul.f32 %v4851, %v4415
    %v4855 = vsub.f32 %v4840, %v4852
    %v4856 = vsub.f32 %v4841, %v4853
    %v4857 = vsub.f32 %v4842, %v4854
    %v4858 = vmul.f32 %v4855, %v4855
    %v4859 = vmul.f32 %v4856, %v4856
    %v4860 = vmul.f32 %v4857, %v4857
    %v4861 = vsel %vm4405, %v4858, 0.0
    %4862 = vadd.xlane.f32.xlu0 %v4861
    %v4863 = vpop.xlane.xlu0 %4862
    %v4864 = vsel %vm4405, %v4859, 0.0
    %4865 = vadd.xlane.f32.xlu0 %v4864
    %v4866 = vpop.xlane.xlu0 %4865
    %v4867 = vsel %vm4405, %v4860, 0.0
    %4868 = vadd.xlane.f32.xlu0 %v4867
    %v4869 = vpop.xlane.xlu0 %4868
    %v4870 = vmul.f32 %v4863, %v4415
    %v4871 = vmul.f32 %v4866, %v4415
    %v4872 = vmul.f32 %v4869, %v4415
    %v4873 = vadd.f32 %v4870, 1e-05
    %v4874 = vadd.f32 %v4871, 1e-05
    %v4875 = vadd.f32 %v4872, 1e-05
    %v4876 = vrsqrt.pop %v4873
    %v4877 = vrsqrt.pop %v4874
    %v4878 = vrsqrt.pop %v4875
    %v4879 = vmul.f32 %v4855, %v4876
    %v4880 = vmul.f32 %v4856, %v4877
    %v4881 = vmul.f32 %v4857, %v4878
    %v4882 = vmul.f32 %v4879, %v4450
    %v4883 = vmul.f32 %v4880, %v4450
    %v4884 = vmul.f32 %v4881, %v4450
    %v4885 = vadd.f32 %v4882, %v4459
    %v4886 = vadd.f32 %v4883, %v4459
    %v4887 = vadd.f32 %v4884, %v4459
    %v4889 = vsel %vm4405, %v4885, 0
    %v4892 = vsel %vm4405, %v4886, 0
    %v4895 = vsel %vm4405, %v4887, 0
    %4897 = vmatprep.subr.mxu0 0.0
    %4898 = vmatpush1.msra.mxu0 %v4374
    %4899 = vmatprep.subr.mxu0 0.0
    %4900 = vmatpush1.msra.mxu0 %v4375
    %4901 = vmatprep.subr.mxu0 0.0
    %4902 = vmatpush1.msra.mxu0 %v4376
    %4903 = vmatprep.subr.mxu0 0.0
    %4904 = vmatpush1.msra.mxu0 %v4377
    %4905 = vmatprep.subr.mxu0 0.0
    %4906 = vmatpush1.msra.mxu0 %v4378
    %4907 = vmatprep.subr.mxu0 0.0
    %4908 = vmatpush1.msra.mxu0 %v4379
    %4909 = vmatprep.subr.mxu0 0.0
    %4910 = vmatpush1.msra.mxu0 %v4380
    %4911 = vmatprep.subr.mxu0 0.0
    %4912 = vmatpush1.msra.mxu0 %v4381
    %4913 = vmatprep.subr.mxu0 0.0
    %4914 = vmatpush1.msra.mxu0 0.0
    %4915 = vmatprep.subr.mxu0 0.0
    %4916 = vmatpush1.msra.mxu0 0.0
    %4917 = vmatprep.subr.mxu0 0.0
    %4918 = vmatpush1.msra.mxu0 0.0
    %4919 = vmatprep.subr.mxu0 0.0
    %4920 = vmatpush1.msra.mxu0 0.0
    %4921 = vmatprep.subr.mxu0 0.0
    %4922 = vmatpush1.msra.mxu0 0.0
    %4923 = vmatprep.subr.mxu0 0.0
    %4924 = vmatpush1.msra.mxu0 0.0
    %4925 = vmatprep.subr.mxu0 0.0
    %4926 = vmatpush1.msra.mxu0 0.0
    %4927 = vmatprep.subr.mxu0 0.0
    %4928 = vmatpush1.msra.mxu0 0.0
    %4929 = vmatprep.subr.mxu0 0.0
    %4930 = vmatpush1.msra.mxu0 0.0
    %4931 = vmatprep.subr.mxu0 0.0
    %4932 = vmatpush1.msra.mxu0 0.0
    %4933 = vmatprep.subr.mxu0 0.0
    %4934 = vmatpush1.msra.mxu0 0.0
    %4935 = vmatprep.subr.mxu0 0.0
    %4936 = vmatpush1.msra.mxu0 0.0
    %4937 = vmatprep.subr.mxu0 0.0
    %4938 = vmatpush1.msra.mxu0 0.0
    %4939 = vmatprep.subr.mxu0 0.0
    %4940 = vmatpush1.msra.mxu0 0.0
    %4941 = vmatprep.subr.mxu0 0.0
    %4942 = vmatpush1.msra.mxu0 0.0
    %4943 = vmatprep.subr.mxu0 0.0
    %4944 = vmatpush1.msra.mxu0 0.0
    %4945 = vmatprep.subr.mxu0 0.0
    %4946 = vmatpush1.msra.mxu0 0.0
    %4947 = vmatprep.subr.mxu0 0.0
    %4948 = vmatpush1.msra.mxu0 0.0
    %4949 = vmatprep.subr.mxu0 0.0
    %4950 = vmatpush1.msra.mxu0 0.0
    %4951 = vmatprep.subr.mxu0 0.0
    %4952 = vmatpush1.msra.mxu0 0.0
    %4953 = vmatprep.subr.mxu0 0.0
    %4954 = vmatpush1.msra.mxu0 0.0
    %4955 = vmatprep.subr.mxu0 0.0
    %4956 = vmatpush1.msra.mxu0 0.0
    %4957 = vmatprep.subr.mxu0 0.0
    %4958 = vmatpush1.msra.mxu0 0.0
    %4959 = vmatprep.subr.mxu0 0.0
    %4960 = vmatpush1.msra.mxu0 0.0
    %4961 = vmatprep.mubr.f32.mxu0 0.0
    %4962 = vmatmul.mubr.f32.gmra.mrb[0].mxu0 %v4889
    %v4963 = vpop.f32.mrb[0].mxu0
    %v4964 = vadd.f32 %v4468, %v4963
    %v4965 = vpop.f32.mrb[0].mxu0
    %4966 = vmatprep.mubr.f32.mxu0 0.0
    %4967 = vmatmul.mubr.f32.gmra.mrb[0].mxu0 %v4892
    %v4968 = vpop.f32.mrb[0].mxu0
    %v4969 = vadd.f32 %v4468, %v4968
    %v4970 = vpop.f32.mrb[0].mxu0
    %4971 = vmatprep.mubr.f32.mxu0 0.0
    %4972 = vmatmul.mubr.f32.gmra.mrb[0].mxu0 %v4895
    %v4973 = vpop.f32.mrb[0].mxu0
    %v4974 = vadd.f32 %v4468, %v4973
    %v4975 = vpop.f32.mrb[0].mxu0
    %4976 = vdwg.mxu0
    %v4977 = vtanh.pop %v4964
    %v4978 = vtanh.pop %v4969
    %v4979 = vtanh.pop %v4974
    %v4980 = vmul.f32 %v4977, %v4566
    %v4981 = vmul.f32 %v4978, %v4566
    %v4982 = vmul.f32 %v4979, %v4566
    %v4983 = vsel %vm4405, %v4980, 0.0
    %4984 = vadd.xlane.f32.xlu0 %v4983
    %v4985 = vpop.xlane.xlu0 %4984
    %v4986 = vsel %vm4405, %v4981, 0.0
    %4987 = vadd.xlane.f32.xlu0 %v4986
    %v4988 = vpop.xlane.xlu0 %4987
    %v4989 = vsel %vm4405, %v4982, 0.0
    %4990 = vadd.xlane.f32.xlu0 %v4989
    %v4991 = vpop.xlane.xlu0 %4990
    %v4992 = vmul.f32 %v4985, 1.442695
    %v4993 = vpow.pop %v4992
    %v4994 = vmul.f32 %v4988, 1.442695
    %v4995 = vpow.pop %v4994
    %v4996 = vmul.f32 %v4991, 1.442695
    %v4997 = vpow.pop %v4996
    %v4998 = vld [vmem:[%s1098] sm:$0xff]
    %v4999 = vld [vmem:[%s1098 + $0x8] sm:$0xff]
    %v5000 = vld [vmem:[%s1098 + $0x10] sm:$0xff]
    %v5001 = vmul.f32 %v4993, %v4998
    %v5002 = vmul.f32 %v4995, %v4999
    %v5003 = vmul.f32 %v4997, %v5000
    %5005 = vset.pattern.permute.xlu0 0
    %5006 = vperm.xlu0 %5005, %v5001
    %v5007 = vpop.permute.xlu0 %5006
    %5010 = vset.pattern.permute.xlu0 0
    %5011 = vperm.xlu0 %5010, %v5002
    %v5012 = vpop.permute.xlu0 %5011
    %5015 = vset.pattern.permute.xlu0 0
    %5016 = vperm.xlu0 %5015, %v5003
    %v5017 = vpop.permute.xlu0 %5016
    %v5019 = vmul.f32 %v5007, %v4840
    %v5020 = vmul.f32 %v5012, %v4841
    %v5021 = vmul.f32 %v5017, %v4842
    %v5022 = vadd.f32 %v4816, %v5019
    %v5023 = vadd.f32 %v4817, %v5020
    %v5024 = vadd.f32 %v4818, %v5021
    %v5025 = vadd.f32 %v4819, %v5001
    %v5026 = vadd.f32 %v4820, %v5002
    %v5027 = vadd.f32 %v4821, %v5003
    %v5028 = vld [vmem:[%s1561] sm:$0xff]
    %v5029 = vld [vmem:[%s1561 + $0x8] sm:$0xff]
    %v5030 = vld [vmem:[%s1561 + $0x10] sm:$0xff]
    %v5031 = vld [vmem:[%s3667] sm:$0xff]
    %v5032 = vld [vmem:[%s3667 + $0x8] sm:$0xff]
    %v5033 = vld [vmem:[%s3667 + $0x10] sm:$0xff]
    %5037 = vrot.lane.b32.xlu0 %v5031, 32
    %v5038 = vpop.permute.xlu0 %5037
    %5039 = vrot.lane.b32.xlu0 %v5032, 32
    %v5040 = vpop.permute.xlu0 %5039
    %5041 = vrot.lane.b32.xlu0 %v5033, 32
    %v5042 = vpop.permute.xlu0 %5041
    %v5046 = vsel %vm91, %v5028, %v5038
    %v5047 = vsel %vm91, %v5029, %v5040
    %v5048 = vsel %vm91, %v5030, %v5042
    %v5049 = vsel %vm4405, %v5046, 0.0
    %5050 = vadd.xlane.f32.xlu0 %v5049
    %v5051 = vpop.xlane.xlu0 %5050
    %v5052 = vsel %vm4405, %v5047, 0.0
    %5053 = vadd.xlane.f32.xlu0 %v5052
    %v5054 = vpop.xlane.xlu0 %5053
    %v5055 = vsel %vm4405, %v5048, 0.0
    %5056 = vadd.xlane.f32.xlu0 %v5055
    %v5057 = vpop.xlane.xlu0 %5056
    %v5058 = vmul.f32 %v5051, %v4415
    %v5059 = vmul.f32 %v5054, %v4415
    %v5060 = vmul.f32 %v5057, %v4415
    %v5061 = vsub.f32 %v5046, %v5058
    %v5062 = vsub.f32 %v5047, %v5059
    %v5063 = vsub.f32 %v5048, %v5060
    %v5064 = vmul.f32 %v5061, %v5061
    %v5065 = vmul.f32 %v5062, %v5062
    %v5066 = vmul.f32 %v5063, %v5063
    %v5067 = vsel %vm4405, %v5064, 0.0
    %5068 = vadd.xlane.f32.xlu0 %v5067
    %v5069 = vpop.xlane.xlu0 %5068
    %v5070 = vsel %vm4405, %v5065, 0.0
    %5071 = vadd.xlane.f32.xlu0 %v5070
    %v5072 = vpop.xlane.xlu0 %5071
    %v5073 = vsel %vm4405, %v5066, 0.0
    %5074 = vadd.xlane.f32.xlu0 %v5073
    %v5075 = vpop.xlane.xlu0 %5074
    %v5076 = vmul.f32 %v5069, %v4415
    %v5077 = vmul.f32 %v5072, %v4415
    %v5078 = vmul.f32 %v5075, %v4415
    %v5079 = vadd.f32 %v5076, 1e-05
    %v5080 = vadd.f32 %v5077, 1e-05
    %v5081 = vadd.f32 %v5078, 1e-05
    %v5082 = vrsqrt.pop %v5079
    %v5083 = vrsqrt.pop %v5080
    %v5084 = vrsqrt.pop %v5081
    %v5085 = vmul.f32 %v5061, %v5082
    %v5086 = vmul.f32 %v5062, %v5083
    %v5087 = vmul.f32 %v5063, %v5084
    %v5088 = vmul.f32 %v5085, %v4450
    %v5089 = vmul.f32 %v5086, %v4450
    %v5090 = vmul.f32 %v5087, %v4450
    %v5091 = vadd.f32 %v5088, %v4459
    %v5092 = vadd.f32 %v5089, %v4459
    %v5093 = vadd.f32 %v5090, %v4459
    %v5095 = vsel %vm4405, %v5091, 0
    %v5098 = vsel %vm4405, %v5092, 0
    %v5101 = vsel %vm4405, %v5093, 0
    %5103 = vmatprep.subr.mxu0 0.0
    %5104 = vmatpush1.msra.mxu0 %v4374
    %5105 = vmatprep.subr.mxu0 0.0
    %5106 = vmatpush1.msra.mxu0 %v4375
    %5107 = vmatprep.subr.mxu0 0.0
    %5108 = vmatpush1.msra.mxu0 %v4376
    %5109 = vmatprep.subr.mxu0 0.0
    %5110 = vmatpush1.msra.mxu0 %v4377
    %5111 = vmatprep.subr.mxu0 0.0
    %5112 = vmatpush1.msra.mxu0 %v4378
    %5113 = vmatprep.subr.mxu0 0.0
    %5114 = vmatpush1.msra.mxu0 %v4379
    %5115 = vmatprep.subr.mxu0 0.0
    %5116 = vmatpush1.msra.mxu0 %v4380
    %5117 = vmatprep.subr.mxu0 0.0
    %5118 = vmatpush1.msra.mxu0 %v4381
    %5119 = vmatprep.subr.mxu0 0.0
    %5120 = vmatpush1.msra.mxu0 0.0
    %5121 = vmatprep.subr.mxu0 0.0
    %5122 = vmatpush1.msra.mxu0 0.0
    %5123 = vmatprep.subr.mxu0 0.0
    %5124 = vmatpush1.msra.mxu0 0.0
    %5125 = vmatprep.subr.mxu0 0.0
    %5126 = vmatpush1.msra.mxu0 0.0
    %5127 = vmatprep.subr.mxu0 0.0
    %5128 = vmatpush1.msra.mxu0 0.0
    %5129 = vmatprep.subr.mxu0 0.0
    %5130 = vmatpush1.msra.mxu0 0.0
    %5131 = vmatprep.subr.mxu0 0.0
    %5132 = vmatpush1.msra.mxu0 0.0
    %5133 = vmatprep.subr.mxu0 0.0
    %5134 = vmatpush1.msra.mxu0 0.0
    %5135 = vmatprep.subr.mxu0 0.0
    %5136 = vmatpush1.msra.mxu0 0.0
    %5137 = vmatprep.subr.mxu0 0.0
    %5138 = vmatpush1.msra.mxu0 0.0
    %5139 = vmatprep.subr.mxu0 0.0
    %5140 = vmatpush1.msra.mxu0 0.0
    %5141 = vmatprep.subr.mxu0 0.0
    %5142 = vmatpush1.msra.mxu0 0.0
    %5143 = vmatprep.subr.mxu0 0.0
    %5144 = vmatpush1.msra.mxu0 0.0
    %5145 = vmatprep.subr.mxu0 0.0
    %5146 = vmatpush1.msra.mxu0 0.0
    %5147 = vmatprep.subr.mxu0 0.0
    %5148 = vmatpush1.msra.mxu0 0.0
    %5149 = vmatprep.subr.mxu0 0.0
    %5150 = vmatpush1.msra.mxu0 0.0
    %5151 = vmatprep.subr.mxu0 0.0
    %5152 = vmatpush1.msra.mxu0 0.0
    %5153 = vmatprep.subr.mxu0 0.0
    %5154 = vmatpush1.msra.mxu0 0.0
    %5155 = vmatprep.subr.mxu0 0.0
    %5156 = vmatpush1.msra.mxu0 0.0
    %5157 = vmatprep.subr.mxu0 0.0
    %5158 = vmatpush1.msra.mxu0 0.0
    %5159 = vmatprep.subr.mxu0 0.0
    %5160 = vmatpush1.msra.mxu0 0.0
    %5161 = vmatprep.subr.mxu0 0.0
    %5162 = vmatpush1.msra.mxu0 0.0
    %5163 = vmatprep.subr.mxu0 0.0
    %5164 = vmatpush1.msra.mxu0 0.0
    %5165 = vmatprep.subr.mxu0 0.0
    %5166 = vmatpush1.msra.mxu0 0.0
    %5167 = vmatprep.mubr.f32.mxu0 0.0
    %5168 = vmatmul.mubr.f32.gmra.mrb[0].mxu0 %v5095
    %v5169 = vpop.f32.mrb[0].mxu0
    %v5170 = vadd.f32 %v4468, %v5169
    %v5171 = vpop.f32.mrb[0].mxu0
    %5172 = vmatprep.mubr.f32.mxu0 0.0
    %5173 = vmatmul.mubr.f32.gmra.mrb[0].mxu0 %v5098
    %v5174 = vpop.f32.mrb[0].mxu0
    %v5175 = vadd.f32 %v4468, %v5174
    %v5176 = vpop.f32.mrb[0].mxu0
    %5177 = vmatprep.mubr.f32.mxu0 0.0
    %5178 = vmatmul.mubr.f32.gmra.mrb[0].mxu0 %v5101
    %v5179 = vpop.f32.mrb[0].mxu0
    %v5180 = vadd.f32 %v4468, %v5179
    %v5181 = vpop.f32.mrb[0].mxu0
    %5182 = vdwg.mxu0
    %v5183 = vtanh.pop %v5170
    %v5184 = vtanh.pop %v5175
    %v5185 = vtanh.pop %v5180
    %v5186 = vmul.f32 %v5183, %v4566
    %v5187 = vmul.f32 %v5184, %v4566
    %v5188 = vmul.f32 %v5185, %v4566
    %v5189 = vsel %vm4405, %v5186, 0.0
    %5190 = vadd.xlane.f32.xlu0 %v5189
    %v5191 = vpop.xlane.xlu0 %5190
    %v5192 = vsel %vm4405, %v5187, 0.0
    %5193 = vadd.xlane.f32.xlu0 %v5192
    %v5194 = vpop.xlane.xlu0 %5193
    %v5195 = vsel %vm4405, %v5188, 0.0
    %5196 = vadd.xlane.f32.xlu0 %v5195
    %v5197 = vpop.xlane.xlu0 %5196
    %v5198 = vmul.f32 %v5191, 1.442695
    %v5199 = vpow.pop %v5198
    %v5200 = vmul.f32 %v5194, 1.442695
    %v5201 = vpow.pop %v5200
    %v5202 = vmul.f32 %v5197, 1.442695
    %v5203 = vpow.pop %v5202
    %v5204 = vld [vmem:[%s1333] sm:$0xff]
    %v5205 = vld [vmem:[%s1333 + $0x8] sm:$0xff]
    %v5206 = vld [vmem:[%s1333 + $0x10] sm:$0xff]
    %v5207 = vmul.f32 %v5199, %v5204
    %v5208 = vmul.f32 %v5201, %v5205
    %v5209 = vmul.f32 %v5203, %v5206
    %5211 = vset.pattern.permute.xlu0 0
    %5212 = vperm.xlu0 %5211, %v5207
    %v5213 = vpop.permute.xlu0 %5212
    %5216 = vset.pattern.permute.xlu0 0
    %5217 = vperm.xlu0 %5216, %v5208
    %v5218 = vpop.permute.xlu0 %5217
    %5221 = vset.pattern.permute.xlu0 0
    %5222 = vperm.xlu0 %5221, %v5209
    %v5223 = vpop.permute.xlu0 %5222
    %v5225 = vmul.f32 %v5213, %v5046
    %v5226 = vmul.f32 %v5218, %v5047
    %v5227 = vmul.f32 %v5223, %v5048
    %v5228 = vadd.f32 %v5022, %v5225
    %v5229 = vadd.f32 %v5023, %v5226
    %v5230 = vadd.f32 %v5024, %v5227
    %v5231 = vadd.f32 %v5025, %v5207
    %v5232 = vadd.f32 %v5026, %v5208
    %v5233 = vadd.f32 %v5027, %v5209
    %v5234 = vld [vmem:[%s1796] sm:$0xff]
    %v5235 = vld [vmem:[%s1796 + $0x8] sm:$0xff]
    %v5236 = vld [vmem:[%s1796 + $0x10] sm:$0xff]
    %v5237 = vld [vmem:[%s3433] sm:$0xff]
    %v5238 = vld [vmem:[%s3433 + $0x8] sm:$0xff]
    %v5239 = vld [vmem:[%s3433 + $0x10] sm:$0xff]
    %5243 = vrot.lane.b32.xlu0 %v5237, 32
    %v5244 = vpop.permute.xlu0 %5243
    %5245 = vrot.lane.b32.xlu0 %v5238, 32
    %v5246 = vpop.permute.xlu0 %5245
    %5247 = vrot.lane.b32.xlu0 %v5239, 32
    %v5248 = vpop.permute.xlu0 %5247
    %v5252 = vsel %vm91, %v5234, %v5244
    %v5253 = vsel %vm91, %v5235, %v5246
    %v5254 = vsel %vm91, %v5236, %v5248
    %v5255 = vsel %vm4405, %v5252, 0.0
    %5256 = vadd.xlane.f32.xlu0 %v5255
    %v5257 = vpop.xlane.xlu0 %5256
    %v5258 = vsel %vm4405, %v5253, 0.0
    %5259 = vadd.xlane.f32.xlu0 %v5258
    %v5260 = vpop.xlane.xlu0 %5259
    %v5261 = vsel %vm4405, %v5254, 0.0
    %5262 = vadd.xlane.f32.xlu0 %v5261
    %v5263 = vpop.xlane.xlu0 %5262
    %v5264 = vmul.f32 %v5257, %v4415
    %v5265 = vmul.f32 %v5260, %v4415
    %v5266 = vmul.f32 %v5263, %v4415
    %v5267 = vsub.f32 %v5252, %v5264
    %v5268 = vsub.f32 %v5253, %v5265
    %v5269 = vsub.f32 %v5254, %v5266
    %v5270 = vmul.f32 %v5267, %v5267
    %v5271 = vmul.f32 %v5268, %v5268
    %v5272 = vmul.f32 %v5269, %v5269
    %v5273 = vsel %vm4405, %v5270, 0.0
    %5274 = vadd.xlane.f32.xlu0 %v5273
    %v5275 = vpop.xlane.xlu0 %5274
    %v5276 = vsel %vm4405, %v5271, 0.0
    %5277 = vadd.xlane.f32.xlu0 %v5276
    %v5278 = vpop.xlane.xlu0 %5277
    %v5279 = vsel %vm4405, %v5272, 0.0
    %5280 = vadd.xlane.f32.xlu0 %v5279
    %v5281 = vpop.xlane.xlu0 %5280
    %v5282 = vmul.f32 %v5275, %v4415
    %v5283 = vmul.f32 %v5278, %v4415
    %v5284 = vmul.f32 %v5281, %v4415
    %v5285 = vadd.f32 %v5282, 1e-05
    %v5286 = vadd.f32 %v5283, 1e-05
    %v5287 = vadd.f32 %v5284, 1e-05
    %v5288 = vrsqrt.pop %v5285
    %v5289 = vrsqrt.pop %v5286
    %v5290 = vrsqrt.pop %v5287
    %v5291 = vmul.f32 %v5267, %v5288
    %v5292 = vmul.f32 %v5268, %v5289
    %v5293 = vmul.f32 %v5269, %v5290
    %v5294 = vmul.f32 %v5291, %v4450
    %v5295 = vmul.f32 %v5292, %v4450
    %v5296 = vmul.f32 %v5293, %v4450
    %v5297 = vadd.f32 %v5294, %v4459
    %v5298 = vadd.f32 %v5295, %v4459
    %v5299 = vadd.f32 %v5296, %v4459
    %v5301 = vsel %vm4405, %v5297, 0
    %v5304 = vsel %vm4405, %v5298, 0
    %v5307 = vsel %vm4405, %v5299, 0
    %5309 = vmatprep.subr.mxu0 0.0
    %5310 = vmatpush1.msra.mxu0 %v4374
    %5311 = vmatprep.subr.mxu0 0.0
    %5312 = vmatpush1.msra.mxu0 %v4375
    %5313 = vmatprep.subr.mxu0 0.0
    %5314 = vmatpush1.msra.mxu0 %v4376
    %5315 = vmatprep.subr.mxu0 0.0
    %5316 = vmatpush1.msra.mxu0 %v4377
    %5317 = vmatprep.subr.mxu0 0.0
    %5318 = vmatpush1.msra.mxu0 %v4378
    %5319 = vmatprep.subr.mxu0 0.0
    %5320 = vmatpush1.msra.mxu0 %v4379
    %5321 = vmatprep.subr.mxu0 0.0
    %5322 = vmatpush1.msra.mxu0 %v4380
    %5323 = vmatprep.subr.mxu0 0.0
    %5324 = vmatpush1.msra.mxu0 %v4381
    %5325 = vmatprep.subr.mxu0 0.0
    %5326 = vmatpush1.msra.mxu0 0.0
    %5327 = vmatprep.subr.mxu0 0.0
    %5328 = vmatpush1.msra.mxu0 0.0
    %5329 = vmatprep.subr.mxu0 0.0
    %5330 = vmatpush1.msra.mxu0 0.0
    %5331 = vmatprep.subr.mxu0 0.0
    %5332 = vmatpush1.msra.mxu0 0.0
    %5333 = vmatprep.subr.mxu0 0.0
    %5334 = vmatpush1.msra.mxu0 0.0
    %5335 = vmatprep.subr.mxu0 0.0
    %5336 = vmatpush1.msra.mxu0 0.0
    %5337 = vmatprep.subr.mxu0 0.0
    %5338 = vmatpush1.msra.mxu0 0.0
    %5339 = vmatprep.subr.mxu0 0.0
    %5340 = vmatpush1.msra.mxu0 0.0
    %5341 = vmatprep.subr.mxu0 0.0
    %5342 = vmatpush1.msra.mxu0 0.0
    %5343 = vmatprep.subr.mxu0 0.0
    %5344 = vmatpush1.msra.mxu0 0.0
    %5345 = vmatprep.subr.mxu0 0.0
    %5346 = vmatpush1.msra.mxu0 0.0
    %5347 = vmatprep.subr.mxu0 0.0
    %5348 = vmatpush1.msra.mxu0 0.0
    %5349 = vmatprep.subr.mxu0 0.0
    %5350 = vmatpush1.msra.mxu0 0.0
    %5351 = vmatprep.subr.mxu0 0.0
    %5352 = vmatpush1.msra.mxu0 0.0
    %5353 = vmatprep.subr.mxu0 0.0
    %5354 = vmatpush1.msra.mxu0 0.0
    %5355 = vmatprep.subr.mxu0 0.0
    %5356 = vmatpush1.msra.mxu0 0.0
    %5357 = vmatprep.subr.mxu0 0.0
    %5358 = vmatpush1.msra.mxu0 0.0
    %5359 = vmatprep.subr.mxu0 0.0
    %5360 = vmatpush1.msra.mxu0 0.0
    %5361 = vmatprep.subr.mxu0 0.0
    %5362 = vmatpush1.msra.mxu0 0.0
    %5363 = vmatprep.subr.mxu0 0.0
    %5364 = vmatpush1.msra.mxu0 0.0
    %5365 = vmatprep.subr.mxu0 0.0
    %5366 = vmatpush1.msra.mxu0 0.0
    %5367 = vmatprep.subr.mxu0 0.0
    %5368 = vmatpush1.msra.mxu0 0.0
    %5369 = vmatprep.subr.mxu0 0.0
    %5370 = vmatpush1.msra.mxu0 0.0
    %5371 = vmatprep.subr.mxu0 0.0
    %5372 = vmatpush1.msra.mxu0 0.0
    %5373 = vmatprep.mubr.f32.mxu0 0.0
    %5374 = vmatmul.mubr.f32.gmra.mrb[0].mxu0 %v5301
    %v5375 = vpop.f32.mrb[0].mxu0
    %v5376 = vadd.f32 %v4468, %v5375
    %v5377 = vpop.f32.mrb[0].mxu0
    %5378 = vmatprep.mubr.f32.mxu0 0.0
    %5379 = vmatmul.mubr.f32.gmra.mrb[0].mxu0 %v5304
    %v5380 = vpop.f32.mrb[0].mxu0
    %v5381 = vadd.f32 %v4468, %v5380
    %v5382 = vpop.f32.mrb[0].mxu0
    %5383 = vmatprep.mubr.f32.mxu0 0.0
    %5384 = vmatmul.mubr.f32.gmra.mrb[0].mxu0 %v5307
    %v5385 = vpop.f32.mrb[0].mxu0
    %v5386 = vadd.f32 %v4468, %v5385
    %v5387 = vpop.f32.mrb[0].mxu0
    %5388 = vdwg.mxu0
    %v5389 = vtanh.pop %v5376
    %v5390 = vtanh.pop %v5381
    %v5391 = vtanh.pop %v5386
    %v5392 = vmul.f32 %v5389, %v4566
    %v5393 = vmul.f32 %v5390, %v4566
    %v5394 = vmul.f32 %v5391, %v4566
    %v5395 = vsel %vm4405, %v5392, 0.0
    %5396 = vadd.xlane.f32.xlu0 %v5395
    %v5397 = vpop.xlane.xlu0 %5396
    %v5398 = vsel %vm4405, %v5393, 0.0
    %5399 = vadd.xlane.f32.xlu0 %v5398
    %v5400 = vpop.xlane.xlu0 %5399
    %v5401 = vsel %vm4405, %v5394, 0.0
    %5402 = vadd.xlane.f32.xlu0 %v5401
    %v5403 = vpop.xlane.xlu0 %5402
    %v5404 = vmul.f32 %v5397, 1.442695
    %v5405 = vpow.pop %v5404
    %v5406 = vmul.f32 %v5400, 1.442695
    %v5407 = vpow.pop %v5406
    %v5408 = vmul.f32 %v5403, 1.442695
    %v5409 = vpow.pop %v5408
    %v5410 = vld [vmem:[%s1568] sm:$0xff]
    %v5411 = vld [vmem:[%s1568 + $0x8] sm:$0xff]
    %v5412 = vld [vmem:[%s1568 + $0x10] sm:$0xff]
    %v5413 = vmul.f32 %v5405, %v5410
    %v5414 = vmul.f32 %v5407, %v5411
    %v5415 = vmul.f32 %v5409, %v5412
    %5417 = vset.pattern.permute.xlu0 0
    %5418 = vperm.xlu0 %5417, %v5413
    %v5419 = vpop.permute.xlu0 %5418
    %5422 = vset.pattern.permute.xlu0 0
    %5423 = vperm.xlu0 %5422, %v5414
    %v5424 = vpop.permute.xlu0 %5423
    %5427 = vset.pattern.permute.xlu0 0
    %5428 = vperm.xlu0 %5427, %v5415
    %v5429 = vpop.permute.xlu0 %5428
    %v5431 = vmul.f32 %v5419, %v5252
    %v5432 = vmul.f32 %v5424, %v5253
    %v5433 = vmul.f32 %v5429, %v5254
    %v5434 = vadd.f32 %v5228, %v5431
    %v5435 = vadd.f32 %v5229, %v5432
    %v5436 = vadd.f32 %v5230, %v5433
    %v5437 = vadd.f32 %v5231, %v5413
    %v5438 = vadd.f32 %v5232, %v5414
    %v5439 = vadd.f32 %v5233, %v5415
    %v5440 = vld [vmem:[%s2031] sm:$0xff]
    %v5441 = vld [vmem:[%s2031 + $0x8] sm:$0xff]
    %v5442 = vld [vmem:[%s2031 + $0x10] sm:$0xff]
    %v5443 = vld [vmem:[%s3199] sm:$0xff]
    %v5444 = vld [vmem:[%s3199 + $0x8] sm:$0xff]
    %v5445 = vld [vmem:[%s3199 + $0x10] sm:$0xff]
    %5449 = vrot.lane.b32.xlu0 %v5443, 32
    %v5450 = vpop.permute.xlu0 %5449
    %5451 = vrot.lane.b32.xlu0 %v5444, 32
    %v5452 = vpop.permute.xlu0 %5451
    %5453 = vrot.lane.b32.xlu0 %v5445, 32
    %v5454 = vpop.permute.xlu0 %5453
    %v5458 = vsel %vm91, %v5440, %v5450
    %v5459 = vsel %vm91, %v5441, %v5452
    %v5460 = vsel %vm91, %v5442, %v5454
    %v5461 = vsel %vm4405, %v5458, 0.0
    %5462 = vadd.xlane.f32.xlu0 %v5461
    %v5463 = vpop.xlane.xlu0 %5462
    %v5464 = vsel %vm4405, %v5459, 0.0
    %5465 = vadd.xlane.f32.xlu0 %v5464
    %v5466 = vpop.xlane.xlu0 %5465
    %v5467 = vsel %vm4405, %v5460, 0.0
    %5468 = vadd.xlane.f32.xlu0 %v5467
    %v5469 = vpop.xlane.xlu0 %5468
    %v5470 = vmul.f32 %v5463, %v4415
    %v5471 = vmul.f32 %v5466, %v4415
    %v5472 = vmul.f32 %v5469, %v4415
    %v5473 = vsub.f32 %v5458, %v5470
    %v5474 = vsub.f32 %v5459, %v5471
    %v5475 = vsub.f32 %v5460, %v5472
    %v5476 = vmul.f32 %v5473, %v5473
    %v5477 = vmul.f32 %v5474, %v5474
    %v5478 = vmul.f32 %v5475, %v5475
    %v5479 = vsel %vm4405, %v5476, 0.0
    %5480 = vadd.xlane.f32.xlu0 %v5479
    %v5481 = vpop.xlane.xlu0 %5480
    %v5482 = vsel %vm4405, %v5477, 0.0
    %5483 = vadd.xlane.f32.xlu0 %v5482
    %v5484 = vpop.xlane.xlu0 %5483
    %v5485 = vsel %vm4405, %v5478, 0.0
    %5486 = vadd.xlane.f32.xlu0 %v5485
    %v5487 = vpop.xlane.xlu0 %5486
    %v5488 = vmul.f32 %v5481, %v4415
    %v5489 = vmul.f32 %v5484, %v4415
    %v5490 = vmul.f32 %v5487, %v4415
    %v5491 = vadd.f32 %v5488, 1e-05
    %v5492 = vadd.f32 %v5489, 1e-05
    %v5493 = vadd.f32 %v5490, 1e-05
    %v5494 = vrsqrt.pop %v5491
    %v5495 = vrsqrt.pop %v5492
    %v5496 = vrsqrt.pop %v5493
    %v5497 = vmul.f32 %v5473, %v5494
    %v5498 = vmul.f32 %v5474, %v5495
    %v5499 = vmul.f32 %v5475, %v5496
    %v5500 = vmul.f32 %v5497, %v4450
    %v5501 = vmul.f32 %v5498, %v4450
    %v5502 = vmul.f32 %v5499, %v4450
    %v5503 = vadd.f32 %v5500, %v4459
    %v5504 = vadd.f32 %v5501, %v4459
    %v5505 = vadd.f32 %v5502, %v4459
    %v5507 = vsel %vm4405, %v5503, 0
    %v5510 = vsel %vm4405, %v5504, 0
    %v5513 = vsel %vm4405, %v5505, 0
    %5515 = vmatprep.subr.mxu0 0.0
    %5516 = vmatpush1.msra.mxu0 %v4374
    %5517 = vmatprep.subr.mxu0 0.0
    %5518 = vmatpush1.msra.mxu0 %v4375
    %5519 = vmatprep.subr.mxu0 0.0
    %5520 = vmatpush1.msra.mxu0 %v4376
    %5521 = vmatprep.subr.mxu0 0.0
    %5522 = vmatpush1.msra.mxu0 %v4377
    %5523 = vmatprep.subr.mxu0 0.0
    %5524 = vmatpush1.msra.mxu0 %v4378
    %5525 = vmatprep.subr.mxu0 0.0
    %5526 = vmatpush1.msra.mxu0 %v4379
    %5527 = vmatprep.subr.mxu0 0.0
    %5528 = vmatpush1.msra.mxu0 %v4380
    %5529 = vmatprep.subr.mxu0 0.0
    %5530 = vmatpush1.msra.mxu0 %v4381
    %5531 = vmatprep.subr.mxu0 0.0
    %5532 = vmatpush1.msra.mxu0 0.0
    %5533 = vmatprep.subr.mxu0 0.0
    %5534 = vmatpush1.msra.mxu0 0.0
    %5535 = vmatprep.subr.mxu0 0.0
    %5536 = vmatpush1.msra.mxu0 0.0
    %5537 = vmatprep.subr.mxu0 0.0
    %5538 = vmatpush1.msra.mxu0 0.0
    %5539 = vmatprep.subr.mxu0 0.0
    %5540 = vmatpush1.msra.mxu0 0.0
    %5541 = vmatprep.subr.mxu0 0.0
    %5542 = vmatpush1.msra.mxu0 0.0
    %5543 = vmatprep.subr.mxu0 0.0
    %5544 = vmatpush1.msra.mxu0 0.0
    %5545 = vmatprep.subr.mxu0 0.0
    %5546 = vmatpush1.msra.mxu0 0.0
    %5547 = vmatprep.subr.mxu0 0.0
    %5548 = vmatpush1.msra.mxu0 0.0
    %5549 = vmatprep.subr.mxu0 0.0
    %5550 = vmatpush1.msra.mxu0 0.0
    %5551 = vmatprep.subr.mxu0 0.0
    %5552 = vmatpush1.msra.mxu0 0.0
    %5553 = vmatprep.subr.mxu0 0.0
    %5554 = vmatpush1.msra.mxu0 0.0
    %5555 = vmatprep.subr.mxu0 0.0
    %5556 = vmatpush1.msra.mxu0 0.0
    %5557 = vmatprep.subr.mxu0 0.0
    %5558 = vmatpush1.msra.mxu0 0.0
    %5559 = vmatprep.subr.mxu0 0.0
    %5560 = vmatpush1.msra.mxu0 0.0
    %5561 = vmatprep.subr.mxu0 0.0
    %5562 = vmatpush1.msra.mxu0 0.0
    %5563 = vmatprep.subr.mxu0 0.0
    %5564 = vmatpush1.msra.mxu0 0.0
    %5565 = vmatprep.subr.mxu0 0.0
    %5566 = vmatpush1.msra.mxu0 0.0
    %5567 = vmatprep.subr.mxu0 0.0
    %5568 = vmatpush1.msra.mxu0 0.0
    %5569 = vmatprep.subr.mxu0 0.0
    %5570 = vmatpush1.msra.mxu0 0.0
    %5571 = vmatprep.subr.mxu0 0.0
    %5572 = vmatpush1.msra.mxu0 0.0
    %5573 = vmatprep.subr.mxu0 0.0
    %5574 = vmatpush1.msra.mxu0 0.0
    %5575 = vmatprep.subr.mxu0 0.0
    %5576 = vmatpush1.msra.mxu0 0.0
    %5577 = vmatprep.subr.mxu0 0.0
    %5578 = vmatpush1.msra.mxu0 0.0
    %5579 = vmatprep.mubr.f32.mxu0 0.0
    %5580 = vmatmul.mubr.f32.gmra.mrb[0].mxu0 %v5507
    %v5581 = vpop.f32.mrb[0].mxu0
    %v5582 = vadd.f32 %v4468, %v5581
    %v5583 = vpop.f32.mrb[0].mxu0
    %5584 = vmatprep.mubr.f32.mxu0 0.0
    %5585 = vmatmul.mubr.f32.gmra.mrb[0].mxu0 %v5510
    %v5586 = vpop.f32.mrb[0].mxu0
    %v5587 = vadd.f32 %v4468, %v5586
    %v5588 = vpop.f32.mrb[0].mxu0
    %5589 = vmatprep.mubr.f32.mxu0 0.0
    %5590 = vmatmul.mubr.f32.gmra.mrb[0].mxu0 %v5513
    %v5591 = vpop.f32.mrb[0].mxu0
    %v5592 = vadd.f32 %v4468, %v5591
    %v5593 = vpop.f32.mrb[0].mxu0
    %5594 = vdwg.mxu0
    %v5595 = vtanh.pop %v5582
    %v5596 = vtanh.pop %v5587
    %v5597 = vtanh.pop %v5592
    %v5598 = vmul.f32 %v5595, %v4566
    %v5599 = vmul.f32 %v5596, %v4566
    %v5600 = vmul.f32 %v5597, %v4566
    %v5601 = vsel %vm4405, %v5598, 0.0
    %5602 = vadd.xlane.f32.xlu0 %v5601
    %v5603 = vpop.xlane.xlu0 %5602
    %v5604 = vsel %vm4405, %v5599, 0.0
    %5605 = vadd.xlane.f32.xlu0 %v5604
    %v5606 = vpop.xlane.xlu0 %5605
    %v5607 = vsel %vm4405, %v5600, 0.0
    %5608 = vadd.xlane.f32.xlu0 %v5607
    %v5609 = vpop.xlane.xlu0 %5608
    %v5610 = vmul.f32 %v5603, 1.442695
    %v5611 = vpow.pop %v5610
    %v5612 = vmul.f32 %v5606, 1.442695
    %v5613 = vpow.pop %v5612
    %v5614 = vmul.f32 %v5609, 1.442695
    %v5615 = vpow.pop %v5614
    %v5616 = vld [vmem:[%s1803] sm:$0xff]
    %v5617 = vld [vmem:[%s1803 + $0x8] sm:$0xff]
    %v5618 = vld [vmem:[%s1803 + $0x10] sm:$0xff]
    %v5619 = vmul.f32 %v5611, %v5616
    %v5620 = vmul.f32 %v5613, %v5617
    %v5621 = vmul.f32 %v5615, %v5618
    %5623 = vset.pattern.permute.xlu0 0
    %5624 = vperm.xlu0 %5623, %v5619
    %v5625 = vpop.permute.xlu0 %5624
    %5628 = vset.pattern.permute.xlu0 0
    %5629 = vperm.xlu0 %5628, %v5620
    %v5630 = vpop.permute.xlu0 %5629
    %5633 = vset.pattern.permute.xlu0 0
    %5634 = vperm.xlu0 %5633, %v5621
    %v5635 = vpop.permute.xlu0 %5634
    %v5637 = vmul.f32 %v5625, %v5458
    %v5638 = vmul.f32 %v5630, %v5459
    %v5639 = vmul.f32 %v5635, %v5460
    %v5640 = vadd.f32 %v5434, %v5637
    %v5641 = vadd.f32 %v5435, %v5638
    %v5642 = vadd.f32 %v5436, %v5639
    %v5643 = vadd.f32 %v5437, %v5619
    %v5644 = vadd.f32 %v5438, %v5620
    %v5645 = vadd.f32 %v5439, %v5621
    %v5646 = vld [vmem:[%s2266] sm:$0xff]
    %v5647 = vld [vmem:[%s2266 + $0x8] sm:$0xff]
    %v5648 = vld [vmem:[%s2266 + $0x10] sm:$0xff]
    %v5649 = vld [vmem:[%s2965] sm:$0xff]
    %v5650 = vld [vmem:[%s2965 + $0x8] sm:$0xff]
    %v5651 = vld [vmem:[%s2965 + $0x10] sm:$0xff]
    %5655 = vrot.lane.b32.xlu0 %v5649, 32
    %v5656 = vpop.permute.xlu0 %5655
    %5657 = vrot.lane.b32.xlu0 %v5650, 32
    %v5658 = vpop.permute.xlu0 %5657
    %5659 = vrot.lane.b32.xlu0 %v5651, 32
    %v5660 = vpop.permute.xlu0 %5659
    %v5664 = vsel %vm91, %v5646, %v5656
    %v5665 = vsel %vm91, %v5647, %v5658
    %v5666 = vsel %vm91, %v5648, %v5660
    %v5667 = vsel %vm4405, %v5664, 0.0
    %5668 = vadd.xlane.f32.xlu0 %v5667
    %v5669 = vpop.xlane.xlu0 %5668
    %v5670 = vsel %vm4405, %v5665, 0.0
    %5671 = vadd.xlane.f32.xlu0 %v5670
    %v5672 = vpop.xlane.xlu0 %5671
    %v5673 = vsel %vm4405, %v5666, 0.0
    %5674 = vadd.xlane.f32.xlu0 %v5673
    %v5675 = vpop.xlane.xlu0 %5674
    %v5676 = vmul.f32 %v5669, %v4415
    %v5677 = vmul.f32 %v5672, %v4415
    %v5678 = vmul.f32 %v5675, %v4415
    %v5679 = vsub.f32 %v5664, %v5676
    %v5680 = vsub.f32 %v5665, %v5677
    %v5681 = vsub.f32 %v5666, %v5678
    %v5682 = vmul.f32 %v5679, %v5679
    %v5683 = vmul.f32 %v5680, %v5680
    %v5684 = vmul.f32 %v5681, %v5681
    %v5685 = vsel %vm4405, %v5682, 0.0
    %5686 = vadd.xlane.f32.xlu0 %v5685
    %v5687 = vpop.xlane.xlu0 %5686
    %v5688 = vsel %vm4405, %v5683, 0.0
    %5689 = vadd.xlane.f32.xlu0 %v5688
    %v5690 = vpop.xlane.xlu0 %5689
    %v5691 = vsel %vm4405, %v5684, 0.0
    %5692 = vadd.xlane.f32.xlu0 %v5691
    %v5693 = vpop.xlane.xlu0 %5692
    %v5694 = vmul.f32 %v5687, %v4415
    %v5695 = vmul.f32 %v5690, %v4415
    %v5696 = vmul.f32 %v5693, %v4415
    %v5697 = vadd.f32 %v5694, 1e-05
    %v5698 = vadd.f32 %v5695, 1e-05
    %v5699 = vadd.f32 %v5696, 1e-05
    %v5700 = vrsqrt.pop %v5697
    %v5701 = vrsqrt.pop %v5698
    %v5702 = vrsqrt.pop %v5699
    %v5703 = vmul.f32 %v5679, %v5700
    %v5704 = vmul.f32 %v5680, %v5701
    %v5705 = vmul.f32 %v5681, %v5702
    %v5706 = vmul.f32 %v5703, %v4450
    %v5707 = vmul.f32 %v5704, %v4450
    %v5708 = vmul.f32 %v5705, %v4450
    %v5709 = vadd.f32 %v5706, %v4459
    %v5710 = vadd.f32 %v5707, %v4459
    %v5711 = vadd.f32 %v5708, %v4459
    %v5713 = vsel %vm4405, %v5709, 0
    %v5716 = vsel %vm4405, %v5710, 0
    %v5719 = vsel %vm4405, %v5711, 0
    %5721 = vmatprep.subr.mxu0 0.0
    %5722 = vmatpush1.msra.mxu0 %v4374
    %5723 = vmatprep.subr.mxu0 0.0
    %5724 = vmatpush1.msra.mxu0 %v4375
    %5725 = vmatprep.subr.mxu0 0.0
    %5726 = vmatpush1.msra.mxu0 %v4376
    %5727 = vmatprep.subr.mxu0 0.0
    %5728 = vmatpush1.msra.mxu0 %v4377
    %5729 = vmatprep.subr.mxu0 0.0
    %5730 = vmatpush1.msra.mxu0 %v4378
    %5731 = vmatprep.subr.mxu0 0.0
    %5732 = vmatpush1.msra.mxu0 %v4379
    %5733 = vmatprep.subr.mxu0 0.0
    %5734 = vmatpush1.msra.mxu0 %v4380
    %5735 = vmatprep.subr.mxu0 0.0
    %5736 = vmatpush1.msra.mxu0 %v4381
    %5737 = vmatprep.subr.mxu0 0.0
    %5738 = vmatpush1.msra.mxu0 0.0
    %5739 = vmatprep.subr.mxu0 0.0
    %5740 = vmatpush1.msra.mxu0 0.0
    %5741 = vmatprep.subr.mxu0 0.0
    %5742 = vmatpush1.msra.mxu0 0.0
    %5743 = vmatprep.subr.mxu0 0.0
    %5744 = vmatpush1.msra.mxu0 0.0
    %5745 = vmatprep.subr.mxu0 0.0
    %5746 = vmatpush1.msra.mxu0 0.0
    %5747 = vmatprep.subr.mxu0 0.0
    %5748 = vmatpush1.msra.mxu0 0.0
    %5749 = vmatprep.subr.mxu0 0.0
    %5750 = vmatpush1.msra.mxu0 0.0
    %5751 = vmatprep.subr.mxu0 0.0
    %5752 = vmatpush1.msra.mxu0 0.0
    %5753 = vmatprep.subr.mxu0 0.0
    %5754 = vmatpush1.msra.mxu0 0.0
    %5755 = vmatprep.subr.mxu0 0.0
    %5756 = vmatpush1.msra.mxu0 0.0
    %5757 = vmatprep.subr.mxu0 0.0
    %5758 = vmatpush1.msra.mxu0 0.0
    %5759 = vmatprep.subr.mxu0 0.0
    %5760 = vmatpush1.msra.mxu0 0.0
    %5761 = vmatprep.subr.mxu0 0.0
    %5762 = vmatpush1.msra.mxu0 0.0
    %5763 = vmatprep.subr.mxu0 0.0
    %5764 = vmatpush1.msra.mxu0 0.0
    %5765 = vmatprep.subr.mxu0 0.0
    %5766 = vmatpush1.msra.mxu0 0.0
    %5767 = vmatprep.subr.mxu0 0.0
    %5768 = vmatpush1.msra.mxu0 0.0
    %5769 = vmatprep.subr.mxu0 0.0
    %5770 = vmatpush1.msra.mxu0 0.0
    %5771 = vmatprep.subr.mxu0 0.0
    %5772 = vmatpush1.msra.mxu0 0.0
    %5773 = vmatprep.subr.mxu0 0.0
    %5774 = vmatpush1.msra.mxu0 0.0
    %5775 = vmatprep.subr.mxu0 0.0
    %5776 = vmatpush1.msra.mxu0 0.0
    %5777 = vmatprep.subr.mxu0 0.0
    %5778 = vmatpush1.msra.mxu0 0.0
    %5779 = vmatprep.subr.mxu0 0.0
    %5780 = vmatpush1.msra.mxu0 0.0
    %5781 = vmatprep.subr.mxu0 0.0
    %5782 = vmatpush1.msra.mxu0 0.0
    %5783 = vmatprep.subr.mxu0 0.0
    %5784 = vmatpush1.msra.mxu0 0.0
    %5785 = vmatprep.mubr.f32.mxu0 0.0
    %5786 = vmatmul.mubr.f32.gmra.mrb[0].mxu0 %v5713
    %v5787 = vpop.f32.mrb[0].mxu0
    %v5788 = vadd.f32 %v4468, %v5787
    %v5789 = vpop.f32.mrb[0].mxu0
    %5790 = vmatprep.mubr.f32.mxu0 0.0
    %5791 = vmatmul.mubr.f32.gmra.mrb[0].mxu0 %v5716
    %v5792 = vpop.f32.mrb[0].mxu0
    %v5793 = vadd.f32 %v4468, %v5792
    %v5794 = vpop.f32.mrb[0].mxu0
    %5795 = vmatprep.mubr.f32.mxu0 0.0
    %5796 = vmatmul.mubr.f32.gmra.mrb[0].mxu0 %v5719
    %v5797 = vpop.f32.mrb[0].mxu0
    %v5798 = vadd.f32 %v4468, %v5797
    %v5799 = vpop.f32.mrb[0].mxu0
    %5800 = vdwg.mxu0
    %v5801 = vtanh.pop %v5788
    %v5802 = vtanh.pop %v5793
    %v5803 = vtanh.pop %v5798
    %v5804 = vmul.f32 %v5801, %v4566
    %v5805 = vmul.f32 %v5802, %v4566
    %v5806 = vmul.f32 %v5803, %v4566
    %v5807 = vsel %vm4405, %v5804, 0.0
    %5808 = vadd.xlane.f32.xlu0 %v5807
    %v5809 = vpop.xlane.xlu0 %5808
    %v5810 = vsel %vm4405, %v5805, 0.0
    %5811 = vadd.xlane.f32.xlu0 %v5810
    %v5812 = vpop.xlane.xlu0 %5811
    %v5813 = vsel %vm4405, %v5806, 0.0
    %5814 = vadd.xlane.f32.xlu0 %v5813
    %v5815 = vpop.xlane.xlu0 %5814
    %v5816 = vmul.f32 %v5809, 1.442695
    %v5817 = vpow.pop %v5816
    %v5818 = vmul.f32 %v5812, 1.442695
    %v5819 = vpow.pop %v5818
    %v5820 = vmul.f32 %v5815, 1.442695
    %v5821 = vpow.pop %v5820
    %v5822 = vld [vmem:[%s2038] sm:$0xff]
    %v5823 = vld [vmem:[%s2038 + $0x8] sm:$0xff]
    %v5824 = vld [vmem:[%s2038 + $0x10] sm:$0xff]
    %v5825 = vmul.f32 %v5817, %v5822
    %v5826 = vmul.f32 %v5819, %v5823
    %v5827 = vmul.f32 %v5821, %v5824
    %5829 = vset.pattern.permute.xlu0 0
    %5830 = vperm.xlu0 %5829, %v5825
    %v5831 = vpop.permute.xlu0 %5830
    %5834 = vset.pattern.permute.xlu0 0
    %5835 = vperm.xlu0 %5834, %v5826
    %v5836 = vpop.permute.xlu0 %5835
    %5839 = vset.pattern.permute.xlu0 0
    %5840 = vperm.xlu0 %5839, %v5827
    %v5841 = vpop.permute.xlu0 %5840
    %v5843 = vmul.f32 %v5831, %v5664
    %v5844 = vmul.f32 %v5836, %v5665
    %v5845 = vmul.f32 %v5841, %v5666
    %v5846 = vadd.f32 %v5640, %v5843
    %v5847 = vadd.f32 %v5641, %v5844
    %v5848 = vadd.f32 %v5642, %v5845
    %v5849 = vadd.f32 %v5643, %v5825
    %v5850 = vadd.f32 %v5644, %v5826
    %v5851 = vadd.f32 %v5645, %v5827
    %v5852 = vld [vmem:[%s2501] sm:$0xff]
    %v5853 = vld [vmem:[%s2501 + $0x8] sm:$0xff]
    %v5854 = vld [vmem:[%s2501 + $0x10] sm:$0xff]
    %v5855 = vld [vmem:[%s2731] sm:$0xff]
    %v5856 = vld [vmem:[%s2731 + $0x8] sm:$0xff]
    %v5857 = vld [vmem:[%s2731 + $0x10] sm:$0xff]
    %5861 = vrot.lane.b32.xlu0 %v5855, 32
    %v5862 = vpop.permute.xlu0 %5861
    %5863 = vrot.lane.b32.xlu0 %v5856, 32
    %v5864 = vpop.permute.xlu0 %5863
    %5865 = vrot.lane.b32.xlu0 %v5857, 32
    %v5866 = vpop.permute.xlu0 %5865
    %v5870 = vsel %vm91, %v5852, %v5862
    %v5871 = vsel %vm91, %v5853, %v5864
    %v5872 = vsel %vm91, %v5854, %v5866
    %v5873 = vsel %vm4405, %v5870, 0.0
    %5874 = vadd.xlane.f32.xlu0 %v5873
    %v5875 = vpop.xlane.xlu0 %5874
    %v5876 = vsel %vm4405, %v5871, 0.0
    %5877 = vadd.xlane.f32.xlu0 %v5876
    %v5878 = vpop.xlane.xlu0 %5877
    %v5879 = vsel %vm4405, %v5872, 0.0
    %5880 = vadd.xlane.f32.xlu0 %v5879
    %v5881 = vpop.xlane.xlu0 %5880
    %v5882 = vmul.f32 %v5875, %v4415
    %v5883 = vmul.f32 %v5878, %v4415
    %v5884 = vmul.f32 %v5881, %v4415
    %v5885 = vsub.f32 %v5870, %v5882
    %v5886 = vsub.f32 %v5871, %v5883
    %v5887 = vsub.f32 %v5872, %v5884
    %v5888 = vmul.f32 %v5885, %v5885
    %v5889 = vmul.f32 %v5886, %v5886
    %v5890 = vmul.f32 %v5887, %v5887
    %v5891 = vsel %vm4405, %v5888, 0.0
    %5892 = vadd.xlane.f32.xlu0 %v5891
    %v5893 = vpop.xlane.xlu0 %5892
    %v5894 = vsel %vm4405, %v5889, 0.0
    %5895 = vadd.xlane.f32.xlu0 %v5894
    %v5896 = vpop.xlane.xlu0 %5895
    %v5897 = vsel %vm4405, %v5890, 0.0
    %5898 = vadd.xlane.f32.xlu0 %v5897
    %v5899 = vpop.xlane.xlu0 %5898
    %v5900 = vmul.f32 %v5893, %v4415
    %v5901 = vmul.f32 %v5896, %v4415
    %v5902 = vmul.f32 %v5899, %v4415
    %v5903 = vadd.f32 %v5900, 1e-05
    %v5904 = vadd.f32 %v5901, 1e-05
    %v5905 = vadd.f32 %v5902, 1e-05
    %v5906 = vrsqrt.pop %v5903
    %v5907 = vrsqrt.pop %v5904
    %v5908 = vrsqrt.pop %v5905
    %v5909 = vmul.f32 %v5885, %v5906
    %v5910 = vmul.f32 %v5886, %v5907
    %v5911 = vmul.f32 %v5887, %v5908
    %v5912 = vmul.f32 %v5909, %v4450
    %v5913 = vmul.f32 %v5910, %v4450
    %v5914 = vmul.f32 %v5911, %v4450
    %v5915 = vadd.f32 %v5912, %v4459
    %v5916 = vadd.f32 %v5913, %v4459
    %v5917 = vadd.f32 %v5914, %v4459
    %v5919 = vsel %vm4405, %v5915, 0
    %v5922 = vsel %vm4405, %v5916, 0
    %v5925 = vsel %vm4405, %v5917, 0
    %5927 = vmatprep.subr.mxu0 0.0
    %5928 = vmatpush1.msra.mxu0 %v4374
    %5929 = vmatprep.subr.mxu0 0.0
    %5930 = vmatpush1.msra.mxu0 %v4375
    %5931 = vmatprep.subr.mxu0 0.0
    %5932 = vmatpush1.msra.mxu0 %v4376
    %5933 = vmatprep.subr.mxu0 0.0
    %5934 = vmatpush1.msra.mxu0 %v4377
    %5935 = vmatprep.subr.mxu0 0.0
    %5936 = vmatpush1.msra.mxu0 %v4378
    %5937 = vmatprep.subr.mxu0 0.0
    %5938 = vmatpush1.msra.mxu0 %v4379
    %5939 = vmatprep.subr.mxu0 0.0
    %5940 = vmatpush1.msra.mxu0 %v4380
    %5941 = vmatprep.subr.mxu0 0.0
    %5942 = vmatpush1.msra.mxu0 %v4381
    %5943 = vmatprep.subr.mxu0 0.0
    %5944 = vmatpush1.msra.mxu0 0.0
    %5945 = vmatprep.subr.mxu0 0.0
    %5946 = vmatpush1.msra.mxu0 0.0
    %5947 = vmatprep.subr.mxu0 0.0
    %5948 = vmatpush1.msra.mxu0 0.0
    %5949 = vmatprep.subr.mxu0 0.0
    %5950 = vmatpush1.msra.mxu0 0.0
    %5951 = vmatprep.subr.mxu0 0.0
    %5952 = vmatpush1.msra.mxu0 0.0
    %5953 = vmatprep.subr.mxu0 0.0
    %5954 = vmatpush1.msra.mxu0 0.0
    %5955 = vmatprep.subr.mxu0 0.0
    %5956 = vmatpush1.msra.mxu0 0.0
    %5957 = vmatprep.subr.mxu0 0.0
    %5958 = vmatpush1.msra.mxu0 0.0
    %5959 = vmatprep.subr.mxu0 0.0
    %5960 = vmatpush1.msra.mxu0 0.0
    %5961 = vmatprep.subr.mxu0 0.0
    %5962 = vmatpush1.msra.mxu0 0.0
    %5963 = vmatprep.subr.mxu0 0.0
    %5964 = vmatpush1.msra.mxu0 0.0
    %5965 = vmatprep.subr.mxu0 0.0
    %5966 = vmatpush1.msra.mxu0 0.0
    %5967 = vmatprep.subr.mxu0 0.0
    %5968 = vmatpush1.msra.mxu0 0.0
    %5969 = vmatprep.subr.mxu0 0.0
    %5970 = vmatpush1.msra.mxu0 0.0
    %5971 = vmatprep.subr.mxu0 0.0
    %5972 = vmatpush1.msra.mxu0 0.0
    %5973 = vmatprep.subr.mxu0 0.0
    %5974 = vmatpush1.msra.mxu0 0.0
    %5975 = vmatprep.subr.mxu0 0.0
    %5976 = vmatpush1.msra.mxu0 0.0
    %5977 = vmatprep.subr.mxu0 0.0
    %5978 = vmatpush1.msra.mxu0 0.0
    %5979 = vmatprep.subr.mxu0 0.0
    %5980 = vmatpush1.msra.mxu0 0.0
    %5981 = vmatprep.subr.mxu0 0.0
    %5982 = vmatpush1.msra.mxu0 0.0
    %5983 = vmatprep.subr.mxu0 0.0
    %5984 = vmatpush1.msra.mxu0 0.0
    %5985 = vmatprep.subr.mxu0 0.0
    %5986 = vmatpush1.msra.mxu0 0.0
    %5987 = vmatprep.subr.mxu0 0.0
    %5988 = vmatpush1.msra.mxu0 0.0
    %5989 = vmatprep.subr.mxu0 0.0
    %5990 = vmatpush1.msra.mxu0 0.0
    %5991 = vmatprep.mubr.f32.mxu0 0.0
    %5992 = vmatmul.mubr.f32.gmra.mrb[0].mxu0 %v5919
    %v5993 = vpop.f32.mrb[0].mxu0
    %v5994 = vadd.f32 %v4468, %v5993
    %v5995 = vpop.f32.mrb[0].mxu0
    %5996 = vmatprep.mubr.f32.mxu0 0.0
    %5997 = vmatmul.mubr.f32.gmra.mrb[0].mxu0 %v5922
    %v5998 = vpop.f32.mrb[0].mxu0
    %v5999 = vadd.f32 %v4468, %v5998
    %v6000 = vpop.f32.mrb[0].mxu0
    %6001 = vmatprep.mubr.f32.mxu0 0.0
    %6002 = vmatmul.mubr.f32.gmra.mrb[0].mxu0 %v5925
    %v6003 = vpop.f32.mrb[0].mxu0
    %v6004 = vadd.f32 %v4468, %v6003
    %v6005 = vpop.f32.mrb[0].mxu0
    %6006 = vdwg.mxu0
    %v6007 = vtanh.pop %v5994
    %v6008 = vtanh.pop %v5999
    %v6009 = vtanh.pop %v6004
    %v6010 = vmul.f32 %v6007, %v4566
    %v6011 = vmul.f32 %v6008, %v4566
    %v6012 = vmul.f32 %v6009, %v4566
    %v6013 = vsel %vm4405, %v6010, 0.0
    %6014 = vadd.xlane.f32.xlu0 %v6013
    %v6015 = vpop.xlane.xlu0 %6014
    %v6016 = vsel %vm4405, %v6011, 0.0
    %6017 = vadd.xlane.f32.xlu0 %v6016
    %v6018 = vpop.xlane.xlu0 %6017
    %v6019 = vsel %vm4405, %v6012, 0.0
    %6020 = vadd.xlane.f32.xlu0 %v6019
    %v6021 = vpop.xlane.xlu0 %6020
    %v6022 = vmul.f32 %v6015, 1.442695
    %v6023 = vpow.pop %v6022
    %v6024 = vmul.f32 %v6018, 1.442695
    %v6025 = vpow.pop %v6024
    %v6026 = vmul.f32 %v6021, 1.442695
    %v6027 = vpow.pop %v6026
    %v6028 = vld [vmem:[%s2273] sm:$0xff]
    %v6029 = vld [vmem:[%s2273 + $0x8] sm:$0xff]
    %v6030 = vld [vmem:[%s2273 + $0x10] sm:$0xff]
    %v6031 = vmul.f32 %v6023, %v6028
    %v6032 = vmul.f32 %v6025, %v6029
    %v6033 = vmul.f32 %v6027, %v6030
    %6035 = vset.pattern.permute.xlu0 0
    %6036 = vperm.xlu0 %6035, %v6031
    %v6037 = vpop.permute.xlu0 %6036
    %6040 = vset.pattern.permute.xlu0 0
    %6041 = vperm.xlu0 %6040, %v6032
    %v6042 = vpop.permute.xlu0 %6041
    %6045 = vset.pattern.permute.xlu0 0
    %6046 = vperm.xlu0 %6045, %v6033
    %v6047 = vpop.permute.xlu0 %6046
    %v6049 = vmul.f32 %v6037, %v5870
    %v6050 = vmul.f32 %v6042, %v5871
    %v6051 = vmul.f32 %v6047, %v5872
    %v6052 = vadd.f32 %v5846, %v6049
    %v6053 = vadd.f32 %v5847, %v6050
    %v6054 = vadd.f32 %v5848, %v6051
    %v6055 = vadd.f32 %v5849, %v6031
    %v6056 = vadd.f32 %v5850, %v6032
    %v6057 = vadd.f32 %v5851, %v6033
    %vm6058 = vcmp.gt.f32.partialorder %v6055, 0.0
    %vm6059 = vcmp.gt.f32.partialorder %v6056, 0.0
    %vm6060 = vcmp.gt.f32.partialorder %v6057, 0.0
    %v6061 = vsel %vm6058, %v6055, 1.0
    %v6062 = vsel %vm6059, %v6056, 1.0
    %v6063 = vsel %vm6060, %v6057, 1.0
    %v6064 = vrcp.pop %v6061
    %v6065 = vmul.f32 1.0, %v6064
    %v6066 = vrcp.pop %v6062
    %v6067 = vmul.f32 1.0, %v6066
    %v6068 = vrcp.pop %v6063
    %v6069 = vmul.f32 1.0, %v6068
    %v6070 = vsel %vm6058, %v6065, 0.0
    %v6071 = vsel %vm6059, %v6067, 0.0
    %v6072 = vsel %vm6060, %v6069, 0.0
    %6074 = vset.pattern.permute.xlu0 0
    %6075 = vperm.xlu0 %6074, %v6070
    %v6076 = vpop.permute.xlu0 %6075
    %6079 = vset.pattern.permute.xlu0 0
    %6080 = vperm.xlu0 %6079, %v6071
    %v6081 = vpop.permute.xlu0 %6080
    %6084 = vset.pattern.permute.xlu0 0
    %6085 = vperm.xlu0 %6084, %v6072
    %v6086 = vpop.permute.xlu0 %6085
    %v6088 = vmul.f32 %v6052, %v6076
    %v6089 = vmul.f32 %v6053, %v6081
    %v6090 = vmul.f32 %v6054, %v6086
    %6091 = vst.msk [vmem:[#allocation6] sm:$0xff] %vm4405, %v6088
    %6092 = vst.msk [vmem:[#allocation6 + $0x8] sm:$0xff] %vm4405, %v6089
    %6093 = vst.msk [vmem:[#allocation6 + $0x10] sm:$0xff] %vm4405, %v6090
    %6094 = vrot.lane.b32.xlu0 %v4795, 1
    %v6095 = vpop.permute.xlu0 %6094
    %6096 = vrot.lane.b32.xlu0 %v4796, 1
    %v6097 = vpop.permute.xlu0 %6096
    %6098 = vrot.lane.b32.xlu0 %v4797, 1
    %v6099 = vpop.permute.xlu0 %6098
    %6103 = vrot.lane.b32.xlu0 %v5001, 2
    %v6104 = vpop.permute.xlu0 %6103
    %6105 = vrot.lane.b32.xlu0 %v5002, 2
    %v6106 = vpop.permute.xlu0 %6105
    %6107 = vrot.lane.b32.xlu0 %v5003, 2
    %v6108 = vpop.permute.xlu0 %6107
    %6112 = vrot.lane.b32.xlu0 %v5207, 3
    %v6113 = vpop.permute.xlu0 %6112
    %6114 = vrot.lane.b32.xlu0 %v5208, 3
    %v6115 = vpop.permute.xlu0 %6114
    %6116 = vrot.lane.b32.xlu0 %v5209, 3
    %v6117 = vpop.permute.xlu0 %6116
    %6121 = vrot.lane.b32.xlu0 %v5413, 4
    %v6122 = vpop.permute.xlu0 %6121
    %6123 = vrot.lane.b32.xlu0 %v5414, 4
    %v6124 = vpop.permute.xlu0 %6123
    %6125 = vrot.lane.b32.xlu0 %v5415, 4
    %v6126 = vpop.permute.xlu0 %6125
    %6130 = vrot.lane.b32.xlu0 %v5619, 5
    %v6131 = vpop.permute.xlu0 %6130
    %6132 = vrot.lane.b32.xlu0 %v5620, 5
    %v6133 = vpop.permute.xlu0 %6132
    %6134 = vrot.lane.b32.xlu0 %v5621, 5
    %v6135 = vpop.permute.xlu0 %6134
    %6139 = vrot.lane.b32.xlu0 %v5825, 6
    %v6140 = vpop.permute.xlu0 %6139
    %6141 = vrot.lane.b32.xlu0 %v5826, 6
    %v6142 = vpop.permute.xlu0 %6141
    %6143 = vrot.lane.b32.xlu0 %v5827, 6
    %v6144 = vpop.permute.xlu0 %6143
    %6148 = vrot.lane.b32.xlu0 %v6031, 7
    %v6149 = vpop.permute.xlu0 %6148
    %6150 = vrot.lane.b32.xlu0 %v6032, 7
    %v6151 = vpop.permute.xlu0 %6150
    %6152 = vrot.lane.b32.xlu0 %v6033, 7
    %v6153 = vpop.permute.xlu0 %6152
    %vm6157 = vcmask 7168
    %v6158 = vsel %vm6157, %v4589, %v6095
    %v6159 = vsel %vm6157, %v4590, %v6097
    %v6160 = vsel %vm6157, %v4591, %v6099
    %vm6161 = vcmask 15360
    %v6162 = vsel %vm6161, %v6158, %v6104
    %v6163 = vsel %vm6161, %v6159, %v6106
    %v6164 = vsel %vm6161, %v6160, %v6108
    %vm6165 = vcmask 23552
    %v6166 = vsel %vm6165, %v6162, %v6113
    %v6167 = vsel %vm6165, %v6163, %v6115
    %v6168 = vsel %vm6165, %v6164, %v6117
    %vm6169 = vcmask 31744
    %v6170 = vsel %vm6169, %v6166, %v6122
    %v6171 = vsel %vm6169, %v6167, %v6124
    %v6172 = vsel %vm6169, %v6168, %v6126
    %vm6173 = vcmask 39936
    %v6174 = vsel %vm6173, %v6170, %v6131
    %v6175 = vsel %vm6173, %v6171, %v6133
    %v6176 = vsel %vm6173, %v6172, %v6135
    %vm6177 = vcmask 48128
    %v6178 = vsel %vm6177, %v6174, %v6140
    %v6179 = vsel %vm6177, %v6175, %v6142
    %v6180 = vsel %vm6177, %v6176, %v6144
    %vm6181 = vcmask 56320
    %v6182 = vsel %vm6181, %v6178, %v6149
    %v6183 = vsel %vm6181, %v6179, %v6151
    %v6184 = vsel %vm6181, %v6180, %v6153
    %v6185 = vmul.f32 %v6182, %v6076
    %v6186 = vmul.f32 %v6183, %v6081
    %v6187 = vmul.f32 %v6184, %v6086
    %vm6188 = vcmask 64512
    %6189 = vst.msk [vmem:[%s14] sm:$0xff] %vm6188, %v6185
    %6190 = vst.msk [vmem:[%s14 + $0x8] sm:$0xff] %vm6188, %v6186
    %6191 = vst.msk [vmem:[%s14 + $0x10] sm:$0xff] %vm6188, %v6187
    // Predicated region
    $region54: #{tpu_custom_call.1} parent=1 // pred_check
      _
    $region55: #{tpu_custom_call.1} parent=1 // pred_check_branch
      %6193 = sbr.rel (0) target = $region57
    $region56: #{tpu_custom_call.1} parent=1 // pred_region
      %s6195 = ssub.s32 384, 384
      %6196 = vsyncadd [#allocation7], %s6195
      %s6197 = sshll.u32 [#allocation6], 4
      %s6198 = int_to_ptr.vmem [resolvable:$true] %s6197
      %6203 = dma.vmem_to_hbm [thread:$0]  %s6198, 384, %s13, [#allocation7], 128, 128, 8
    $region57: #{tpu_custom_call.1} parent=1 // pred_fallthru
      _
    // Predicated region
    $region58: #{tpu_custom_call.1} parent=1 // pred_check
      _
    $region59: #{tpu_custom_call.1} parent=1 // pred_check_branch
      %6205 = sbr.rel (0) target = $region61
    $region60: #{tpu_custom_call.1} parent=1 // pred_region
      _
    $region61: #{tpu_custom_call.1} parent=1 // pred_fallthru
      _
    // Predicated region
    $region62: #{tpu_custom_call.1} parent=1 // pred_check
      _
    $region63: #{tpu_custom_call.1} parent=1 // pred_check_branch
      %6207 = sbr.rel (0) target = $region65
    $region64: #{tpu_custom_call.1} parent=1 // pred_region
      %6208 = dma.done [#allocation7], 384
    $region65: #{tpu_custom_call.1} parent=1 // pred_fallthru
      _
    // Predicated region
    $region66: #{tpu_custom_call.1} parent=1 // pred_check
      _
    $region67: #{tpu_custom_call.1} parent=1 // pred_check_branch
      %6210 = sbr.rel (0) target = $region69
    $region68: #{tpu_custom_call.1} parent=1 // pred_region
      _
    $region69: #{tpu_custom_call.1} parent=1 // pred_fallthru
      _
    %6211 = vsyncpa [#allocation7], 1

</llo_original>
